<compile_context>
chip_gen: v5e
topology: v5e:2x2
jax: 0.10.0
libtpu: 0.0.40
codegen_flags: <defaults>
</compile_context>

<pallas_src>
import numpy as np
import jax
import jax.numpy as jnp
from jax import lax
from jax.experimental import pallas as pl
from jax.experimental.pallas import tpu as pltpu

LRELU_SLOPE = 0.2
IN_EPS = 1e-5                      # PyTorch InstanceNorm2d default
_STRIDES = (2, 2, 2, 2, 1)


def _out_hw(n, stride):
    return (n + 2 - 3) // stride + 1


def _gather_mats(hi, wi, ho, wo, stride):
    """0/1 selection matrices: patches[t] = G[t] @ act  (pad=1, 3x3 kernel)."""
    g = np.zeros((9, ho * wo, hi * wi), np.float32)
    for kh in range(3):
        for kw in range(3):
            t = kh * 3 + kw
            for i in range(ho):
                r = stride * i + kh - 1
                if r < 0 or r >= hi:
                    continue
                for j in range(wo):
                    c = stride * j + kw - 1
                    if c < 0 or c >= wi:
                        continue
                    g[t, i * wo + j, r * wi + c] = 1.0
    return g


def pack_params(params, H, W, compute_dtype=jnp.bfloat16):
    """Pre-pack weights/biases/gather matrices (one-time, hoisted out of fwd).

    Returned list order (after the layer-1 patch matrix):
      [W1, b1, G2, W2, b2, G3, W3, b3, G4, W4, b4, G5, W5, b5]
    """
    cdt = compute_dtype
    hs, ws = [H], [W]
    for s in _STRIDES:
        hs.append(_out_hw(hs[-1], s))
        ws.append(_out_hw(ws[-1], s))

    (w1, b1), (w2, b2), (w3, b3), (w4, b4), (w5, b5) = params

    # Layer 1: flat (K, 64) weight, K zero-padded to a multiple of 128 lanes.
    cin1 = w1.shape[1]
    k1 = 9 * cin1
    k1_pad = max(128, -(-k1 // 128) * 128)
    w1m = jnp.transpose(w1, (2, 3, 1, 0)).reshape(k1, w1.shape[0])
    w1m = jnp.pad(w1m, ((0, k1_pad - k1), (0, 0)))
    ops = [w1m.astype(cdt), b1.reshape(1, -1).astype(jnp.float32)]

    # Layers 2-4: per-tap weights (9, Cin, Cout) + 0/1 gather matrices.
    for idx, (w, b) in enumerate(((w2, b2), (w3, b3), (w4, b4)), start=1):
        g = _gather_mats(hs[idx], ws[idx], hs[idx + 1], ws[idx + 1], _STRIDES[idx])
        wt = jnp.transpose(w, (2, 3, 1, 0)).reshape(9, w.shape[1], w.shape[0])
        ops += [jnp.asarray(g, cdt), wt.astype(cdt),
                b.reshape(1, -1).astype(jnp.float32)]

    # Layer 5 (Cout == 1): gather matrix + per-tap row weights kept in f32.
    g5 = _gather_mats(hs[4], ws[4], hs[5], ws[5], _STRIDES[4])
    w5t = jnp.transpose(w5, (2, 3, 0, 1)).reshape(9, 1, w5.shape[1])
    ops += [jnp.asarray(g5, cdt), w5t.astype(jnp.float32),
            b5.reshape(1, 1).astype(jnp.float32)]
    return ops


def _disc_kernel(p1_ref, w1_ref, b1_ref,
                 g2_ref, w2_ref, b2_ref,
                 g3_ref, w3_ref, b3_ref,
                 g4_ref, w4_ref, b4_ref,
                 g5_ref, w5_ref, b5_ref,
                 o_ref):
    """Full 5-layer discriminator for one batch element (one grid step)."""
    f32 = jnp.float32

    def lrelu(y):
        return jnp.where(y >= 0, y, LRELU_SLOPE * y)

    def inorm(y):                        # InstanceNorm over spatial rows, in f32
        m = jnp.mean(y, axis=0, keepdims=True)
        v = jnp.mean(jnp.square(y - m), axis=0, keepdims=True)
        return (y - m) * lax.rsqrt(v + IN_EPS)

    def conv_block(y, g_ref, w_ref, b_ref, norm):
        cdt = w_ref.dtype
        yb = y.astype(cdt)               # single rounding per layer input
        p_out = g_ref.shape[1]
        c_out = w_ref.shape[2]
        acc = jnp.zeros((p_out, c_out), f32)
        for t in range(9):               # tap gather (0/1 matmul) + tap matmul
            patches = jnp.dot(g_ref[t], yb, preferred_element_type=f32).astype(cdt)
            acc = acc + jnp.dot(patches, w_ref[t], preferred_element_type=f32)
        y = lrelu(acc + b_ref[...])
        return inorm(y) if norm else y

    # Layer 1: one lane-aligned matmul over the pre-built, K-padded patches.
    y = jnp.dot(p1_ref[0], w1_ref[...], preferred_element_type=f32) + b1_ref[...]
    y = lrelu(y)                                            # (P1, 64)

    y = conv_block(y, g2_ref, w2_ref, b2_ref, norm=True)    # (P2, 128)
    y = conv_block(y, g3_ref, w3_ref, b3_ref, norm=True)    # (P3, 256)
    y = conv_block(y, g4_ref, w4_ref, b4_ref, norm=True)    # (P4, 512)

    # Layer 5 (Cout = 1): VPU multiply + lane reduce instead of a Kx1 matvec.
    yb = y.astype(g5_ref.dtype)
    p5 = g5_ref.shape[1]
    acc = jnp.zeros((p5, 1), f32)
    for t in range(9):
        patches = jnp.dot(g5_ref[t], yb, preferred_element_type=f32)  # (P5, C4)
        acc = acc + jnp.sum(patches * w5_ref[t], axis=1, keepdims=True)
    o_ref[0] = (acc + b5_ref[...]).astype(o_ref.dtype)


def _layer1_patches(img_nchw, k_pad):
    """im2col for the first conv (3x3, stride 2, pad 1) on the tiny input."""
    x = jnp.transpose(img_nchw, (0, 2, 3, 1))               # NCHW -> NHWC
    B, H, W, C = x.shape
    xp = jnp.pad(x, ((0, 0), (1, 1), (1, 1), (0, 0)))
    ho, wo = _out_hw(H, 2), _out_hw(W, 2)
    cols = []
    for kh in range(3):
        for kw in range(3):
            cols.append(xp[:, kh:kh + 2 * (ho - 1) + 1:2,
                           kw:kw + 2 * (wo - 1) + 1:2, :])
    p = jnp.stack(cols, axis=3).reshape(B, ho * wo, 9 * C)  # (kh, kw, cin) order
    return jnp.pad(p, ((0, 0), (0, 0), (0, k_pad - 9 * C)))


def discriminator_forward(img_nchw, packed):
    """NCHW image -> NCHW validity map; one fused Pallas kernel call."""
    cdt = packed[0].dtype
    B, _, H, W = img_nchw.shape
    p1 = _layer1_patches(img_nchw, packed[0].shape[0]).astype(cdt)

    hs, ws = [H], [W]
    for s in _STRIDES:
        hs.append(_out_hw(hs[-1], s))
        ws.append(_out_hw(ws[-1], s))
    p5 = hs[-1] * ws[-1]

    def _const(n):
        return lambda b: (0,) * n

    out = pl.pallas_call(
        _disc_kernel,
        out_shape=jax.ShapeDtypeStruct((B, p5, 1), jnp.float32),
        grid=(B,),
        in_specs=[pl.BlockSpec((1,) + p1.shape[1:], lambda b: (b, 0, 0))]
                 + [pl.BlockSpec(a.shape, _const(a.ndim)) for a in packed],
        out_specs=pl.BlockSpec((1, p5, 1), lambda b: (b, 0, 0)),
        compiler_params=pltpu.CompilerParams(
            dimension_semantics=("parallel",),
            vmem_limit_bytes=64 * 1024 * 1024,
        ),
    )(p1, *packed)
    return out.reshape(B, hs[-1], ws[-1])[:, None, :, :]


def init_params(key, channels):
    """Deterministic Kaiming-uniform-like init (PyTorch Conv2d default style)."""
    dims = [(channels, 64), (64, 128), (128, 256), (256, 512), (512, 1)]
    params = []
    for i, (cin, cout) in enumerate(dims):
        kw_, kb_ = jax.random.split(jax.random.fold_in(key, i))
        scale = 1.0 / float(jnp.sqrt(cin * 9))
        w = jax.random.uniform(kw_, (cout, cin, 3, 3), jnp.float32, -scale, scale)
        b = jax.random.uniform(kb_, (cout,), jnp.float32, -scale, scale)
        params.append((w, b))
    return params


_REF_CFG = [(2, True, False), (2, True, True), (2, True, True),
            (2, True, True), (1, False, False)]


def reference_forward(img_nchw, params):
    """Pure-JAX (XLA) f32 reference for correctness checking."""
    x = img_nchw
    for (w, b), (stride, do_lrelu, do_norm) in zip(params, _REF_CFG):
        x = lax.conv_general_dilated(
            x, w, (stride, stride), ((1, 1), (1, 1)),
            dimension_numbers=("NCHW", "OIHW", "NCHW"))
        x = x + b[None, :, None, None]
        if do_lrelu:
            x = jnp.where(x >= 0, x, LRELU_SLOPE * x)
        if do_norm:
            m = jnp.mean(x, axis=(2, 3), keepdims=True)
            v = jnp.mean(jnp.square(x - m), axis=(2, 3), keepdims=True)
            x = (x - m) * lax.rsqrt(v + IN_EPS)
    return x


if __name__ == "__main__":
    key = jax.random.PRNGKey(0)
    B, C, H, W = 2, 3, 32, 32                    # 32 -> 16 -> 8 -> 4 -> 2 -> 2
    img = jax.random.normal(jax.random.fold_in(key, 100), (B, C, H, W), jnp.float32)
    params = init_params(key, C)
    ref = jax.block_until_ready(reference_forward(img, params))

    fwd = jax.jit(discriminator_forward)

    # Tight numerical check with the f32 compute path.
    packed_f32 = pack_params(params, H, W, compute_dtype=jnp.float32)
    out_f32 = jax.block_until_ready(fwd(img, packed_f32))
    assert out_f32.shape == (B, 1, 2, 2), out_f32.shape
    assert jnp.allclose(out_f32, ref, rtol=1e-3, atol=1e-3), \
        float(jnp.max(jnp.abs(out_f32 - ref)))

    # Performance path: bf16 weights / gathered activations on the MXU with
    # f32 accumulation and f32 bias/LeakyReLU/InstanceNorm math (bf16 input
    # rounding ~0.2%/element -> looser tolerance vs. the pure-f32 reference).
    packed_bf16 = pack_params(params, H, W, compute_dtype=jnp.bfloat16)
    out_bf16 = jax.block_until_ready(fwd(img, packed_bf16))
    assert out_bf16.shape == (B, 1, 2, 2), out_bf16.shape
    assert jnp.allclose(out_bf16, ref, rtol=5e-2, atol=5e-2), \
        float(jnp.max(jnp.abs(out_bf16 - ref)))

    print("KERNEL_OK")
</pallas_src>

<mosaic_0001>
module attributes {stable_mosaic.version = 11 : i64} {
  func.func @_disc_kernel(%arg0: i32, %arg1: memref<1x256x128xf32, #tpu.memory_space<vmem>>, %arg2: memref<128x64xf32, #tpu.memory_space<vmem>>, %arg3: memref<1x64xf32, #tpu.memory_space<vmem>>, %arg4: memref<9x64x256xf32, #tpu.memory_space<vmem>>, %arg5: memref<9x64x128xf32, #tpu.memory_space<vmem>>, %arg6: memref<1x128xf32, #tpu.memory_space<vmem>>, %arg7: memref<9x16x64xf32, #tpu.memory_space<vmem>>, %arg8: memref<9x128x256xf32, #tpu.memory_space<vmem>>, %arg9: memref<1x256xf32, #tpu.memory_space<vmem>>, %arg10: memref<9x4x16xf32, #tpu.memory_space<vmem>>, %arg11: memref<9x256x512xf32, #tpu.memory_space<vmem>>, %arg12: memref<1x512xf32, #tpu.memory_space<vmem>>, %arg13: memref<9x4x4xf32, #tpu.memory_space<vmem>>, %arg14: memref<9x1x512xf32, #tpu.memory_space<vmem>>, %arg15: memref<1x1xf32, #tpu.memory_space<vmem>>, %arg16: memref<1x4x1xf32, #tpu.memory_space<vmem>>) attributes {dimension_semantics = [#tpu.dimension_semantics<parallel>], iteration_bounds = array<i64: 2>, scalar_prefetch = 0 : i64, scratch_operands = 0 : i64, tpu.core_type = #tpu.core_type<tc>, window_params = [{transform_indices = @transform_0, window_bounds = array<i64: 1, 256, 128>}, {pipeline_mode = #tpu.pipeline_mode<synchronous>, transform_indices = @transform_1, window_bounds = array<i64: 128, 64>}, {pipeline_mode = #tpu.pipeline_mode<synchronous>, transform_indices = @transform_2, window_bounds = array<i64: 1, 64>}, {pipeline_mode = #tpu.pipeline_mode<synchronous>, transform_indices = @transform_3, window_bounds = array<i64: 9, 64, 256>}, {pipeline_mode = #tpu.pipeline_mode<synchronous>, transform_indices = @transform_4, window_bounds = array<i64: 9, 64, 128>}, {pipeline_mode = #tpu.pipeline_mode<synchronous>, transform_indices = @transform_5, window_bounds = array<i64: 1, 128>}, {pipeline_mode = #tpu.pipeline_mode<synchronous>, transform_indices = @transform_6, window_bounds = array<i64: 9, 16, 64>}, {pipeline_mode = #tpu.pipeline_mode<synchronous>, transform_indices = @transform_7, window_bounds = array<i64: 9, 128, 256>}, {pipeline_mode = #tpu.pipeline_mode<synchronous>, transform_indices = @transform_8, window_bounds = array<i64: 1, 256>}, {pipeline_mode = #tpu.pipeline_mode<synchronous>, transform_indices = @transform_9, window_bounds = array<i64: 9, 4, 16>}, {pipeline_mode = #tpu.pipeline_mode<synchronous>, transform_indices = @transform_10, window_bounds = array<i64: 9, 256, 512>}, {pipeline_mode = #tpu.pipeline_mode<synchronous>, transform_indices = @transform_11, window_bounds = array<i64: 1, 512>}, {pipeline_mode = #tpu.pipeline_mode<synchronous>, transform_indices = @transform_12, window_bounds = array<i64: 9, 4, 4>}, {pipeline_mode = #tpu.pipeline_mode<synchronous>, transform_indices = @transform_13, window_bounds = array<i64: 9, 1, 512>}, {pipeline_mode = #tpu.pipeline_mode<synchronous>, transform_indices = @transform_14, window_bounds = array<i64: 1, 1>}, {transform_indices = @transform_15, window_bounds = array<i64: 1, 4, 1>}]} {
    %c0 = arith.constant 0 : index
    %c0_0 = arith.constant 0 : index
    %c0_1 = arith.constant 0 : index
    %0 = vector.load %arg1[%c0, %c0_0, %c0_1] : memref<1x256x128xf32, #tpu.memory_space<vmem>>, vector<1x256x128xf32>
    %1 = vector.shape_cast %0 : vector<1x256x128xf32> to vector<256x128xf32>
    %c0_2 = arith.constant 0 : index
    %c0_3 = arith.constant 0 : index
    %2 = vector.load %arg2[%c0_2, %c0_3] : memref<128x64xf32, #tpu.memory_space<vmem>>, vector<128x64xf32>
    %cst = arith.constant dense<0.000000e+00> : vector<256x64xf32>
    %3 = tpu.matmul %1, %2, %cst {dimension_numbers = #tpu.dot_dimension_numbers<[1], [0], [0], [1], [0, 0, 1, 1], [], []>} : vector<256x128xf32>, vector<128x64xf32>, vector<256x64xf32> -> vector<256x64xf32>
    %c0_4 = arith.constant 0 : index
    %c0_5 = arith.constant 0 : index
    %4 = vector.load %arg3[%c0_4, %c0_5] : memref<1x64xf32, #tpu.memory_space<vmem>>, vector<1x64xf32>
    %5 = vector.broadcast %4 : vector<1x64xf32> to vector<256x64xf32>
    %6 = arith.addf %3, %5 : vector<256x64xf32>
    %cst_6 = arith.constant 0.000000e+00 : f32
    %7 = vector.broadcast %cst_6 : f32 to vector<256x64xf32>
    %8 = arith.cmpf oge, %6, %7 : vector<256x64xf32>
    %cst_7 = arith.constant 2.000000e-01 : f32
    %9 = vector.broadcast %cst_7 : f32 to vector<256x64xf32>
    %10 = arith.mulf %9, %6 : vector<256x64xf32>
    %11 = arith.select %8, %6, %10 : vector<256x64xi1>, vector<256x64xf32>
    %cst_8 = arith.constant 0.000000e+00 : f32
    %12 = vector.broadcast %cst_8 : f32 to vector<64x128xf32>
    %c0_9 = arith.constant 0 : index
    %c0_10 = arith.constant 0 : index
    %c0_11 = arith.constant 0 : index
    %13 = vector.load %arg4[%c0_9, %c0_10, %c0_11] : memref<9x64x256xf32, #tpu.memory_space<vmem>>, vector<1x64x256xf32>
    %14 = vector.shape_cast %13 : vector<1x64x256xf32> to vector<64x256xf32>
    %cst_12 = arith.constant dense<0.000000e+00> : vector<64x64xf32>
    %15 = tpu.matmul %14, %11, %cst_12 {dimension_numbers = #tpu.dot_dimension_numbers<[1], [0], [0], [1], [0, 0, 1, 1], [], []>} : vector<64x256xf32>, vector<256x64xf32>, vector<64x64xf32> -> vector<64x64xf32>
    %c0_13 = arith.constant 0 : index
    %c0_14 = arith.constant 0 : index
    %c0_15 = arith.constant 0 : index
    %16 = vector.load %arg5[%c0_13, %c0_14, %c0_15] : memref<9x64x128xf32, #tpu.memory_space<vmem>>, vector<1x64x128xf32>
    %17 = vector.shape_cast %16 : vector<1x64x128xf32> to vector<64x128xf32>
    %cst_16 = arith.constant dense<0.000000e+00> : vector<64x128xf32>
    %18 = tpu.matmul %15, %17, %cst_16 {dimension_numbers = #tpu.dot_dimension_numbers<[1], [0], [0], [1], [0, 0, 1, 1], [], []>} : vector<64x64xf32>, vector<64x128xf32>, vector<64x128xf32> -> vector<64x128xf32>
    %19 = arith.addf %12, %18 : vector<64x128xf32>
    %c1 = arith.constant 1 : index
    %c0_17 = arith.constant 0 : index
    %c0_18 = arith.constant 0 : index
    %20 = vector.load %arg4[%c1, %c0_17, %c0_18] : memref<9x64x256xf32, #tpu.memory_space<vmem>>, vector<1x64x256xf32>
    %21 = vector.shape_cast %20 : vector<1x64x256xf32> to vector<64x256xf32>
    %cst_19 = arith.constant dense<0.000000e+00> : vector<64x64xf32>
    %22 = tpu.matmul %21, %11, %cst_19 {dimension_numbers = #tpu.dot_dimension_numbers<[1], [0], [0], [1], [0, 0, 1, 1], [], []>} : vector<64x256xf32>, vector<256x64xf32>, vector<64x64xf32> -> vector<64x64xf32>
    %c1_20 = arith.constant 1 : index
    %c0_21 = arith.constant 0 : index
    %c0_22 = arith.constant 0 : index
    %23 = vector.load %arg5[%c1_20, %c0_21, %c0_22] : memref<9x64x128xf32, #tpu.memory_space<vmem>>, vector<1x64x128xf32>
    %24 = vector.shape_cast %23 : vector<1x64x128xf32> to vector<64x128xf32>
    %cst_23 = arith.constant dense<0.000000e+00> : vector<64x128xf32>
    %25 = tpu.matmul %22, %24, %cst_23 {dimension_numbers = #tpu.dot_dimension_numbers<[1], [0], [0], [1], [0, 0, 1, 1], [], []>} : vector<64x64xf32>, vector<64x128xf32>, vector<64x128xf32> -> vector<64x128xf32>
    %26 = arith.addf %19, %25 : vector<64x128xf32>
    %c2 = arith.constant 2 : index
    %c0_24 = arith.constant 0 : index
    %c0_25 = arith.constant 0 : index
    %27 = vector.load %arg4[%c2, %c0_24, %c0_25] : memref<9x64x256xf32, #tpu.memory_space<vmem>>, vector<1x64x256xf32>
    %28 = vector.shape_cast %27 : vector<1x64x256xf32> to vector<64x256xf32>
    %cst_26 = arith.constant dense<0.000000e+00> : vector<64x64xf32>
    %29 = tpu.matmul %28, %11, %cst_26 {dimension_numbers = #tpu.dot_dimension_numbers<[1], [0], [0], [1], [0, 0, 1, 1], [], []>} : vector<64x256xf32>, vector<256x64xf32>, vector<64x64xf32> -> vector<64x64xf32>
    %c2_27 = arith.constant 2 : index
    %c0_28 = arith.constant 0 : index
    %c0_29 = arith.constant 0 : index
    %30 = vector.load %arg5[%c2_27, %c0_28, %c0_29] : memref<9x64x128xf32, #tpu.memory_space<vmem>>, vector<1x64x128xf32>
    %31 = vector.shape_cast %30 : vector<1x64x128xf32> to vector<64x128xf32>
    %cst_30 = arith.constant dense<0.000000e+00> : vector<64x128xf32>
    %32 = tpu.matmul %29, %31, %cst_30 {dimension_numbers = #tpu.dot_dimension_numbers<[1], [0], [0], [1], [0, 0, 1, 1], [], []>} : vector<64x64xf32>, vector<64x128xf32>, vector<64x128xf32> -> vector<64x128xf32>
    %33 = arith.addf %26, %32 : vector<64x128xf32>
    %c3 = arith.constant 3 : index
    %c0_31 = arith.constant 0 : index
    %c0_32 = arith.constant 0 : index
    %34 = vector.load %arg4[%c3, %c0_31, %c0_32] : memref<9x64x256xf32, #tpu.memory_space<vmem>>, vector<1x64x256xf32>
    %35 = vector.shape_cast %34 : vector<1x64x256xf32> to vector<64x256xf32>
    %cst_33 = arith.constant dense<0.000000e+00> : vector<64x64xf32>
    %36 = tpu.matmul %35, %11, %cst_33 {dimension_numbers = #tpu.dot_dimension_numbers<[1], [0], [0], [1], [0, 0, 1, 1], [], []>} : vector<64x256xf32>, vector<256x64xf32>, vector<64x64xf32> -> vector<64x64xf32>
    %c3_34 = arith.constant 3 : index
    %c0_35 = arith.constant 0 : index
    %c0_36 = arith.constant 0 : index
    %37 = vector.load %arg5[%c3_34, %c0_35, %c0_36] : memref<9x64x128xf32, #tpu.memory_space<vmem>>, vector<1x64x128xf32>
    %38 = vector.shape_cast %37 : vector<1x64x128xf32> to vector<64x128xf32>
    %cst_37 = arith.constant dense<0.000000e+00> : vector<64x128xf32>
    %39 = tpu.matmul %36, %38, %cst_37 {dimension_numbers = #tpu.dot_dimension_numbers<[1], [0], [0], [1], [0, 0, 1, 1], [], []>} : vector<64x64xf32>, vector<64x128xf32>, vector<64x128xf32> -> vector<64x128xf32>
    %40 = arith.addf %33, %39 : vector<64x128xf32>
    %c4 = arith.constant 4 : index
    %c0_38 = arith.constant 0 : index
    %c0_39 = arith.constant 0 : index
    %41 = vector.load %arg4[%c4, %c0_38, %c0_39] : memref<9x64x256xf32, #tpu.memory_space<vmem>>, vector<1x64x256xf32>
    %42 = vector.shape_cast %41 : vector<1x64x256xf32> to vector<64x256xf32>
    %cst_40 = arith.constant dense<0.000000e+00> : vector<64x64xf32>
    %43 = tpu.matmul %42, %11, %cst_40 {dimension_numbers = #tpu.dot_dimension_numbers<[1], [0], [0], [1], [0, 0, 1, 1], [], []>} : vector<64x256xf32>, vector<256x64xf32>, vector<64x64xf32> -> vector<64x64xf32>
    %c4_41 = arith.constant 4 : index
    %c0_42 = arith.constant 0 : index
    %c0_43 = arith.constant 0 : index
    %44 = vector.load %arg5[%c4_41, %c0_42, %c0_43] : memref<9x64x128xf32, #tpu.memory_space<vmem>>, vector<1x64x128xf32>
    %45 = vector.shape_cast %44 : vector<1x64x128xf32> to vector<64x128xf32>
    %cst_44 = arith.constant dense<0.000000e+00> : vector<64x128xf32>
    %46 = tpu.matmul %43, %45, %cst_44 {dimension_numbers = #tpu.dot_dimension_numbers<[1], [0], [0], [1], [0, 0, 1, 1], [], []>} : vector<64x64xf32>, vector<64x128xf32>, vector<64x128xf32> -> vector<64x128xf32>
    %47 = arith.addf %40, %46 : vector<64x128xf32>
    %c5 = arith.constant 5 : index
    %c0_45 = arith.constant 0 : index
    %c0_46 = arith.constant 0 : index
    %48 = vector.load %arg4[%c5, %c0_45, %c0_46] : memref<9x64x256xf32, #tpu.memory_space<vmem>>, vector<1x64x256xf32>
    %49 = vector.shape_cast %48 : vector<1x64x256xf32> to vector<64x256xf32>
    %cst_47 = arith.constant dense<0.000000e+00> : vector<64x64xf32>
    %50 = tpu.matmul %49, %11, %cst_47 {dimension_numbers = #tpu.dot_dimension_numbers<[1], [0], [0], [1], [0, 0, 1, 1], [], []>} : vector<64x256xf32>, vector<256x64xf32>, vector<64x64xf32> -> vector<64x64xf32>
    %c5_48 = arith.constant 5 : index
    %c0_49 = arith.constant 0 : index
    %c0_50 = arith.constant 0 : index
    %51 = vector.load %arg5[%c5_48, %c0_49, %c0_50] : memref<9x64x128xf32, #tpu.memory_space<vmem>>, vector<1x64x128xf32>
    %52 = vector.shape_cast %51 : vector<1x64x128xf32> to vector<64x128xf32>
    %cst_51 = arith.constant dense<0.000000e+00> : vector<64x128xf32>
    %53 = tpu.matmul %50, %52, %cst_51 {dimension_numbers = #tpu.dot_dimension_numbers<[1], [0], [0], [1], [0, 0, 1, 1], [], []>} : vector<64x64xf32>, vector<64x128xf32>, vector<64x128xf32> -> vector<64x128xf32>
    %54 = arith.addf %47, %53 : vector<64x128xf32>
    %c6 = arith.constant 6 : index
    %c0_52 = arith.constant 0 : index
    %c0_53 = arith.constant 0 : index
    %55 = vector.load %arg4[%c6, %c0_52, %c0_53] : memref<9x64x256xf32, #tpu.memory_space<vmem>>, vector<1x64x256xf32>
    %56 = vector.shape_cast %55 : vector<1x64x256xf32> to vector<64x256xf32>
    %cst_54 = arith.constant dense<0.000000e+00> : vector<64x64xf32>
    %57 = tpu.matmul %56, %11, %cst_54 {dimension_numbers = #tpu.dot_dimension_numbers<[1], [0], [0], [1], [0, 0, 1, 1], [], []>} : vector<64x256xf32>, vector<256x64xf32>, vector<64x64xf32> -> vector<64x64xf32>
    %c6_55 = arith.constant 6 : index
    %c0_56 = arith.constant 0 : index
    %c0_57 = arith.constant 0 : index
    %58 = vector.load %arg5[%c6_55, %c0_56, %c0_57] : memref<9x64x128xf32, #tpu.memory_space<vmem>>, vector<1x64x128xf32>
    %59 = vector.shape_cast %58 : vector<1x64x128xf32> to vector<64x128xf32>
    %cst_58 = arith.constant dense<0.000000e+00> : vector<64x128xf32>
    %60 = tpu.matmul %57, %59, %cst_58 {dimension_numbers = #tpu.dot_dimension_numbers<[1], [0], [0], [1], [0, 0, 1, 1], [], []>} : vector<64x64xf32>, vector<64x128xf32>, vector<64x128xf32> -> vector<64x128xf32>
    %61 = arith.addf %54, %60 : vector<64x128xf32>
    %c7 = arith.constant 7 : index
    %c0_59 = arith.constant 0 : index
    %c0_60 = arith.constant 0 : index
    %62 = vector.load %arg4[%c7, %c0_59, %c0_60] : memref<9x64x256xf32, #tpu.memory_space<vmem>>, vector<1x64x256xf32>
    %63 = vector.shape_cast %62 : vector<1x64x256xf32> to vector<64x256xf32>
    %cst_61 = arith.constant dense<0.000000e+00> : vector<64x64xf32>
    %64 = tpu.matmul %63, %11, %cst_61 {dimension_numbers = #tpu.dot_dimension_numbers<[1], [0], [0], [1], [0, 0, 1, 1], [], []>} : vector<64x256xf32>, vector<256x64xf32>, vector<64x64xf32> -> vector<64x64xf32>
    %c7_62 = arith.constant 7 : index
    %c0_63 = arith.constant 0 : index
    %c0_64 = arith.constant 0 : index
    %65 = vector.load %arg5[%c7_62, %c0_63, %c0_64] : memref<9x64x128xf32, #tpu.memory_space<vmem>>, vector<1x64x128xf32>
    %66 = vector.shape_cast %65 : vector<1x64x128xf32> to vector<64x128xf32>
    %cst_65 = arith.constant dense<0.000000e+00> : vector<64x128xf32>
    %67 = tpu.matmul %64, %66, %cst_65 {dimension_numbers = #tpu.dot_dimension_numbers<[1], [0], [0], [1], [0, 0, 1, 1], [], []>} : vector<64x64xf32>, vector<64x128xf32>, vector<64x128xf32> -> vector<64x128xf32>
    %68 = arith.addf %61, %67 : vector<64x128xf32>
    %c8 = arith.constant 8 : index
    %c0_66 = arith.constant 0 : index
    %c0_67 = arith.constant 0 : index
    %69 = vector.load %arg4[%c8, %c0_66, %c0_67] : memref<9x64x256xf32, #tpu.memory_space<vmem>>, vector<1x64x256xf32>
    %70 = vector.shape_cast %69 : vector<1x64x256xf32> to vector<64x256xf32>
    %cst_68 = arith.constant dense<0.000000e+00> : vector<64x64xf32>
    %71 = tpu.matmul %70, %11, %cst_68 {dimension_numbers = #tpu.dot_dimension_numbers<[1], [0], [0], [1], [0, 0, 1, 1], [], []>} : vector<64x256xf32>, vector<256x64xf32>, vector<64x64xf32> -> vector<64x64xf32>
    %c8_69 = arith.constant 8 : index
    %c0_70 = arith.constant 0 : index
    %c0_71 = arith.constant 0 : index
    %72 = vector.load %arg5[%c8_69, %c0_70, %c0_71] : memref<9x64x128xf32, #tpu.memory_space<vmem>>, vector<1x64x128xf32>
    %73 = vector.shape_cast %72 : vector<1x64x128xf32> to vector<64x128xf32>
    %cst_72 = arith.constant dense<0.000000e+00> : vector<64x128xf32>
    %74 = tpu.matmul %71, %73, %cst_72 {dimension_numbers = #tpu.dot_dimension_numbers<[1], [0], [0], [1], [0, 0, 1, 1], [], []>} : vector<64x64xf32>, vector<64x128xf32>, vector<64x128xf32> -> vector<64x128xf32>
    %75 = arith.addf %68, %74 : vector<64x128xf32>
    %c0_73 = arith.constant 0 : index
    %c0_74 = arith.constant 0 : index
    %76 = vector.load %arg6[%c0_73, %c0_74] : memref<1x128xf32, #tpu.memory_space<vmem>>, vector<1x128xf32>
    %77 = vector.broadcast %76 : vector<1x128xf32> to vector<64x128xf32>
    %78 = arith.addf %75, %77 : vector<64x128xf32>
    %cst_75 = arith.constant 0.000000e+00 : f32
    %79 = vector.broadcast %cst_75 : f32 to vector<64x128xf32>
    %80 = arith.cmpf oge, %78, %79 : vector<64x128xf32>
    %cst_76 = arith.constant 2.000000e-01 : f32
    %81 = vector.broadcast %cst_76 : f32 to vector<64x128xf32>
    %82 = arith.mulf %81, %78 : vector<64x128xf32>
    %83 = arith.select %80, %78, %82 : vector<64x128xi1>, vector<64x128xf32>
    %cst_77 = arith.constant dense<0.000000e+00> : vector<128xf32>
    %84 = vector.multi_reduction <add>, %83, %cst_77 [0] : vector<64x128xf32> to vector<128xf32>
    %85 = vector.shape_cast %84 : vector<128xf32> to vector<1x128xf32>
    %cst_78 = arith.constant 6.400000e+01 : f32
    %86 = vector.broadcast %cst_78 : f32 to vector<1x128xf32>
    %87 = arith.divf %85, %86 : vector<1x128xf32>
    %88 = vector.broadcast %87 : vector<1x128xf32> to vector<64x128xf32>
    %89 = arith.subf %83, %88 : vector<64x128xf32>
    %90 = arith.mulf %89, %89 : vector<64x128xf32>
    %cst_79 = arith.constant dense<0.000000e+00> : vector<128xf32>
    %91 = vector.multi_reduction <add>, %90, %cst_79 [0] : vector<64x128xf32> to vector<128xf32>
    %92 = vector.shape_cast %91 : vector<128xf32> to vector<1x128xf32>
    %cst_80 = arith.constant 6.400000e+01 : f32
    %93 = vector.broadcast %cst_80 : f32 to vector<1x128xf32>
    %94 = arith.divf %92, %93 : vector<1x128xf32>
    %95 = vector.broadcast %87 : vector<1x128xf32> to vector<64x128xf32>
    %96 = arith.subf %83, %95 : vector<64x128xf32>
    %cst_81 = arith.constant 9.99999974E-6 : f32
    %97 = vector.broadcast %cst_81 : f32 to vector<1x128xf32>
    %98 = arith.addf %94, %97 : vector<1x128xf32>
    %99 = math.rsqrt %98 : vector<1x128xf32>
    %100 = vector.broadcast %99 : vector<1x128xf32> to vector<64x128xf32>
    %101 = arith.mulf %96, %100 : vector<64x128xf32>
    %cst_82 = arith.constant 0.000000e+00 : f32
    %102 = vector.broadcast %cst_82 : f32 to vector<16x256xf32>
    %c0_83 = arith.constant 0 : index
    %c0_84 = arith.constant 0 : index
    %c0_85 = arith.constant 0 : index
    %103 = vector.load %arg7[%c0_83, %c0_84, %c0_85] : memref<9x16x64xf32, #tpu.memory_space<vmem>>, vector<1x16x64xf32>
    %104 = vector.shape_cast %103 : vector<1x16x64xf32> to vector<16x64xf32>
    %cst_86 = arith.constant dense<0.000000e+00> : vector<16x128xf32>
    %105 = tpu.matmul %104, %101, %cst_86 {dimension_numbers = #tpu.dot_dimension_numbers<[1], [0], [0], [1], [0, 0, 1, 1], [], []>} : vector<16x64xf32>, vector<64x128xf32>, vector<16x128xf32> -> vector<16x128xf32>
    %c0_87 = arith.constant 0 : index
    %c0_88 = arith.constant 0 : index
    %c0_89 = arith.constant 0 : index
    %106 = vector.load %arg8[%c0_87, %c0_88, %c0_89] : memref<9x128x256xf32, #tpu.memory_space<vmem>>, vector<1x128x256xf32>
    %107 = vector.shape_cast %106 : vector<1x128x256xf32> to vector<128x256xf32>
    %cst_90 = arith.constant dense<0.000000e+00> : vector<16x256xf32>
    %108 = tpu.matmul %105, %107, %cst_90 {dimension_numbers = #tpu.dot_dimension_numbers<[1], [0], [0], [1], [0, 0, 1, 1], [], []>} : vector<16x128xf32>, vector<128x256xf32>, vector<16x256xf32> -> vector<16x256xf32>
    %109 = arith.addf %102, %108 : vector<16x256xf32>
    %c1_91 = arith.constant 1 : index
    %c0_92 = arith.constant 0 : index
    %c0_93 = arith.constant 0 : index
    %110 = vector.load %arg7[%c1_91, %c0_92, %c0_93] : memref<9x16x64xf32, #tpu.memory_space<vmem>>, vector<1x16x64xf32>
    %111 = vector.shape_cast %110 : vector<1x16x64xf32> to vector<16x64xf32>
    %cst_94 = arith.constant dense<0.000000e+00> : vector<16x128xf32>
    %112 = tpu.matmul %111, %101, %cst_94 {dimension_numbers = #tpu.dot_dimension_numbers<[1], [0], [0], [1], [0, 0, 1, 1], [], []>} : vector<16x64xf32>, vector<64x128xf32>, vector<16x128xf32> -> vector<16x128xf32>
    %c1_95 = arith.constant 1 : index
    %c0_96 = arith.constant 0 : index
    %c0_97 = arith.constant 0 : index
    %113 = vector.load %arg8[%c1_95, %c0_96, %c0_97] : memref<9x128x256xf32, #tpu.memory_space<vmem>>, vector<1x128x256xf32>
    %114 = vector.shape_cast %113 : vector<1x128x256xf32> to vector<128x256xf32>
    %cst_98 = arith.constant dense<0.000000e+00> : vector<16x256xf32>
    %115 = tpu.matmul %112, %114, %cst_98 {dimension_numbers = #tpu.dot_dimension_numbers<[1], [0], [0], [1], [0, 0, 1, 1], [], []>} : vector<16x128xf32>, vector<128x256xf32>, vector<16x256xf32> -> vector<16x256xf32>
    %116 = arith.addf %109, %115 : vector<16x256xf32>
    %c2_99 = arith.constant 2 : index
    %c0_100 = arith.constant 0 : index
    %c0_101 = arith.constant 0 : index
    %117 = vector.load %arg7[%c2_99, %c0_100, %c0_101] : memref<9x16x64xf32, #tpu.memory_space<vmem>>, vector<1x16x64xf32>
    %118 = vector.shape_cast %117 : vector<1x16x64xf32> to vector<16x64xf32>
    %cst_102 = arith.constant dense<0.000000e+00> : vector<16x128xf32>
    %119 = tpu.matmul %118, %101, %cst_102 {dimension_numbers = #tpu.dot_dimension_numbers<[1], [0], [0], [1], [0, 0, 1, 1], [], []>} : vector<16x64xf32>, vector<64x128xf32>, vector<16x128xf32> -> vector<16x128xf32>
    %c2_103 = arith.constant 2 : index
    %c0_104 = arith.constant 0 : index
    %c0_105 = arith.constant 0 : index
    %120 = vector.load %arg8[%c2_103, %c0_104, %c0_105] : memref<9x128x256xf32, #tpu.memory_space<vmem>>, vector<1x128x256xf32>
    %121 = vector.shape_cast %120 : vector<1x128x256xf32> to vector<128x256xf32>
    %cst_106 = arith.constant dense<0.000000e+00> : vector<16x256xf32>
    %122 = tpu.matmul %119, %121, %cst_106 {dimension_numbers = #tpu.dot_dimension_numbers<[1], [0], [0], [1], [0, 0, 1, 1], [], []>} : vector<16x128xf32>, vector<128x256xf32>, vector<16x256xf32> -> vector<16x256xf32>
    %123 = arith.addf %116, %122 : vector<16x256xf32>
    %c3_107 = arith.constant 3 : index
    %c0_108 = arith.constant 0 : index
    %c0_109 = arith.constant 0 : index
    %124 = vector.load %arg7[%c3_107, %c0_108, %c0_109] : memref<9x16x64xf32, #tpu.memory_space<vmem>>, vector<1x16x64xf32>
    %125 = vector.shape_cast %124 : vector<1x16x64xf32> to vector<16x64xf32>
    %cst_110 = arith.constant dense<0.000000e+00> : vector<16x128xf32>
    %126 = tpu.matmul %125, %101, %cst_110 {dimension_numbers = #tpu.dot_dimension_numbers<[1], [0], [0], [1], [0, 0, 1, 1], [], []>} : vector<16x64xf32>, vector<64x128xf32>, vector<16x128xf32> -> vector<16x128xf32>
    %c3_111 = arith.constant 3 : index
    %c0_112 = arith.constant 0 : index
    %c0_113 = arith.constant 0 : index
    %127 = vector.load %arg8[%c3_111, %c0_112, %c0_113] : memref<9x128x256xf32, #tpu.memory_space<vmem>>, vector<1x128x256xf32>
    %128 = vector.shape_cast %127 : vector<1x128x256xf32> to vector<128x256xf32>
    %cst_114 = arith.constant dense<0.000000e+00> : vector<16x256xf32>
    %129 = tpu.matmul %126, %128, %cst_114 {dimension_numbers = #tpu.dot_dimension_numbers<[1], [0], [0], [1], [0, 0, 1, 1], [], []>} : vector<16x128xf32>, vector<128x256xf32>, vector<16x256xf32> -> vector<16x256xf32>
    %130 = arith.addf %123, %129 : vector<16x256xf32>
    %c4_115 = arith.constant 4 : index
    %c0_116 = arith.constant 0 : index
    %c0_117 = arith.constant 0 : index
    %131 = vector.load %arg7[%c4_115, %c0_116, %c0_117] : memref<9x16x64xf32, #tpu.memory_space<vmem>>, vector<1x16x64xf32>
    %132 = vector.shape_cast %131 : vector<1x16x64xf32> to vector<16x64xf32>
    %cst_118 = arith.constant dense<0.000000e+00> : vector<16x128xf32>
    %133 = tpu.matmul %132, %101, %cst_118 {dimension_numbers = #tpu.dot_dimension_numbers<[1], [0], [0], [1], [0, 0, 1, 1], [], []>} : vector<16x64xf32>, vector<64x128xf32>, vector<16x128xf32> -> vector<16x128xf32>
    %c4_119 = arith.constant 4 : index
    %c0_120 = arith.constant 0 : index
    %c0_121 = arith.constant 0 : index
    %134 = vector.load %arg8[%c4_119, %c0_120, %c0_121] : memref<9x128x256xf32, #tpu.memory_space<vmem>>, vector<1x128x256xf32>
    %135 = vector.shape_cast %134 : vector<1x128x256xf32> to vector<128x256xf32>
    %cst_122 = arith.constant dense<0.000000e+00> : vector<16x256xf32>
    %136 = tpu.matmul %133, %135, %cst_122 {dimension_numbers = #tpu.dot_dimension_numbers<[1], [0], [0], [1], [0, 0, 1, 1], [], []>} : vector<16x128xf32>, vector<128x256xf32>, vector<16x256xf32> -> vector<16x256xf32>
    %137 = arith.addf %130, %136 : vector<16x256xf32>
    %c5_123 = arith.constant 5 : index
    %c0_124 = arith.constant 0 : index
    %c0_125 = arith.constant 0 : index
    %138 = vector.load %arg7[%c5_123, %c0_124, %c0_125] : memref<9x16x64xf32, #tpu.memory_space<vmem>>, vector<1x16x64xf32>
    %139 = vector.shape_cast %138 : vector<1x16x64xf32> to vector<16x64xf32>
    %cst_126 = arith.constant dense<0.000000e+00> : vector<16x128xf32>
    %140 = tpu.matmul %139, %101, %cst_126 {dimension_numbers = #tpu.dot_dimension_numbers<[1], [0], [0], [1], [0, 0, 1, 1], [], []>} : vector<16x64xf32>, vector<64x128xf32>, vector<16x128xf32> -> vector<16x128xf32>
    %c5_127 = arith.constant 5 : index
    %c0_128 = arith.constant 0 : index
    %c0_129 = arith.constant 0 : index
    %141 = vector.load %arg8[%c5_127, %c0_128, %c0_129] : memref<9x128x256xf32, #tpu.memory_space<vmem>>, vector<1x128x256xf32>
    %142 = vector.shape_cast %141 : vector<1x128x256xf32> to vector<128x256xf32>
    %cst_130 = arith.constant dense<0.000000e+00> : vector<16x256xf32>
    %143 = tpu.matmul %140, %142, %cst_130 {dimension_numbers = #tpu.dot_dimension_numbers<[1], [0], [0], [1], [0, 0, 1, 1], [], []>} : vector<16x128xf32>, vector<128x256xf32>, vector<16x256xf32> -> vector<16x256xf32>
    %144 = arith.addf %137, %143 : vector<16x256xf32>
    %c6_131 = arith.constant 6 : index
    %c0_132 = arith.constant 0 : index
    %c0_133 = arith.constant 0 : index
    %145 = vector.load %arg7[%c6_131, %c0_132, %c0_133] : memref<9x16x64xf32, #tpu.memory_space<vmem>>, vector<1x16x64xf32>
    %146 = vector.shape_cast %145 : vector<1x16x64xf32> to vector<16x64xf32>
    %cst_134 = arith.constant dense<0.000000e+00> : vector<16x128xf32>
    %147 = tpu.matmul %146, %101, %cst_134 {dimension_numbers = #tpu.dot_dimension_numbers<[1], [0], [0], [1], [0, 0, 1, 1], [], []>} : vector<16x64xf32>, vector<64x128xf32>, vector<16x128xf32> -> vector<16x128xf32>
    %c6_135 = arith.constant 6 : index
    %c0_136 = arith.constant 0 : index
    %c0_137 = arith.constant 0 : index
    %148 = vector.load %arg8[%c6_135, %c0_136, %c0_137] : memref<9x128x256xf32, #tpu.memory_space<vmem>>, vector<1x128x256xf32>
    %149 = vector.shape_cast %148 : vector<1x128x256xf32> to vector<128x256xf32>
    %cst_138 = arith.constant dense<0.000000e+00> : vector<16x256xf32>
    %150 = tpu.matmul %147, %149, %cst_138 {dimension_numbers = #tpu.dot_dimension_numbers<[1], [0], [0], [1], [0, 0, 1, 1], [], []>} : vector<16x128xf32>, vector<128x256xf32>, vector<16x256xf32> -> vector<16x256xf32>
    %151 = arith.addf %144, %150 : vector<16x256xf32>
    %c7_139 = arith.constant 7 : index
    %c0_140 = arith.constant 0 : index
    %c0_141 = arith.constant 0 : index
    %152 = vector.load %arg7[%c7_139, %c0_140, %c0_141] : memref<9x16x64xf32, #tpu.memory_space<vmem>>, vector<1x16x64xf32>
    %153 = vector.shape_cast %152 : vector<1x16x64xf32> to vector<16x64xf32>
    %cst_142 = arith.constant dense<0.000000e+00> : vector<16x128xf32>
    %154 = tpu.matmul %153, %101, %cst_142 {dimension_numbers = #tpu.dot_dimension_numbers<[1], [0], [0], [1], [0, 0, 1, 1], [], []>} : vector<16x64xf32>, vector<64x128xf32>, vector<16x128xf32> -> vector<16x128xf32>
    %c7_143 = arith.constant 7 : index
    %c0_144 = arith.constant 0 : index
    %c0_145 = arith.constant 0 : index
    %155 = vector.load %arg8[%c7_143, %c0_144, %c0_145] : memref<9x128x256xf32, #tpu.memory_space<vmem>>, vector<1x128x256xf32>
    %156 = vector.shape_cast %155 : vector<1x128x256xf32> to vector<128x256xf32>
    %cst_146 = arith.constant dense<0.000000e+00> : vector<16x256xf32>
    %157 = tpu.matmul %154, %156, %cst_146 {dimension_numbers = #tpu.dot_dimension_numbers<[1], [0], [0], [1], [0, 0, 1, 1], [], []>} : vector<16x128xf32>, vector<128x256xf32>, vector<16x256xf32> -> vector<16x256xf32>
    %158 = arith.addf %151, %157 : vector<16x256xf32>
    %c8_147 = arith.constant 8 : index
    %c0_148 = arith.constant 0 : index
    %c0_149 = arith.constant 0 : index
    %159 = vector.load %arg7[%c8_147, %c0_148, %c0_149] : memref<9x16x64xf32, #tpu.memory_space<vmem>>, vector<1x16x64xf32>
    %160 = vector.shape_cast %159 : vector<1x16x64xf32> to vector<16x64xf32>
    %cst_150 = arith.constant dense<0.000000e+00> : vector<16x128xf32>
    %161 = tpu.matmul %160, %101, %cst_150 {dimension_numbers = #tpu.dot_dimension_numbers<[1], [0], [0], [1], [0, 0, 1, 1], [], []>} : vector<16x64xf32>, vector<64x128xf32>, vector<16x128xf32> -> vector<16x128xf32>
    %c8_151 = arith.constant 8 : index
    %c0_152 = arith.constant 0 : index
    %c0_153 = arith.constant 0 : index
    %162 = vector.load %arg8[%c8_151, %c0_152, %c0_153] : memref<9x128x256xf32, #tpu.memory_space<vmem>>, vector<1x128x256xf32>
    %163 = vector.shape_cast %162 : vector<1x128x256xf32> to vector<128x256xf32>
    %cst_154 = arith.constant dense<0.000000e+00> : vector<16x256xf32>
    %164 = tpu.matmul %161, %163, %cst_154 {dimension_numbers = #tpu.dot_dimension_numbers<[1], [0], [0], [1], [0, 0, 1, 1], [], []>} : vector<16x128xf32>, vector<128x256xf32>, vector<16x256xf32> -> vector<16x256xf32>
    %165 = arith.addf %158, %164 : vector<16x256xf32>
    %c0_155 = arith.constant 0 : index
    %c0_156 = arith.constant 0 : index
    %166 = vector.load %arg9[%c0_155, %c0_156] : memref<1x256xf32, #tpu.memory_space<vmem>>, vector<1x256xf32>
    %167 = vector.broadcast %166 : vector<1x256xf32> to vector<16x256xf32>
    %168 = arith.addf %165, %167 : vector<16x256xf32>
    %cst_157 = arith.constant 0.000000e+00 : f32
    %169 = vector.broadcast %cst_157 : f32 to vector<16x256xf32>
    %170 = arith.cmpf oge, %168, %169 : vector<16x256xf32>
    %cst_158 = arith.constant 2.000000e-01 : f32
    %171 = vector.broadcast %cst_158 : f32 to vector<16x256xf32>
    %172 = arith.mulf %171, %168 : vector<16x256xf32>
    %173 = arith.select %170, %168, %172 : vector<16x256xi1>, vector<16x256xf32>
    %cst_159 = arith.constant dense<0.000000e+00> : vector<256xf32>
    %174 = vector.multi_reduction <add>, %173, %cst_159 [0] : vector<16x256xf32> to vector<256xf32>
    %175 = vector.shape_cast %174 : vector<256xf32> to vector<1x256xf32>
    %cst_160 = arith.constant 1.600000e+01 : f32
    %176 = vector.broadcast %cst_160 : f32 to vector<1x256xf32>
    %177 = arith.divf %175, %176 : vector<1x256xf32>
    %178 = vector.broadcast %177 : vector<1x256xf32> to vector<16x256xf32>
    %179 = arith.subf %173, %178 : vector<16x256xf32>
    %180 = arith.mulf %179, %179 : vector<16x256xf32>
    %cst_161 = arith.constant dense<0.000000e+00> : vector<256xf32>
    %181 = vector.multi_reduction <add>, %180, %cst_161 [0] : vector<16x256xf32> to vector<256xf32>
    %182 = vector.shape_cast %181 : vector<256xf32> to vector<1x256xf32>
    %cst_162 = arith.constant 1.600000e+01 : f32
    %183 = vector.broadcast %cst_162 : f32 to vector<1x256xf32>
    %184 = arith.divf %182, %183 : vector<1x256xf32>
    %185 = vector.broadcast %177 : vector<1x256xf32> to vector<16x256xf32>
    %186 = arith.subf %173, %185 : vector<16x256xf32>
    %cst_163 = arith.constant 9.99999974E-6 : f32
    %187 = vector.broadcast %cst_163 : f32 to vector<1x256xf32>
    %188 = arith.addf %184, %187 : vector<1x256xf32>
    %189 = math.rsqrt %188 : vector<1x256xf32>
    %190 = vector.broadcast %189 : vector<1x256xf32> to vector<16x256xf32>
    %191 = arith.mulf %186, %190 : vector<16x256xf32>
    %cst_164 = arith.constant 0.000000e+00 : f32
    %192 = vector.broadcast %cst_164 : f32 to vector<4x512xf32>
    %c0_165 = arith.constant 0 : index
    %c0_166 = arith.constant 0 : index
    %c0_167 = arith.constant 0 : index
    %193 = vector.load %arg10[%c0_165, %c0_166, %c0_167] : memref<9x4x16xf32, #tpu.memory_space<vmem>>, vector<1x4x16xf32>
    %194 = vector.shape_cast %193 : vector<1x4x16xf32> to vector<4x16xf32>
    %cst_168 = arith.constant dense<0.000000e+00> : vector<4x256xf32>
    %195 = tpu.matmul %194, %191, %cst_168 {dimension_numbers = #tpu.dot_dimension_numbers<[1], [0], [0], [1], [0, 0, 1, 1], [], []>} : vector<4x16xf32>, vector<16x256xf32>, vector<4x256xf32> -> vector<4x256xf32>
    %c0_169 = arith.constant 0 : index
    %c0_170 = arith.constant 0 : index
    %c0_171 = arith.constant 0 : index
    %196 = vector.load %arg11[%c0_169, %c0_170, %c0_171] : memref<9x256x512xf32, #tpu.memory_space<vmem>>, vector<1x256x512xf32>
    %197 = vector.shape_cast %196 : vector<1x256x512xf32> to vector<256x512xf32>
    %cst_172 = arith.constant dense<0.000000e+00> : vector<4x512xf32>
    %198 = tpu.matmul %195, %197, %cst_172 {dimension_numbers = #tpu.dot_dimension_numbers<[1], [0], [0], [1], [0, 0, 1, 1], [], []>} : vector<4x256xf32>, vector<256x512xf32>, vector<4x512xf32> -> vector<4x512xf32>
    %199 = arith.addf %192, %198 : vector<4x512xf32>
    %c1_173 = arith.constant 1 : index
    %c0_174 = arith.constant 0 : index
    %c0_175 = arith.constant 0 : index
    %200 = vector.load %arg10[%c1_173, %c0_174, %c0_175] : memref<9x4x16xf32, #tpu.memory_space<vmem>>, vector<1x4x16xf32>
    %201 = vector.shape_cast %200 : vector<1x4x16xf32> to vector<4x16xf32>
    %cst_176 = arith.constant dense<0.000000e+00> : vector<4x256xf32>
    %202 = tpu.matmul %201, %191, %cst_176 {dimension_numbers = #tpu.dot_dimension_numbers<[1], [0], [0], [1], [0, 0, 1, 1], [], []>} : vector<4x16xf32>, vector<16x256xf32>, vector<4x256xf32> -> vector<4x256xf32>
    %c1_177 = arith.constant 1 : index
    %c0_178 = arith.constant 0 : index
    %c0_179 = arith.constant 0 : index
    %203 = vector.load %arg11[%c1_177, %c0_178, %c0_179] : memref<9x256x512xf32, #tpu.memory_space<vmem>>, vector<1x256x512xf32>
    %204 = vector.shape_cast %203 : vector<1x256x512xf32> to vector<256x512xf32>
    %cst_180 = arith.constant dense<0.000000e+00> : vector<4x512xf32>
    %205 = tpu.matmul %202, %204, %cst_180 {dimension_numbers = #tpu.dot_dimension_numbers<[1], [0], [0], [1], [0, 0, 1, 1], [], []>} : vector<4x256xf32>, vector<256x512xf32>, vector<4x512xf32> -> vector<4x512xf32>
    %206 = arith.addf %199, %205 : vector<4x512xf32>
    %c2_181 = arith.constant 2 : index
    %c0_182 = arith.constant 0 : index
    %c0_183 = arith.constant 0 : index
    %207 = vector.load %arg10[%c2_181, %c0_182, %c0_183] : memref<9x4x16xf32, #tpu.memory_space<vmem>>, vector<1x4x16xf32>
    %208 = vector.shape_cast %207 : vector<1x4x16xf32> to vector<4x16xf32>
    %cst_184 = arith.constant dense<0.000000e+00> : vector<4x256xf32>
    %209 = tpu.matmul %208, %191, %cst_184 {dimension_numbers = #tpu.dot_dimension_numbers<[1], [0], [0], [1], [0, 0, 1, 1], [], []>} : vector<4x16xf32>, vector<16x256xf32>, vector<4x256xf32> -> vector<4x256xf32>
    %c2_185 = arith.constant 2 : index
    %c0_186 = arith.constant 0 : index
    %c0_187 = arith.constant 0 : index
    %210 = vector.load %arg11[%c2_185, %c0_186, %c0_187] : memref<9x256x512xf32, #tpu.memory_space<vmem>>, vector<1x256x512xf32>
    %211 = vector.shape_cast %210 : vector<1x256x512xf32> to vector<256x512xf32>
    %cst_188 = arith.constant dense<0.000000e+00> : vector<4x512xf32>
    %212 = tpu.matmul %209, %211, %cst_188 {dimension_numbers = #tpu.dot_dimension_numbers<[1], [0], [0], [1], [0, 0, 1, 1], [], []>} : vector<4x256xf32>, vector<256x512xf32>, vector<4x512xf32> -> vector<4x512xf32>
    %213 = arith.addf %206, %212 : vector<4x512xf32>
    %c3_189 = arith.constant 3 : index
    %c0_190 = arith.constant 0 : index
    %c0_191 = arith.constant 0 : index
    %214 = vector.load %arg10[%c3_189, %c0_190, %c0_191] : memref<9x4x16xf32, #tpu.memory_space<vmem>>, vector<1x4x16xf32>
    %215 = vector.shape_cast %214 : vector<1x4x16xf32> to vector<4x16xf32>
    %cst_192 = arith.constant dense<0.000000e+00> : vector<4x256xf32>
    %216 = tpu.matmul %215, %191, %cst_192 {dimension_numbers = #tpu.dot_dimension_numbers<[1], [0], [0], [1], [0, 0, 1, 1], [], []>} : vector<4x16xf32>, vector<16x256xf32>, vector<4x256xf32> -> vector<4x256xf32>
    %c3_193 = arith.constant 3 : index
    %c0_194 = arith.constant 0 : index
    %c0_195 = arith.constant 0 : index
    %217 = vector.load %arg11[%c3_193, %c0_194, %c0_195] : memref<9x256x512xf32, #tpu.memory_space<vmem>>, vector<1x256x512xf32>
    %218 = vector.shape_cast %217 : vector<1x256x512xf32> to vector<256x512xf32>
    %cst_196 = arith.constant dense<0.000000e+00> : vector<4x512xf32>
    %219 = tpu.matmul %216, %218, %cst_196 {dimension_numbers = #tpu.dot_dimension_numbers<[1], [0], [0], [1], [0, 0, 1, 1], [], []>} : vector<4x256xf32>, vector<256x512xf32>, vector<4x512xf32> -> vector<4x512xf32>
    %220 = arith.addf %213, %219 : vector<4x512xf32>
    %c4_197 = arith.constant 4 : index
    %c0_198 = arith.constant 0 : index
    %c0_199 = arith.constant 0 : index
    %221 = vector.load %arg10[%c4_197, %c0_198, %c0_199] : memref<9x4x16xf32, #tpu.memory_space<vmem>>, vector<1x4x16xf32>
    %222 = vector.shape_cast %221 : vector<1x4x16xf32> to vector<4x16xf32>
    %cst_200 = arith.constant dense<0.000000e+00> : vector<4x256xf32>
    %223 = tpu.matmul %222, %191, %cst_200 {dimension_numbers = #tpu.dot_dimension_numbers<[1], [0], [0], [1], [0, 0, 1, 1], [], []>} : vector<4x16xf32>, vector<16x256xf32>, vector<4x256xf32> -> vector<4x256xf32>
    %c4_201 = arith.constant 4 : index
    %c0_202 = arith.constant 0 : index
    %c0_203 = arith.constant 0 : index
    %224 = vector.load %arg11[%c4_201, %c0_202, %c0_203] : memref<9x256x512xf32, #tpu.memory_space<vmem>>, vector<1x256x512xf32>
    %225 = vector.shape_cast %224 : vector<1x256x512xf32> to vector<256x512xf32>
    %cst_204 = arith.constant dense<0.000000e+00> : vector<4x512xf32>
    %226 = tpu.matmul %223, %225, %cst_204 {dimension_numbers = #tpu.dot_dimension_numbers<[1], [0], [0], [1], [0, 0, 1, 1], [], []>} : vector<4x256xf32>, vector<256x512xf32>, vector<4x512xf32> -> vector<4x512xf32>
    %227 = arith.addf %220, %226 : vector<4x512xf32>
    %c5_205 = arith.constant 5 : index
    %c0_206 = arith.constant 0 : index
    %c0_207 = arith.constant 0 : index
    %228 = vector.load %arg10[%c5_205, %c0_206, %c0_207] : memref<9x4x16xf32, #tpu.memory_space<vmem>>, vector<1x4x16xf32>
    %229 = vector.shape_cast %228 : vector<1x4x16xf32> to vector<4x16xf32>
    %cst_208 = arith.constant dense<0.000000e+00> : vector<4x256xf32>
    %230 = tpu.matmul %229, %191, %cst_208 {dimension_numbers = #tpu.dot_dimension_numbers<[1], [0], [0], [1], [0, 0, 1, 1], [], []>} : vector<4x16xf32>, vector<16x256xf32>, vector<4x256xf32> -> vector<4x256xf32>
    %c5_209 = arith.constant 5 : index
    %c0_210 = arith.constant 0 : index
    %c0_211 = arith.constant 0 : index
    %231 = vector.load %arg11[%c5_209, %c0_210, %c0_211] : memref<9x256x512xf32, #tpu.memory_space<vmem>>, vector<1x256x512xf32>
    %232 = vector.shape_cast %231 : vector<1x256x512xf32> to vector<256x512xf32>
    %cst_212 = arith.constant dense<0.000000e+00> : vector<4x512xf32>
    %233 = tpu.matmul %230, %232, %cst_212 {dimension_numbers = #tpu.dot_dimension_numbers<[1], [0], [0], [1], [0, 0, 1, 1], [], []>} : vector<4x256xf32>, vector<256x512xf32>, vector<4x512xf32> -> vector<4x512xf32>
    %234 = arith.addf %227, %233 : vector<4x512xf32>
    %c6_213 = arith.constant 6 : index
    %c0_214 = arith.constant 0 : index
    %c0_215 = arith.constant 0 : index
    %235 = vector.load %arg10[%c6_213, %c0_214, %c0_215] : memref<9x4x16xf32, #tpu.memory_space<vmem>>, vector<1x4x16xf32>
    %236 = vector.shape_cast %235 : vector<1x4x16xf32> to vector<4x16xf32>
    %cst_216 = arith.constant dense<0.000000e+00> : vector<4x256xf32>
    %237 = tpu.matmul %236, %191, %cst_216 {dimension_numbers = #tpu.dot_dimension_numbers<[1], [0], [0], [1], [0, 0, 1, 1], [], []>} : vector<4x16xf32>, vector<16x256xf32>, vector<4x256xf32> -> vector<4x256xf32>
    %c6_217 = arith.constant 6 : index
    %c0_218 = arith.constant 0 : index
    %c0_219 = arith.constant 0 : index
    %238 = vector.load %arg11[%c6_217, %c0_218, %c0_219] : memref<9x256x512xf32, #tpu.memory_space<vmem>>, vector<1x256x512xf32>
    %239 = vector.shape_cast %238 : vector<1x256x512xf32> to vector<256x512xf32>
    %cst_220 = arith.constant dense<0.000000e+00> : vector<4x512xf32>
    %240 = tpu.matmul %237, %239, %cst_220 {dimension_numbers = #tpu.dot_dimension_numbers<[1], [0], [0], [1], [0, 0, 1, 1], [], []>} : vector<4x256xf32>, vector<256x512xf32>, vector<4x512xf32> -> vector<4x512xf32>
    %241 = arith.addf %234, %240 : vector<4x512xf32>
    %c7_221 = arith.constant 7 : index
    %c0_222 = arith.constant 0 : index
    %c0_223 = arith.constant 0 : index
    %242 = vector.load %arg10[%c7_221, %c0_222, %c0_223] : memref<9x4x16xf32, #tpu.memory_space<vmem>>, vector<1x4x16xf32>
    %243 = vector.shape_cast %242 : vector<1x4x16xf32> to vector<4x16xf32>
    %cst_224 = arith.constant dense<0.000000e+00> : vector<4x256xf32>
    %244 = tpu.matmul %243, %191, %cst_224 {dimension_numbers = #tpu.dot_dimension_numbers<[1], [0], [0], [1], [0, 0, 1, 1], [], []>} : vector<4x16xf32>, vector<16x256xf32>, vector<4x256xf32> -> vector<4x256xf32>
    %c7_225 = arith.constant 7 : index
    %c0_226 = arith.constant 0 : index
    %c0_227 = arith.constant 0 : index
    %245 = vector.load %arg11[%c7_225, %c0_226, %c0_227] : memref<9x256x512xf32, #tpu.memory_space<vmem>>, vector<1x256x512xf32>
    %246 = vector.shape_cast %245 : vector<1x256x512xf32> to vector<256x512xf32>
    %cst_228 = arith.constant dense<0.000000e+00> : vector<4x512xf32>
    %247 = tpu.matmul %244, %246, %cst_228 {dimension_numbers = #tpu.dot_dimension_numbers<[1], [0], [0], [1], [0, 0, 1, 1], [], []>} : vector<4x256xf32>, vector<256x512xf32>, vector<4x512xf32> -> vector<4x512xf32>
    %248 = arith.addf %241, %247 : vector<4x512xf32>
    %c8_229 = arith.constant 8 : index
    %c0_230 = arith.constant 0 : index
    %c0_231 = arith.constant 0 : index
    %249 = vector.load %arg10[%c8_229, %c0_230, %c0_231] : memref<9x4x16xf32, #tpu.memory_space<vmem>>, vector<1x4x16xf32>
    %250 = vector.shape_cast %249 : vector<1x4x16xf32> to vector<4x16xf32>
    %cst_232 = arith.constant dense<0.000000e+00> : vector<4x256xf32>
    %251 = tpu.matmul %250, %191, %cst_232 {dimension_numbers = #tpu.dot_dimension_numbers<[1], [0], [0], [1], [0, 0, 1, 1], [], []>} : vector<4x16xf32>, vector<16x256xf32>, vector<4x256xf32> -> vector<4x256xf32>
    %c8_233 = arith.constant 8 : index
    %c0_234 = arith.constant 0 : index
    %c0_235 = arith.constant 0 : index
    %252 = vector.load %arg11[%c8_233, %c0_234, %c0_235] : memref<9x256x512xf32, #tpu.memory_space<vmem>>, vector<1x256x512xf32>
    %253 = vector.shape_cast %252 : vector<1x256x512xf32> to vector<256x512xf32>
    %cst_236 = arith.constant dense<0.000000e+00> : vector<4x512xf32>
    %254 = tpu.matmul %251, %253, %cst_236 {dimension_numbers = #tpu.dot_dimension_numbers<[1], [0], [0], [1], [0, 0, 1, 1], [], []>} : vector<4x256xf32>, vector<256x512xf32>, vector<4x512xf32> -> vector<4x512xf32>
    %255 = arith.addf %248, %254 : vector<4x512xf32>
    %c0_237 = arith.constant 0 : index
    %c0_238 = arith.constant 0 : index
    %256 = vector.load %arg12[%c0_237, %c0_238] : memref<1x512xf32, #tpu.memory_space<vmem>>, vector<1x512xf32>
    %257 = vector.broadcast %256 : vector<1x512xf32> to vector<4x512xf32>
    %258 = arith.addf %255, %257 : vector<4x512xf32>
    %cst_239 = arith.constant 0.000000e+00 : f32
    %259 = vector.broadcast %cst_239 : f32 to vector<4x512xf32>
    %260 = arith.cmpf oge, %258, %259 : vector<4x512xf32>
    %cst_240 = arith.constant 2.000000e-01 : f32
    %261 = vector.broadcast %cst_240 : f32 to vector<4x512xf32>
    %262 = arith.mulf %261, %258 : vector<4x512xf32>
    %263 = arith.select %260, %258, %262 : vector<4x512xi1>, vector<4x512xf32>
    %cst_241 = arith.constant dense<0.000000e+00> : vector<512xf32>
    %264 = vector.multi_reduction <add>, %263, %cst_241 [0] : vector<4x512xf32> to vector<512xf32>
    %265 = vector.shape_cast %264 : vector<512xf32> to vector<1x512xf32>
    %cst_242 = arith.constant 4.000000e+00 : f32
    %266 = vector.broadcast %cst_242 : f32 to vector<1x512xf32>
    %267 = arith.divf %265, %266 : vector<1x512xf32>
    %268 = vector.broadcast %267 : vector<1x512xf32> to vector<4x512xf32>
    %269 = arith.subf %263, %268 : vector<4x512xf32>
    %270 = arith.mulf %269, %269 : vector<4x512xf32>
    %cst_243 = arith.constant dense<0.000000e+00> : vector<512xf32>
    %271 = vector.multi_reduction <add>, %270, %cst_243 [0] : vector<4x512xf32> to vector<512xf32>
    %272 = vector.shape_cast %271 : vector<512xf32> to vector<1x512xf32>
    %cst_244 = arith.constant 4.000000e+00 : f32
    %273 = vector.broadcast %cst_244 : f32 to vector<1x512xf32>
    %274 = arith.divf %272, %273 : vector<1x512xf32>
    %275 = vector.broadcast %267 : vector<1x512xf32> to vector<4x512xf32>
    %276 = arith.subf %263, %275 : vector<4x512xf32>
    %cst_245 = arith.constant 9.99999974E-6 : f32
    %277 = vector.broadcast %cst_245 : f32 to vector<1x512xf32>
    %278 = arith.addf %274, %277 : vector<1x512xf32>
    %279 = math.rsqrt %278 : vector<1x512xf32>
    %280 = vector.broadcast %279 : vector<1x512xf32> to vector<4x512xf32>
    %281 = arith.mulf %276, %280 : vector<4x512xf32>
    %cst_246 = arith.constant 0.000000e+00 : f32
    %282 = vector.broadcast %cst_246 : f32 to vector<4x1xf32>
    %c0_247 = arith.constant 0 : index
    %c0_248 = arith.constant 0 : index
    %c0_249 = arith.constant 0 : index
    %283 = vector.load %arg13[%c0_247, %c0_248, %c0_249] : memref<9x4x4xf32, #tpu.memory_space<vmem>>, vector<1x4x4xf32>
    %284 = vector.shape_cast %283 : vector<1x4x4xf32> to vector<4x4xf32>
    %cst_250 = arith.constant dense<0.000000e+00> : vector<4x512xf32>
    %285 = tpu.matmul %284, %281, %cst_250 {dimension_numbers = #tpu.dot_dimension_numbers<[1], [0], [0], [1], [0, 0, 1, 1], [], []>} : vector<4x4xf32>, vector<4x512xf32>, vector<4x512xf32> -> vector<4x512xf32>
    %c0_251 = arith.constant 0 : index
    %c0_252 = arith.constant 0 : index
    %c0_253 = arith.constant 0 : index
    %286 = vector.load %arg14[%c0_251, %c0_252, %c0_253] : memref<9x1x512xf32, #tpu.memory_space<vmem>>, vector<1x1x512xf32>
    %287 = vector.shape_cast %286 : vector<1x1x512xf32> to vector<1x512xf32>
    %288 = vector.broadcast %287 : vector<1x512xf32> to vector<4x512xf32>
    %289 = arith.mulf %285, %288 : vector<4x512xf32>
    %cst_254 = arith.constant dense<0.000000e+00> : vector<4xf32>
    %290 = vector.multi_reduction <add>, %289, %cst_254 [1] : vector<4x512xf32> to vector<4xf32>
    %291 = vector.shape_cast %290 : vector<4xf32> to vector<4x1xf32>
    %292 = arith.addf %282, %291 : vector<4x1xf32>
    %c1_255 = arith.constant 1 : index
    %c0_256 = arith.constant 0 : index
    %c0_257 = arith.constant 0 : index
    %293 = vector.load %arg13[%c1_255, %c0_256, %c0_257] : memref<9x4x4xf32, #tpu.memory_space<vmem>>, vector<1x4x4xf32>
    %294 = vector.shape_cast %293 : vector<1x4x4xf32> to vector<4x4xf32>
    %cst_258 = arith.constant dense<0.000000e+00> : vector<4x512xf32>
    %295 = tpu.matmul %294, %281, %cst_258 {dimension_numbers = #tpu.dot_dimension_numbers<[1], [0], [0], [1], [0, 0, 1, 1], [], []>} : vector<4x4xf32>, vector<4x512xf32>, vector<4x512xf32> -> vector<4x512xf32>
    %c1_259 = arith.constant 1 : index
    %c0_260 = arith.constant 0 : index
    %c0_261 = arith.constant 0 : index
    %296 = vector.load %arg14[%c1_259, %c0_260, %c0_261] : memref<9x1x512xf32, #tpu.memory_space<vmem>>, vector<1x1x512xf32>
    %297 = vector.shape_cast %296 : vector<1x1x512xf32> to vector<1x512xf32>
    %298 = vector.broadcast %297 : vector<1x512xf32> to vector<4x512xf32>
    %299 = arith.mulf %295, %298 : vector<4x512xf32>
    %cst_262 = arith.constant dense<0.000000e+00> : vector<4xf32>
    %300 = vector.multi_reduction <add>, %299, %cst_262 [1] : vector<4x512xf32> to vector<4xf32>
    %301 = vector.shape_cast %300 : vector<4xf32> to vector<4x1xf32>
    %302 = arith.addf %292, %301 : vector<4x1xf32>
    %c2_263 = arith.constant 2 : index
    %c0_264 = arith.constant 0 : index
    %c0_265 = arith.constant 0 : index
    %303 = vector.load %arg13[%c2_263, %c0_264, %c0_265] : memref<9x4x4xf32, #tpu.memory_space<vmem>>, vector<1x4x4xf32>
    %304 = vector.shape_cast %303 : vector<1x4x4xf32> to vector<4x4xf32>
    %cst_266 = arith.constant dense<0.000000e+00> : vector<4x512xf32>
    %305 = tpu.matmul %304, %281, %cst_266 {dimension_numbers = #tpu.dot_dimension_numbers<[1], [0], [0], [1], [0, 0, 1, 1], [], []>} : vector<4x4xf32>, vector<4x512xf32>, vector<4x512xf32> -> vector<4x512xf32>
    %c2_267 = arith.constant 2 : index
    %c0_268 = arith.constant 0 : index
    %c0_269 = arith.constant 0 : index
    %306 = vector.load %arg14[%c2_267, %c0_268, %c0_269] : memref<9x1x512xf32, #tpu.memory_space<vmem>>, vector<1x1x512xf32>
    %307 = vector.shape_cast %306 : vector<1x1x512xf32> to vector<1x512xf32>
    %308 = vector.broadcast %307 : vector<1x512xf32> to vector<4x512xf32>
    %309 = arith.mulf %305, %308 : vector<4x512xf32>
    %cst_270 = arith.constant dense<0.000000e+00> : vector<4xf32>
    %310 = vector.multi_reduction <add>, %309, %cst_270 [1] : vector<4x512xf32> to vector<4xf32>
    %311 = vector.shape_cast %310 : vector<4xf32> to vector<4x1xf32>
    %312 = arith.addf %302, %311 : vector<4x1xf32>
    %c3_271 = arith.constant 3 : index
    %c0_272 = arith.constant 0 : index
    %c0_273 = arith.constant 0 : index
    %313 = vector.load %arg13[%c3_271, %c0_272, %c0_273] : memref<9x4x4xf32, #tpu.memory_space<vmem>>, vector<1x4x4xf32>
    %314 = vector.shape_cast %313 : vector<1x4x4xf32> to vector<4x4xf32>
    %cst_274 = arith.constant dense<0.000000e+00> : vector<4x512xf32>
    %315 = tpu.matmul %314, %281, %cst_274 {dimension_numbers = #tpu.dot_dimension_numbers<[1], [0], [0], [1], [0, 0, 1, 1], [], []>} : vector<4x4xf32>, vector<4x512xf32>, vector<4x512xf32> -> vector<4x512xf32>
    %c3_275 = arith.constant 3 : index
    %c0_276 = arith.constant 0 : index
    %c0_277 = arith.constant 0 : index
    %316 = vector.load %arg14[%c3_275, %c0_276, %c0_277] : memref<9x1x512xf32, #tpu.memory_space<vmem>>, vector<1x1x512xf32>
    %317 = vector.shape_cast %316 : vector<1x1x512xf32> to vector<1x512xf32>
    %318 = vector.broadcast %317 : vector<1x512xf32> to vector<4x512xf32>
    %319 = arith.mulf %315, %318 : vector<4x512xf32>
    %cst_278 = arith.constant dense<0.000000e+00> : vector<4xf32>
    %320 = vector.multi_reduction <add>, %319, %cst_278 [1] : vector<4x512xf32> to vector<4xf32>
    %321 = vector.shape_cast %320 : vector<4xf32> to vector<4x1xf32>
    %322 = arith.addf %312, %321 : vector<4x1xf32>
    %c4_279 = arith.constant 4 : index
    %c0_280 = arith.constant 0 : index
    %c0_281 = arith.constant 0 : index
    %323 = vector.load %arg13[%c4_279, %c0_280, %c0_281] : memref<9x4x4xf32, #tpu.memory_space<vmem>>, vector<1x4x4xf32>
    %324 = vector.shape_cast %323 : vector<1x4x4xf32> to vector<4x4xf32>
    %cst_282 = arith.constant dense<0.000000e+00> : vector<4x512xf32>
    %325 = tpu.matmul %324, %281, %cst_282 {dimension_numbers = #tpu.dot_dimension_numbers<[1], [0], [0], [1], [0, 0, 1, 1], [], []>} : vector<4x4xf32>, vector<4x512xf32>, vector<4x512xf32> -> vector<4x512xf32>
    %c4_283 = arith.constant 4 : index
    %c0_284 = arith.constant 0 : index
    %c0_285 = arith.constant 0 : index
    %326 = vector.load %arg14[%c4_283, %c0_284, %c0_285] : memref<9x1x512xf32, #tpu.memory_space<vmem>>, vector<1x1x512xf32>
    %327 = vector.shape_cast %326 : vector<1x1x512xf32> to vector<1x512xf32>
    %328 = vector.broadcast %327 : vector<1x512xf32> to vector<4x512xf32>
    %329 = arith.mulf %325, %328 : vector<4x512xf32>
    %cst_286 = arith.constant dense<0.000000e+00> : vector<4xf32>
    %330 = vector.multi_reduction <add>, %329, %cst_286 [1] : vector<4x512xf32> to vector<4xf32>
    %331 = vector.shape_cast %330 : vector<4xf32> to vector<4x1xf32>
    %332 = arith.addf %322, %331 : vector<4x1xf32>
    %c5_287 = arith.constant 5 : index
    %c0_288 = arith.constant 0 : index
    %c0_289 = arith.constant 0 : index
    %333 = vector.load %arg13[%c5_287, %c0_288, %c0_289] : memref<9x4x4xf32, #tpu.memory_space<vmem>>, vector<1x4x4xf32>
    %334 = vector.shape_cast %333 : vector<1x4x4xf32> to vector<4x4xf32>
    %cst_290 = arith.constant dense<0.000000e+00> : vector<4x512xf32>
    %335 = tpu.matmul %334, %281, %cst_290 {dimension_numbers = #tpu.dot_dimension_numbers<[1], [0], [0], [1], [0, 0, 1, 1], [], []>} : vector<4x4xf32>, vector<4x512xf32>, vector<4x512xf32> -> vector<4x512xf32>
    %c5_291 = arith.constant 5 : index
    %c0_292 = arith.constant 0 : index
    %c0_293 = arith.constant 0 : index
    %336 = vector.load %arg14[%c5_291, %c0_292, %c0_293] : memref<9x1x512xf32, #tpu.memory_space<vmem>>, vector<1x1x512xf32>
    %337 = vector.shape_cast %336 : vector<1x1x512xf32> to vector<1x512xf32>
    %338 = vector.broadcast %337 : vector<1x512xf32> to vector<4x512xf32>
    %339 = arith.mulf %335, %338 : vector<4x512xf32>
    %cst_294 = arith.constant dense<0.000000e+00> : vector<4xf32>
    %340 = vector.multi_reduction <add>, %339, %cst_294 [1] : vector<4x512xf32> to vector<4xf32>
    %341 = vector.shape_cast %340 : vector<4xf32> to vector<4x1xf32>
    %342 = arith.addf %332, %341 : vector<4x1xf32>
    %c6_295 = arith.constant 6 : index
    %c0_296 = arith.constant 0 : index
    %c0_297 = arith.constant 0 : index
    %343 = vector.load %arg13[%c6_295, %c0_296, %c0_297] : memref<9x4x4xf32, #tpu.memory_space<vmem>>, vector<1x4x4xf32>
    %344 = vector.shape_cast %343 : vector<1x4x4xf32> to vector<4x4xf32>
    %cst_298 = arith.constant dense<0.000000e+00> : vector<4x512xf32>
    %345 = tpu.matmul %344, %281, %cst_298 {dimension_numbers = #tpu.dot_dimension_numbers<[1], [0], [0], [1], [0, 0, 1, 1], [], []>} : vector<4x4xf32>, vector<4x512xf32>, vector<4x512xf32> -> vector<4x512xf32>
    %c6_299 = arith.constant 6 : index
    %c0_300 = arith.constant 0 : index
    %c0_301 = arith.constant 0 : index
    %346 = vector.load %arg14[%c6_299, %c0_300, %c0_301] : memref<9x1x512xf32, #tpu.memory_space<vmem>>, vector<1x1x512xf32>
    %347 = vector.shape_cast %346 : vector<1x1x512xf32> to vector<1x512xf32>
    %348 = vector.broadcast %347 : vector<1x512xf32> to vector<4x512xf32>
    %349 = arith.mulf %345, %348 : vector<4x512xf32>
    %cst_302 = arith.constant dense<0.000000e+00> : vector<4xf32>
    %350 = vector.multi_reduction <add>, %349, %cst_302 [1] : vector<4x512xf32> to vector<4xf32>
    %351 = vector.shape_cast %350 : vector<4xf32> to vector<4x1xf32>
    %352 = arith.addf %342, %351 : vector<4x1xf32>
    %c7_303 = arith.constant 7 : index
    %c0_304 = arith.constant 0 : index
    %c0_305 = arith.constant 0 : index
    %353 = vector.load %arg13[%c7_303, %c0_304, %c0_305] : memref<9x4x4xf32, #tpu.memory_space<vmem>>, vector<1x4x4xf32>
    %354 = vector.shape_cast %353 : vector<1x4x4xf32> to vector<4x4xf32>
    %cst_306 = arith.constant dense<0.000000e+00> : vector<4x512xf32>
    %355 = tpu.matmul %354, %281, %cst_306 {dimension_numbers = #tpu.dot_dimension_numbers<[1], [0], [0], [1], [0, 0, 1, 1], [], []>} : vector<4x4xf32>, vector<4x512xf32>, vector<4x512xf32> -> vector<4x512xf32>
    %c7_307 = arith.constant 7 : index
    %c0_308 = arith.constant 0 : index
    %c0_309 = arith.constant 0 : index
    %356 = vector.load %arg14[%c7_307, %c0_308, %c0_309] : memref<9x1x512xf32, #tpu.memory_space<vmem>>, vector<1x1x512xf32>
    %357 = vector.shape_cast %356 : vector<1x1x512xf32> to vector<1x512xf32>
    %358 = vector.broadcast %357 : vector<1x512xf32> to vector<4x512xf32>
    %359 = arith.mulf %355, %358 : vector<4x512xf32>
    %cst_310 = arith.constant dense<0.000000e+00> : vector<4xf32>
    %360 = vector.multi_reduction <add>, %359, %cst_310 [1] : vector<4x512xf32> to vector<4xf32>
    %361 = vector.shape_cast %360 : vector<4xf32> to vector<4x1xf32>
    %362 = arith.addf %352, %361 : vector<4x1xf32>
    %c8_311 = arith.constant 8 : index
    %c0_312 = arith.constant 0 : index
    %c0_313 = arith.constant 0 : index
    %363 = vector.load %arg13[%c8_311, %c0_312, %c0_313] : memref<9x4x4xf32, #tpu.memory_space<vmem>>, vector<1x4x4xf32>
    %364 = vector.shape_cast %363 : vector<1x4x4xf32> to vector<4x4xf32>
    %cst_314 = arith.constant dense<0.000000e+00> : vector<4x512xf32>
    %365 = tpu.matmul %364, %281, %cst_314 {dimension_numbers = #tpu.dot_dimension_numbers<[1], [0], [0], [1], [0, 0, 1, 1], [], []>} : vector<4x4xf32>, vector<4x512xf32>, vector<4x512xf32> -> vector<4x512xf32>
    %c8_315 = arith.constant 8 : index
    %c0_316 = arith.constant 0 : index
    %c0_317 = arith.constant 0 : index
    %366 = vector.load %arg14[%c8_315, %c0_316, %c0_317] : memref<9x1x512xf32, #tpu.memory_space<vmem>>, vector<1x1x512xf32>
    %367 = vector.shape_cast %366 : vector<1x1x512xf32> to vector<1x512xf32>
    %368 = vector.broadcast %367 : vector<1x512xf32> to vector<4x512xf32>
    %369 = arith.mulf %365, %368 : vector<4x512xf32>
    %cst_318 = arith.constant dense<0.000000e+00> : vector<4xf32>
    %370 = vector.multi_reduction <add>, %369, %cst_318 [1] : vector<4x512xf32> to vector<4xf32>
    %371 = vector.shape_cast %370 : vector<4xf32> to vector<4x1xf32>
    %372 = arith.addf %362, %371 : vector<4x1xf32>
    %c0_319 = arith.constant 0 : index
    %c0_320 = arith.constant 0 : index
    %373 = vector.load %arg15[%c0_319, %c0_320] : memref<1x1xf32, #tpu.memory_space<vmem>>, vector<1x1xf32>
    %374 = vector.broadcast %373 : vector<1x1xf32> to vector<4x1xf32>
    %375 = arith.addf %372, %374 : vector<4x1xf32>
    %c0_321 = arith.constant 0 : index
    %c0_322 = arith.constant 0 : index
    %c0_323 = arith.constant 0 : index
    %376 = vector.load %arg16[%c0_321, %c0_322, %c0_323] : memref<1x4x1xf32, #tpu.memory_space<vmem>>, vector<1x4x1xf32>
    %377 = vector.shape_cast %376 : vector<1x4x1xf32> to vector<4x1xf32>
    %378 = vector.shape_cast %375 : vector<4x1xf32> to vector<1x4x1xf32>
    tpu.vector_store %arg16[%c0_321, %c0_322, %c0_323], %378 {strides = array<i32>} : memref<1x4x1xf32, #tpu.memory_space<vmem>>, vector<1x4x1xf32>,
    return
  }
  func.func @transform_0(%arg0: i32) -> (i32, i32, i32) {
    %c0_i32 = arith.constant 0 : i32
    %c0_i32_0 = arith.constant 0 : i32
    %c0_i32_1 = arith.constant 0 : i32
    return %arg0, %c0_i32, %c0_i32_0 : i32, i32, i32
  }
  func.func @transform_1(%arg0: i32) -> (i32, i32) {
    %c0_i32 = arith.constant 0 : i32
    %c0_i32_0 = arith.constant 0 : i32
    %c0_i32_1 = arith.constant 0 : i32
    return %c0_i32, %c0_i32_0 : i32, i32
  }
  func.func @transform_2(%arg0: i32) -> (i32, i32) {
    %c0_i32 = arith.constant 0 : i32
    %c0_i32_0 = arith.constant 0 : i32
    %c0_i32_1 = arith.constant 0 : i32
    return %c0_i32, %c0_i32_0 : i32, i32
  }
  func.func @transform_3(%arg0: i32) -> (i32, i32, i32) {
    %c0_i32 = arith.constant 0 : i32
    %c0_i32_0 = arith.constant 0 : i32
    %c0_i32_1 = arith.constant 0 : i32
    %c0_i32_2 = arith.constant 0 : i32
    return %c0_i32, %c0_i32_0, %c0_i32_1 : i32, i32, i32
  }
  func.func @transform_4(%arg0: i32) -> (i32, i32, i32) {
    %c0_i32 = arith.constant 0 : i32
    %c0_i32_0 = arith.constant 0 : i32
    %c0_i32_1 = arith.constant 0 : i32
    %c0_i32_2 = arith.constant 0 : i32
    return %c0_i32, %c0_i32_0, %c0_i32_1 : i32, i32, i32
  }
  func.func @transform_5(%arg0: i32) -> (i32, i32) {
    %c0_i32 = arith.constant 0 : i32
    %c0_i32_0 = arith.constant 0 : i32
    %c0_i32_1 = arith.constant 0 : i32
    return %c0_i32, %c0_i32_0 : i32, i32
  }
  func.func @transform_6(%arg0: i32) -> (i32, i32, i32) {
    %c0_i32 = arith.constant 0 : i32
    %c0_i32_0 = arith.constant 0 : i32
    %c0_i32_1 = arith.constant 0 : i32
    %c0_i32_2 = arith.constant 0 : i32
    return %c0_i32, %c0_i32_0, %c0_i32_1 : i32, i32, i32
  }
  func.func @transform_7(%arg0: i32) -> (i32, i32, i32) {
    %c0_i32 = arith.constant 0 : i32
    %c0_i32_0 = arith.constant 0 : i32
    %c0_i32_1 = arith.constant 0 : i32
    %c0_i32_2 = arith.constant 0 : i32
    return %c0_i32, %c0_i32_0, %c0_i32_1 : i32, i32, i32
  }
  func.func @transform_8(%arg0: i32) -> (i32, i32) {
    %c0_i32 = arith.constant 0 : i32
    %c0_i32_0 = arith.constant 0 : i32
    %c0_i32_1 = arith.constant 0 : i32
    return %c0_i32, %c0_i32_0 : i32, i32
  }
  func.func @transform_9(%arg0: i32) -> (i32, i32, i32) {
    %c0_i32 = arith.constant 0 : i32
    %c0_i32_0 = arith.constant 0 : i32
    %c0_i32_1 = arith.constant 0 : i32
    %c0_i32_2 = arith.constant 0 : i32
    return %c0_i32, %c0_i32_0, %c0_i32_1 : i32, i32, i32
  }
  func.func @transform_10(%arg0: i32) -> (i32, i32, i32) {
    %c0_i32 = arith.constant 0 : i32
    %c0_i32_0 = arith.constant 0 : i32
    %c0_i32_1 = arith.constant 0 : i32
    %c0_i32_2 = arith.constant 0 : i32
    return %c0_i32, %c0_i32_0, %c0_i32_1 : i32, i32, i32
  }
  func.func @transform_11(%arg0: i32) -> (i32, i32) {
    %c0_i32 = arith.constant 0 : i32
    %c0_i32_0 = arith.constant 0 : i32
    %c0_i32_1 = arith.constant 0 : i32
    return %c0_i32, %c0_i32_0 : i32, i32
  }
  func.func @transform_12(%arg0: i32) -> (i32, i32, i32) {
    %c0_i32 = arith.constant 0 : i32
    %c0_i32_0 = arith.constant 0 : i32
    %c0_i32_1 = arith.constant 0 : i32
    %c0_i32_2 = arith.constant 0 : i32
    return %c0_i32, %c0_i32_0, %c0_i32_1 : i32, i32, i32
  }
  func.func @transform_13(%arg0: i32) -> (i32, i32, i32) {
    %c0_i32 = arith.constant 0 : i32
    %c0_i32_0 = arith.constant 0 : i32
    %c0_i32_1 = arith.constant 0 : i32
    %c0_i32_2 = arith.constant 0 : i32
    return %c0_i32, %c0_i32_0, %c0_i32_1 : i32, i32, i32
  }
  func.func @transform_14(%arg0: i32) -> (i32, i32) {
    %c0_i32 = arith.constant 0 : i32
    %c0_i32_0 = arith.constant 0 : i32
    %c0_i32_1 = arith.constant 0 : i32
    return %c0_i32, %c0_i32_0 : i32, i32
  }
  func.func @transform_15(%arg0: i32) -> (i32, i32, i32) {
    %c0_i32 = arith.constant 0 : i32
    %c0_i32_0 = arith.constant 0 : i32
    %c0_i32_1 = arith.constant 0 : i32
    return %arg0, %c0_i32, %c0_i32_0 : i32, i32, i32
  }
}

</mosaic_0001>

<llo_original>
// kernel: discriminator_forward.1
$region0: #{discriminator_forward.1}
  #allocation0 [shape = 'u32[]', space=smem, size = 0x4, offset = 0x4, fixed_abs, tag = 'smem constant byte address 0x4 - core index']
  #allocation1 [shape = 'u32[72,128]{1,0:T(1,128)}', space=vmem, size = 0x9000, scoped, tag = 'internal scratch']
  #allocation2 [shape = 'f32[1,1]{1,0:T(1,128)S(1)}', space=vmem, size = 0x200, scoped, tag = 'scoped memory for discriminator_forward.1']
  %s0 = inlined_call_operand.vmem [shape: f32[2,256,128], index: 0, kind: input, shape index: {}]
  %s1 = inlined_call_operand.vmem [shape: f32[128,64], index: 1, kind: input, shape index: {}]
  %s2 = inlined_call_operand.hbm [shape: f32[1,64], index: 2, kind: input, shape index: {}]
  %s3 = inlined_call_operand.hbm [shape: f32[9,64,256], index: 3, kind: input, shape index: {}]
  %s4 = inlined_call_operand.hbm [shape: f32[9,64,128], index: 4, kind: input, shape index: {}]
  %s5 = inlined_call_operand.hbm [shape: f32[1,128], index: 5, kind: input, shape index: {}]
  %s6 = inlined_call_operand.hbm [shape: f32[9,16,64], index: 6, kind: input, shape index: {}]
  %s7 = inlined_call_operand.hbm [shape: f32[9,128,256], index: 7, kind: input, shape index: {}]
  %s8 = inlined_call_operand.hbm [shape: f32[1,256], index: 8, kind: input, shape index: {}]
  %s9 = inlined_call_operand.hbm [shape: f32[9,4,16], index: 9, kind: input, shape index: {}]
  %s10 = inlined_call_operand.hbm [shape: f32[9,256,512], index: 10, kind: input, shape index: {}]
  %s11 = inlined_call_operand.hbm [shape: f32[1,512], index: 11, kind: input, shape index: {}]
  %s12 = inlined_call_operand.vmem [shape: f32[9,4,4], index: 12, kind: input, shape index: {}]
  %s13 = inlined_call_operand.hbm [shape: f32[9,1,512], index: 13, kind: input, shape index: {}]
  %s14 = inlined_call_operand.<no memory space> [shape: f32[1,1], index: 14, kind: input, shape index: {}]
  %s15 = inlined_call_operand.vmem [shape: f32[2,4,1], index: 15, kind: output, shape index: {}]
  %s16 = sld [smem:[#allocation0]]
  $region137: #{discriminator_forward.1} parent=0
    _
  %s18 = ssub.s32 1, %s16
  %s19 = scalar_select 0, %s18, %s16
  %v20 = vstv %s14
  %21 = vst [vmem:[#allocation2] sm:$0x1] %v20
  $region1: #{discriminator_forward.1} parent=0
    #allocation3 [shape = 'u8[512]{0}', space=vmem, size = 0x400, scoped, tag = 'input window, operand 2, single buffered']
    #allocation4 [shape = 's32[2]{0}', space=sflag, size = 0x8, scoped, tag = 'scoped memory for discriminator_forward.1']
    #allocation5 [shape = 'u8[589824]{0}', space=vmem, size = 0x90000, scoped, tag = 'input window, operand 3, single buffered']
    #allocation6 [shape = 's32[1]{0}', space=sflag, size = 0x4, scoped, tag = 'scoped memory for discriminator_forward.1']
    #allocation7 [shape = 'u8[294912]{0}', space=vmem, size = 0x48000, scoped, tag = 'input window, operand 4, single buffered']
    #allocation8 [shape = 'u8[512]{0}', space=vmem, size = 0x400, scoped, tag = 'input window, operand 5, single buffered']
    #allocation9 [shape = 's32[1]{0}', space=sflag, size = 0x4, scoped, tag = 'scoped memory for discriminator_forward.1']
    #allocation10 [shape = 'u8[73728]{0}', space=vmem, size = 0x12000, scoped, tag = 'input window, operand 6, single buffered']
    #allocation11 [shape = 'u8[1179648]{0}', space=vmem, size = 0x120000, scoped, tag = 'input window, operand 7, single buffered']
    #allocation12 [shape = 's32[1]{0}', space=sflag, size = 0x4, scoped, tag = 'scoped memory for discriminator_forward.1']
    #allocation13 [shape = 'u8[1024]{0}', space=vmem, size = 0x400, scoped, tag = 'input window, operand 8, single buffered']
    #allocation14 [shape = 'u8[18432]{0}', space=vmem, size = 0x4800, scoped, tag = 'input window, operand 9, single buffered']
    #allocation15 [shape = 's32[1]{0}', space=sflag, size = 0x4, scoped, tag = 'scoped memory for discriminator_forward.1']
    #allocation16 [shape = 'u8[4718592]{0}', space=vmem, size = 0x480000, scoped, tag = 'input window, operand 10, single buffered']
    #allocation17 [shape = 'u8[2048]{0}', space=vmem, size = 0x800, scoped, tag = 'input window, operand 11, single buffered']
    #allocation18 [shape = 's32[1]{0}', space=sflag, size = 0x4, scoped, tag = 'scoped memory for discriminator_forward.1']
    #allocation19 [shape = 'u8[18432]{0}', space=vmem, size = 0x4800, scoped, tag = 'input window, operand 13, single buffered']
    %22 = vsyncpa [#allocation4], 0
    %23 = vsyncpa [#allocation6], 0
    %24 = vsyncpa [#allocation9], 0
    %25 = vsyncpa [#allocation12], 0
    %26 = vsyncpa [#allocation15], 0
    %27 = vsyncpa [#allocation18], 0
    loop: start=0, step=1, limit=4
    $region2: #{discriminator_forward.1} parent=1 // loop_pre_header
      _
    $region3: #{discriminator_forward.1} parent=1 // loop_header
      %s29 = sphi 0, %s33
      %p30 = scmp.ge.s32.totalorder %s29, 4
      %s39 = sphi 0, %s41
      %s42 = sphi 0, %s39
      %s43 = sphi 0, %s42
      %s59 = sphi 0, %s43
      %s63 = sphi 0, %s63
      %s65 = sphi 0, %s63
      %s66 = sphi 0, %s65
      %s80 = sphi 0, %s66
      %s84 = sphi 0, %s84
      %s86 = sphi 0, %s84
      %s87 = sphi 0, %s86
      %s101 = sphi 0, %s87
      %s105 = sphi 0, %s105
      %s107 = sphi 0, %s105
      %s108 = sphi 0, %s107
      %s122 = sphi 0, %s108
      %s126 = sphi 0, %s126
      %s128 = sphi 0, %s126
      %s129 = sphi 0, %s128
      %s143 = sphi 0, %s129
      %s147 = sphi 0, %s147
      %s149 = sphi 0, %s147
      %s150 = sphi 0, %s149
      %s164 = sphi 0, %s150
      %s168 = sphi 0, %s168
      %s170 = sphi 0, %s168
      %s171 = sphi 0, %s170
      %s185 = sphi 0, %s171
      %s189 = sphi 0, %s189
      %s191 = sphi 0, %s189
      %s192 = sphi 0, %s191
      %s206 = sphi 0, %s192
      %s210 = sphi 0, %s210
      %s212 = sphi 0, %s210
      %s213 = sphi 0, %s212
      %s227 = sphi 0, %s213
      %s231 = sphi 0, %s231
      %s233 = sphi 0, %s231
      %s234 = sphi 0, %s233
      %s248 = sphi 0, %s234
      %s252 = sphi 0, %s252
      %s254 = sphi 0, %s252
      %s255 = sphi 0, %s254
      %s269 = sphi 0, %s255
      %s273 = sphi 0, %s273
      %s275 = sphi 0, %s273
      %s276 = sphi 0, %s275
      %s290 = sphi 0, %s276
      %s294 = sphi 0, %s294
      %s296 = sphi 0, %s294
      %s297 = sphi 0, %s296
      %s311 = sphi 0, %s297
      %s315 = sphi 0, %s315
      %s317 = sphi 0, %s315
      %s318 = sphi 0, %s317
      %s332 = sphi 0, %s318
      %s336 = sphi 0, %s336
      %s338 = sphi 0, %s336
      %s339 = sphi 0, %s338
      %s353 = sphi 0, %s339
      %s359 = sphi 0, %s361
      %s362 = sphi 0, %s359
      %s363 = sphi 0, %s362
      %s379 = sphi 0, %s363
    $region4: #{discriminator_forward.1} parent=1 // loop_header_branch
      %32 = sbr.rel (%p30) target = $region8
    $region5: #{discriminator_forward.1} parent=1 // loop_body
      %s34 = ssub.s32 %s29, 1
      %s35 = ssub.s32 %s29, 2
      %s36 = sadd.s32 %s29, 1
      %s37 = ssub.s32 %s29, %s36
      %p38 = scmp.eq.s32.totalorder %s37, 0
      %s40 = sadd.s32 %s39, 1
      %s41 = scalar_select %p38, %s39, %s40
      %p44 = pneg %p38
      %p45 = scmp.eq.s32.totalorder %s29, 1
      %p46 = por %p44, %p45
      %p47 = scmp.ne.s32.totalorder %s39, %s42
      %p48 = scmp.eq.s32.totalorder %s29, 0
      %p49 = por %p47, %p48
      %p50 = scmp.ne.s32.totalorder %s39, %s42
      %p51 = scmp.eq.s32.totalorder %s34, 1
      %p52 = por %p50, %p51
      %p53 = scmp.ne.s32.totalorder %s42, %s43
      %p54 = scmp.eq.s32.totalorder %s34, 0
      %p55 = por %p53, %p54
      %p56 = scmp.ne.s32.totalorder %s42, %s43
      %p57 = scmp.eq.s32.totalorder %s35, 1
      %p58 = por %p56, %p57
      %p60 = scmp.ne.s32.totalorder %s43, %s59
      %p61 = scmp.eq.s32.totalorder %s35, 0
      %p62 = por %p60, %p61
      %s64 = sadd.s32 %s63, 1
      %p67 = scmp.eq.s32.totalorder %s29, 1
      %p68 = scmp.ne.s32.totalorder %s63, %s65
      %p69 = scmp.eq.s32.totalorder %s29, 0
      %p70 = por %p68, %p69
      %p71 = scmp.ne.s32.totalorder %s63, %s65
      %p72 = scmp.eq.s32.totalorder %s34, 1
      %p73 = por %p71, %p72
      %p74 = scmp.ne.s32.totalorder %s65, %s66
      %p75 = scmp.eq.s32.totalorder %s34, 0
      %p76 = por %p74, %p75
      %p77 = scmp.ne.s32.totalorder %s65, %s66
      %p78 = scmp.eq.s32.totalorder %s35, 1
      %p79 = por %p77, %p78
      %p81 = scmp.ne.s32.totalorder %s66, %s80
      %p82 = scmp.eq.s32.totalorder %s35, 0
      %p83 = por %p81, %p82
      %s85 = sadd.s32 %s84, 1
      %p88 = scmp.eq.s32.totalorder %s29, 1
      %p89 = scmp.ne.s32.totalorder %s84, %s86
      %p90 = scmp.eq.s32.totalorder %s29, 0
      %p91 = por %p89, %p90
      %p92 = scmp.ne.s32.totalorder %s84, %s86
      %p93 = scmp.eq.s32.totalorder %s34, 1
      %p94 = por %p92, %p93
      %p95 = scmp.ne.s32.totalorder %s86, %s87
      %p96 = scmp.eq.s32.totalorder %s34, 0
      %p97 = por %p95, %p96
      %p98 = scmp.ne.s32.totalorder %s86, %s87
      %p99 = scmp.eq.s32.totalorder %s35, 1
      %p100 = por %p98, %p99
      %p102 = scmp.ne.s32.totalorder %s87, %s101
      %p103 = scmp.eq.s32.totalorder %s35, 0
      %p104 = por %p102, %p103
      %s106 = sadd.s32 %s105, 1
      %p109 = scmp.eq.s32.totalorder %s29, 1
      %p110 = scmp.ne.s32.totalorder %s105, %s107
      %p111 = scmp.eq.s32.totalorder %s29, 0
      %p112 = por %p110, %p111
      %p113 = scmp.ne.s32.totalorder %s105, %s107
      %p114 = scmp.eq.s32.totalorder %s34, 1
      %p115 = por %p113, %p114
      %p116 = scmp.ne.s32.totalorder %s107, %s108
      %p117 = scmp.eq.s32.totalorder %s34, 0
      %p118 = por %p116, %p117
      %p119 = scmp.ne.s32.totalorder %s107, %s108
      %p120 = scmp.eq.s32.totalorder %s35, 1
      %p121 = por %p119, %p120
      %p123 = scmp.ne.s32.totalorder %s108, %s122
      %p124 = scmp.eq.s32.totalorder %s35, 0
      %p125 = por %p123, %p124
      %s127 = sadd.s32 %s126, 1
      %p130 = scmp.eq.s32.totalorder %s29, 1
      %p131 = scmp.ne.s32.totalorder %s126, %s128
      %p132 = scmp.eq.s32.totalorder %s29, 0
      %p133 = por %p131, %p132
      %p134 = scmp.ne.s32.totalorder %s126, %s128
      %p135 = scmp.eq.s32.totalorder %s34, 1
      %p136 = por %p134, %p135
      %p137 = scmp.ne.s32.totalorder %s128, %s129
      %p138 = scmp.eq.s32.totalorder %s34, 0
      %p139 = por %p137, %p138
      %p140 = scmp.ne.s32.totalorder %s128, %s129
      %p141 = scmp.eq.s32.totalorder %s35, 1
      %p142 = por %p140, %p141
      %p144 = scmp.ne.s32.totalorder %s129, %s143
      %p145 = scmp.eq.s32.totalorder %s35, 0
      %p146 = por %p144, %p145
      %s148 = sadd.s32 %s147, 1
      %p151 = scmp.eq.s32.totalorder %s29, 1
      %p152 = scmp.ne.s32.totalorder %s147, %s149
      %p153 = scmp.eq.s32.totalorder %s29, 0
      %p154 = por %p152, %p153
      %p155 = scmp.ne.s32.totalorder %s147, %s149
      %p156 = scmp.eq.s32.totalorder %s34, 1
      %p157 = por %p155, %p156
      %p158 = scmp.ne.s32.totalorder %s149, %s150
      %p159 = scmp.eq.s32.totalorder %s34, 0
      %p160 = por %p158, %p159
      %p161 = scmp.ne.s32.totalorder %s149, %s150
      %p162 = scmp.eq.s32.totalorder %s35, 1
      %p163 = por %p161, %p162
      %p165 = scmp.ne.s32.totalorder %s150, %s164
      %p166 = scmp.eq.s32.totalorder %s35, 0
      %p167 = por %p165, %p166
      %s169 = sadd.s32 %s168, 1
      %p172 = scmp.eq.s32.totalorder %s29, 1
      %p173 = scmp.ne.s32.totalorder %s168, %s170
      %p174 = scmp.eq.s32.totalorder %s29, 0
      %p175 = por %p173, %p174
      %p176 = scmp.ne.s32.totalorder %s168, %s170
      %p177 = scmp.eq.s32.totalorder %s34, 1
      %p178 = por %p176, %p177
      %p179 = scmp.ne.s32.totalorder %s170, %s171
      %p180 = scmp.eq.s32.totalorder %s34, 0
      %p181 = por %p179, %p180
      %p182 = scmp.ne.s32.totalorder %s170, %s171
      %p183 = scmp.eq.s32.totalorder %s35, 1
      %p184 = por %p182, %p183
      %p186 = scmp.ne.s32.totalorder %s171, %s185
      %p187 = scmp.eq.s32.totalorder %s35, 0
      %p188 = por %p186, %p187
      %s190 = sadd.s32 %s189, 1
      %p193 = scmp.eq.s32.totalorder %s29, 1
      %p194 = scmp.ne.s32.totalorder %s189, %s191
      %p195 = scmp.eq.s32.totalorder %s29, 0
      %p196 = por %p194, %p195
      %p197 = scmp.ne.s32.totalorder %s189, %s191
      %p198 = scmp.eq.s32.totalorder %s34, 1
      %p199 = por %p197, %p198
      %p200 = scmp.ne.s32.totalorder %s191, %s192
      %p201 = scmp.eq.s32.totalorder %s34, 0
      %p202 = por %p200, %p201
      %p203 = scmp.ne.s32.totalorder %s191, %s192
      %p204 = scmp.eq.s32.totalorder %s35, 1
      %p205 = por %p203, %p204
      %p207 = scmp.ne.s32.totalorder %s192, %s206
      %p208 = scmp.eq.s32.totalorder %s35, 0
      %p209 = por %p207, %p208
      %s211 = sadd.s32 %s210, 1
      %p214 = scmp.eq.s32.totalorder %s29, 1
      %p215 = scmp.ne.s32.totalorder %s210, %s212
      %p216 = scmp.eq.s32.totalorder %s29, 0
      %p217 = por %p215, %p216
      %p218 = scmp.ne.s32.totalorder %s210, %s212
      %p219 = scmp.eq.s32.totalorder %s34, 1
      %p220 = por %p218, %p219
      %p221 = scmp.ne.s32.totalorder %s212, %s213
      %p222 = scmp.eq.s32.totalorder %s34, 0
      %p223 = por %p221, %p222
      %p224 = scmp.ne.s32.totalorder %s212, %s213
      %p225 = scmp.eq.s32.totalorder %s35, 1
      %p226 = por %p224, %p225
      %p228 = scmp.ne.s32.totalorder %s213, %s227
      %p229 = scmp.eq.s32.totalorder %s35, 0
      %p230 = por %p228, %p229
      %s232 = sadd.s32 %s231, 1
      %p235 = scmp.eq.s32.totalorder %s29, 1
      %p236 = scmp.ne.s32.totalorder %s231, %s233
      %p237 = scmp.eq.s32.totalorder %s29, 0
      %p238 = por %p236, %p237
      %p239 = scmp.ne.s32.totalorder %s231, %s233
      %p240 = scmp.eq.s32.totalorder %s34, 1
      %p241 = por %p239, %p240
      %p242 = scmp.ne.s32.totalorder %s233, %s234
      %p243 = scmp.eq.s32.totalorder %s34, 0
      %p244 = por %p242, %p243
      %p245 = scmp.ne.s32.totalorder %s233, %s234
      %p246 = scmp.eq.s32.totalorder %s35, 1
      %p247 = por %p245, %p246
      %p249 = scmp.ne.s32.totalorder %s234, %s248
      %p250 = scmp.eq.s32.totalorder %s35, 0
      %p251 = por %p249, %p250
      %s253 = sadd.s32 %s252, 1
      %p256 = scmp.eq.s32.totalorder %s29, 1
      %p257 = scmp.ne.s32.totalorder %s252, %s254
      %p258 = scmp.eq.s32.totalorder %s29, 0
      %p259 = por %p257, %p258
      %p260 = scmp.ne.s32.totalorder %s252, %s254
      %p261 = scmp.eq.s32.totalorder %s34, 1
      %p262 = por %p260, %p261
      %p263 = scmp.ne.s32.totalorder %s254, %s255
      %p264 = scmp.eq.s32.totalorder %s34, 0
      %p265 = por %p263, %p264
      %p266 = scmp.ne.s32.totalorder %s254, %s255
      %p267 = scmp.eq.s32.totalorder %s35, 1
      %p268 = por %p266, %p267
      %p270 = scmp.ne.s32.totalorder %s255, %s269
      %p271 = scmp.eq.s32.totalorder %s35, 0
      %p272 = por %p270, %p271
      %s274 = sadd.s32 %s273, 1
      %p277 = scmp.eq.s32.totalorder %s29, 1
      %p278 = scmp.ne.s32.totalorder %s273, %s275
      %p279 = scmp.eq.s32.totalorder %s29, 0
      %p280 = por %p278, %p279
      %p281 = scmp.ne.s32.totalorder %s273, %s275
      %p282 = scmp.eq.s32.totalorder %s34, 1
      %p283 = por %p281, %p282
      %p284 = scmp.ne.s32.totalorder %s275, %s276
      %p285 = scmp.eq.s32.totalorder %s34, 0
      %p286 = por %p284, %p285
      %p287 = scmp.ne.s32.totalorder %s275, %s276
      %p288 = scmp.eq.s32.totalorder %s35, 1
      %p289 = por %p287, %p288
      %p291 = scmp.ne.s32.totalorder %s276, %s290
      %p292 = scmp.eq.s32.totalorder %s35, 0
      %p293 = por %p291, %p292
      %s295 = sadd.s32 %s294, 1
      %p298 = scmp.eq.s32.totalorder %s29, 1
      %p299 = scmp.ne.s32.totalorder %s294, %s296
      %p300 = scmp.eq.s32.totalorder %s29, 0
      %p301 = por %p299, %p300
      %p302 = scmp.ne.s32.totalorder %s294, %s296
      %p303 = scmp.eq.s32.totalorder %s34, 1
      %p304 = por %p302, %p303
      %p305 = scmp.ne.s32.totalorder %s296, %s297
      %p306 = scmp.eq.s32.totalorder %s34, 0
      %p307 = por %p305, %p306
      %p308 = scmp.ne.s32.totalorder %s296, %s297
      %p309 = scmp.eq.s32.totalorder %s35, 1
      %p310 = por %p308, %p309
      %p312 = scmp.ne.s32.totalorder %s297, %s311
      %p313 = scmp.eq.s32.totalorder %s35, 0
      %p314 = por %p312, %p313
      %s316 = sadd.s32 %s315, 1
      %p319 = scmp.eq.s32.totalorder %s29, 1
      %p320 = scmp.ne.s32.totalorder %s315, %s317
      %p321 = scmp.eq.s32.totalorder %s29, 0
      %p322 = por %p320, %p321
      %p323 = scmp.ne.s32.totalorder %s315, %s317
      %p324 = scmp.eq.s32.totalorder %s34, 1
      %p325 = por %p323, %p324
      %p326 = scmp.ne.s32.totalorder %s317, %s318
      %p327 = scmp.eq.s32.totalorder %s34, 0
      %p328 = por %p326, %p327
      %p329 = scmp.ne.s32.totalorder %s317, %s318
      %p330 = scmp.eq.s32.totalorder %s35, 1
      %p331 = por %p329, %p330
      %p333 = scmp.ne.s32.totalorder %s318, %s332
      %p334 = scmp.eq.s32.totalorder %s35, 0
      %p335 = por %p333, %p334
      %s337 = sadd.s32 %s336, 1
      %p340 = scmp.eq.s32.totalorder %s29, 1
      %p341 = scmp.ne.s32.totalorder %s336, %s338
      %p342 = scmp.eq.s32.totalorder %s29, 0
      %p343 = por %p341, %p342
      %p344 = scmp.ne.s32.totalorder %s336, %s338
      %p345 = scmp.eq.s32.totalorder %s34, 1
      %p346 = por %p344, %p345
      %p347 = scmp.ne.s32.totalorder %s338, %s339
      %p348 = scmp.eq.s32.totalorder %s34, 0
      %p349 = por %p347, %p348
      %p350 = scmp.ne.s32.totalorder %s338, %s339
      %p351 = scmp.eq.s32.totalorder %s35, 1
      %p352 = por %p350, %p351
      %p354 = scmp.ne.s32.totalorder %s339, %s353
      %p355 = scmp.eq.s32.totalorder %s35, 0
      %p356 = por %p354, %p355
      %s357 = ssub.s32 %s29, %s36
      %p358 = scmp.eq.s32.totalorder %s357, 0
      %s360 = sadd.s32 %s359, 1
      %s361 = scalar_select %p358, %s359, %s360
      %p364 = pneg %p358
      %p365 = scmp.eq.s32.totalorder %s29, 1
      %p366 = por %p364, %p365
      %p367 = scmp.ne.s32.totalorder %s359, %s362
      %p368 = scmp.eq.s32.totalorder %s29, 0
      %p369 = por %p367, %p368
      %p370 = scmp.ne.s32.totalorder %s359, %s362
      %p371 = scmp.eq.s32.totalorder %s34, 1
      %p372 = por %p370, %p371
      %p373 = scmp.ne.s32.totalorder %s362, %s363
      %p374 = scmp.eq.s32.totalorder %s34, 0
      %p375 = por %p373, %p374
      %p376 = scmp.ne.s32.totalorder %s362, %s363
      %p377 = scmp.eq.s32.totalorder %s35, 1
      %p378 = por %p376, %p377
      %p380 = scmp.ne.s32.totalorder %s363, %s379
      %p381 = scmp.eq.s32.totalorder %s35, 0
      %p382 = por %p380, %p381
      %p383 = scmp.le.s32.totalorder 1, %s29
      %p384 = scmp.lt.s32.totalorder %s29, 3
      %p385 = pnand %p383, %p384
      %p386 = pneg %p385
      // Predicated region
      $region9: #{discriminator_forward.1} parent=5 // pred_check
        _
      $region10: #{discriminator_forward.1} parent=5 // pred_check_branch
        %388 = sbr.rel (%p385) target = $region12
      $region11: #{discriminator_forward.1} parent=5 // pred_region
        %s389 = ssub.s32 %s29, 1
        // Predicated region
        $region13: #{discriminator_forward.1} parent=11 // pred_check
          %p390 = pneg %p76
        $region14: #{discriminator_forward.1} parent=11 // pred_check_branch
          %392 = sbr.rel (%p390) target = $region16
        $region15: #{discriminator_forward.1} parent=11 // pred_region
          _
        $region16: #{discriminator_forward.1} parent=11 // pred_fallthru
          _
        // Predicated region
        $region17: #{discriminator_forward.1} parent=11 // pred_check
          %p393 = pneg %p97
        $region18: #{discriminator_forward.1} parent=11 // pred_check_branch
          %395 = sbr.rel (%p393) target = $region20
        $region19: #{discriminator_forward.1} parent=11 // pred_region
          %397 = vsyncadd [#allocation4], 0
          %s399 = sshll.u32 %s2, 4
          %s400 = int_to_ptr.hbm [resolvable:$true] %s399
          %s401 = sshll.u32 [#allocation3], 4
          %s402 = int_to_ptr.vmem [resolvable:$true] %s401
          %404 = dma.hbm_to_vmem [thread:$0]  %s400, 16, %s402, [#allocation4]
        $region20: #{discriminator_forward.1} parent=11 // pred_fallthru
          _
        // Predicated region
        $region21: #{discriminator_forward.1} parent=11 // pred_check
          %p405 = pneg %p118
        $region22: #{discriminator_forward.1} parent=11 // pred_check_branch
          %407 = sbr.rel (%p405) target = $region24
        $region23: #{discriminator_forward.1} parent=11 // pred_region
          %409 = vsyncadd [#allocation6], 0
          %s410 = sshll.u32 %s3, 4
          %s411 = int_to_ptr.hbm [resolvable:$true] %s410
          %s412 = sshll.u32 [#allocation5], 4
          %s413 = int_to_ptr.vmem [resolvable:$true] %s412
          %418 = dma.hbm_to_vmem [thread:$0]  %s411, 18432, %s413, [#allocation6], 256, 256, 16
        $region24: #{discriminator_forward.1} parent=11 // pred_fallthru
          _
        // Predicated region
        $region25: #{discriminator_forward.1} parent=11 // pred_check
          %p419 = pneg %p139
        $region26: #{discriminator_forward.1} parent=11 // pred_check_branch
          %421 = sbr.rel (%p419) target = $region28
        $region27: #{discriminator_forward.1} parent=11 // pred_region
          %423 = vsyncadd [#allocation6], 0
          %s424 = sshll.u32 %s4, 4
          %s425 = int_to_ptr.hbm [resolvable:$true] %s424
          %s426 = sshll.u32 [#allocation7], 4
          %s427 = int_to_ptr.vmem [resolvable:$true] %s426
          %432 = dma.hbm_to_vmem [thread:$0]  %s425, 9216, %s427, [#allocation6], 128, 128, 8
        $region28: #{discriminator_forward.1} parent=11 // pred_fallthru
          _
        // Predicated region
        $region29: #{discriminator_forward.1} parent=11 // pred_check
          %p433 = pneg %p160
        $region30: #{discriminator_forward.1} parent=11 // pred_check_branch
          %435 = sbr.rel (%p433) target = $region32
        $region31: #{discriminator_forward.1} parent=11 // pred_region
          %437 = vsyncadd [#allocation9], 0
          %s439 = sshll.u32 %s5, 4
          %s440 = int_to_ptr.hbm [resolvable:$true] %s439
          %s441 = sshll.u32 [#allocation8], 4
          %s442 = int_to_ptr.vmem [resolvable:$true] %s441
          %444 = dma.hbm_to_vmem [thread:$0]  %s440, 16, %s442, [#allocation9]
        $region32: #{discriminator_forward.1} parent=11 // pred_fallthru
          _
        // Predicated region
        $region33: #{discriminator_forward.1} parent=11 // pred_check
          %p445 = pneg %p181
        $region34: #{discriminator_forward.1} parent=11 // pred_check_branch
          %447 = sbr.rel (%p445) target = $region36
        $region35: #{discriminator_forward.1} parent=11 // pred_region
          %449 = vsyncadd [#allocation9], 0
          %s450 = sshll.u32 %s6, 4
          %s451 = int_to_ptr.hbm [resolvable:$true] %s450
          %s452 = sshll.u32 [#allocation10], 4
          %s453 = int_to_ptr.vmem [resolvable:$true] %s452
          %458 = dma.hbm_to_vmem [thread:$0]  %s451, 2304, %s453, [#allocation9], 128, 128, 8
        $region36: #{discriminator_forward.1} parent=11 // pred_fallthru
          _
        // Predicated region
        $region37: #{discriminator_forward.1} parent=11 // pred_check
          %p459 = pneg %p202
        $region38: #{discriminator_forward.1} parent=11 // pred_check_branch
          %461 = sbr.rel (%p459) target = $region40
        $region39: #{discriminator_forward.1} parent=11 // pred_region
          %463 = vsyncadd [#allocation12], 0
          %s464 = sshll.u32 %s7, 4
          %s465 = int_to_ptr.hbm [resolvable:$true] %s464
          %s466 = sshll.u32 [#allocation11], 4
          %s467 = int_to_ptr.vmem [resolvable:$true] %s466
          %472 = dma.hbm_to_vmem [thread:$0]  %s465, 36864, %s467, [#allocation12], 256, 256, 16
        $region40: #{discriminator_forward.1} parent=11 // pred_fallthru
          _
        // Predicated region
        $region41: #{discriminator_forward.1} parent=11 // pred_check
          %p473 = pneg %p223
        $region42: #{discriminator_forward.1} parent=11 // pred_check_branch
          %475 = sbr.rel (%p473) target = $region44
        $region43: #{discriminator_forward.1} parent=11 // pred_region
          %477 = vsyncadd [#allocation12], 0
          %s479 = sshll.u32 %s8, 4
          %s480 = int_to_ptr.hbm [resolvable:$true] %s479
          %s481 = sshll.u32 [#allocation13], 4
          %s482 = int_to_ptr.vmem [resolvable:$true] %s481
          %484 = dma.hbm_to_vmem [thread:$0]  %s480, 32, %s482, [#allocation12]
        $region44: #{discriminator_forward.1} parent=11 // pred_fallthru
          _
        // Predicated region
        $region45: #{discriminator_forward.1} parent=11 // pred_check
          %p485 = pneg %p244
        $region46: #{discriminator_forward.1} parent=11 // pred_check_branch
          %487 = sbr.rel (%p485) target = $region48
        $region47: #{discriminator_forward.1} parent=11 // pred_region
          %489 = vsyncadd [#allocation15], 0
          %s490 = sshll.u32 %s9, 4
          %s491 = int_to_ptr.hbm [resolvable:$true] %s490
          %s492 = sshll.u32 [#allocation14], 4
          %s493 = int_to_ptr.vmem [resolvable:$true] %s492
          %498 = dma.hbm_to_vmem [thread:$0]  %s491, 576, %s493, [#allocation15], 64, 64, 4
        $region48: #{discriminator_forward.1} parent=11 // pred_fallthru
          _
        // Predicated region
        $region49: #{discriminator_forward.1} parent=11 // pred_check
          %p499 = pneg %p265
        $region50: #{discriminator_forward.1} parent=11 // pred_check_branch
          %501 = sbr.rel (%p499) target = $region52
        $region51: #{discriminator_forward.1} parent=11 // pred_region
          %503 = vsyncadd [#allocation15], 0
          %s504 = sshll.u32 %s10, 4
          %s505 = int_to_ptr.hbm [resolvable:$true] %s504
          %s506 = sshll.u32 [#allocation16], 4
          %s507 = int_to_ptr.vmem [resolvable:$true] %s506
          %512 = dma.hbm_to_vmem [thread:$0]  %s505, 147456, %s507, [#allocation15], 512, 512, 32
        $region52: #{discriminator_forward.1} parent=11 // pred_fallthru
          _
        // Predicated region
        $region53: #{discriminator_forward.1} parent=11 // pred_check
          %p513 = pneg %p286
        $region54: #{discriminator_forward.1} parent=11 // pred_check_branch
          %515 = sbr.rel (%p513) target = $region56
        $region55: #{discriminator_forward.1} parent=11 // pred_region
          %517 = vsyncadd [#allocation18], 0
          %s519 = sshll.u32 %s11, 4
          %s520 = int_to_ptr.hbm [resolvable:$true] %s519
          %s521 = sshll.u32 [#allocation17], 4
          %s522 = int_to_ptr.vmem [resolvable:$true] %s521
          %524 = dma.hbm_to_vmem [thread:$0]  %s520, 64, %s522, [#allocation18]
        $region56: #{discriminator_forward.1} parent=11 // pred_fallthru
          _
        // Predicated region
        $region57: #{discriminator_forward.1} parent=11 // pred_check
          %p525 = pneg %p307
        $region58: #{discriminator_forward.1} parent=11 // pred_check_branch
          %527 = sbr.rel (%p525) target = $region60
        $region59: #{discriminator_forward.1} parent=11 // pred_region
          _
        $region60: #{discriminator_forward.1} parent=11 // pred_fallthru
          _
        // Predicated region
        $region61: #{discriminator_forward.1} parent=11 // pred_check
          %p528 = pneg %p328
        $region62: #{discriminator_forward.1} parent=11 // pred_check_branch
          %530 = sbr.rel (%p528) target = $region64
        $region63: #{discriminator_forward.1} parent=11 // pred_region
          %532 = vsyncadd [#allocation18], 0
          %s533 = sshll.u32 %s13, 4
          %s534 = int_to_ptr.hbm [resolvable:$true] %s533
          %s535 = sshll.u32 [#allocation19], 4
          %s536 = int_to_ptr.vmem [resolvable:$true] %s535
          %541 = dma.hbm_to_vmem [thread:$0]  %s534, 576, %s536, [#allocation18], 64, 64, 4
        $region64: #{discriminator_forward.1} parent=11 // pred_fallthru
          _
        // Predicated region
        $region65: #{discriminator_forward.1} parent=11 // pred_check
          %p542 = pneg %p349
        $region66: #{discriminator_forward.1} parent=11 // pred_check_branch
          %544 = sbr.rel (%p542) target = $region68
        $region67: #{discriminator_forward.1} parent=11 // pred_region
          _
        $region68: #{discriminator_forward.1} parent=11 // pred_fallthru
          _
      $region12: #{discriminator_forward.1} parent=5 // pred_fallthru
        _
      %p545 = scmp.lt.s32.totalorder %s29, 2
      // Predicated region
      $region69: #{discriminator_forward.1} parent=5 // pred_check
        %p546 = pneg %p545
      $region70: #{discriminator_forward.1} parent=5 // pred_check_branch
        %548 = sbr.rel (%p546) target = $region72
      $region71: #{discriminator_forward.1} parent=5 // pred_region
        // Predicated region
        $region73: #{discriminator_forward.1} parent=71 // pred_check
          %p549 = pneg %p49
        $region74: #{discriminator_forward.1} parent=71 // pred_check_branch
          %551 = sbr.rel (%p549) target = $region76
        $region75: #{discriminator_forward.1} parent=71 // pred_region
          %p552 = scmp.lt.s32.totalorder %s29, 1
          %s553 = scalar_select %p552, %s29, 1
          %s554 = smul.addr %s553, 32
          %s555 = smul.addr %s554, 8
          %s556 = scalar_lea.vmem %s0, %s555
        $region76: #{discriminator_forward.1} parent=71 // pred_fallthru
          _
      $region72: #{discriminator_forward.1} parent=5 // pred_fallthru
        _
      %p557 = scmp.le.s32.totalorder 1, %s29
      %p558 = scmp.lt.s32.totalorder %s29, 3
      %p559 = pnand %p557, %p558
      %p560 = pneg %p559
      // Predicated region
      $region77: #{discriminator_forward.1} parent=5 // pred_check
        _
      $region78: #{discriminator_forward.1} parent=5 // pred_check_branch
        %562 = sbr.rel (%p559) target = $region80
      $region79: #{discriminator_forward.1} parent=5 // pred_region
        %s563 = ssub.s32 %s29, 1
        // Predicated region
        $region81: #{discriminator_forward.1} parent=79 // pred_check
          %p564 = pneg %p97
        $region82: #{discriminator_forward.1} parent=79 // pred_check_branch
          %566 = sbr.rel (%p564) target = $region84
        $region83: #{discriminator_forward.1} parent=79 // pred_region
          %568 = dma.done [#allocation4], 16
        $region84: #{discriminator_forward.1} parent=79 // pred_fallthru
          _
        // Predicated region
        $region85: #{discriminator_forward.1} parent=79 // pred_check
          %p569 = pneg %p118
        $region86: #{discriminator_forward.1} parent=79 // pred_check_branch
          %571 = sbr.rel (%p569) target = $region88
        $region87: #{discriminator_forward.1} parent=79 // pred_region
          %573 = dma.done [#allocation6], 18432
        $region88: #{discriminator_forward.1} parent=79 // pred_fallthru
          _
        // Predicated region
        $region89: #{discriminator_forward.1} parent=79 // pred_check
          %p574 = pneg %p139
        $region90: #{discriminator_forward.1} parent=79 // pred_check_branch
          %576 = sbr.rel (%p574) target = $region92
        $region91: #{discriminator_forward.1} parent=79 // pred_region
          %578 = dma.done [#allocation6], 9216
        $region92: #{discriminator_forward.1} parent=79 // pred_fallthru
          _
        // Predicated region
        $region93: #{discriminator_forward.1} parent=79 // pred_check
          %p579 = pneg %p160
        $region94: #{discriminator_forward.1} parent=79 // pred_check_branch
          %581 = sbr.rel (%p579) target = $region96
        $region95: #{discriminator_forward.1} parent=79 // pred_region
          %583 = dma.done [#allocation9], 16
        $region96: #{discriminator_forward.1} parent=79 // pred_fallthru
          _
        // Predicated region
        $region97: #{discriminator_forward.1} parent=79 // pred_check
          %p584 = pneg %p181
        $region98: #{discriminator_forward.1} parent=79 // pred_check_branch
          %586 = sbr.rel (%p584) target = $region100
        $region99: #{discriminator_forward.1} parent=79 // pred_region
          %588 = dma.done [#allocation9], 2304
        $region100: #{discriminator_forward.1} parent=79 // pred_fallthru
          _
        // Predicated region
        $region101: #{discriminator_forward.1} parent=79 // pred_check
          %p589 = pneg %p202
        $region102: #{discriminator_forward.1} parent=79 // pred_check_branch
          %591 = sbr.rel (%p589) target = $region104
        $region103: #{discriminator_forward.1} parent=79 // pred_region
          %593 = dma.done [#allocation12], 36864
        $region104: #{discriminator_forward.1} parent=79 // pred_fallthru
          _
        // Predicated region
        $region105: #{discriminator_forward.1} parent=79 // pred_check
          %p594 = pneg %p223
        $region106: #{discriminator_forward.1} parent=79 // pred_check_branch
          %596 = sbr.rel (%p594) target = $region108
        $region107: #{discriminator_forward.1} parent=79 // pred_region
          %598 = dma.done [#allocation12], 32
        $region108: #{discriminator_forward.1} parent=79 // pred_fallthru
          _
        // Predicated region
        $region109: #{discriminator_forward.1} parent=79 // pred_check
          %p599 = pneg %p244
        $region110: #{discriminator_forward.1} parent=79 // pred_check_branch
          %601 = sbr.rel (%p599) target = $region112
        $region111: #{discriminator_forward.1} parent=79 // pred_region
          %603 = dma.done [#allocation15], 576
        $region112: #{discriminator_forward.1} parent=79 // pred_fallthru
          _
        // Predicated region
        $region113: #{discriminator_forward.1} parent=79 // pred_check
          %p604 = pneg %p265
        $region114: #{discriminator_forward.1} parent=79 // pred_check_branch
          %606 = sbr.rel (%p604) target = $region116
        $region115: #{discriminator_forward.1} parent=79 // pred_region
          %608 = dma.done [#allocation15], 147456
        $region116: #{discriminator_forward.1} parent=79 // pred_fallthru
          _
        // Predicated region
        $region117: #{discriminator_forward.1} parent=79 // pred_check
          %p609 = pneg %p286
        $region118: #{discriminator_forward.1} parent=79 // pred_check_branch
          %611 = sbr.rel (%p609) target = $region120
        $region119: #{discriminator_forward.1} parent=79 // pred_region
          %613 = dma.done [#allocation18], 64
        $region120: #{discriminator_forward.1} parent=79 // pred_fallthru
          _
        // Predicated region
        $region121: #{discriminator_forward.1} parent=79 // pred_check
          %p614 = pneg %p328
        $region122: #{discriminator_forward.1} parent=79 // pred_check_branch
          %616 = sbr.rel (%p614) target = $region124
        $region123: #{discriminator_forward.1} parent=79 // pred_region
          %618 = dma.done [#allocation18], 576
        $region124: #{discriminator_forward.1} parent=79 // pred_fallthru
          _
        %p619 = scmp.lt.s32.totalorder %s34, 1
        %s620 = scalar_select %p619, %s34, 1
        %s621 = smul.addr %s620, 32
        %s622 = smul.addr %s621, 8
        %s623 = scalar_lea.vmem %s0, %s622
        %p624 = pneg %p55
        %p625 = pneg %p52
        %p626 = pneg %p76
        %p627 = pneg %p73
        %p628 = pneg %p97
        %p629 = pneg %p94
        %p630 = pneg %p118
        %p631 = pneg %p115
        %p632 = pneg %p139
        %p633 = pneg %p136
        %p634 = pneg %p160
        %p635 = pneg %p157
        %p636 = pneg %p181
        %p637 = pneg %p178
        %p638 = pneg %p202
        %p639 = pneg %p199
        %p640 = pneg %p223
        %p641 = pneg %p220
        %p642 = pneg %p244
        %p643 = pneg %p241
        %p644 = pneg %p265
        %p645 = pneg %p262
        %p646 = pneg %p286
        %p647 = pneg %p283
        %p648 = pneg %p307
        %p649 = pneg %p304
        %p650 = pneg %p328
        %p651 = pneg %p325
        %p652 = pneg %p349
        %p653 = pneg %p346
        %p654 = pneg %p375
        %p655 = pneg %p372
        %p656 = scmp.lt.s32.totalorder %s34, 1
        %s657 = scalar_select %p656, %s34, 1
        %s658 = smul.addr %s657, 4
        %s659 = scalar_lea.vmem %s15, %s658
        %p660 = scmp.lt.s32.totalorder %s34, 1
        %s661 = scalar_select %p660, %s34, 1
        %s662 = smul.addr %s661, 32
        %s663 = smul.addr %s662, 8
        %s664 = scalar_lea.vmem %s0, %s663
        %p665 = scmp.lt.s32.totalorder %s34, 1
        %s666 = scalar_select %p665, %s34, 1
        %s667 = smul.addr %s666, 4
        %s668 = scalar_lea.vmem %s15, %s667
        %v669 = vld [vmem:[%s664] sm:$0xff]
        %v670 = vld [vmem:[%s664 + $0x8] sm:$0xff]
        %v671 = vld [vmem:[%s664 + $0x10] sm:$0xff]
        %v672 = vld [vmem:[%s664 + $0x18] sm:$0xff]
        %v673 = vld [vmem:[%s664 + $0x20] sm:$0xff]
        %v674 = vld [vmem:[%s664 + $0x28] sm:$0xff]
        %v675 = vld [vmem:[%s664 + $0x30] sm:$0xff]
        %v676 = vld [vmem:[%s664 + $0x38] sm:$0xff]
        %v677 = vld [vmem:[%s664 + $0x40] sm:$0xff]
        %v678 = vld [vmem:[%s664 + $0x48] sm:$0xff]
        %v679 = vld [vmem:[%s664 + $0x50] sm:$0xff]
        %v680 = vld [vmem:[%s664 + $0x58] sm:$0xff]
        %v681 = vld [vmem:[%s664 + $0x60] sm:$0xff]
        %v682 = vld [vmem:[%s664 + $0x68] sm:$0xff]
        %v683 = vld [vmem:[%s664 + $0x70] sm:$0xff]
        %v684 = vld [vmem:[%s664 + $0x78] sm:$0xff]
        %v685 = vld [vmem:[%s664 + $0x80] sm:$0xff]
        %v686 = vld [vmem:[%s664 + $0x88] sm:$0xff]
        %v687 = vld [vmem:[%s664 + $0x90] sm:$0xff]
        %v688 = vld [vmem:[%s664 + $0x98] sm:$0xff]
        %v689 = vld [vmem:[%s664 + $0xa0] sm:$0xff]
        %v690 = vld [vmem:[%s664 + $0xa8] sm:$0xff]
        %v691 = vld [vmem:[%s664 + $0xb0] sm:$0xff]
        %v692 = vld [vmem:[%s664 + $0xb8] sm:$0xff]
        %v693 = vld [vmem:[%s664 + $0xc0] sm:$0xff]
        %v694 = vld [vmem:[%s664 + $0xc8] sm:$0xff]
        %v695 = vld [vmem:[%s664 + $0xd0] sm:$0xff]
        %v696 = vld [vmem:[%s664 + $0xd8] sm:$0xff]
        %v697 = vld [vmem:[%s664 + $0xe0] sm:$0xff]
        %v698 = vld [vmem:[%s664 + $0xe8] sm:$0xff]
        %v699 = vld [vmem:[%s664 + $0xf0] sm:$0xff]
        %v700 = vld [vmem:[%s664 + $0xf8] sm:$0xff]
        %v701 = vld [vmem:[%s1] sm:$0xff]
        %v702 = vld [vmem:[%s1 + $0x8] sm:$0xff]
        %v703 = vld [vmem:[%s1 + $0x10] sm:$0xff]
        %v704 = vld [vmem:[%s1 + $0x18] sm:$0xff]
        %v705 = vld [vmem:[%s1 + $0x20] sm:$0xff]
        %v706 = vld [vmem:[%s1 + $0x28] sm:$0xff]
        %v707 = vld [vmem:[%s1 + $0x30] sm:$0xff]
        %v708 = vld [vmem:[%s1 + $0x38] sm:$0xff]
        %v709 = vld [vmem:[%s1 + $0x40] sm:$0xff]
        %v710 = vld [vmem:[%s1 + $0x48] sm:$0xff]
        %v711 = vld [vmem:[%s1 + $0x50] sm:$0xff]
        %v712 = vld [vmem:[%s1 + $0x58] sm:$0xff]
        %v713 = vld [vmem:[%s1 + $0x60] sm:$0xff]
        %v714 = vld [vmem:[%s1 + $0x68] sm:$0xff]
        %v715 = vld [vmem:[%s1 + $0x70] sm:$0xff]
        %v716 = vld [vmem:[%s1 + $0x78] sm:$0xff]
        %v717 = vld [vmem:[#allocation3] sm:$0x1]
        %v719 = vperm.slane %v717, 0
        %721 = vmatpush.msra.mxu0 %v716
        %722 = vmatpush.msra.mxu0 %v715
        %723 = vmatpush.msra.mxu0 %v714
        %724 = vmatpush.msra.mxu0 %v713
        %725 = vmatpush.msra.mxu0 %v712
        %726 = vmatpush.msra.mxu0 %v711
        %727 = vmatpush.msra.mxu0 %v710
        %728 = vmatpush.msra.mxu0 %v709
        %729 = vmatpush.msra.mxu0 %v708
        %730 = vmatpush.msra.mxu0 %v707
        %731 = vmatpush.msra.mxu0 %v706
        %732 = vmatpush.msra.mxu0 %v705
        %733 = vmatpush.msra.mxu0 %v704
        %734 = vmatpush.msra.mxu0 %v703
        %735 = vmatpush.msra.mxu0 %v702
        %736 = vmatpush.msra.mxu0 %v701
        %737 = vmatmul.f32.gmra.mxu0 %v669
        %v738 = vpop.f32.mrf.mxu0
        %v739 = vadd.f32 %v719, %v738
        %740 = vmatmul.f32.gmra.mxu0 %v670
        %v741 = vpop.f32.mrf.mxu0
        %v742 = vadd.f32 %v719, %v741
        %743 = vmatmul.f32.gmra.mxu0 %v671
        %v744 = vpop.f32.mrf.mxu0
        %v745 = vadd.f32 %v719, %v744
        %746 = vmatmul.f32.gmra.mxu0 %v672
        %v747 = vpop.f32.mrf.mxu0
        %v748 = vadd.f32 %v719, %v747
        %749 = vmatmul.f32.gmra.mxu0 %v673
        %v750 = vpop.f32.mrf.mxu0
        %v751 = vadd.f32 %v719, %v750
        %752 = vmatmul.f32.gmra.mxu0 %v674
        %v753 = vpop.f32.mrf.mxu0
        %v754 = vadd.f32 %v719, %v753
        %755 = vmatmul.f32.gmra.mxu0 %v675
        %v756 = vpop.f32.mrf.mxu0
        %v757 = vadd.f32 %v719, %v756
        %758 = vmatmul.f32.gmra.mxu0 %v676
        %v759 = vpop.f32.mrf.mxu0
        %v760 = vadd.f32 %v719, %v759
        %761 = vmatmul.f32.gmra.mxu0 %v677
        %v762 = vpop.f32.mrf.mxu0
        %v763 = vadd.f32 %v719, %v762
        %764 = vmatmul.f32.gmra.mxu0 %v678
        %v765 = vpop.f32.mrf.mxu0
        %v766 = vadd.f32 %v719, %v765
        %767 = vmatmul.f32.gmra.mxu0 %v679
        %v768 = vpop.f32.mrf.mxu0
        %v769 = vadd.f32 %v719, %v768
        %770 = vmatmul.f32.gmra.mxu0 %v680
        %v771 = vpop.f32.mrf.mxu0
        %v772 = vadd.f32 %v719, %v771
        %773 = vmatmul.f32.gmra.mxu0 %v681
        %v774 = vpop.f32.mrf.mxu0
        %v775 = vadd.f32 %v719, %v774
        %776 = vmatmul.f32.gmra.mxu0 %v682
        %v777 = vpop.f32.mrf.mxu0
        %v778 = vadd.f32 %v719, %v777
        %779 = vmatmul.f32.gmra.mxu0 %v683
        %v780 = vpop.f32.mrf.mxu0
        %v781 = vadd.f32 %v719, %v780
        %782 = vmatmul.f32.gmra.mxu0 %v684
        %v783 = vpop.f32.mrf.mxu0
        %v784 = vadd.f32 %v719, %v783
        %785 = vmatmul.f32.gmra.mxu0 %v685
        %v786 = vpop.f32.mrf.mxu0
        %v787 = vadd.f32 %v719, %v786
        %788 = vmatmul.f32.gmra.mxu0 %v686
        %v789 = vpop.f32.mrf.mxu0
        %v790 = vadd.f32 %v719, %v789
        %791 = vmatmul.f32.gmra.mxu0 %v687
        %v792 = vpop.f32.mrf.mxu0
        %v793 = vadd.f32 %v719, %v792
        %794 = vmatmul.f32.gmra.mxu0 %v688
        %v795 = vpop.f32.mrf.mxu0
        %v796 = vadd.f32 %v719, %v795
        %797 = vmatmul.f32.gmra.mxu0 %v689
        %v798 = vpop.f32.mrf.mxu0
        %v799 = vadd.f32 %v719, %v798
        %800 = vmatmul.f32.gmra.mxu0 %v690
        %v801 = vpop.f32.mrf.mxu0
        %v802 = vadd.f32 %v719, %v801
        %803 = vmatmul.f32.gmra.mxu0 %v691
        %v804 = vpop.f32.mrf.mxu0
        %v805 = vadd.f32 %v719, %v804
        %806 = vmatmul.f32.gmra.mxu0 %v692
        %v807 = vpop.f32.mrf.mxu0
        %v808 = vadd.f32 %v719, %v807
        %809 = vmatmul.f32.gmra.mxu0 %v693
        %v810 = vpop.f32.mrf.mxu0
        %v811 = vadd.f32 %v719, %v810
        %812 = vmatmul.f32.gmra.mxu0 %v694
        %v813 = vpop.f32.mrf.mxu0
        %v814 = vadd.f32 %v719, %v813
        %815 = vmatmul.f32.gmra.mxu0 %v695
        %v816 = vpop.f32.mrf.mxu0
        %v817 = vadd.f32 %v719, %v816
        %818 = vmatmul.f32.gmra.mxu0 %v696
        %v819 = vpop.f32.mrf.mxu0
        %v820 = vadd.f32 %v719, %v819
        %821 = vmatmul.f32.gmra.mxu0 %v697
        %v822 = vpop.f32.mrf.mxu0
        %v823 = vadd.f32 %v719, %v822
        %824 = vmatmul.f32.gmra.mxu0 %v698
        %v825 = vpop.f32.mrf.mxu0
        %v826 = vadd.f32 %v719, %v825
        %827 = vmatmul.f32.gmra.mxu0 %v699
        %v828 = vpop.f32.mrf.mxu0
        %v829 = vadd.f32 %v719, %v828
        %830 = vmatmul.f32.gmra.mxu0 %v700
        %v831 = vpop.f32.mrf.mxu0
        %v832 = vadd.f32 %v719, %v831
        %833 = vdwg.mxu0
        %vm834 = vcmp.ge.f32.partialorder %v739, 0.0
        %vm835 = vcmp.ge.f32.partialorder %v742, 0.0
        %vm836 = vcmp.ge.f32.partialorder %v745, 0.0
        %vm837 = vcmp.ge.f32.partialorder %v748, 0.0
        %vm838 = vcmp.ge.f32.partialorder %v751, 0.0
        %vm839 = vcmp.ge.f32.partialorder %v754, 0.0
        %vm840 = vcmp.ge.f32.partialorder %v757, 0.0
        %vm841 = vcmp.ge.f32.partialorder %v760, 0.0
        %vm842 = vcmp.ge.f32.partialorder %v763, 0.0
        %vm843 = vcmp.ge.f32.partialorder %v766, 0.0
        %vm844 = vcmp.ge.f32.partialorder %v769, 0.0
        %vm845 = vcmp.ge.f32.partialorder %v772, 0.0
        %vm846 = vcmp.ge.f32.partialorder %v775, 0.0
        %vm847 = vcmp.ge.f32.partialorder %v778, 0.0
        %vm848 = vcmp.ge.f32.partialorder %v781, 0.0
        %vm849 = vcmp.ge.f32.partialorder %v784, 0.0
        %vm850 = vcmp.ge.f32.partialorder %v787, 0.0
        %vm851 = vcmp.ge.f32.partialorder %v790, 0.0
        %vm852 = vcmp.ge.f32.partialorder %v793, 0.0
        %vm853 = vcmp.ge.f32.partialorder %v796, 0.0
        %vm854 = vcmp.ge.f32.partialorder %v799, 0.0
        %vm855 = vcmp.ge.f32.partialorder %v802, 0.0
        %vm856 = vcmp.ge.f32.partialorder %v805, 0.0
        %vm857 = vcmp.ge.f32.partialorder %v808, 0.0
        %vm858 = vcmp.ge.f32.partialorder %v811, 0.0
        %vm859 = vcmp.ge.f32.partialorder %v814, 0.0
        %vm860 = vcmp.ge.f32.partialorder %v817, 0.0
        %vm861 = vcmp.ge.f32.partialorder %v820, 0.0
        %vm862 = vcmp.ge.f32.partialorder %v823, 0.0
        %vm863 = vcmp.ge.f32.partialorder %v826, 0.0
        %vm864 = vcmp.ge.f32.partialorder %v829, 0.0
        %vm865 = vcmp.ge.f32.partialorder %v832, 0.0
        %v866 = vmul.f32 %v739, 0.2
        %v867 = vmul.f32 %v742, 0.2
        %v868 = vmul.f32 %v745, 0.2
        %v869 = vmul.f32 %v748, 0.2
        %v870 = vmul.f32 %v751, 0.2
        %v871 = vmul.f32 %v754, 0.2
        %v872 = vmul.f32 %v757, 0.2
        %v873 = vmul.f32 %v760, 0.2
        %v874 = vmul.f32 %v763, 0.2
        %v875 = vmul.f32 %v766, 0.2
        %v876 = vmul.f32 %v769, 0.2
        %v877 = vmul.f32 %v772, 0.2
        %v878 = vmul.f32 %v775, 0.2
        %v879 = vmul.f32 %v778, 0.2
        %v880 = vmul.f32 %v781, 0.2
        %v881 = vmul.f32 %v784, 0.2
        %v882 = vmul.f32 %v787, 0.2
        %v883 = vmul.f32 %v790, 0.2
        %v884 = vmul.f32 %v793, 0.2
        %v885 = vmul.f32 %v796, 0.2
        %v886 = vmul.f32 %v799, 0.2
        %v887 = vmul.f32 %v802, 0.2
        %v888 = vmul.f32 %v805, 0.2
        %v889 = vmul.f32 %v808, 0.2
        %v890 = vmul.f32 %v811, 0.2
        %v891 = vmul.f32 %v814, 0.2
        %v892 = vmul.f32 %v817, 0.2
        %v893 = vmul.f32 %v820, 0.2
        %v894 = vmul.f32 %v823, 0.2
        %v895 = vmul.f32 %v826, 0.2
        %v896 = vmul.f32 %v829, 0.2
        %v897 = vmul.f32 %v832, 0.2
        %v898 = vsel %vm834, %v739, %v866
        %v899 = vsel %vm835, %v742, %v867
        %v900 = vsel %vm836, %v745, %v868
        %v901 = vsel %vm837, %v748, %v869
        %v902 = vsel %vm838, %v751, %v870
        %v903 = vsel %vm839, %v754, %v871
        %v904 = vsel %vm840, %v757, %v872
        %v905 = vsel %vm841, %v760, %v873
        %v906 = vsel %vm842, %v763, %v874
        %v907 = vsel %vm843, %v766, %v875
        %v908 = vsel %vm844, %v769, %v876
        %v909 = vsel %vm845, %v772, %v877
        %v910 = vsel %vm846, %v775, %v878
        %v911 = vsel %vm847, %v778, %v879
        %v912 = vsel %vm848, %v781, %v880
        %v913 = vsel %vm849, %v784, %v881
        %v914 = vsel %vm850, %v787, %v882
        %v915 = vsel %vm851, %v790, %v883
        %v916 = vsel %vm852, %v793, %v884
        %v917 = vsel %vm853, %v796, %v885
        %v918 = vsel %vm854, %v799, %v886
        %v919 = vsel %vm855, %v802, %v887
        %v920 = vsel %vm856, %v805, %v888
        %v921 = vsel %vm857, %v808, %v889
        %v922 = vsel %vm858, %v811, %v890
        %v923 = vsel %vm859, %v814, %v891
        %v924 = vsel %vm860, %v817, %v892
        %v925 = vsel %vm861, %v820, %v893
        %v926 = vsel %vm862, %v823, %v894
        %v927 = vsel %vm863, %v826, %v895
        %v928 = vsel %vm864, %v829, %v896
        %v929 = vsel %vm865, %v832, %v897
        %v930 = vld [vmem:[#allocation5] sm:$0xff]
        %v931 = vld [vmem:[#allocation5 + $0x8] sm:$0xff]
        %v932 = vld [vmem:[#allocation5 + $0x10] sm:$0xff]
        %v933 = vld [vmem:[#allocation5 + $0x18] sm:$0xff]
        %v934 = vld [vmem:[#allocation5 + $0x20] sm:$0xff]
        %v935 = vld [vmem:[#allocation5 + $0x28] sm:$0xff]
        %v936 = vld [vmem:[#allocation5 + $0x30] sm:$0xff]
        %v937 = vld [vmem:[#allocation5 + $0x38] sm:$0xff]
        %v938 = vld [vmem:[#allocation5 + $0x40] sm:$0xff]
        %v939 = vld [vmem:[#allocation5 + $0x48] sm:$0xff]
        %v940 = vld [vmem:[#allocation5 + $0x50] sm:$0xff]
        %v941 = vld [vmem:[#allocation5 + $0x58] sm:$0xff]
        %v942 = vld [vmem:[#allocation5 + $0x60] sm:$0xff]
        %v943 = vld [vmem:[#allocation5 + $0x68] sm:$0xff]
        %v944 = vld [vmem:[#allocation5 + $0x70] sm:$0xff]
        %v945 = vld [vmem:[#allocation5 + $0x78] sm:$0xff]
        %946 = vmatpush.msra.mxu0 %v913
        %947 = vmatpush.msra.mxu0 %v912
        %948 = vmatpush.msra.mxu0 %v911
        %949 = vmatpush.msra.mxu0 %v910
        %950 = vmatpush.msra.mxu0 %v909
        %951 = vmatpush.msra.mxu0 %v908
        %952 = vmatpush.msra.mxu0 %v907
        %953 = vmatpush.msra.mxu0 %v906
        %954 = vmatpush.msra.mxu0 %v905
        %955 = vmatpush.msra.mxu0 %v904
        %956 = vmatpush.msra.mxu0 %v903
        %957 = vmatpush.msra.mxu0 %v902
        %958 = vmatpush.msra.mxu0 %v901
        %959 = vmatpush.msra.mxu0 %v900
        %960 = vmatpush.msra.mxu0 %v899
        %961 = vmatpush.msra.mxu0 %v898
        %962 = vmatmul.f32.gmra.mxu0 %v930
        %v963 = vpop.f32.mrf.mxu0
        %v964 = vadd.f32 0.0, %v963
        %965 = vmatmul.f32.gmra.mxu0 %v932
        %v966 = vpop.f32.mrf.mxu0
        %v967 = vadd.f32 0.0, %v966
        %968 = vmatmul.f32.gmra.mxu0 %v934
        %v969 = vpop.f32.mrf.mxu0
        %v970 = vadd.f32 0.0, %v969
        %971 = vmatmul.f32.gmra.mxu0 %v936
        %v972 = vpop.f32.mrf.mxu0
        %v973 = vadd.f32 0.0, %v972
        %974 = vmatmul.f32.gmra.mxu0 %v938
        %v975 = vpop.f32.mrf.mxu0
        %v976 = vadd.f32 0.0, %v975
        %977 = vmatmul.f32.gmra.mxu0 %v940
        %v978 = vpop.f32.mrf.mxu0
        %v979 = vadd.f32 0.0, %v978
        %980 = vmatmul.f32.gmra.mxu0 %v942
        %v981 = vpop.f32.mrf.mxu0
        %v982 = vadd.f32 0.0, %v981
        %983 = vmatmul.f32.gmra.mxu0 %v944
        %v984 = vpop.f32.mrf.mxu0
        %v985 = vadd.f32 0.0, %v984
        %986 = vdwg.mxu0
        %987 = vmatpush.msra.mxu0 %v929
        %988 = vmatpush.msra.mxu0 %v928
        %989 = vmatpush.msra.mxu0 %v927
        %990 = vmatpush.msra.mxu0 %v926
        %991 = vmatpush.msra.mxu0 %v925
        %992 = vmatpush.msra.mxu0 %v924
        %993 = vmatpush.msra.mxu0 %v923
        %994 = vmatpush.msra.mxu0 %v922
        %995 = vmatpush.msra.mxu0 %v921
        %996 = vmatpush.msra.mxu0 %v920
        %997 = vmatpush.msra.mxu0 %v919
        %998 = vmatpush.msra.mxu0 %v918
        %999 = vmatpush.msra.mxu0 %v917
        %1000 = vmatpush.msra.mxu0 %v916
        %1001 = vmatpush.msra.mxu0 %v915
        %1002 = vmatpush.msra.mxu0 %v914
        %1003 = vmatmul.f32.gmra.mxu0 %v931
        %v1004 = vpop.f32.mrf.mxu0
        %v1005 = vadd.f32 %v964, %v1004
        %1006 = vmatmul.f32.gmra.mxu0 %v933
        %v1007 = vpop.f32.mrf.mxu0
        %v1008 = vadd.f32 %v967, %v1007
        %1009 = vmatmul.f32.gmra.mxu0 %v935
        %v1010 = vpop.f32.mrf.mxu0
        %v1011 = vadd.f32 %v970, %v1010
        %1012 = vmatmul.f32.gmra.mxu0 %v937
        %v1013 = vpop.f32.mrf.mxu0
        %v1014 = vadd.f32 %v973, %v1013
        %1015 = vmatmul.f32.gmra.mxu0 %v939
        %v1016 = vpop.f32.mrf.mxu0
        %v1017 = vadd.f32 %v976, %v1016
        %1018 = vmatmul.f32.gmra.mxu0 %v941
        %v1019 = vpop.f32.mrf.mxu0
        %v1020 = vadd.f32 %v979, %v1019
        %1021 = vmatmul.f32.gmra.mxu0 %v943
        %v1022 = vpop.f32.mrf.mxu0
        %v1023 = vadd.f32 %v982, %v1022
        %1024 = vmatmul.f32.gmra.mxu0 %v945
        %v1025 = vpop.f32.mrf.mxu0
        %v1026 = vadd.f32 %v985, %v1025
        %1027 = vdwg.mxu0
        %v1028 = vld [vmem:[#allocation7] sm:$0xff]
        %v1029 = vld [vmem:[#allocation7 + $0x8] sm:$0xff]
        %v1030 = vld [vmem:[#allocation7 + $0x10] sm:$0xff]
        %v1031 = vld [vmem:[#allocation7 + $0x18] sm:$0xff]
        %v1032 = vld [vmem:[#allocation7 + $0x20] sm:$0xff]
        %v1033 = vld [vmem:[#allocation7 + $0x28] sm:$0xff]
        %v1034 = vld [vmem:[#allocation7 + $0x30] sm:$0xff]
        %v1035 = vld [vmem:[#allocation7 + $0x38] sm:$0xff]
        %s1036 = scalar_lea.vmem [#allocation5], 128
        %v1037 = vld [vmem:[%s1036] sm:$0xff]
        %v1038 = vld [vmem:[%s1036 + $0x8] sm:$0xff]
        %v1039 = vld [vmem:[%s1036 + $0x10] sm:$0xff]
        %v1040 = vld [vmem:[%s1036 + $0x18] sm:$0xff]
        %v1041 = vld [vmem:[%s1036 + $0x20] sm:$0xff]
        %v1042 = vld [vmem:[%s1036 + $0x28] sm:$0xff]
        %v1043 = vld [vmem:[%s1036 + $0x30] sm:$0xff]
        %v1044 = vld [vmem:[%s1036 + $0x38] sm:$0xff]
        %v1045 = vld [vmem:[%s1036 + $0x40] sm:$0xff]
        %v1046 = vld [vmem:[%s1036 + $0x48] sm:$0xff]
        %v1047 = vld [vmem:[%s1036 + $0x50] sm:$0xff]
        %v1048 = vld [vmem:[%s1036 + $0x58] sm:$0xff]
        %v1049 = vld [vmem:[%s1036 + $0x60] sm:$0xff]
        %v1050 = vld [vmem:[%s1036 + $0x68] sm:$0xff]
        %v1051 = vld [vmem:[%s1036 + $0x70] sm:$0xff]
        %v1052 = vld [vmem:[%s1036 + $0x78] sm:$0xff]
        %1053 = vmatpush.msra.mxu0 %v913
        %1054 = vmatpush.msra.mxu0 %v912
        %1055 = vmatpush.msra.mxu0 %v911
        %1056 = vmatpush.msra.mxu0 %v910
        %1057 = vmatpush.msra.mxu0 %v909
        %1058 = vmatpush.msra.mxu0 %v908
        %1059 = vmatpush.msra.mxu0 %v907
        %1060 = vmatpush.msra.mxu0 %v906
        %1061 = vmatpush.msra.mxu0 %v905
        %1062 = vmatpush.msra.mxu0 %v904
        %1063 = vmatpush.msra.mxu0 %v903
        %1064 = vmatpush.msra.mxu0 %v902
        %1065 = vmatpush.msra.mxu0 %v901
        %1066 = vmatpush.msra.mxu0 %v900
        %1067 = vmatpush.msra.mxu0 %v899
        %1068 = vmatpush.msra.mxu0 %v898
        %1069 = vmatmul.f32.gmra.mxu0 %v1037
        %v1070 = vpop.f32.mrf.mxu0
        %v1071 = vadd.f32 0.0, %v1070
        %1072 = vmatmul.f32.gmra.mxu0 %v1039
        %v1073 = vpop.f32.mrf.mxu0
        %v1074 = vadd.f32 0.0, %v1073
        %1075 = vmatmul.f32.gmra.mxu0 %v1041
        %v1076 = vpop.f32.mrf.mxu0
        %v1077 = vadd.f32 0.0, %v1076
        %1078 = vmatmul.f32.gmra.mxu0 %v1043
        %v1079 = vpop.f32.mrf.mxu0
        %v1080 = vadd.f32 0.0, %v1079
        %1081 = vmatmul.f32.gmra.mxu0 %v1045
        %v1082 = vpop.f32.mrf.mxu0
        %v1083 = vadd.f32 0.0, %v1082
        %1084 = vmatmul.f32.gmra.mxu0 %v1047
        %v1085 = vpop.f32.mrf.mxu0
        %v1086 = vadd.f32 0.0, %v1085
        %1087 = vmatmul.f32.gmra.mxu0 %v1049
        %v1088 = vpop.f32.mrf.mxu0
        %v1089 = vadd.f32 0.0, %v1088
        %1090 = vmatmul.f32.gmra.mxu0 %v1051
        %v1091 = vpop.f32.mrf.mxu0
        %v1092 = vadd.f32 0.0, %v1091
        %1093 = vdwg.mxu0
        %1094 = vmatpush.msra.mxu0 %v929
        %1095 = vmatpush.msra.mxu0 %v928
        %1096 = vmatpush.msra.mxu0 %v927
        %1097 = vmatpush.msra.mxu0 %v926
        %1098 = vmatpush.msra.mxu0 %v925
        %1099 = vmatpush.msra.mxu0 %v924
        %1100 = vmatpush.msra.mxu0 %v923
        %1101 = vmatpush.msra.mxu0 %v922
        %1102 = vmatpush.msra.mxu0 %v921
        %1103 = vmatpush.msra.mxu0 %v920
        %1104 = vmatpush.msra.mxu0 %v919
        %1105 = vmatpush.msra.mxu0 %v918
        %1106 = vmatpush.msra.mxu0 %v917
        %1107 = vmatpush.msra.mxu0 %v916
        %1108 = vmatpush.msra.mxu0 %v915
        %1109 = vmatpush.msra.mxu0 %v914
        %1110 = vmatmul.f32.gmra.mxu0 %v1038
        %v1111 = vpop.f32.mrf.mxu0
        %v1112 = vadd.f32 %v1071, %v1111
        %1113 = vmatmul.f32.gmra.mxu0 %v1040
        %v1114 = vpop.f32.mrf.mxu0
        %v1115 = vadd.f32 %v1074, %v1114
        %1116 = vmatmul.f32.gmra.mxu0 %v1042
        %v1117 = vpop.f32.mrf.mxu0
        %v1118 = vadd.f32 %v1077, %v1117
        %1119 = vmatmul.f32.gmra.mxu0 %v1044
        %v1120 = vpop.f32.mrf.mxu0
        %v1121 = vadd.f32 %v1080, %v1120
        %1122 = vmatmul.f32.gmra.mxu0 %v1046
        %v1123 = vpop.f32.mrf.mxu0
        %v1124 = vadd.f32 %v1083, %v1123
        %1125 = vmatmul.f32.gmra.mxu0 %v1048
        %v1126 = vpop.f32.mrf.mxu0
        %v1127 = vadd.f32 %v1086, %v1126
        %1128 = vmatmul.f32.gmra.mxu0 %v1050
        %v1129 = vpop.f32.mrf.mxu0
        %v1130 = vadd.f32 %v1089, %v1129
        %1131 = vmatmul.f32.gmra.mxu0 %v1052
        %v1132 = vpop.f32.mrf.mxu0
        %v1133 = vadd.f32 %v1092, %v1132
        %1134 = vdwg.mxu0
        %s1135 = scalar_lea.vmem [#allocation7], 64
        %v1136 = vld [vmem:[%s1135] sm:$0xff]
        %v1137 = vld [vmem:[%s1135 + $0x8] sm:$0xff]
        %v1138 = vld [vmem:[%s1135 + $0x10] sm:$0xff]
        %v1139 = vld [vmem:[%s1135 + $0x18] sm:$0xff]
        %v1140 = vld [vmem:[%s1135 + $0x20] sm:$0xff]
        %v1141 = vld [vmem:[%s1135 + $0x28] sm:$0xff]
        %v1142 = vld [vmem:[%s1135 + $0x30] sm:$0xff]
        %v1143 = vld [vmem:[%s1135 + $0x38] sm:$0xff]
        %vm1144 = vcmask 523264
        %v1146 = vsel %vm1144, %v1112, 0
        %v1149 = vsel %vm1144, %v1115, 0
        %v1152 = vsel %vm1144, %v1118, 0
        %v1155 = vsel %vm1144, %v1121, 0
        %v1158 = vsel %vm1144, %v1124, 0
        %v1161 = vsel %vm1144, %v1127, 0
        %v1164 = vsel %vm1144, %v1130, 0
        %v1167 = vsel %vm1144, %v1133, 0
        %1169 = vmatpush.msra.mxu0 0.0
        %1170 = vmatpush.msra.mxu0 0.0
        %1171 = vmatpush.msra.mxu0 0.0
        %1172 = vmatpush.msra.mxu0 0.0
        %1173 = vmatpush.msra.mxu0 0.0
        %1174 = vmatpush.msra.mxu0 0.0
        %1175 = vmatpush.msra.mxu0 0.0
        %1176 = vmatpush.msra.mxu0 0.0
        %1177 = vmatpush.msra.mxu0 %v1143
        %1178 = vmatpush.msra.mxu0 %v1142
        %1179 = vmatpush.msra.mxu0 %v1141
        %1180 = vmatpush.msra.mxu0 %v1140
        %1181 = vmatpush.msra.mxu0 %v1139
        %1182 = vmatpush.msra.mxu0 %v1138
        %1183 = vmatpush.msra.mxu0 %v1137
        %1184 = vmatpush.msra.mxu0 %v1136
        %1185 = vmatmul.f32.gmra.mxu0 %v1146
        %v1186 = vpop.f32.mrf.mxu0
        %v1187 = vadd.f32 0.0, %v1186
        %1188 = vmatmul.f32.gmra.mxu0 %v1149
        %v1189 = vpop.f32.mrf.mxu0
        %v1190 = vadd.f32 0.0, %v1189
        %1191 = vmatmul.f32.gmra.mxu0 %v1152
        %v1192 = vpop.f32.mrf.mxu0
        %v1193 = vadd.f32 0.0, %v1192
        %1194 = vmatmul.f32.gmra.mxu0 %v1155
        %v1195 = vpop.f32.mrf.mxu0
        %v1196 = vadd.f32 0.0, %v1195
        %1197 = vmatmul.f32.gmra.mxu0 %v1158
        %v1198 = vpop.f32.mrf.mxu0
        %v1199 = vadd.f32 0.0, %v1198
        %1200 = vmatmul.f32.gmra.mxu0 %v1161
        %v1201 = vpop.f32.mrf.mxu0
        %v1202 = vadd.f32 0.0, %v1201
        %1203 = vmatmul.f32.gmra.mxu0 %v1164
        %v1204 = vpop.f32.mrf.mxu0
        %v1205 = vadd.f32 0.0, %v1204
        %1206 = vmatmul.f32.gmra.mxu0 %v1167
        %v1207 = vpop.f32.mrf.mxu0
        %v1208 = vadd.f32 0.0, %v1207
        %1209 = vdwg.mxu0
        %v1211 = vsel %vm1144, %v1005, 0
        %v1214 = vsel %vm1144, %v1008, 0
        %v1217 = vsel %vm1144, %v1011, 0
        %v1220 = vsel %vm1144, %v1014, 0
        %v1223 = vsel %vm1144, %v1017, 0
        %v1226 = vsel %vm1144, %v1020, 0
        %v1229 = vsel %vm1144, %v1023, 0
        %v1232 = vsel %vm1144, %v1026, 0
        %1234 = vmatpush.msra.mxu0 0.0
        %1235 = vmatpush.msra.mxu0 0.0
        %1236 = vmatpush.msra.mxu0 0.0
        %1237 = vmatpush.msra.mxu0 0.0
        %1238 = vmatpush.msra.mxu0 0.0
        %1239 = vmatpush.msra.mxu0 0.0
        %1240 = vmatpush.msra.mxu0 0.0
        %1241 = vmatpush.msra.mxu0 0.0
        %1242 = vmatpush.msra.mxu0 %v1035
        %1243 = vmatpush.msra.mxu0 %v1034
        %1244 = vmatpush.msra.mxu0 %v1033
        %1245 = vmatpush.msra.mxu0 %v1032
        %1246 = vmatpush.msra.mxu0 %v1031
        %1247 = vmatpush.msra.mxu0 %v1030
        %1248 = vmatpush.msra.mxu0 %v1029
        %1249 = vmatpush.msra.mxu0 %v1028
        %1250 = vmatmul.f32.gmra.mxu0 %v1211
        %v1251 = vpop.f32.mrf.mxu0
        %v1252 = vadd.f32 %v1187, %v1251
        %1253 = vmatmul.f32.gmra.mxu0 %v1214
        %v1254 = vpop.f32.mrf.mxu0
        %v1255 = vadd.f32 %v1190, %v1254
        %1256 = vmatmul.f32.gmra.mxu0 %v1217
        %v1257 = vpop.f32.mrf.mxu0
        %v1258 = vadd.f32 %v1193, %v1257
        %1259 = vmatmul.f32.gmra.mxu0 %v1220
        %v1260 = vpop.f32.mrf.mxu0
        %v1261 = vadd.f32 %v1196, %v1260
        %1262 = vmatmul.f32.gmra.mxu0 %v1223
        %v1263 = vpop.f32.mrf.mxu0
        %v1264 = vadd.f32 %v1199, %v1263
        %1265 = vmatmul.f32.gmra.mxu0 %v1226
        %v1266 = vpop.f32.mrf.mxu0
        %v1267 = vadd.f32 %v1202, %v1266
        %1268 = vmatmul.f32.gmra.mxu0 %v1229
        %v1269 = vpop.f32.mrf.mxu0
        %v1270 = vadd.f32 %v1205, %v1269
        %1271 = vmatmul.f32.gmra.mxu0 %v1232
        %v1272 = vpop.f32.mrf.mxu0
        %v1273 = vadd.f32 %v1208, %v1272
        %1274 = vdwg.mxu0
        %s1275 = scalar_lea.vmem [#allocation5], 256
        %v1276 = vld [vmem:[%s1275] sm:$0xff]
        %v1277 = vld [vmem:[%s1275 + $0x8] sm:$0xff]
        %v1278 = vld [vmem:[%s1275 + $0x10] sm:$0xff]
        %v1279 = vld [vmem:[%s1275 + $0x18] sm:$0xff]
        %v1280 = vld [vmem:[%s1275 + $0x20] sm:$0xff]
        %v1281 = vld [vmem:[%s1275 + $0x28] sm:$0xff]
        %v1282 = vld [vmem:[%s1275 + $0x30] sm:$0xff]
        %v1283 = vld [vmem:[%s1275 + $0x38] sm:$0xff]
        %v1284 = vld [vmem:[%s1275 + $0x40] sm:$0xff]
        %v1285 = vld [vmem:[%s1275 + $0x48] sm:$0xff]
        %v1286 = vld [vmem:[%s1275 + $0x50] sm:$0xff]
        %v1287 = vld [vmem:[%s1275 + $0x58] sm:$0xff]
        %v1288 = vld [vmem:[%s1275 + $0x60] sm:$0xff]
        %v1289 = vld [vmem:[%s1275 + $0x68] sm:$0xff]
        %v1290 = vld [vmem:[%s1275 + $0x70] sm:$0xff]
        %v1291 = vld [vmem:[%s1275 + $0x78] sm:$0xff]
        %1292 = vmatpush.msra.mxu0 %v913
        %1293 = vmatpush.msra.mxu0 %v912
        %1294 = vmatpush.msra.mxu0 %v911
        %1295 = vmatpush.msra.mxu0 %v910
        %1296 = vmatpush.msra.mxu0 %v909
        %1297 = vmatpush.msra.mxu0 %v908
        %1298 = vmatpush.msra.mxu0 %v907
        %1299 = vmatpush.msra.mxu0 %v906
        %1300 = vmatpush.msra.mxu0 %v905
        %1301 = vmatpush.msra.mxu0 %v904
        %1302 = vmatpush.msra.mxu0 %v903
        %1303 = vmatpush.msra.mxu0 %v902
        %1304 = vmatpush.msra.mxu0 %v901
        %1305 = vmatpush.msra.mxu0 %v900
        %1306 = vmatpush.msra.mxu0 %v899
        %1307 = vmatpush.msra.mxu0 %v898
        %1308 = vmatmul.f32.gmra.mxu0 %v1276
        %v1309 = vpop.f32.mrf.mxu0
        %v1310 = vadd.f32 0.0, %v1309
        %1311 = vmatmul.f32.gmra.mxu0 %v1278
        %v1312 = vpop.f32.mrf.mxu0
        %v1313 = vadd.f32 0.0, %v1312
        %1314 = vmatmul.f32.gmra.mxu0 %v1280
        %v1315 = vpop.f32.mrf.mxu0
        %v1316 = vadd.f32 0.0, %v1315
        %1317 = vmatmul.f32.gmra.mxu0 %v1282
        %v1318 = vpop.f32.mrf.mxu0
        %v1319 = vadd.f32 0.0, %v1318
        %1320 = vmatmul.f32.gmra.mxu0 %v1284
        %v1321 = vpop.f32.mrf.mxu0
        %v1322 = vadd.f32 0.0, %v1321
        %1323 = vmatmul.f32.gmra.mxu0 %v1286
        %v1324 = vpop.f32.mrf.mxu0
        %v1325 = vadd.f32 0.0, %v1324
        %1326 = vmatmul.f32.gmra.mxu0 %v1288
        %v1327 = vpop.f32.mrf.mxu0
        %v1328 = vadd.f32 0.0, %v1327
        %1329 = vmatmul.f32.gmra.mxu0 %v1290
        %v1330 = vpop.f32.mrf.mxu0
        %v1331 = vadd.f32 0.0, %v1330
        %1332 = vdwg.mxu0
        %1333 = vmatpush.msra.mxu0 %v929
        %1334 = vmatpush.msra.mxu0 %v928
        %1335 = vmatpush.msra.mxu0 %v927
        %1336 = vmatpush.msra.mxu0 %v926
        %1337 = vmatpush.msra.mxu0 %v925
        %1338 = vmatpush.msra.mxu0 %v924
        %1339 = vmatpush.msra.mxu0 %v923
        %1340 = vmatpush.msra.mxu0 %v922
        %1341 = vmatpush.msra.mxu0 %v921
        %1342 = vmatpush.msra.mxu0 %v920
        %1343 = vmatpush.msra.mxu0 %v919
        %1344 = vmatpush.msra.mxu0 %v918
        %1345 = vmatpush.msra.mxu0 %v917
        %1346 = vmatpush.msra.mxu0 %v916
        %1347 = vmatpush.msra.mxu0 %v915
        %1348 = vmatpush.msra.mxu0 %v914
        %1349 = vmatmul.f32.gmra.mxu0 %v1277
        %v1350 = vpop.f32.mrf.mxu0
        %v1351 = vadd.f32 %v1310, %v1350
        %1352 = vmatmul.f32.gmra.mxu0 %v1279
        %v1353 = vpop.f32.mrf.mxu0
        %v1354 = vadd.f32 %v1313, %v1353
        %1355 = vmatmul.f32.gmra.mxu0 %v1281
        %v1356 = vpop.f32.mrf.mxu0
        %v1357 = vadd.f32 %v1316, %v1356
        %1358 = vmatmul.f32.gmra.mxu0 %v1283
        %v1359 = vpop.f32.mrf.mxu0
        %v1360 = vadd.f32 %v1319, %v1359
        %1361 = vmatmul.f32.gmra.mxu0 %v1285
        %v1362 = vpop.f32.mrf.mxu0
        %v1363 = vadd.f32 %v1322, %v1362
        %1364 = vmatmul.f32.gmra.mxu0 %v1287
        %v1365 = vpop.f32.mrf.mxu0
        %v1366 = vadd.f32 %v1325, %v1365
        %1367 = vmatmul.f32.gmra.mxu0 %v1289
        %v1368 = vpop.f32.mrf.mxu0
        %v1369 = vadd.f32 %v1328, %v1368
        %1370 = vmatmul.f32.gmra.mxu0 %v1291
        %v1371 = vpop.f32.mrf.mxu0
        %v1372 = vadd.f32 %v1331, %v1371
        %1373 = vdwg.mxu0
        %s1374 = scalar_lea.vmem [#allocation7], 128
        %v1375 = vld [vmem:[%s1374] sm:$0xff]
        %v1376 = vld [vmem:[%s1374 + $0x8] sm:$0xff]
        %v1377 = vld [vmem:[%s1374 + $0x10] sm:$0xff]
        %v1378 = vld [vmem:[%s1374 + $0x18] sm:$0xff]
        %v1379 = vld [vmem:[%s1374 + $0x20] sm:$0xff]
        %v1380 = vld [vmem:[%s1374 + $0x28] sm:$0xff]
        %v1381 = vld [vmem:[%s1374 + $0x30] sm:$0xff]
        %v1382 = vld [vmem:[%s1374 + $0x38] sm:$0xff]
        %v1384 = vsel %vm1144, %v1351, 0
        %v1387 = vsel %vm1144, %v1354, 0
        %v1390 = vsel %vm1144, %v1357, 0
        %v1393 = vsel %vm1144, %v1360, 0
        %v1396 = vsel %vm1144, %v1363, 0
        %v1399 = vsel %vm1144, %v1366, 0
        %v1402 = vsel %vm1144, %v1369, 0
        %v1405 = vsel %vm1144, %v1372, 0
        %1407 = vmatpush.msra.mxu0 0.0
        %1408 = vmatpush.msra.mxu0 0.0
        %1409 = vmatpush.msra.mxu0 0.0
        %1410 = vmatpush.msra.mxu0 0.0
        %1411 = vmatpush.msra.mxu0 0.0
        %1412 = vmatpush.msra.mxu0 0.0
        %1413 = vmatpush.msra.mxu0 0.0
        %1414 = vmatpush.msra.mxu0 0.0
        %1415 = vmatpush.msra.mxu0 %v1382
        %1416 = vmatpush.msra.mxu0 %v1381
        %1417 = vmatpush.msra.mxu0 %v1380
        %1418 = vmatpush.msra.mxu0 %v1379
        %1419 = vmatpush.msra.mxu0 %v1378
        %1420 = vmatpush.msra.mxu0 %v1377
        %1421 = vmatpush.msra.mxu0 %v1376
        %1422 = vmatpush.msra.mxu0 %v1375
        %1423 = vmatmul.f32.gmra.mxu0 %v1384
        %v1424 = vpop.f32.mrf.mxu0
        %v1425 = vadd.f32 0.0, %v1424
        %1426 = vmatmul.f32.gmra.mxu0 %v1387
        %v1427 = vpop.f32.mrf.mxu0
        %v1428 = vadd.f32 0.0, %v1427
        %1429 = vmatmul.f32.gmra.mxu0 %v1390
        %v1430 = vpop.f32.mrf.mxu0
        %v1431 = vadd.f32 0.0, %v1430
        %1432 = vmatmul.f32.gmra.mxu0 %v1393
        %v1433 = vpop.f32.mrf.mxu0
        %v1434 = vadd.f32 0.0, %v1433
        %1435 = vmatmul.f32.gmra.mxu0 %v1396
        %v1436 = vpop.f32.mrf.mxu0
        %v1437 = vadd.f32 0.0, %v1436
        %1438 = vmatmul.f32.gmra.mxu0 %v1399
        %v1439 = vpop.f32.mrf.mxu0
        %v1440 = vadd.f32 0.0, %v1439
        %1441 = vmatmul.f32.gmra.mxu0 %v1402
        %v1442 = vpop.f32.mrf.mxu0
        %v1443 = vadd.f32 0.0, %v1442
        %1444 = vmatmul.f32.gmra.mxu0 %v1405
        %v1445 = vpop.f32.mrf.mxu0
        %v1446 = vadd.f32 0.0, %v1445
        %1447 = vdwg.mxu0
        %v1448 = vadd.f32 %v1252, %v1425
        %v1449 = vadd.f32 %v1255, %v1428
        %v1450 = vadd.f32 %v1258, %v1431
        %v1451 = vadd.f32 %v1261, %v1434
        %v1452 = vadd.f32 %v1264, %v1437
        %v1453 = vadd.f32 %v1267, %v1440
        %v1454 = vadd.f32 %v1270, %v1443
        %v1455 = vadd.f32 %v1273, %v1446
        %s1456 = scalar_lea.vmem [#allocation5], 384
        %v1457 = vld [vmem:[%s1456] sm:$0xff]
        %v1458 = vld [vmem:[%s1456 + $0x8] sm:$0xff]
        %v1459 = vld [vmem:[%s1456 + $0x10] sm:$0xff]
        %v1460 = vld [vmem:[%s1456 + $0x18] sm:$0xff]
        %v1461 = vld [vmem:[%s1456 + $0x20] sm:$0xff]
        %v1462 = vld [vmem:[%s1456 + $0x28] sm:$0xff]
        %v1463 = vld [vmem:[%s1456 + $0x30] sm:$0xff]
        %v1464 = vld [vmem:[%s1456 + $0x38] sm:$0xff]
        %v1465 = vld [vmem:[%s1456 + $0x40] sm:$0xff]
        %v1466 = vld [vmem:[%s1456 + $0x48] sm:$0xff]
        %v1467 = vld [vmem:[%s1456 + $0x50] sm:$0xff]
        %v1468 = vld [vmem:[%s1456 + $0x58] sm:$0xff]
        %v1469 = vld [vmem:[%s1456 + $0x60] sm:$0xff]
        %v1470 = vld [vmem:[%s1456 + $0x68] sm:$0xff]
        %v1471 = vld [vmem:[%s1456 + $0x70] sm:$0xff]
        %v1472 = vld [vmem:[%s1456 + $0x78] sm:$0xff]
        %1473 = vmatpush.msra.mxu0 %v913
        %1474 = vmatpush.msra.mxu0 %v912
        %1475 = vmatpush.msra.mxu0 %v911
        %1476 = vmatpush.msra.mxu0 %v910
        %1477 = vmatpush.msra.mxu0 %v909
        %1478 = vmatpush.msra.mxu0 %v908
        %1479 = vmatpush.msra.mxu0 %v907
        %1480 = vmatpush.msra.mxu0 %v906
        %1481 = vmatpush.msra.mxu0 %v905
        %1482 = vmatpush.msra.mxu0 %v904
        %1483 = vmatpush.msra.mxu0 %v903
        %1484 = vmatpush.msra.mxu0 %v902
        %1485 = vmatpush.msra.mxu0 %v901
        %1486 = vmatpush.msra.mxu0 %v900
        %1487 = vmatpush.msra.mxu0 %v899
        %1488 = vmatpush.msra.mxu0 %v898
        %1489 = vmatmul.f32.gmra.mxu0 %v1457
        %v1490 = vpop.f32.mrf.mxu0
        %v1491 = vadd.f32 0.0, %v1490
        %1492 = vmatmul.f32.gmra.mxu0 %v1459
        %v1493 = vpop.f32.mrf.mxu0
        %v1494 = vadd.f32 0.0, %v1493
        %1495 = vmatmul.f32.gmra.mxu0 %v1461
        %v1496 = vpop.f32.mrf.mxu0
        %v1497 = vadd.f32 0.0, %v1496
        %1498 = vmatmul.f32.gmra.mxu0 %v1463
        %v1499 = vpop.f32.mrf.mxu0
        %v1500 = vadd.f32 0.0, %v1499
        %1501 = vmatmul.f32.gmra.mxu0 %v1465
        %v1502 = vpop.f32.mrf.mxu0
        %v1503 = vadd.f32 0.0, %v1502
        %1504 = vmatmul.f32.gmra.mxu0 %v1467
        %v1505 = vpop.f32.mrf.mxu0
        %v1506 = vadd.f32 0.0, %v1505
        %1507 = vmatmul.f32.gmra.mxu0 %v1469
        %v1508 = vpop.f32.mrf.mxu0
        %v1509 = vadd.f32 0.0, %v1508
        %1510 = vmatmul.f32.gmra.mxu0 %v1471
        %v1511 = vpop.f32.mrf.mxu0
        %v1512 = vadd.f32 0.0, %v1511
        %1513 = vdwg.mxu0
        %1514 = vmatpush.msra.mxu0 %v929
        %1515 = vmatpush.msra.mxu0 %v928
        %1516 = vmatpush.msra.mxu0 %v927
        %1517 = vmatpush.msra.mxu0 %v926
        %1518 = vmatpush.msra.mxu0 %v925
        %1519 = vmatpush.msra.mxu0 %v924
        %1520 = vmatpush.msra.mxu0 %v923
        %1521 = vmatpush.msra.mxu0 %v922
        %1522 = vmatpush.msra.mxu0 %v921
        %1523 = vmatpush.msra.mxu0 %v920
        %1524 = vmatpush.msra.mxu0 %v919
        %1525 = vmatpush.msra.mxu0 %v918
        %1526 = vmatpush.msra.mxu0 %v917
        %1527 = vmatpush.msra.mxu0 %v916
        %1528 = vmatpush.msra.mxu0 %v915
        %1529 = vmatpush.msra.mxu0 %v914
        %1530 = vmatmul.f32.gmra.mxu0 %v1458
        %v1531 = vpop.f32.mrf.mxu0
        %v1532 = vadd.f32 %v1491, %v1531
        %1533 = vmatmul.f32.gmra.mxu0 %v1460
        %v1534 = vpop.f32.mrf.mxu0
        %v1535 = vadd.f32 %v1494, %v1534
        %1536 = vmatmul.f32.gmra.mxu0 %v1462
        %v1537 = vpop.f32.mrf.mxu0
        %v1538 = vadd.f32 %v1497, %v1537
        %1539 = vmatmul.f32.gmra.mxu0 %v1464
        %v1540 = vpop.f32.mrf.mxu0
        %v1541 = vadd.f32 %v1500, %v1540
        %1542 = vmatmul.f32.gmra.mxu0 %v1466
        %v1543 = vpop.f32.mrf.mxu0
        %v1544 = vadd.f32 %v1503, %v1543
        %1545 = vmatmul.f32.gmra.mxu0 %v1468
        %v1546 = vpop.f32.mrf.mxu0
        %v1547 = vadd.f32 %v1506, %v1546
        %1548 = vmatmul.f32.gmra.mxu0 %v1470
        %v1549 = vpop.f32.mrf.mxu0
        %v1550 = vadd.f32 %v1509, %v1549
        %1551 = vmatmul.f32.gmra.mxu0 %v1472
        %v1552 = vpop.f32.mrf.mxu0
        %v1553 = vadd.f32 %v1512, %v1552
        %1554 = vdwg.mxu0
        %s1555 = scalar_lea.vmem [#allocation7], 192
        %v1556 = vld [vmem:[%s1555] sm:$0xff]
        %v1557 = vld [vmem:[%s1555 + $0x8] sm:$0xff]
        %v1558 = vld [vmem:[%s1555 + $0x10] sm:$0xff]
        %v1559 = vld [vmem:[%s1555 + $0x18] sm:$0xff]
        %v1560 = vld [vmem:[%s1555 + $0x20] sm:$0xff]
        %v1561 = vld [vmem:[%s1555 + $0x28] sm:$0xff]
        %v1562 = vld [vmem:[%s1555 + $0x30] sm:$0xff]
        %v1563 = vld [vmem:[%s1555 + $0x38] sm:$0xff]
        %v1565 = vsel %vm1144, %v1532, 0
        %v1568 = vsel %vm1144, %v1535, 0
        %v1571 = vsel %vm1144, %v1538, 0
        %v1574 = vsel %vm1144, %v1541, 0
        %v1577 = vsel %vm1144, %v1544, 0
        %v1580 = vsel %vm1144, %v1547, 0
        %v1583 = vsel %vm1144, %v1550, 0
        %v1586 = vsel %vm1144, %v1553, 0
        %1588 = vmatpush.msra.mxu0 0.0
        %1589 = vmatpush.msra.mxu0 0.0
        %1590 = vmatpush.msra.mxu0 0.0
        %1591 = vmatpush.msra.mxu0 0.0
        %1592 = vmatpush.msra.mxu0 0.0
        %1593 = vmatpush.msra.mxu0 0.0
        %1594 = vmatpush.msra.mxu0 0.0
        %1595 = vmatpush.msra.mxu0 0.0
        %1596 = vmatpush.msra.mxu0 %v1563
        %1597 = vmatpush.msra.mxu0 %v1562
        %1598 = vmatpush.msra.mxu0 %v1561
        %1599 = vmatpush.msra.mxu0 %v1560
        %1600 = vmatpush.msra.mxu0 %v1559
        %1601 = vmatpush.msra.mxu0 %v1558
        %1602 = vmatpush.msra.mxu0 %v1557
        %1603 = vmatpush.msra.mxu0 %v1556
        %1604 = vmatmul.f32.gmra.mxu0 %v1565
        %v1605 = vpop.f32.mrf.mxu0
        %v1606 = vadd.f32 0.0, %v1605
        %1607 = vmatmul.f32.gmra.mxu0 %v1568
        %v1608 = vpop.f32.mrf.mxu0
        %v1609 = vadd.f32 0.0, %v1608
        %1610 = vmatmul.f32.gmra.mxu0 %v1571
        %v1611 = vpop.f32.mrf.mxu0
        %v1612 = vadd.f32 0.0, %v1611
        %1613 = vmatmul.f32.gmra.mxu0 %v1574
        %v1614 = vpop.f32.mrf.mxu0
        %v1615 = vadd.f32 0.0, %v1614
        %1616 = vmatmul.f32.gmra.mxu0 %v1577
        %v1617 = vpop.f32.mrf.mxu0
        %v1618 = vadd.f32 0.0, %v1617
        %1619 = vmatmul.f32.gmra.mxu0 %v1580
        %v1620 = vpop.f32.mrf.mxu0
        %v1621 = vadd.f32 0.0, %v1620
        %1622 = vmatmul.f32.gmra.mxu0 %v1583
        %v1623 = vpop.f32.mrf.mxu0
        %v1624 = vadd.f32 0.0, %v1623
        %1625 = vmatmul.f32.gmra.mxu0 %v1586
        %v1626 = vpop.f32.mrf.mxu0
        %v1627 = vadd.f32 0.0, %v1626
        %1628 = vdwg.mxu0
        %v1629 = vadd.f32 %v1448, %v1606
        %v1630 = vadd.f32 %v1449, %v1609
        %v1631 = vadd.f32 %v1450, %v1612
        %v1632 = vadd.f32 %v1451, %v1615
        %v1633 = vadd.f32 %v1452, %v1618
        %v1634 = vadd.f32 %v1453, %v1621
        %v1635 = vadd.f32 %v1454, %v1624
        %v1636 = vadd.f32 %v1455, %v1627
        %s1637 = scalar_lea.vmem [#allocation5], 512
        %v1638 = vld [vmem:[%s1637] sm:$0xff]
        %v1639 = vld [vmem:[%s1637 + $0x8] sm:$0xff]
        %v1640 = vld [vmem:[%s1637 + $0x10] sm:$0xff]
        %v1641 = vld [vmem:[%s1637 + $0x18] sm:$0xff]
        %v1642 = vld [vmem:[%s1637 + $0x20] sm:$0xff]
        %v1643 = vld [vmem:[%s1637 + $0x28] sm:$0xff]
        %v1644 = vld [vmem:[%s1637 + $0x30] sm:$0xff]
        %v1645 = vld [vmem:[%s1637 + $0x38] sm:$0xff]
        %v1646 = vld [vmem:[%s1637 + $0x40] sm:$0xff]
        %v1647 = vld [vmem:[%s1637 + $0x48] sm:$0xff]
        %v1648 = vld [vmem:[%s1637 + $0x50] sm:$0xff]
        %v1649 = vld [vmem:[%s1637 + $0x58] sm:$0xff]
        %v1650 = vld [vmem:[%s1637 + $0x60] sm:$0xff]
        %v1651 = vld [vmem:[%s1637 + $0x68] sm:$0xff]
        %v1652 = vld [vmem:[%s1637 + $0x70] sm:$0xff]
        %v1653 = vld [vmem:[%s1637 + $0x78] sm:$0xff]
        %1654 = vmatpush.msra.mxu0 %v913
        %1655 = vmatpush.msra.mxu0 %v912
        %1656 = vmatpush.msra.mxu0 %v911
        %1657 = vmatpush.msra.mxu0 %v910
        %1658 = vmatpush.msra.mxu0 %v909
        %1659 = vmatpush.msra.mxu0 %v908
        %1660 = vmatpush.msra.mxu0 %v907
        %1661 = vmatpush.msra.mxu0 %v906
        %1662 = vmatpush.msra.mxu0 %v905
        %1663 = vmatpush.msra.mxu0 %v904
        %1664 = vmatpush.msra.mxu0 %v903
        %1665 = vmatpush.msra.mxu0 %v902
        %1666 = vmatpush.msra.mxu0 %v901
        %1667 = vmatpush.msra.mxu0 %v900
        %1668 = vmatpush.msra.mxu0 %v899
        %1669 = vmatpush.msra.mxu0 %v898
        %1670 = vmatmul.f32.gmra.mxu0 %v1638
        %v1671 = vpop.f32.mrf.mxu0
        %v1672 = vadd.f32 0.0, %v1671
        %1673 = vmatmul.f32.gmra.mxu0 %v1640
        %v1674 = vpop.f32.mrf.mxu0
        %v1675 = vadd.f32 0.0, %v1674
        %1676 = vmatmul.f32.gmra.mxu0 %v1642
        %v1677 = vpop.f32.mrf.mxu0
        %v1678 = vadd.f32 0.0, %v1677
        %1679 = vmatmul.f32.gmra.mxu0 %v1644
        %v1680 = vpop.f32.mrf.mxu0
        %v1681 = vadd.f32 0.0, %v1680
        %1682 = vmatmul.f32.gmra.mxu0 %v1646
        %v1683 = vpop.f32.mrf.mxu0
        %v1684 = vadd.f32 0.0, %v1683
        %1685 = vmatmul.f32.gmra.mxu0 %v1648
        %v1686 = vpop.f32.mrf.mxu0
        %v1687 = vadd.f32 0.0, %v1686
        %1688 = vmatmul.f32.gmra.mxu0 %v1650
        %v1689 = vpop.f32.mrf.mxu0
        %v1690 = vadd.f32 0.0, %v1689
        %1691 = vmatmul.f32.gmra.mxu0 %v1652
        %v1692 = vpop.f32.mrf.mxu0
        %v1693 = vadd.f32 0.0, %v1692
        %1694 = vdwg.mxu0
        %1695 = vmatpush.msra.mxu0 %v929
        %1696 = vmatpush.msra.mxu0 %v928
        %1697 = vmatpush.msra.mxu0 %v927
        %1698 = vmatpush.msra.mxu0 %v926
        %1699 = vmatpush.msra.mxu0 %v925
        %1700 = vmatpush.msra.mxu0 %v924
        %1701 = vmatpush.msra.mxu0 %v923
        %1702 = vmatpush.msra.mxu0 %v922
        %1703 = vmatpush.msra.mxu0 %v921
        %1704 = vmatpush.msra.mxu0 %v920
        %1705 = vmatpush.msra.mxu0 %v919
        %1706 = vmatpush.msra.mxu0 %v918
        %1707 = vmatpush.msra.mxu0 %v917
        %1708 = vmatpush.msra.mxu0 %v916
        %1709 = vmatpush.msra.mxu0 %v915
        %1710 = vmatpush.msra.mxu0 %v914
        %1711 = vmatmul.f32.gmra.mxu0 %v1639
        %v1712 = vpop.f32.mrf.mxu0
        %v1713 = vadd.f32 %v1672, %v1712
        %1714 = vmatmul.f32.gmra.mxu0 %v1641
        %v1715 = vpop.f32.mrf.mxu0
        %v1716 = vadd.f32 %v1675, %v1715
        %1717 = vmatmul.f32.gmra.mxu0 %v1643
        %v1718 = vpop.f32.mrf.mxu0
        %v1719 = vadd.f32 %v1678, %v1718
        %1720 = vmatmul.f32.gmra.mxu0 %v1645
        %v1721 = vpop.f32.mrf.mxu0
        %v1722 = vadd.f32 %v1681, %v1721
        %1723 = vmatmul.f32.gmra.mxu0 %v1647
        %v1724 = vpop.f32.mrf.mxu0
        %v1725 = vadd.f32 %v1684, %v1724
        %1726 = vmatmul.f32.gmra.mxu0 %v1649
        %v1727 = vpop.f32.mrf.mxu0
        %v1728 = vadd.f32 %v1687, %v1727
        %1729 = vmatmul.f32.gmra.mxu0 %v1651
        %v1730 = vpop.f32.mrf.mxu0
        %v1731 = vadd.f32 %v1690, %v1730
        %1732 = vmatmul.f32.gmra.mxu0 %v1653
        %v1733 = vpop.f32.mrf.mxu0
        %v1734 = vadd.f32 %v1693, %v1733
        %1735 = vdwg.mxu0
        %s1736 = scalar_lea.vmem [#allocation7], 256
        %v1737 = vld [vmem:[%s1736] sm:$0xff]
        %v1738 = vld [vmem:[%s1736 + $0x8] sm:$0xff]
        %v1739 = vld [vmem:[%s1736 + $0x10] sm:$0xff]
        %v1740 = vld [vmem:[%s1736 + $0x18] sm:$0xff]
        %v1741 = vld [vmem:[%s1736 + $0x20] sm:$0xff]
        %v1742 = vld [vmem:[%s1736 + $0x28] sm:$0xff]
        %v1743 = vld [vmem:[%s1736 + $0x30] sm:$0xff]
        %v1744 = vld [vmem:[%s1736 + $0x38] sm:$0xff]
        %v1746 = vsel %vm1144, %v1713, 0
        %v1749 = vsel %vm1144, %v1716, 0
        %v1752 = vsel %vm1144, %v1719, 0
        %v1755 = vsel %vm1144, %v1722, 0
        %v1758 = vsel %vm1144, %v1725, 0
        %v1761 = vsel %vm1144, %v1728, 0
        %v1764 = vsel %vm1144, %v1731, 0
        %v1767 = vsel %vm1144, %v1734, 0
        %1769 = vmatpush.msra.mxu0 0.0
        %1770 = vmatpush.msra.mxu0 0.0
        %1771 = vmatpush.msra.mxu0 0.0
        %1772 = vmatpush.msra.mxu0 0.0
        %1773 = vmatpush.msra.mxu0 0.0
        %1774 = vmatpush.msra.mxu0 0.0
        %1775 = vmatpush.msra.mxu0 0.0
        %1776 = vmatpush.msra.mxu0 0.0
        %1777 = vmatpush.msra.mxu0 %v1744
        %1778 = vmatpush.msra.mxu0 %v1743
        %1779 = vmatpush.msra.mxu0 %v1742
        %1780 = vmatpush.msra.mxu0 %v1741
        %1781 = vmatpush.msra.mxu0 %v1740
        %1782 = vmatpush.msra.mxu0 %v1739
        %1783 = vmatpush.msra.mxu0 %v1738
        %1784 = vmatpush.msra.mxu0 %v1737
        %1785 = vmatmul.f32.gmra.mxu0 %v1746
        %v1786 = vpop.f32.mrf.mxu0
        %v1787 = vadd.f32 0.0, %v1786
        %1788 = vmatmul.f32.gmra.mxu0 %v1749
        %v1789 = vpop.f32.mrf.mxu0
        %v1790 = vadd.f32 0.0, %v1789
        %1791 = vmatmul.f32.gmra.mxu0 %v1752
        %v1792 = vpop.f32.mrf.mxu0
        %v1793 = vadd.f32 0.0, %v1792
        %1794 = vmatmul.f32.gmra.mxu0 %v1755
        %v1795 = vpop.f32.mrf.mxu0
        %v1796 = vadd.f32 0.0, %v1795
        %1797 = vmatmul.f32.gmra.mxu0 %v1758
        %v1798 = vpop.f32.mrf.mxu0
        %v1799 = vadd.f32 0.0, %v1798
        %1800 = vmatmul.f32.gmra.mxu0 %v1761
        %v1801 = vpop.f32.mrf.mxu0
        %v1802 = vadd.f32 0.0, %v1801
        %1803 = vmatmul.f32.gmra.mxu0 %v1764
        %v1804 = vpop.f32.mrf.mxu0
        %v1805 = vadd.f32 0.0, %v1804
        %1806 = vmatmul.f32.gmra.mxu0 %v1767
        %v1807 = vpop.f32.mrf.mxu0
        %v1808 = vadd.f32 0.0, %v1807
        %1809 = vdwg.mxu0
        %v1810 = vadd.f32 %v1629, %v1787
        %v1811 = vadd.f32 %v1630, %v1790
        %v1812 = vadd.f32 %v1631, %v1793
        %v1813 = vadd.f32 %v1632, %v1796
        %v1814 = vadd.f32 %v1633, %v1799
        %v1815 = vadd.f32 %v1634, %v1802
        %v1816 = vadd.f32 %v1635, %v1805
        %v1817 = vadd.f32 %v1636, %v1808
        %s1818 = scalar_lea.vmem [#allocation5], 640
        %v1819 = vld [vmem:[%s1818] sm:$0xff]
        %v1820 = vld [vmem:[%s1818 + $0x8] sm:$0xff]
        %v1821 = vld [vmem:[%s1818 + $0x10] sm:$0xff]
        %v1822 = vld [vmem:[%s1818 + $0x18] sm:$0xff]
        %v1823 = vld [vmem:[%s1818 + $0x20] sm:$0xff]
        %v1824 = vld [vmem:[%s1818 + $0x28] sm:$0xff]
        %v1825 = vld [vmem:[%s1818 + $0x30] sm:$0xff]
        %v1826 = vld [vmem:[%s1818 + $0x38] sm:$0xff]
        %v1827 = vld [vmem:[%s1818 + $0x40] sm:$0xff]
        %v1828 = vld [vmem:[%s1818 + $0x48] sm:$0xff]
        %v1829 = vld [vmem:[%s1818 + $0x50] sm:$0xff]
        %v1830 = vld [vmem:[%s1818 + $0x58] sm:$0xff]
        %v1831 = vld [vmem:[%s1818 + $0x60] sm:$0xff]
        %v1832 = vld [vmem:[%s1818 + $0x68] sm:$0xff]
        %v1833 = vld [vmem:[%s1818 + $0x70] sm:$0xff]
        %v1834 = vld [vmem:[%s1818 + $0x78] sm:$0xff]
        %1835 = vmatpush.msra.mxu0 %v913
        %1836 = vmatpush.msra.mxu0 %v912
        %1837 = vmatpush.msra.mxu0 %v911
        %1838 = vmatpush.msra.mxu0 %v910
        %1839 = vmatpush.msra.mxu0 %v909
        %1840 = vmatpush.msra.mxu0 %v908
        %1841 = vmatpush.msra.mxu0 %v907
        %1842 = vmatpush.msra.mxu0 %v906
        %1843 = vmatpush.msra.mxu0 %v905
        %1844 = vmatpush.msra.mxu0 %v904
        %1845 = vmatpush.msra.mxu0 %v903
        %1846 = vmatpush.msra.mxu0 %v902
        %1847 = vmatpush.msra.mxu0 %v901
        %1848 = vmatpush.msra.mxu0 %v900
        %1849 = vmatpush.msra.mxu0 %v899
        %1850 = vmatpush.msra.mxu0 %v898
        %1851 = vmatmul.f32.gmra.mxu0 %v1819
        %v1852 = vpop.f32.mrf.mxu0
        %v1853 = vadd.f32 0.0, %v1852
        %1854 = vmatmul.f32.gmra.mxu0 %v1821
        %v1855 = vpop.f32.mrf.mxu0
        %v1856 = vadd.f32 0.0, %v1855
        %1857 = vmatmul.f32.gmra.mxu0 %v1823
        %v1858 = vpop.f32.mrf.mxu0
        %v1859 = vadd.f32 0.0, %v1858
        %1860 = vmatmul.f32.gmra.mxu0 %v1825
        %v1861 = vpop.f32.mrf.mxu0
        %v1862 = vadd.f32 0.0, %v1861
        %1863 = vmatmul.f32.gmra.mxu0 %v1827
        %v1864 = vpop.f32.mrf.mxu0
        %v1865 = vadd.f32 0.0, %v1864
        %1866 = vmatmul.f32.gmra.mxu0 %v1829
        %v1867 = vpop.f32.mrf.mxu0
        %v1868 = vadd.f32 0.0, %v1867
        %1869 = vmatmul.f32.gmra.mxu0 %v1831
        %v1870 = vpop.f32.mrf.mxu0
        %v1871 = vadd.f32 0.0, %v1870
        %1872 = vmatmul.f32.gmra.mxu0 %v1833
        %v1873 = vpop.f32.mrf.mxu0
        %v1874 = vadd.f32 0.0, %v1873
        %1875 = vdwg.mxu0
        %1876 = vmatpush.msra.mxu0 %v929
        %1877 = vmatpush.msra.mxu0 %v928
        %1878 = vmatpush.msra.mxu0 %v927
        %1879 = vmatpush.msra.mxu0 %v926
        %1880 = vmatpush.msra.mxu0 %v925
        %1881 = vmatpush.msra.mxu0 %v924
        %1882 = vmatpush.msra.mxu0 %v923
        %1883 = vmatpush.msra.mxu0 %v922
        %1884 = vmatpush.msra.mxu0 %v921
        %1885 = vmatpush.msra.mxu0 %v920
        %1886 = vmatpush.msra.mxu0 %v919
        %1887 = vmatpush.msra.mxu0 %v918
        %1888 = vmatpush.msra.mxu0 %v917
        %1889 = vmatpush.msra.mxu0 %v916
        %1890 = vmatpush.msra.mxu0 %v915
        %1891 = vmatpush.msra.mxu0 %v914
        %1892 = vmatmul.f32.gmra.mxu0 %v1820
        %v1893 = vpop.f32.mrf.mxu0
        %v1894 = vadd.f32 %v1853, %v1893
        %1895 = vmatmul.f32.gmra.mxu0 %v1822
        %v1896 = vpop.f32.mrf.mxu0
        %v1897 = vadd.f32 %v1856, %v1896
        %1898 = vmatmul.f32.gmra.mxu0 %v1824
        %v1899 = vpop.f32.mrf.mxu0
        %v1900 = vadd.f32 %v1859, %v1899
        %1901 = vmatmul.f32.gmra.mxu0 %v1826
        %v1902 = vpop.f32.mrf.mxu0
        %v1903 = vadd.f32 %v1862, %v1902
        %1904 = vmatmul.f32.gmra.mxu0 %v1828
        %v1905 = vpop.f32.mrf.mxu0
        %v1906 = vadd.f32 %v1865, %v1905
        %1907 = vmatmul.f32.gmra.mxu0 %v1830
        %v1908 = vpop.f32.mrf.mxu0
        %v1909 = vadd.f32 %v1868, %v1908
        %1910 = vmatmul.f32.gmra.mxu0 %v1832
        %v1911 = vpop.f32.mrf.mxu0
        %v1912 = vadd.f32 %v1871, %v1911
        %1913 = vmatmul.f32.gmra.mxu0 %v1834
        %v1914 = vpop.f32.mrf.mxu0
        %v1915 = vadd.f32 %v1874, %v1914
        %1916 = vdwg.mxu0
        %s1917 = scalar_lea.vmem [#allocation7], 320
        %v1918 = vld [vmem:[%s1917] sm:$0xff]
        %v1919 = vld [vmem:[%s1917 + $0x8] sm:$0xff]
        %v1920 = vld [vmem:[%s1917 + $0x10] sm:$0xff]
        %v1921 = vld [vmem:[%s1917 + $0x18] sm:$0xff]
        %v1922 = vld [vmem:[%s1917 + $0x20] sm:$0xff]
        %v1923 = vld [vmem:[%s1917 + $0x28] sm:$0xff]
        %v1924 = vld [vmem:[%s1917 + $0x30] sm:$0xff]
        %v1925 = vld [vmem:[%s1917 + $0x38] sm:$0xff]
        %v1927 = vsel %vm1144, %v1894, 0
        %v1930 = vsel %vm1144, %v1897, 0
        %v1933 = vsel %vm1144, %v1900, 0
        %v1936 = vsel %vm1144, %v1903, 0
        %v1939 = vsel %vm1144, %v1906, 0
        %v1942 = vsel %vm1144, %v1909, 0
        %v1945 = vsel %vm1144, %v1912, 0
        %v1948 = vsel %vm1144, %v1915, 0
        %1950 = vmatpush.msra.mxu0 0.0
        %1951 = vmatpush.msra.mxu0 0.0
        %1952 = vmatpush.msra.mxu0 0.0
        %1953 = vmatpush.msra.mxu0 0.0
        %1954 = vmatpush.msra.mxu0 0.0
        %1955 = vmatpush.msra.mxu0 0.0
        %1956 = vmatpush.msra.mxu0 0.0
        %1957 = vmatpush.msra.mxu0 0.0
        %1958 = vmatpush.msra.mxu0 %v1925
        %1959 = vmatpush.msra.mxu0 %v1924
        %1960 = vmatpush.msra.mxu0 %v1923
        %1961 = vmatpush.msra.mxu0 %v1922
        %1962 = vmatpush.msra.mxu0 %v1921
        %1963 = vmatpush.msra.mxu0 %v1920
        %1964 = vmatpush.msra.mxu0 %v1919
        %1965 = vmatpush.msra.mxu0 %v1918
        %1966 = vmatmul.f32.gmra.mxu0 %v1927
        %v1967 = vpop.f32.mrf.mxu0
        %v1968 = vadd.f32 0.0, %v1967
        %1969 = vmatmul.f32.gmra.mxu0 %v1930
        %v1970 = vpop.f32.mrf.mxu0
        %v1971 = vadd.f32 0.0, %v1970
        %1972 = vmatmul.f32.gmra.mxu0 %v1933
        %v1973 = vpop.f32.mrf.mxu0
        %v1974 = vadd.f32 0.0, %v1973
        %1975 = vmatmul.f32.gmra.mxu0 %v1936
        %v1976 = vpop.f32.mrf.mxu0
        %v1977 = vadd.f32 0.0, %v1976
        %1978 = vmatmul.f32.gmra.mxu0 %v1939
        %v1979 = vpop.f32.mrf.mxu0
        %v1980 = vadd.f32 0.0, %v1979
        %1981 = vmatmul.f32.gmra.mxu0 %v1942
        %v1982 = vpop.f32.mrf.mxu0
        %v1983 = vadd.f32 0.0, %v1982
        %1984 = vmatmul.f32.gmra.mxu0 %v1945
        %v1985 = vpop.f32.mrf.mxu0
        %v1986 = vadd.f32 0.0, %v1985
        %1987 = vmatmul.f32.gmra.mxu0 %v1948
        %v1988 = vpop.f32.mrf.mxu0
        %v1989 = vadd.f32 0.0, %v1988
        %1990 = vdwg.mxu0
        %v1991 = vadd.f32 %v1810, %v1968
        %v1992 = vadd.f32 %v1811, %v1971
        %v1993 = vadd.f32 %v1812, %v1974
        %v1994 = vadd.f32 %v1813, %v1977
        %v1995 = vadd.f32 %v1814, %v1980
        %v1996 = vadd.f32 %v1815, %v1983
        %v1997 = vadd.f32 %v1816, %v1986
        %v1998 = vadd.f32 %v1817, %v1989
        %s1999 = scalar_lea.vmem [#allocation5], 768
        %v2000 = vld [vmem:[%s1999] sm:$0xff]
        %v2001 = vld [vmem:[%s1999 + $0x8] sm:$0xff]
        %v2002 = vld [vmem:[%s1999 + $0x10] sm:$0xff]
        %v2003 = vld [vmem:[%s1999 + $0x18] sm:$0xff]
        %v2004 = vld [vmem:[%s1999 + $0x20] sm:$0xff]
        %v2005 = vld [vmem:[%s1999 + $0x28] sm:$0xff]
        %v2006 = vld [vmem:[%s1999 + $0x30] sm:$0xff]
        %v2007 = vld [vmem:[%s1999 + $0x38] sm:$0xff]
        %v2008 = vld [vmem:[%s1999 + $0x40] sm:$0xff]
        %v2009 = vld [vmem:[%s1999 + $0x48] sm:$0xff]
        %v2010 = vld [vmem:[%s1999 + $0x50] sm:$0xff]
        %v2011 = vld [vmem:[%s1999 + $0x58] sm:$0xff]
        %v2012 = vld [vmem:[%s1999 + $0x60] sm:$0xff]
        %v2013 = vld [vmem:[%s1999 + $0x68] sm:$0xff]
        %v2014 = vld [vmem:[%s1999 + $0x70] sm:$0xff]
        %v2015 = vld [vmem:[%s1999 + $0x78] sm:$0xff]
        %2016 = vmatpush.msra.mxu0 %v913
        %2017 = vmatpush.msra.mxu0 %v912
        %2018 = vmatpush.msra.mxu0 %v911
        %2019 = vmatpush.msra.mxu0 %v910
        %2020 = vmatpush.msra.mxu0 %v909
        %2021 = vmatpush.msra.mxu0 %v908
        %2022 = vmatpush.msra.mxu0 %v907
        %2023 = vmatpush.msra.mxu0 %v906
        %2024 = vmatpush.msra.mxu0 %v905
        %2025 = vmatpush.msra.mxu0 %v904
        %2026 = vmatpush.msra.mxu0 %v903
        %2027 = vmatpush.msra.mxu0 %v902
        %2028 = vmatpush.msra.mxu0 %v901
        %2029 = vmatpush.msra.mxu0 %v900
        %2030 = vmatpush.msra.mxu0 %v899
        %2031 = vmatpush.msra.mxu0 %v898
        %2032 = vmatmul.f32.gmra.mxu0 %v2000
        %v2033 = vpop.f32.mrf.mxu0
        %v2034 = vadd.f32 0.0, %v2033
        %2035 = vmatmul.f32.gmra.mxu0 %v2002
        %v2036 = vpop.f32.mrf.mxu0
        %v2037 = vadd.f32 0.0, %v2036
        %2038 = vmatmul.f32.gmra.mxu0 %v2004
        %v2039 = vpop.f32.mrf.mxu0
        %v2040 = vadd.f32 0.0, %v2039
        %2041 = vmatmul.f32.gmra.mxu0 %v2006
        %v2042 = vpop.f32.mrf.mxu0
        %v2043 = vadd.f32 0.0, %v2042
        %2044 = vmatmul.f32.gmra.mxu0 %v2008
        %v2045 = vpop.f32.mrf.mxu0
        %v2046 = vadd.f32 0.0, %v2045
        %2047 = vmatmul.f32.gmra.mxu0 %v2010
        %v2048 = vpop.f32.mrf.mxu0
        %v2049 = vadd.f32 0.0, %v2048
        %2050 = vmatmul.f32.gmra.mxu0 %v2012
        %v2051 = vpop.f32.mrf.mxu0
        %v2052 = vadd.f32 0.0, %v2051
        %2053 = vmatmul.f32.gmra.mxu0 %v2014
        %v2054 = vpop.f32.mrf.mxu0
        %v2055 = vadd.f32 0.0, %v2054
        %2056 = vdwg.mxu0
        %2057 = vmatpush.msra.mxu0 %v929
        %2058 = vmatpush.msra.mxu0 %v928
        %2059 = vmatpush.msra.mxu0 %v927
        %2060 = vmatpush.msra.mxu0 %v926
        %2061 = vmatpush.msra.mxu0 %v925
        %2062 = vmatpush.msra.mxu0 %v924
        %2063 = vmatpush.msra.mxu0 %v923
        %2064 = vmatpush.msra.mxu0 %v922
        %2065 = vmatpush.msra.mxu0 %v921
        %2066 = vmatpush.msra.mxu0 %v920
        %2067 = vmatpush.msra.mxu0 %v919
        %2068 = vmatpush.msra.mxu0 %v918
        %2069 = vmatpush.msra.mxu0 %v917
        %2070 = vmatpush.msra.mxu0 %v916
        %2071 = vmatpush.msra.mxu0 %v915
        %2072 = vmatpush.msra.mxu0 %v914
        %2073 = vmatmul.f32.gmra.mxu0 %v2001
        %v2074 = vpop.f32.mrf.mxu0
        %v2075 = vadd.f32 %v2034, %v2074
        %2076 = vmatmul.f32.gmra.mxu0 %v2003
        %v2077 = vpop.f32.mrf.mxu0
        %v2078 = vadd.f32 %v2037, %v2077
        %2079 = vmatmul.f32.gmra.mxu0 %v2005
        %v2080 = vpop.f32.mrf.mxu0
        %v2081 = vadd.f32 %v2040, %v2080
        %2082 = vmatmul.f32.gmra.mxu0 %v2007
        %v2083 = vpop.f32.mrf.mxu0
        %v2084 = vadd.f32 %v2043, %v2083
        %2085 = vmatmul.f32.gmra.mxu0 %v2009
        %v2086 = vpop.f32.mrf.mxu0
        %v2087 = vadd.f32 %v2046, %v2086
        %2088 = vmatmul.f32.gmra.mxu0 %v2011
        %v2089 = vpop.f32.mrf.mxu0
        %v2090 = vadd.f32 %v2049, %v2089
        %2091 = vmatmul.f32.gmra.mxu0 %v2013
        %v2092 = vpop.f32.mrf.mxu0
        %v2093 = vadd.f32 %v2052, %v2092
        %2094 = vmatmul.f32.gmra.mxu0 %v2015
        %v2095 = vpop.f32.mrf.mxu0
        %v2096 = vadd.f32 %v2055, %v2095
        %2097 = vdwg.mxu0
        %s2098 = scalar_lea.vmem [#allocation7], 384
        %v2099 = vld [vmem:[%s2098] sm:$0xff]
        %v2100 = vld [vmem:[%s2098 + $0x8] sm:$0xff]
        %v2101 = vld [vmem:[%s2098 + $0x10] sm:$0xff]
        %v2102 = vld [vmem:[%s2098 + $0x18] sm:$0xff]
        %v2103 = vld [vmem:[%s2098 + $0x20] sm:$0xff]
        %v2104 = vld [vmem:[%s2098 + $0x28] sm:$0xff]
        %v2105 = vld [vmem:[%s2098 + $0x30] sm:$0xff]
        %v2106 = vld [vmem:[%s2098 + $0x38] sm:$0xff]
        %v2108 = vsel %vm1144, %v2075, 0
        %v2111 = vsel %vm1144, %v2078, 0
        %v2114 = vsel %vm1144, %v2081, 0
        %v2117 = vsel %vm1144, %v2084, 0
        %v2120 = vsel %vm1144, %v2087, 0
        %v2123 = vsel %vm1144, %v2090, 0
        %v2126 = vsel %vm1144, %v2093, 0
        %v2129 = vsel %vm1144, %v2096, 0
        %2131 = vmatpush.msra.mxu0 0.0
        %2132 = vmatpush.msra.mxu0 0.0
        %2133 = vmatpush.msra.mxu0 0.0
        %2134 = vmatpush.msra.mxu0 0.0
        %2135 = vmatpush.msra.mxu0 0.0
        %2136 = vmatpush.msra.mxu0 0.0
        %2137 = vmatpush.msra.mxu0 0.0
        %2138 = vmatpush.msra.mxu0 0.0
        %2139 = vmatpush.msra.mxu0 %v2106
        %2140 = vmatpush.msra.mxu0 %v2105
        %2141 = vmatpush.msra.mxu0 %v2104
        %2142 = vmatpush.msra.mxu0 %v2103
        %2143 = vmatpush.msra.mxu0 %v2102
        %2144 = vmatpush.msra.mxu0 %v2101
        %2145 = vmatpush.msra.mxu0 %v2100
        %2146 = vmatpush.msra.mxu0 %v2099
        %2147 = vmatmul.f32.gmra.mxu0 %v2108
        %v2148 = vpop.f32.mrf.mxu0
        %v2149 = vadd.f32 0.0, %v2148
        %2150 = vmatmul.f32.gmra.mxu0 %v2111
        %v2151 = vpop.f32.mrf.mxu0
        %v2152 = vadd.f32 0.0, %v2151
        %2153 = vmatmul.f32.gmra.mxu0 %v2114
        %v2154 = vpop.f32.mrf.mxu0
        %v2155 = vadd.f32 0.0, %v2154
        %2156 = vmatmul.f32.gmra.mxu0 %v2117
        %v2157 = vpop.f32.mrf.mxu0
        %v2158 = vadd.f32 0.0, %v2157
        %2159 = vmatmul.f32.gmra.mxu0 %v2120
        %v2160 = vpop.f32.mrf.mxu0
        %v2161 = vadd.f32 0.0, %v2160
        %2162 = vmatmul.f32.gmra.mxu0 %v2123
        %v2163 = vpop.f32.mrf.mxu0
        %v2164 = vadd.f32 0.0, %v2163
        %2165 = vmatmul.f32.gmra.mxu0 %v2126
        %v2166 = vpop.f32.mrf.mxu0
        %v2167 = vadd.f32 0.0, %v2166
        %2168 = vmatmul.f32.gmra.mxu0 %v2129
        %v2169 = vpop.f32.mrf.mxu0
        %v2170 = vadd.f32 0.0, %v2169
        %2171 = vdwg.mxu0
        %v2172 = vadd.f32 %v1991, %v2149
        %v2173 = vadd.f32 %v1992, %v2152
        %v2174 = vadd.f32 %v1993, %v2155
        %v2175 = vadd.f32 %v1994, %v2158
        %v2176 = vadd.f32 %v1995, %v2161
        %v2177 = vadd.f32 %v1996, %v2164
        %v2178 = vadd.f32 %v1997, %v2167
        %v2179 = vadd.f32 %v1998, %v2170
        %s2180 = scalar_lea.vmem [#allocation5], 896
        %v2181 = vld [vmem:[%s2180] sm:$0xff]
        %v2182 = vld [vmem:[%s2180 + $0x8] sm:$0xff]
        %v2183 = vld [vmem:[%s2180 + $0x10] sm:$0xff]
        %v2184 = vld [vmem:[%s2180 + $0x18] sm:$0xff]
        %v2185 = vld [vmem:[%s2180 + $0x20] sm:$0xff]
        %v2186 = vld [vmem:[%s2180 + $0x28] sm:$0xff]
        %v2187 = vld [vmem:[%s2180 + $0x30] sm:$0xff]
        %v2188 = vld [vmem:[%s2180 + $0x38] sm:$0xff]
        %v2189 = vld [vmem:[%s2180 + $0x40] sm:$0xff]
        %v2190 = vld [vmem:[%s2180 + $0x48] sm:$0xff]
        %v2191 = vld [vmem:[%s2180 + $0x50] sm:$0xff]
        %v2192 = vld [vmem:[%s2180 + $0x58] sm:$0xff]
        %v2193 = vld [vmem:[%s2180 + $0x60] sm:$0xff]
        %v2194 = vld [vmem:[%s2180 + $0x68] sm:$0xff]
        %v2195 = vld [vmem:[%s2180 + $0x70] sm:$0xff]
        %v2196 = vld [vmem:[%s2180 + $0x78] sm:$0xff]
        %2197 = vmatpush.msra.mxu0 %v913
        %2198 = vmatpush.msra.mxu0 %v912
        %2199 = vmatpush.msra.mxu0 %v911
        %2200 = vmatpush.msra.mxu0 %v910
        %2201 = vmatpush.msra.mxu0 %v909
        %2202 = vmatpush.msra.mxu0 %v908
        %2203 = vmatpush.msra.mxu0 %v907
        %2204 = vmatpush.msra.mxu0 %v906
        %2205 = vmatpush.msra.mxu0 %v905
        %2206 = vmatpush.msra.mxu0 %v904
        %2207 = vmatpush.msra.mxu0 %v903
        %2208 = vmatpush.msra.mxu0 %v902
        %2209 = vmatpush.msra.mxu0 %v901
        %2210 = vmatpush.msra.mxu0 %v900
        %2211 = vmatpush.msra.mxu0 %v899
        %2212 = vmatpush.msra.mxu0 %v898
        %2213 = vmatmul.f32.gmra.mxu0 %v2181
        %v2214 = vpop.f32.mrf.mxu0
        %v2215 = vadd.f32 0.0, %v2214
        %2216 = vmatmul.f32.gmra.mxu0 %v2183
        %v2217 = vpop.f32.mrf.mxu0
        %v2218 = vadd.f32 0.0, %v2217
        %2219 = vmatmul.f32.gmra.mxu0 %v2185
        %v2220 = vpop.f32.mrf.mxu0
        %v2221 = vadd.f32 0.0, %v2220
        %2222 = vmatmul.f32.gmra.mxu0 %v2187
        %v2223 = vpop.f32.mrf.mxu0
        %v2224 = vadd.f32 0.0, %v2223
        %2225 = vmatmul.f32.gmra.mxu0 %v2189
        %v2226 = vpop.f32.mrf.mxu0
        %v2227 = vadd.f32 0.0, %v2226
        %2228 = vmatmul.f32.gmra.mxu0 %v2191
        %v2229 = vpop.f32.mrf.mxu0
        %v2230 = vadd.f32 0.0, %v2229
        %2231 = vmatmul.f32.gmra.mxu0 %v2193
        %v2232 = vpop.f32.mrf.mxu0
        %v2233 = vadd.f32 0.0, %v2232
        %2234 = vmatmul.f32.gmra.mxu0 %v2195
        %v2235 = vpop.f32.mrf.mxu0
        %v2236 = vadd.f32 0.0, %v2235
        %2237 = vdwg.mxu0
        %2238 = vmatpush.msra.mxu0 %v929
        %2239 = vmatpush.msra.mxu0 %v928
        %2240 = vmatpush.msra.mxu0 %v927
        %2241 = vmatpush.msra.mxu0 %v926
        %2242 = vmatpush.msra.mxu0 %v925
        %2243 = vmatpush.msra.mxu0 %v924
        %2244 = vmatpush.msra.mxu0 %v923
        %2245 = vmatpush.msra.mxu0 %v922
        %2246 = vmatpush.msra.mxu0 %v921
        %2247 = vmatpush.msra.mxu0 %v920
        %2248 = vmatpush.msra.mxu0 %v919
        %2249 = vmatpush.msra.mxu0 %v918
        %2250 = vmatpush.msra.mxu0 %v917
        %2251 = vmatpush.msra.mxu0 %v916
        %2252 = vmatpush.msra.mxu0 %v915
        %2253 = vmatpush.msra.mxu0 %v914
        %2254 = vmatmul.f32.gmra.mxu0 %v2182
        %v2255 = vpop.f32.mrf.mxu0
        %v2256 = vadd.f32 %v2215, %v2255
        %2257 = vmatmul.f32.gmra.mxu0 %v2184
        %v2258 = vpop.f32.mrf.mxu0
        %v2259 = vadd.f32 %v2218, %v2258
        %2260 = vmatmul.f32.gmra.mxu0 %v2186
        %v2261 = vpop.f32.mrf.mxu0
        %v2262 = vadd.f32 %v2221, %v2261
        %2263 = vmatmul.f32.gmra.mxu0 %v2188
        %v2264 = vpop.f32.mrf.mxu0
        %v2265 = vadd.f32 %v2224, %v2264
        %2266 = vmatmul.f32.gmra.mxu0 %v2190
        %v2267 = vpop.f32.mrf.mxu0
        %v2268 = vadd.f32 %v2227, %v2267
        %2269 = vmatmul.f32.gmra.mxu0 %v2192
        %v2270 = vpop.f32.mrf.mxu0
        %v2271 = vadd.f32 %v2230, %v2270
        %2272 = vmatmul.f32.gmra.mxu0 %v2194
        %v2273 = vpop.f32.mrf.mxu0
        %v2274 = vadd.f32 %v2233, %v2273
        %2275 = vmatmul.f32.gmra.mxu0 %v2196
        %v2276 = vpop.f32.mrf.mxu0
        %v2277 = vadd.f32 %v2236, %v2276
        %2278 = vdwg.mxu0
        %s2279 = scalar_lea.vmem [#allocation7], 448
        %v2280 = vld [vmem:[%s2279] sm:$0xff]
        %v2281 = vld [vmem:[%s2279 + $0x8] sm:$0xff]
        %v2282 = vld [vmem:[%s2279 + $0x10] sm:$0xff]
        %v2283 = vld [vmem:[%s2279 + $0x18] sm:$0xff]
        %v2284 = vld [vmem:[%s2279 + $0x20] sm:$0xff]
        %v2285 = vld [vmem:[%s2279 + $0x28] sm:$0xff]
        %v2286 = vld [vmem:[%s2279 + $0x30] sm:$0xff]
        %v2287 = vld [vmem:[%s2279 + $0x38] sm:$0xff]
        %v2289 = vsel %vm1144, %v2256, 0
        %v2292 = vsel %vm1144, %v2259, 0
        %v2295 = vsel %vm1144, %v2262, 0
        %v2298 = vsel %vm1144, %v2265, 0
        %v2301 = vsel %vm1144, %v2268, 0
        %v2304 = vsel %vm1144, %v2271, 0
        %v2307 = vsel %vm1144, %v2274, 0
        %v2310 = vsel %vm1144, %v2277, 0
        %2312 = vmatpush.msra.mxu0 0.0
        %2313 = vmatpush.msra.mxu0 0.0
        %2314 = vmatpush.msra.mxu0 0.0
        %2315 = vmatpush.msra.mxu0 0.0
        %2316 = vmatpush.msra.mxu0 0.0
        %2317 = vmatpush.msra.mxu0 0.0
        %2318 = vmatpush.msra.mxu0 0.0
        %2319 = vmatpush.msra.mxu0 0.0
        %2320 = vmatpush.msra.mxu0 %v2287
        %2321 = vmatpush.msra.mxu0 %v2286
        %2322 = vmatpush.msra.mxu0 %v2285
        %2323 = vmatpush.msra.mxu0 %v2284
        %2324 = vmatpush.msra.mxu0 %v2283
        %2325 = vmatpush.msra.mxu0 %v2282
        %2326 = vmatpush.msra.mxu0 %v2281
        %2327 = vmatpush.msra.mxu0 %v2280
        %2328 = vmatmul.f32.gmra.mxu0 %v2289
        %v2329 = vpop.f32.mrf.mxu0
        %v2330 = vadd.f32 0.0, %v2329
        %2331 = vmatmul.f32.gmra.mxu0 %v2292
        %v2332 = vpop.f32.mrf.mxu0
        %v2333 = vadd.f32 0.0, %v2332
        %2334 = vmatmul.f32.gmra.mxu0 %v2295
        %v2335 = vpop.f32.mrf.mxu0
        %v2336 = vadd.f32 0.0, %v2335
        %2337 = vmatmul.f32.gmra.mxu0 %v2298
        %v2338 = vpop.f32.mrf.mxu0
        %v2339 = vadd.f32 0.0, %v2338
        %2340 = vmatmul.f32.gmra.mxu0 %v2301
        %v2341 = vpop.f32.mrf.mxu0
        %v2342 = vadd.f32 0.0, %v2341
        %2343 = vmatmul.f32.gmra.mxu0 %v2304
        %v2344 = vpop.f32.mrf.mxu0
        %v2345 = vadd.f32 0.0, %v2344
        %2346 = vmatmul.f32.gmra.mxu0 %v2307
        %v2347 = vpop.f32.mrf.mxu0
        %v2348 = vadd.f32 0.0, %v2347
        %2349 = vmatmul.f32.gmra.mxu0 %v2310
        %v2350 = vpop.f32.mrf.mxu0
        %v2351 = vadd.f32 0.0, %v2350
        %2352 = vdwg.mxu0
        %v2353 = vadd.f32 %v2172, %v2330
        %v2354 = vadd.f32 %v2173, %v2333
        %v2355 = vadd.f32 %v2174, %v2336
        %v2356 = vadd.f32 %v2175, %v2339
        %v2357 = vadd.f32 %v2176, %v2342
        %v2358 = vadd.f32 %v2177, %v2345
        %v2359 = vadd.f32 %v2178, %v2348
        %v2360 = vadd.f32 %v2179, %v2351
        %s2361 = scalar_lea.vmem [#allocation5], 1024
        %v2362 = vld [vmem:[%s2361] sm:$0xff]
        %v2363 = vld [vmem:[%s2361 + $0x8] sm:$0xff]
        %v2364 = vld [vmem:[%s2361 + $0x10] sm:$0xff]
        %v2365 = vld [vmem:[%s2361 + $0x18] sm:$0xff]
        %v2366 = vld [vmem:[%s2361 + $0x20] sm:$0xff]
        %v2367 = vld [vmem:[%s2361 + $0x28] sm:$0xff]
        %v2368 = vld [vmem:[%s2361 + $0x30] sm:$0xff]
        %v2369 = vld [vmem:[%s2361 + $0x38] sm:$0xff]
        %v2370 = vld [vmem:[%s2361 + $0x40] sm:$0xff]
        %v2371 = vld [vmem:[%s2361 + $0x48] sm:$0xff]
        %v2372 = vld [vmem:[%s2361 + $0x50] sm:$0xff]
        %v2373 = vld [vmem:[%s2361 + $0x58] sm:$0xff]
        %v2374 = vld [vmem:[%s2361 + $0x60] sm:$0xff]
        %v2375 = vld [vmem:[%s2361 + $0x68] sm:$0xff]
        %v2376 = vld [vmem:[%s2361 + $0x70] sm:$0xff]
        %v2377 = vld [vmem:[%s2361 + $0x78] sm:$0xff]
        %2378 = vmatpush.msra.mxu0 %v913
        %2379 = vmatpush.msra.mxu0 %v912
        %2380 = vmatpush.msra.mxu0 %v911
        %2381 = vmatpush.msra.mxu0 %v910
        %2382 = vmatpush.msra.mxu0 %v909
        %2383 = vmatpush.msra.mxu0 %v908
        %2384 = vmatpush.msra.mxu0 %v907
        %2385 = vmatpush.msra.mxu0 %v906
        %2386 = vmatpush.msra.mxu0 %v905
        %2387 = vmatpush.msra.mxu0 %v904
        %2388 = vmatpush.msra.mxu0 %v903
        %2389 = vmatpush.msra.mxu0 %v902
        %2390 = vmatpush.msra.mxu0 %v901
        %2391 = vmatpush.msra.mxu0 %v900
        %2392 = vmatpush.msra.mxu0 %v899
        %2393 = vmatpush.msra.mxu0 %v898
        %2394 = vmatmul.f32.gmra.mxu0 %v2362
        %v2395 = vpop.f32.mrf.mxu0
        %v2396 = vadd.f32 0.0, %v2395
        %2397 = vmatmul.f32.gmra.mxu0 %v2364
        %v2398 = vpop.f32.mrf.mxu0
        %v2399 = vadd.f32 0.0, %v2398
        %2400 = vmatmul.f32.gmra.mxu0 %v2366
        %v2401 = vpop.f32.mrf.mxu0
        %v2402 = vadd.f32 0.0, %v2401
        %2403 = vmatmul.f32.gmra.mxu0 %v2368
        %v2404 = vpop.f32.mrf.mxu0
        %v2405 = vadd.f32 0.0, %v2404
        %2406 = vmatmul.f32.gmra.mxu0 %v2370
        %v2407 = vpop.f32.mrf.mxu0
        %v2408 = vadd.f32 0.0, %v2407
        %2409 = vmatmul.f32.gmra.mxu0 %v2372
        %v2410 = vpop.f32.mrf.mxu0
        %v2411 = vadd.f32 0.0, %v2410
        %2412 = vmatmul.f32.gmra.mxu0 %v2374
        %v2413 = vpop.f32.mrf.mxu0
        %v2414 = vadd.f32 0.0, %v2413
        %2415 = vmatmul.f32.gmra.mxu0 %v2376
        %v2416 = vpop.f32.mrf.mxu0
        %v2417 = vadd.f32 0.0, %v2416
        %2418 = vdwg.mxu0
        %2419 = vmatpush.msra.mxu0 %v929
        %2420 = vmatpush.msra.mxu0 %v928
        %2421 = vmatpush.msra.mxu0 %v927
        %2422 = vmatpush.msra.mxu0 %v926
        %2423 = vmatpush.msra.mxu0 %v925
        %2424 = vmatpush.msra.mxu0 %v924
        %2425 = vmatpush.msra.mxu0 %v923
        %2426 = vmatpush.msra.mxu0 %v922
        %2427 = vmatpush.msra.mxu0 %v921
        %2428 = vmatpush.msra.mxu0 %v920
        %2429 = vmatpush.msra.mxu0 %v919
        %2430 = vmatpush.msra.mxu0 %v918
        %2431 = vmatpush.msra.mxu0 %v917
        %2432 = vmatpush.msra.mxu0 %v916
        %2433 = vmatpush.msra.mxu0 %v915
        %2434 = vmatpush.msra.mxu0 %v914
        %2435 = vmatmul.f32.gmra.mxu0 %v2363
        %v2436 = vpop.f32.mrf.mxu0
        %v2437 = vadd.f32 %v2396, %v2436
        %2438 = vmatmul.f32.gmra.mxu0 %v2365
        %v2439 = vpop.f32.mrf.mxu0
        %v2440 = vadd.f32 %v2399, %v2439
        %2441 = vmatmul.f32.gmra.mxu0 %v2367
        %v2442 = vpop.f32.mrf.mxu0
        %v2443 = vadd.f32 %v2402, %v2442
        %2444 = vmatmul.f32.gmra.mxu0 %v2369
        %v2445 = vpop.f32.mrf.mxu0
        %v2446 = vadd.f32 %v2405, %v2445
        %2447 = vmatmul.f32.gmra.mxu0 %v2371
        %v2448 = vpop.f32.mrf.mxu0
        %v2449 = vadd.f32 %v2408, %v2448
        %2450 = vmatmul.f32.gmra.mxu0 %v2373
        %v2451 = vpop.f32.mrf.mxu0
        %v2452 = vadd.f32 %v2411, %v2451
        %2453 = vmatmul.f32.gmra.mxu0 %v2375
        %v2454 = vpop.f32.mrf.mxu0
        %v2455 = vadd.f32 %v2414, %v2454
        %2456 = vmatmul.f32.gmra.mxu0 %v2377
        %v2457 = vpop.f32.mrf.mxu0
        %v2458 = vadd.f32 %v2417, %v2457
        %2459 = vdwg.mxu0
        %s2460 = scalar_lea.vmem [#allocation7], 512
        %v2461 = vld [vmem:[%s2460] sm:$0xff]
        %v2462 = vld [vmem:[%s2460 + $0x8] sm:$0xff]
        %v2463 = vld [vmem:[%s2460 + $0x10] sm:$0xff]
        %v2464 = vld [vmem:[%s2460 + $0x18] sm:$0xff]
        %v2465 = vld [vmem:[%s2460 + $0x20] sm:$0xff]
        %v2466 = vld [vmem:[%s2460 + $0x28] sm:$0xff]
        %v2467 = vld [vmem:[%s2460 + $0x30] sm:$0xff]
        %v2468 = vld [vmem:[%s2460 + $0x38] sm:$0xff]
        %v2470 = vsel %vm1144, %v2437, 0
        %v2473 = vsel %vm1144, %v2440, 0
        %v2476 = vsel %vm1144, %v2443, 0
        %v2479 = vsel %vm1144, %v2446, 0
        %v2482 = vsel %vm1144, %v2449, 0
        %v2485 = vsel %vm1144, %v2452, 0
        %v2488 = vsel %vm1144, %v2455, 0
        %v2491 = vsel %vm1144, %v2458, 0
        %2493 = vmatpush.msra.mxu0 0.0
        %2494 = vmatpush.msra.mxu0 0.0
        %2495 = vmatpush.msra.mxu0 0.0
        %2496 = vmatpush.msra.mxu0 0.0
        %2497 = vmatpush.msra.mxu0 0.0
        %2498 = vmatpush.msra.mxu0 0.0
        %2499 = vmatpush.msra.mxu0 0.0
        %2500 = vmatpush.msra.mxu0 0.0
        %2501 = vmatpush.msra.mxu0 %v2468
        %2502 = vmatpush.msra.mxu0 %v2467
        %2503 = vmatpush.msra.mxu0 %v2466
        %2504 = vmatpush.msra.mxu0 %v2465
        %2505 = vmatpush.msra.mxu0 %v2464
        %2506 = vmatpush.msra.mxu0 %v2463
        %2507 = vmatpush.msra.mxu0 %v2462
        %2508 = vmatpush.msra.mxu0 %v2461
        %2509 = vmatmul.f32.gmra.mxu0 %v2470
        %v2510 = vpop.f32.mrf.mxu0
        %v2511 = vadd.f32 0.0, %v2510
        %2512 = vmatmul.f32.gmra.mxu0 %v2473
        %v2513 = vpop.f32.mrf.mxu0
        %v2514 = vadd.f32 0.0, %v2513
        %2515 = vmatmul.f32.gmra.mxu0 %v2476
        %v2516 = vpop.f32.mrf.mxu0
        %v2517 = vadd.f32 0.0, %v2516
        %2518 = vmatmul.f32.gmra.mxu0 %v2479
        %v2519 = vpop.f32.mrf.mxu0
        %v2520 = vadd.f32 0.0, %v2519
        %2521 = vmatmul.f32.gmra.mxu0 %v2482
        %v2522 = vpop.f32.mrf.mxu0
        %v2523 = vadd.f32 0.0, %v2522
        %2524 = vmatmul.f32.gmra.mxu0 %v2485
        %v2525 = vpop.f32.mrf.mxu0
        %v2526 = vadd.f32 0.0, %v2525
        %2527 = vmatmul.f32.gmra.mxu0 %v2488
        %v2528 = vpop.f32.mrf.mxu0
        %v2529 = vadd.f32 0.0, %v2528
        %2530 = vmatmul.f32.gmra.mxu0 %v2491
        %v2531 = vpop.f32.mrf.mxu0
        %v2532 = vadd.f32 0.0, %v2531
        %2533 = vdwg.mxu0
        %v2534 = vadd.f32 %v2353, %v2511
        %v2535 = vadd.f32 %v2354, %v2514
        %v2536 = vadd.f32 %v2355, %v2517
        %v2537 = vadd.f32 %v2356, %v2520
        %v2538 = vadd.f32 %v2357, %v2523
        %v2539 = vadd.f32 %v2358, %v2526
        %v2540 = vadd.f32 %v2359, %v2529
        %v2541 = vadd.f32 %v2360, %v2532
        %v2542 = vld [vmem:[#allocation8] sm:$0x1]
        %v2544 = vperm.slane %v2542, 0
        %v2546 = vadd.f32 %v2534, %v2544
        %v2547 = vadd.f32 %v2535, %v2544
        %v2548 = vadd.f32 %v2536, %v2544
        %v2549 = vadd.f32 %v2537, %v2544
        %v2550 = vadd.f32 %v2538, %v2544
        %v2551 = vadd.f32 %v2539, %v2544
        %v2552 = vadd.f32 %v2540, %v2544
        %v2553 = vadd.f32 %v2541, %v2544
        %vm2554 = vcmp.ge.f32.partialorder %v2546, 0.0
        %vm2555 = vcmp.ge.f32.partialorder %v2547, 0.0
        %vm2556 = vcmp.ge.f32.partialorder %v2548, 0.0
        %vm2557 = vcmp.ge.f32.partialorder %v2549, 0.0
        %vm2558 = vcmp.ge.f32.partialorder %v2550, 0.0
        %vm2559 = vcmp.ge.f32.partialorder %v2551, 0.0
        %vm2560 = vcmp.ge.f32.partialorder %v2552, 0.0
        %vm2561 = vcmp.ge.f32.partialorder %v2553, 0.0
        %v2562 = vmul.f32 %v2546, 0.2
        %v2563 = vmul.f32 %v2547, 0.2
        %v2564 = vmul.f32 %v2548, 0.2
        %v2565 = vmul.f32 %v2549, 0.2
        %v2566 = vmul.f32 %v2550, 0.2
        %v2567 = vmul.f32 %v2551, 0.2
        %v2568 = vmul.f32 %v2552, 0.2
        %v2569 = vmul.f32 %v2553, 0.2
        %v2570 = vsel %vm2554, %v2546, %v2562
        %v2571 = vsel %vm2555, %v2547, %v2563
        %v2572 = vsel %vm2556, %v2548, %v2564
        %v2573 = vsel %vm2557, %v2549, %v2565
        %v2574 = vsel %vm2558, %v2550, %v2566
        %v2575 = vsel %vm2559, %v2551, %v2567
        %v2576 = vsel %vm2560, %v2552, %v2568
        %v2577 = vsel %vm2561, %v2553, %v2569
        %v2578 = vadd.f32 %v2570, %v2571
        %v2579 = vadd.f32 %v2578, %v2572
        %v2580 = vadd.f32 %v2579, %v2573
        %v2581 = vadd.f32 %v2580, %v2574
        %v2582 = vadd.f32 %v2581, %v2575
        %v2583 = vadd.f32 %v2582, %v2576
        %v2584 = vadd.f32 %v2583, %v2577
        %v2585 = vrot.slane %v2584, 4
        %v2586 = vadd.f32 %v2584, %v2585
        %v2587 = vrot.slane %v2586, 2
        %v2588 = vadd.f32 %v2586, %v2587
        %v2589 = vrot.slane %v2588, 1
        %v2590 = vadd.f32 %v2588, %v2589
        %v2591 = vrcp.pop 64.0
        %v2592 = vmul.f32 64.0, %v2591
        %v2593 = vsub.f32 1.0, %v2592
        %v2594 = vmul.f32 %v2591, %v2593
        %v2595 = vadd.f32 %v2591, %v2594
        %vm2596 = vweird.f32 %v2591
        %v2597 = vsel %vm2596, %v2591, %v2595
        %v2598 = vmul.f32 %v2590, %v2597
        %v2599 = vsub.f32 %v2570, %v2598
        %v2600 = vsub.f32 %v2571, %v2598
        %v2601 = vsub.f32 %v2572, %v2598
        %v2602 = vsub.f32 %v2573, %v2598
        %v2603 = vsub.f32 %v2574, %v2598
        %v2604 = vsub.f32 %v2575, %v2598
        %v2605 = vsub.f32 %v2576, %v2598
        %v2606 = vsub.f32 %v2577, %v2598
        %v2607 = vmul.f32 %v2599, %v2599
        %v2608 = vmul.f32 %v2600, %v2600
        %v2609 = vmul.f32 %v2601, %v2601
        %v2610 = vmul.f32 %v2602, %v2602
        %v2611 = vmul.f32 %v2603, %v2603
        %v2612 = vmul.f32 %v2604, %v2604
        %v2613 = vmul.f32 %v2605, %v2605
        %v2614 = vmul.f32 %v2606, %v2606
        %v2615 = vadd.f32 %v2607, %v2608
        %v2616 = vadd.f32 %v2615, %v2609
        %v2617 = vadd.f32 %v2616, %v2610
        %v2618 = vadd.f32 %v2617, %v2611
        %v2619 = vadd.f32 %v2618, %v2612
        %v2620 = vadd.f32 %v2619, %v2613
        %v2621 = vadd.f32 %v2620, %v2614
        %v2622 = vrot.slane %v2621, 4
        %v2623 = vadd.f32 %v2621, %v2622
        %v2624 = vrot.slane %v2623, 2
        %v2625 = vadd.f32 %v2623, %v2624
        %v2626 = vrot.slane %v2625, 1
        %v2627 = vadd.f32 %v2625, %v2626
        %v2628 = vmul.f32 %v2627, %v2597
        %v2629 = vadd.f32 %v2628, 1e-05
        %v2630 = vrsqrt.pop %v2629
        %v2631 = vmul.f32 %v2630, %v2629
        %v2632 = vmul.f32 %v2631, %v2630
        %v2633 = vmul.f32 0.5, %v2632
        %v2634 = vsub.f32 1.5, %v2633
        %v2635 = vmul.f32 %v2630, %v2634
        %vm2636 = vweird.f32 %v2629
        %vm2637 = vweird.f32 %v2630
        %vm2638 = vmor %vm2636, %vm2637
        %v2639 = vsel %vm2638, %v2630, %v2635
        %v2640 = vmul.f32 %v2599, %v2639
        %v2641 = vmul.f32 %v2600, %v2639
        %v2642 = vmul.f32 %v2601, %v2639
        %v2643 = vmul.f32 %v2602, %v2639
        %v2644 = vmul.f32 %v2603, %v2639
        %v2645 = vmul.f32 %v2604, %v2639
        %v2646 = vmul.f32 %v2605, %v2639
        %v2647 = vmul.f32 %v2606, %v2639
        %v2648 = vld [vmem:[#allocation10] sm:$0xff]
        %v2649 = vld [vmem:[#allocation10 + $0x8] sm:$0xff]
        %v2651 = vsel %vm1144, %v2648, 0
        %v2654 = vsel %vm1144, %v2649, 0
        %2656 = vmatpush.msra.mxu0 0.0
        %2657 = vmatpush.msra.mxu0 0.0
        %2658 = vmatpush.msra.mxu0 0.0
        %2659 = vmatpush.msra.mxu0 0.0
        %2660 = vmatpush.msra.mxu0 0.0
        %2661 = vmatpush.msra.mxu0 0.0
        %2662 = vmatpush.msra.mxu0 0.0
        %2663 = vmatpush.msra.mxu0 0.0
        %2664 = vmatpush.msra.mxu0 %v2647
        %2665 = vmatpush.msra.mxu0 %v2646
        %2666 = vmatpush.msra.mxu0 %v2645
        %2667 = vmatpush.msra.mxu0 %v2644
        %2668 = vmatpush.msra.mxu0 %v2643
        %2669 = vmatpush.msra.mxu0 %v2642
        %2670 = vmatpush.msra.mxu0 %v2641
        %2671 = vmatpush.msra.mxu0 %v2640
        %2672 = vmatmul.f32.gmra.mxu0 %v2651
        %v2673 = vpop.f32.mrf.mxu0
        %v2674 = vadd.f32 0.0, %v2673
        %2675 = vmatmul.f32.gmra.mxu0 %v2654
        %v2676 = vpop.f32.mrf.mxu0
        %v2677 = vadd.f32 0.0, %v2676
        %2678 = vdwg.mxu0
        %v2679 = vld [vmem:[#allocation11] sm:$0xff]
        %v2680 = vld [vmem:[#allocation11 + $0x8] sm:$0xff]
        %v2681 = vld [vmem:[#allocation11 + $0x10] sm:$0xff]
        %v2682 = vld [vmem:[#allocation11 + $0x18] sm:$0xff]
        %v2683 = vld [vmem:[#allocation11 + $0x20] sm:$0xff]
        %v2684 = vld [vmem:[#allocation11 + $0x28] sm:$0xff]
        %v2685 = vld [vmem:[#allocation11 + $0x30] sm:$0xff]
        %v2686 = vld [vmem:[#allocation11 + $0x38] sm:$0xff]
        %v2687 = vld [vmem:[#allocation11 + $0x40] sm:$0xff]
        %v2688 = vld [vmem:[#allocation11 + $0x48] sm:$0xff]
        %v2689 = vld [vmem:[#allocation11 + $0x50] sm:$0xff]
        %v2690 = vld [vmem:[#allocation11 + $0x58] sm:$0xff]
        %v2691 = vld [vmem:[#allocation11 + $0x60] sm:$0xff]
        %v2692 = vld [vmem:[#allocation11 + $0x68] sm:$0xff]
        %v2693 = vld [vmem:[#allocation11 + $0x70] sm:$0xff]
        %v2694 = vld [vmem:[#allocation11 + $0x78] sm:$0xff]
        %v2695 = vld [vmem:[#allocation11 + $0x80] sm:$0xff]
        %v2696 = vld [vmem:[#allocation11 + $0x88] sm:$0xff]
        %v2697 = vld [vmem:[#allocation11 + $0x90] sm:$0xff]
        %v2698 = vld [vmem:[#allocation11 + $0x98] sm:$0xff]
        %v2699 = vld [vmem:[#allocation11 + $0xa0] sm:$0xff]
        %v2700 = vld [vmem:[#allocation11 + $0xa8] sm:$0xff]
        %v2701 = vld [vmem:[#allocation11 + $0xb0] sm:$0xff]
        %v2702 = vld [vmem:[#allocation11 + $0xb8] sm:$0xff]
        %v2703 = vld [vmem:[#allocation11 + $0xc0] sm:$0xff]
        %v2704 = vld [vmem:[#allocation11 + $0xc8] sm:$0xff]
        %v2705 = vld [vmem:[#allocation11 + $0xd0] sm:$0xff]
        %v2706 = vld [vmem:[#allocation11 + $0xd8] sm:$0xff]
        %v2707 = vld [vmem:[#allocation11 + $0xe0] sm:$0xff]
        %v2708 = vld [vmem:[#allocation11 + $0xe8] sm:$0xff]
        %v2709 = vld [vmem:[#allocation11 + $0xf0] sm:$0xff]
        %v2710 = vld [vmem:[#allocation11 + $0xf8] sm:$0xff]
        %s2711 = scalar_lea.vmem [#allocation10], 16
        %v2712 = vld [vmem:[%s2711] sm:$0xff]
        %v2713 = vld [vmem:[%s2711 + $0x8] sm:$0xff]
        %v2715 = vsel %vm1144, %v2712, 0
        %v2718 = vsel %vm1144, %v2713, 0
        %2720 = vmatpush.msra.mxu0 0.0
        %2721 = vmatpush.msra.mxu0 0.0
        %2722 = vmatpush.msra.mxu0 0.0
        %2723 = vmatpush.msra.mxu0 0.0
        %2724 = vmatpush.msra.mxu0 0.0
        %2725 = vmatpush.msra.mxu0 0.0
        %2726 = vmatpush.msra.mxu0 0.0
        %2727 = vmatpush.msra.mxu0 0.0
        %2728 = vmatpush.msra.mxu0 %v2647
        %2729 = vmatpush.msra.mxu0 %v2646
        %2730 = vmatpush.msra.mxu0 %v2645
        %2731 = vmatpush.msra.mxu0 %v2644
        %2732 = vmatpush.msra.mxu0 %v2643
        %2733 = vmatpush.msra.mxu0 %v2642
        %2734 = vmatpush.msra.mxu0 %v2641
        %2735 = vmatpush.msra.mxu0 %v2640
        %2736 = vmatmul.f32.gmra.mxu0 %v2715
        %v2737 = vpop.f32.mrf.mxu0
        %v2738 = vadd.f32 0.0, %v2737
        %2739 = vmatmul.f32.gmra.mxu0 %v2718
        %v2740 = vpop.f32.mrf.mxu0
        %v2741 = vadd.f32 0.0, %v2740
        %2742 = vdwg.mxu0
        %s2743 = scalar_lea.vmem [#allocation11], 256
        %v2744 = vld [vmem:[%s2743] sm:$0xff]
        %v2745 = vld [vmem:[%s2743 + $0x8] sm:$0xff]
        %v2746 = vld [vmem:[%s2743 + $0x10] sm:$0xff]
        %v2747 = vld [vmem:[%s2743 + $0x18] sm:$0xff]
        %v2748 = vld [vmem:[%s2743 + $0x20] sm:$0xff]
        %v2749 = vld [vmem:[%s2743 + $0x28] sm:$0xff]
        %v2750 = vld [vmem:[%s2743 + $0x30] sm:$0xff]
        %v2751 = vld [vmem:[%s2743 + $0x38] sm:$0xff]
        %v2752 = vld [vmem:[%s2743 + $0x40] sm:$0xff]
        %v2753 = vld [vmem:[%s2743 + $0x48] sm:$0xff]
        %v2754 = vld [vmem:[%s2743 + $0x50] sm:$0xff]
        %v2755 = vld [vmem:[%s2743 + $0x58] sm:$0xff]
        %v2756 = vld [vmem:[%s2743 + $0x60] sm:$0xff]
        %v2757 = vld [vmem:[%s2743 + $0x68] sm:$0xff]
        %v2758 = vld [vmem:[%s2743 + $0x70] sm:$0xff]
        %v2759 = vld [vmem:[%s2743 + $0x78] sm:$0xff]
        %v2760 = vld [vmem:[%s2743 + $0x80] sm:$0xff]
        %v2761 = vld [vmem:[%s2743 + $0x88] sm:$0xff]
        %v2762 = vld [vmem:[%s2743 + $0x90] sm:$0xff]
        %v2763 = vld [vmem:[%s2743 + $0x98] sm:$0xff]
        %v2764 = vld [vmem:[%s2743 + $0xa0] sm:$0xff]
        %v2765 = vld [vmem:[%s2743 + $0xa8] sm:$0xff]
        %v2766 = vld [vmem:[%s2743 + $0xb0] sm:$0xff]
        %v2767 = vld [vmem:[%s2743 + $0xb8] sm:$0xff]
        %v2768 = vld [vmem:[%s2743 + $0xc0] sm:$0xff]
        %v2769 = vld [vmem:[%s2743 + $0xc8] sm:$0xff]
        %v2770 = vld [vmem:[%s2743 + $0xd0] sm:$0xff]
        %v2771 = vld [vmem:[%s2743 + $0xd8] sm:$0xff]
        %v2772 = vld [vmem:[%s2743 + $0xe0] sm:$0xff]
        %v2773 = vld [vmem:[%s2743 + $0xe8] sm:$0xff]
        %v2774 = vld [vmem:[%s2743 + $0xf0] sm:$0xff]
        %v2775 = vld [vmem:[%s2743 + $0xf8] sm:$0xff]
        %2776 = vmatpush.msra.mxu0 %v2774
        %2777 = vmatpush.msra.mxu0 %v2772
        %2778 = vmatpush.msra.mxu0 %v2770
        %2779 = vmatpush.msra.mxu0 %v2768
        %2780 = vmatpush.msra.mxu0 %v2766
        %2781 = vmatpush.msra.mxu0 %v2764
        %2782 = vmatpush.msra.mxu0 %v2762
        %2783 = vmatpush.msra.mxu0 %v2760
        %2784 = vmatpush.msra.mxu0 %v2758
        %2785 = vmatpush.msra.mxu0 %v2756
        %2786 = vmatpush.msra.mxu0 %v2754
        %2787 = vmatpush.msra.mxu0 %v2752
        %2788 = vmatpush.msra.mxu0 %v2750
        %2789 = vmatpush.msra.mxu0 %v2748
        %2790 = vmatpush.msra.mxu0 %v2746
        %2791 = vmatpush.msra.mxu0 %v2744
        %2792 = vmatmul.f32.gmra.mxu0 %v2738
        %v2793 = vpop.f32.mrf.mxu0
        %v2794 = vadd.f32 0.0, %v2793
        %2795 = vmatmul.f32.gmra.mxu0 %v2741
        %v2796 = vpop.f32.mrf.mxu0
        %v2797 = vadd.f32 0.0, %v2796
        %2798 = vdwg.mxu0
        %2799 = vmatpush.msra.mxu0 %v2775
        %2800 = vmatpush.msra.mxu0 %v2773
        %2801 = vmatpush.msra.mxu0 %v2771
        %2802 = vmatpush.msra.mxu0 %v2769
        %2803 = vmatpush.msra.mxu0 %v2767
        %2804 = vmatpush.msra.mxu0 %v2765
        %2805 = vmatpush.msra.mxu0 %v2763
        %2806 = vmatpush.msra.mxu0 %v2761
        %2807 = vmatpush.msra.mxu0 %v2759
        %2808 = vmatpush.msra.mxu0 %v2757
        %2809 = vmatpush.msra.mxu0 %v2755
        %2810 = vmatpush.msra.mxu0 %v2753
        %2811 = vmatpush.msra.mxu0 %v2751
        %2812 = vmatpush.msra.mxu0 %v2749
        %2813 = vmatpush.msra.mxu0 %v2747
        %2814 = vmatpush.msra.mxu0 %v2745
        %2815 = vmatmul.f32.gmra.mxu0 %v2738
        %v2816 = vpop.f32.mrf.mxu0
        %v2817 = vadd.f32 0.0, %v2816
        %2818 = vmatmul.f32.gmra.mxu0 %v2741
        %v2819 = vpop.f32.mrf.mxu0
        %v2820 = vadd.f32 0.0, %v2819
        %2821 = vdwg.mxu0
        %2822 = vmatpush.msra.mxu0 %v2709
        %2823 = vmatpush.msra.mxu0 %v2707
        %2824 = vmatpush.msra.mxu0 %v2705
        %2825 = vmatpush.msra.mxu0 %v2703
        %2826 = vmatpush.msra.mxu0 %v2701
        %2827 = vmatpush.msra.mxu0 %v2699
        %2828 = vmatpush.msra.mxu0 %v2697
        %2829 = vmatpush.msra.mxu0 %v2695
        %2830 = vmatpush.msra.mxu0 %v2693
        %2831 = vmatpush.msra.mxu0 %v2691
        %2832 = vmatpush.msra.mxu0 %v2689
        %2833 = vmatpush.msra.mxu0 %v2687
        %2834 = vmatpush.msra.mxu0 %v2685
        %2835 = vmatpush.msra.mxu0 %v2683
        %2836 = vmatpush.msra.mxu0 %v2681
        %2837 = vmatpush.msra.mxu0 %v2679
        %2838 = vmatmul.f32.gmra.mxu0 %v2674
        %v2839 = vpop.f32.mrf.mxu0
        %v2840 = vadd.f32 %v2794, %v2839
        %2841 = vmatmul.f32.gmra.mxu0 %v2677
        %v2842 = vpop.f32.mrf.mxu0
        %v2843 = vadd.f32 %v2797, %v2842
        %2844 = vdwg.mxu0
        %2845 = vmatpush.msra.mxu0 %v2710
        %2846 = vmatpush.msra.mxu0 %v2708
        %2847 = vmatpush.msra.mxu0 %v2706
        %2848 = vmatpush.msra.mxu0 %v2704
        %2849 = vmatpush.msra.mxu0 %v2702
        %2850 = vmatpush.msra.mxu0 %v2700
        %2851 = vmatpush.msra.mxu0 %v2698
        %2852 = vmatpush.msra.mxu0 %v2696
        %2853 = vmatpush.msra.mxu0 %v2694
        %2854 = vmatpush.msra.mxu0 %v2692
        %2855 = vmatpush.msra.mxu0 %v2690
        %2856 = vmatpush.msra.mxu0 %v2688
        %2857 = vmatpush.msra.mxu0 %v2686
        %2858 = vmatpush.msra.mxu0 %v2684
        %2859 = vmatpush.msra.mxu0 %v2682
        %2860 = vmatpush.msra.mxu0 %v2680
        %2861 = vmatmul.f32.gmra.mxu0 %v2674
        %v2862 = vpop.f32.mrf.mxu0
        %v2863 = vadd.f32 %v2817, %v2862
        %2864 = vmatmul.f32.gmra.mxu0 %v2677
        %v2865 = vpop.f32.mrf.mxu0
        %v2866 = vadd.f32 %v2820, %v2865
        %2867 = vdwg.mxu0
        %s2868 = scalar_lea.vmem [#allocation10], 32
        %v2869 = vld [vmem:[%s2868] sm:$0xff]
        %v2870 = vld [vmem:[%s2868 + $0x8] sm:$0xff]
        %v2872 = vsel %vm1144, %v2869, 0
        %v2875 = vsel %vm1144, %v2870, 0
        %2877 = vmatpush.msra.mxu0 0.0
        %2878 = vmatpush.msra.mxu0 0.0
        %2879 = vmatpush.msra.mxu0 0.0
        %2880 = vmatpush.msra.mxu0 0.0
        %2881 = vmatpush.msra.mxu0 0.0
        %2882 = vmatpush.msra.mxu0 0.0
        %2883 = vmatpush.msra.mxu0 0.0
        %2884 = vmatpush.msra.mxu0 0.0
        %2885 = vmatpush.msra.mxu0 %v2647
        %2886 = vmatpush.msra.mxu0 %v2646
        %2887 = vmatpush.msra.mxu0 %v2645
        %2888 = vmatpush.msra.mxu0 %v2644
        %2889 = vmatpush.msra.mxu0 %v2643
        %2890 = vmatpush.msra.mxu0 %v2642
        %2891 = vmatpush.msra.mxu0 %v2641
        %2892 = vmatpush.msra.mxu0 %v2640
        %2893 = vmatmul.f32.gmra.mxu0 %v2872
        %v2894 = vpop.f32.mrf.mxu0
        %v2895 = vadd.f32 0.0, %v2894
        %2896 = vmatmul.f32.gmra.mxu0 %v2875
        %v2897 = vpop.f32.mrf.mxu0
        %v2898 = vadd.f32 0.0, %v2897
        %2899 = vdwg.mxu0
        %s2900 = scalar_lea.vmem [#allocation11], 512
        %v2901 = vld [vmem:[%s2900] sm:$0xff]
        %v2902 = vld [vmem:[%s2900 + $0x8] sm:$0xff]
        %v2903 = vld [vmem:[%s2900 + $0x10] sm:$0xff]
        %v2904 = vld [vmem:[%s2900 + $0x18] sm:$0xff]
        %v2905 = vld [vmem:[%s2900 + $0x20] sm:$0xff]
        %v2906 = vld [vmem:[%s2900 + $0x28] sm:$0xff]
        %v2907 = vld [vmem:[%s2900 + $0x30] sm:$0xff]
        %v2908 = vld [vmem:[%s2900 + $0x38] sm:$0xff]
        %v2909 = vld [vmem:[%s2900 + $0x40] sm:$0xff]
        %v2910 = vld [vmem:[%s2900 + $0x48] sm:$0xff]
        %v2911 = vld [vmem:[%s2900 + $0x50] sm:$0xff]
        %v2912 = vld [vmem:[%s2900 + $0x58] sm:$0xff]
        %v2913 = vld [vmem:[%s2900 + $0x60] sm:$0xff]
        %v2914 = vld [vmem:[%s2900 + $0x68] sm:$0xff]
        %v2915 = vld [vmem:[%s2900 + $0x70] sm:$0xff]
        %v2916 = vld [vmem:[%s2900 + $0x78] sm:$0xff]
        %v2917 = vld [vmem:[%s2900 + $0x80] sm:$0xff]
        %v2918 = vld [vmem:[%s2900 + $0x88] sm:$0xff]
        %v2919 = vld [vmem:[%s2900 + $0x90] sm:$0xff]
        %v2920 = vld [vmem:[%s2900 + $0x98] sm:$0xff]
        %v2921 = vld [vmem:[%s2900 + $0xa0] sm:$0xff]
        %v2922 = vld [vmem:[%s2900 + $0xa8] sm:$0xff]
        %v2923 = vld [vmem:[%s2900 + $0xb0] sm:$0xff]
        %v2924 = vld [vmem:[%s2900 + $0xb8] sm:$0xff]
        %v2925 = vld [vmem:[%s2900 + $0xc0] sm:$0xff]
        %v2926 = vld [vmem:[%s2900 + $0xc8] sm:$0xff]
        %v2927 = vld [vmem:[%s2900 + $0xd0] sm:$0xff]
        %v2928 = vld [vmem:[%s2900 + $0xd8] sm:$0xff]
        %v2929 = vld [vmem:[%s2900 + $0xe0] sm:$0xff]
        %v2930 = vld [vmem:[%s2900 + $0xe8] sm:$0xff]
        %v2931 = vld [vmem:[%s2900 + $0xf0] sm:$0xff]
        %v2932 = vld [vmem:[%s2900 + $0xf8] sm:$0xff]
        %2933 = vmatpush.msra.mxu0 %v2931
        %2934 = vmatpush.msra.mxu0 %v2929
        %2935 = vmatpush.msra.mxu0 %v2927
        %2936 = vmatpush.msra.mxu0 %v2925
        %2937 = vmatpush.msra.mxu0 %v2923
        %2938 = vmatpush.msra.mxu0 %v2921
        %2939 = vmatpush.msra.mxu0 %v2919
        %2940 = vmatpush.msra.mxu0 %v2917
        %2941 = vmatpush.msra.mxu0 %v2915
        %2942 = vmatpush.msra.mxu0 %v2913
        %2943 = vmatpush.msra.mxu0 %v2911
        %2944 = vmatpush.msra.mxu0 %v2909
        %2945 = vmatpush.msra.mxu0 %v2907
        %2946 = vmatpush.msra.mxu0 %v2905
        %2947 = vmatpush.msra.mxu0 %v2903
        %2948 = vmatpush.msra.mxu0 %v2901
        %2949 = vmatmul.f32.gmra.mxu0 %v2895
        %v2950 = vpop.f32.mrf.mxu0
        %v2951 = vadd.f32 0.0, %v2950
        %2952 = vmatmul.f32.gmra.mxu0 %v2898
        %v2953 = vpop.f32.mrf.mxu0
        %v2954 = vadd.f32 0.0, %v2953
        %2955 = vdwg.mxu0
        %2956 = vmatpush.msra.mxu0 %v2932
        %2957 = vmatpush.msra.mxu0 %v2930
        %2958 = vmatpush.msra.mxu0 %v2928
        %2959 = vmatpush.msra.mxu0 %v2926
        %2960 = vmatpush.msra.mxu0 %v2924
        %2961 = vmatpush.msra.mxu0 %v2922
        %2962 = vmatpush.msra.mxu0 %v2920
        %2963 = vmatpush.msra.mxu0 %v2918
        %2964 = vmatpush.msra.mxu0 %v2916
        %2965 = vmatpush.msra.mxu0 %v2914
        %2966 = vmatpush.msra.mxu0 %v2912
        %2967 = vmatpush.msra.mxu0 %v2910
        %2968 = vmatpush.msra.mxu0 %v2908
        %2969 = vmatpush.msra.mxu0 %v2906
        %2970 = vmatpush.msra.mxu0 %v2904
        %2971 = vmatpush.msra.mxu0 %v2902
        %2972 = vmatmul.f32.gmra.mxu0 %v2895
        %v2973 = vpop.f32.mrf.mxu0
        %v2974 = vadd.f32 0.0, %v2973
        %2975 = vmatmul.f32.gmra.mxu0 %v2898
        %v2976 = vpop.f32.mrf.mxu0
        %v2977 = vadd.f32 0.0, %v2976
        %2978 = vdwg.mxu0
        %v2979 = vadd.f32 %v2840, %v2951
        %v2980 = vadd.f32 %v2863, %v2974
        %v2981 = vadd.f32 %v2843, %v2954
        %v2982 = vadd.f32 %v2866, %v2977
        %s2983 = scalar_lea.vmem [#allocation10], 48
        %v2984 = vld [vmem:[%s2983] sm:$0xff]
        %v2985 = vld [vmem:[%s2983 + $0x8] sm:$0xff]
        %v2987 = vsel %vm1144, %v2984, 0
        %v2990 = vsel %vm1144, %v2985, 0
        %2992 = vmatpush.msra.mxu0 0.0
        %2993 = vmatpush.msra.mxu0 0.0
        %2994 = vmatpush.msra.mxu0 0.0
        %2995 = vmatpush.msra.mxu0 0.0
        %2996 = vmatpush.msra.mxu0 0.0
        %2997 = vmatpush.msra.mxu0 0.0
        %2998 = vmatpush.msra.mxu0 0.0
        %2999 = vmatpush.msra.mxu0 0.0
        %3000 = vmatpush.msra.mxu0 %v2647
        %3001 = vmatpush.msra.mxu0 %v2646
        %3002 = vmatpush.msra.mxu0 %v2645
        %3003 = vmatpush.msra.mxu0 %v2644
        %3004 = vmatpush.msra.mxu0 %v2643
        %3005 = vmatpush.msra.mxu0 %v2642
        %3006 = vmatpush.msra.mxu0 %v2641
        %3007 = vmatpush.msra.mxu0 %v2640
        %3008 = vmatmul.f32.gmra.mxu0 %v2987
        %v3009 = vpop.f32.mrf.mxu0
        %v3010 = vadd.f32 0.0, %v3009
        %3011 = vmatmul.f32.gmra.mxu0 %v2990
        %v3012 = vpop.f32.mrf.mxu0
        %v3013 = vadd.f32 0.0, %v3012
        %3014 = vdwg.mxu0
        %s3015 = scalar_lea.vmem [#allocation11], 768
        %v3016 = vld [vmem:[%s3015] sm:$0xff]
        %v3017 = vld [vmem:[%s3015 + $0x8] sm:$0xff]
        %v3018 = vld [vmem:[%s3015 + $0x10] sm:$0xff]
        %v3019 = vld [vmem:[%s3015 + $0x18] sm:$0xff]
        %v3020 = vld [vmem:[%s3015 + $0x20] sm:$0xff]
        %v3021 = vld [vmem:[%s3015 + $0x28] sm:$0xff]
        %v3022 = vld [vmem:[%s3015 + $0x30] sm:$0xff]
        %v3023 = vld [vmem:[%s3015 + $0x38] sm:$0xff]
        %v3024 = vld [vmem:[%s3015 + $0x40] sm:$0xff]
        %v3025 = vld [vmem:[%s3015 + $0x48] sm:$0xff]
        %v3026 = vld [vmem:[%s3015 + $0x50] sm:$0xff]
        %v3027 = vld [vmem:[%s3015 + $0x58] sm:$0xff]
        %v3028 = vld [vmem:[%s3015 + $0x60] sm:$0xff]
        %v3029 = vld [vmem:[%s3015 + $0x68] sm:$0xff]
        %v3030 = vld [vmem:[%s3015 + $0x70] sm:$0xff]
        %v3031 = vld [vmem:[%s3015 + $0x78] sm:$0xff]
        %v3032 = vld [vmem:[%s3015 + $0x80] sm:$0xff]
        %v3033 = vld [vmem:[%s3015 + $0x88] sm:$0xff]
        %v3034 = vld [vmem:[%s3015 + $0x90] sm:$0xff]
        %v3035 = vld [vmem:[%s3015 + $0x98] sm:$0xff]
        %v3036 = vld [vmem:[%s3015 + $0xa0] sm:$0xff]
        %v3037 = vld [vmem:[%s3015 + $0xa8] sm:$0xff]
        %v3038 = vld [vmem:[%s3015 + $0xb0] sm:$0xff]
        %v3039 = vld [vmem:[%s3015 + $0xb8] sm:$0xff]
        %v3040 = vld [vmem:[%s3015 + $0xc0] sm:$0xff]
        %v3041 = vld [vmem:[%s3015 + $0xc8] sm:$0xff]
        %v3042 = vld [vmem:[%s3015 + $0xd0] sm:$0xff]
        %v3043 = vld [vmem:[%s3015 + $0xd8] sm:$0xff]
        %v3044 = vld [vmem:[%s3015 + $0xe0] sm:$0xff]
        %v3045 = vld [vmem:[%s3015 + $0xe8] sm:$0xff]
        %v3046 = vld [vmem:[%s3015 + $0xf0] sm:$0xff]
        %v3047 = vld [vmem:[%s3015 + $0xf8] sm:$0xff]
        %3048 = vmatpush.msra.mxu0 %v3046
        %3049 = vmatpush.msra.mxu0 %v3044
        %3050 = vmatpush.msra.mxu0 %v3042
        %3051 = vmatpush.msra.mxu0 %v3040
        %3052 = vmatpush.msra.mxu0 %v3038
        %3053 = vmatpush.msra.mxu0 %v3036
        %3054 = vmatpush.msra.mxu0 %v3034
        %3055 = vmatpush.msra.mxu0 %v3032
        %3056 = vmatpush.msra.mxu0 %v3030
        %3057 = vmatpush.msra.mxu0 %v3028
        %3058 = vmatpush.msra.mxu0 %v3026
        %3059 = vmatpush.msra.mxu0 %v3024
        %3060 = vmatpush.msra.mxu0 %v3022
        %3061 = vmatpush.msra.mxu0 %v3020
        %3062 = vmatpush.msra.mxu0 %v3018
        %3063 = vmatpush.msra.mxu0 %v3016
        %3064 = vmatmul.f32.gmra.mxu0 %v3010
        %v3065 = vpop.f32.mrf.mxu0
        %v3066 = vadd.f32 0.0, %v3065
        %3067 = vmatmul.f32.gmra.mxu0 %v3013
        %v3068 = vpop.f32.mrf.mxu0
        %v3069 = vadd.f32 0.0, %v3068
        %3070 = vdwg.mxu0
        %3071 = vmatpush.msra.mxu0 %v3047
        %3072 = vmatpush.msra.mxu0 %v3045
        %3073 = vmatpush.msra.mxu0 %v3043
        %3074 = vmatpush.msra.mxu0 %v3041
        %3075 = vmatpush.msra.mxu0 %v3039
        %3076 = vmatpush.msra.mxu0 %v3037
        %3077 = vmatpush.msra.mxu0 %v3035
        %3078 = vmatpush.msra.mxu0 %v3033
        %3079 = vmatpush.msra.mxu0 %v3031
        %3080 = vmatpush.msra.mxu0 %v3029
        %3081 = vmatpush.msra.mxu0 %v3027
        %3082 = vmatpush.msra.mxu0 %v3025
        %3083 = vmatpush.msra.mxu0 %v3023
        %3084 = vmatpush.msra.mxu0 %v3021
        %3085 = vmatpush.msra.mxu0 %v3019
        %3086 = vmatpush.msra.mxu0 %v3017
        %3087 = vmatmul.f32.gmra.mxu0 %v3010
        %v3088 = vpop.f32.mrf.mxu0
        %v3089 = vadd.f32 0.0, %v3088
        %3090 = vmatmul.f32.gmra.mxu0 %v3013
        %v3091 = vpop.f32.mrf.mxu0
        %v3092 = vadd.f32 0.0, %v3091
        %3093 = vdwg.mxu0
        %v3094 = vadd.f32 %v2979, %v3066
        %v3095 = vadd.f32 %v2980, %v3089
        %v3096 = vadd.f32 %v2981, %v3069
        %v3097 = vadd.f32 %v2982, %v3092
        %s3098 = scalar_lea.vmem [#allocation10], 64
        %v3099 = vld [vmem:[%s3098] sm:$0xff]
        %v3100 = vld [vmem:[%s3098 + $0x8] sm:$0xff]
        %v3102 = vsel %vm1144, %v3099, 0
        %v3105 = vsel %vm1144, %v3100, 0
        %3107 = vmatpush.msra.mxu0 0.0
        %3108 = vmatpush.msra.mxu0 0.0
        %3109 = vmatpush.msra.mxu0 0.0
        %3110 = vmatpush.msra.mxu0 0.0
        %3111 = vmatpush.msra.mxu0 0.0
        %3112 = vmatpush.msra.mxu0 0.0
        %3113 = vmatpush.msra.mxu0 0.0
        %3114 = vmatpush.msra.mxu0 0.0
        %3115 = vmatpush.msra.mxu0 %v2647
        %3116 = vmatpush.msra.mxu0 %v2646
        %3117 = vmatpush.msra.mxu0 %v2645
        %3118 = vmatpush.msra.mxu0 %v2644
        %3119 = vmatpush.msra.mxu0 %v2643
        %3120 = vmatpush.msra.mxu0 %v2642
        %3121 = vmatpush.msra.mxu0 %v2641
        %3122 = vmatpush.msra.mxu0 %v2640
        %3123 = vmatmul.f32.gmra.mxu0 %v3102
        %v3124 = vpop.f32.mrf.mxu0
        %v3125 = vadd.f32 0.0, %v3124
        %3126 = vmatmul.f32.gmra.mxu0 %v3105
        %v3127 = vpop.f32.mrf.mxu0
        %v3128 = vadd.f32 0.0, %v3127
        %3129 = vdwg.mxu0
        %s3130 = scalar_lea.vmem [#allocation11], 1024
        %v3131 = vld [vmem:[%s3130] sm:$0xff]
        %v3132 = vld [vmem:[%s3130 + $0x8] sm:$0xff]
        %v3133 = vld [vmem:[%s3130 + $0x10] sm:$0xff]
        %v3134 = vld [vmem:[%s3130 + $0x18] sm:$0xff]
        %v3135 = vld [vmem:[%s3130 + $0x20] sm:$0xff]
        %v3136 = vld [vmem:[%s3130 + $0x28] sm:$0xff]
        %v3137 = vld [vmem:[%s3130 + $0x30] sm:$0xff]
        %v3138 = vld [vmem:[%s3130 + $0x38] sm:$0xff]
        %v3139 = vld [vmem:[%s3130 + $0x40] sm:$0xff]
        %v3140 = vld [vmem:[%s3130 + $0x48] sm:$0xff]
        %v3141 = vld [vmem:[%s3130 + $0x50] sm:$0xff]
        %v3142 = vld [vmem:[%s3130 + $0x58] sm:$0xff]
        %v3143 = vld [vmem:[%s3130 + $0x60] sm:$0xff]
        %v3144 = vld [vmem:[%s3130 + $0x68] sm:$0xff]
        %v3145 = vld [vmem:[%s3130 + $0x70] sm:$0xff]
        %v3146 = vld [vmem:[%s3130 + $0x78] sm:$0xff]
        %v3147 = vld [vmem:[%s3130 + $0x80] sm:$0xff]
        %v3148 = vld [vmem:[%s3130 + $0x88] sm:$0xff]
        %v3149 = vld [vmem:[%s3130 + $0x90] sm:$0xff]
        %v3150 = vld [vmem:[%s3130 + $0x98] sm:$0xff]
        %v3151 = vld [vmem:[%s3130 + $0xa0] sm:$0xff]
        %v3152 = vld [vmem:[%s3130 + $0xa8] sm:$0xff]
        %v3153 = vld [vmem:[%s3130 + $0xb0] sm:$0xff]
        %v3154 = vld [vmem:[%s3130 + $0xb8] sm:$0xff]
        %v3155 = vld [vmem:[%s3130 + $0xc0] sm:$0xff]
        %v3156 = vld [vmem:[%s3130 + $0xc8] sm:$0xff]
        %v3157 = vld [vmem:[%s3130 + $0xd0] sm:$0xff]
        %v3158 = vld [vmem:[%s3130 + $0xd8] sm:$0xff]
        %v3159 = vld [vmem:[%s3130 + $0xe0] sm:$0xff]
        %v3160 = vld [vmem:[%s3130 + $0xe8] sm:$0xff]
        %v3161 = vld [vmem:[%s3130 + $0xf0] sm:$0xff]
        %v3162 = vld [vmem:[%s3130 + $0xf8] sm:$0xff]
        %3163 = vmatpush.msra.mxu0 %v3161
        %3164 = vmatpush.msra.mxu0 %v3159
        %3165 = vmatpush.msra.mxu0 %v3157
        %3166 = vmatpush.msra.mxu0 %v3155
        %3167 = vmatpush.msra.mxu0 %v3153
        %3168 = vmatpush.msra.mxu0 %v3151
        %3169 = vmatpush.msra.mxu0 %v3149
        %3170 = vmatpush.msra.mxu0 %v3147
        %3171 = vmatpush.msra.mxu0 %v3145
        %3172 = vmatpush.msra.mxu0 %v3143
        %3173 = vmatpush.msra.mxu0 %v3141
        %3174 = vmatpush.msra.mxu0 %v3139
        %3175 = vmatpush.msra.mxu0 %v3137
        %3176 = vmatpush.msra.mxu0 %v3135
        %3177 = vmatpush.msra.mxu0 %v3133
        %3178 = vmatpush.msra.mxu0 %v3131
        %3179 = vmatmul.f32.gmra.mxu0 %v3125
        %v3180 = vpop.f32.mrf.mxu0
        %v3181 = vadd.f32 0.0, %v3180
        %3182 = vmatmul.f32.gmra.mxu0 %v3128
        %v3183 = vpop.f32.mrf.mxu0
        %v3184 = vadd.f32 0.0, %v3183
        %3185 = vdwg.mxu0
        %3186 = vmatpush.msra.mxu0 %v3162
        %3187 = vmatpush.msra.mxu0 %v3160
        %3188 = vmatpush.msra.mxu0 %v3158
        %3189 = vmatpush.msra.mxu0 %v3156
        %3190 = vmatpush.msra.mxu0 %v3154
        %3191 = vmatpush.msra.mxu0 %v3152
        %3192 = vmatpush.msra.mxu0 %v3150
        %3193 = vmatpush.msra.mxu0 %v3148
        %3194 = vmatpush.msra.mxu0 %v3146
        %3195 = vmatpush.msra.mxu0 %v3144
        %3196 = vmatpush.msra.mxu0 %v3142
        %3197 = vmatpush.msra.mxu0 %v3140
        %3198 = vmatpush.msra.mxu0 %v3138
        %3199 = vmatpush.msra.mxu0 %v3136
        %3200 = vmatpush.msra.mxu0 %v3134
        %3201 = vmatpush.msra.mxu0 %v3132
        %3202 = vmatmul.f32.gmra.mxu0 %v3125
        %v3203 = vpop.f32.mrf.mxu0
        %v3204 = vadd.f32 0.0, %v3203
        %3205 = vmatmul.f32.gmra.mxu0 %v3128
        %v3206 = vpop.f32.mrf.mxu0
        %v3207 = vadd.f32 0.0, %v3206
        %3208 = vdwg.mxu0
        %v3209 = vadd.f32 %v3094, %v3181
        %v3210 = vadd.f32 %v3095, %v3204
        %v3211 = vadd.f32 %v3096, %v3184
        %v3212 = vadd.f32 %v3097, %v3207
        %s3213 = scalar_lea.vmem [#allocation10], 80
        %v3214 = vld [vmem:[%s3213] sm:$0xff]
        %v3215 = vld [vmem:[%s3213 + $0x8] sm:$0xff]
        %v3217 = vsel %vm1144, %v3214, 0
        %v3220 = vsel %vm1144, %v3215, 0
        %3222 = vmatpush.msra.mxu0 0.0
        %3223 = vmatpush.msra.mxu0 0.0
        %3224 = vmatpush.msra.mxu0 0.0
        %3225 = vmatpush.msra.mxu0 0.0
        %3226 = vmatpush.msra.mxu0 0.0
        %3227 = vmatpush.msra.mxu0 0.0
        %3228 = vmatpush.msra.mxu0 0.0
        %3229 = vmatpush.msra.mxu0 0.0
        %3230 = vmatpush.msra.mxu0 %v2647
        %3231 = vmatpush.msra.mxu0 %v2646
        %3232 = vmatpush.msra.mxu0 %v2645
        %3233 = vmatpush.msra.mxu0 %v2644
        %3234 = vmatpush.msra.mxu0 %v2643
        %3235 = vmatpush.msra.mxu0 %v2642
        %3236 = vmatpush.msra.mxu0 %v2641
        %3237 = vmatpush.msra.mxu0 %v2640
        %3238 = vmatmul.f32.gmra.mxu0 %v3217
        %v3239 = vpop.f32.mrf.mxu0
        %v3240 = vadd.f32 0.0, %v3239
        %3241 = vmatmul.f32.gmra.mxu0 %v3220
        %v3242 = vpop.f32.mrf.mxu0
        %v3243 = vadd.f32 0.0, %v3242
        %3244 = vdwg.mxu0
        %s3245 = scalar_lea.vmem [#allocation11], 1280
        %v3246 = vld [vmem:[%s3245] sm:$0xff]
        %v3247 = vld [vmem:[%s3245 + $0x8] sm:$0xff]
        %v3248 = vld [vmem:[%s3245 + $0x10] sm:$0xff]
        %v3249 = vld [vmem:[%s3245 + $0x18] sm:$0xff]
        %v3250 = vld [vmem:[%s3245 + $0x20] sm:$0xff]
        %v3251 = vld [vmem:[%s3245 + $0x28] sm:$0xff]
        %v3252 = vld [vmem:[%s3245 + $0x30] sm:$0xff]
        %v3253 = vld [vmem:[%s3245 + $0x38] sm:$0xff]
        %v3254 = vld [vmem:[%s3245 + $0x40] sm:$0xff]
        %v3255 = vld [vmem:[%s3245 + $0x48] sm:$0xff]
        %v3256 = vld [vmem:[%s3245 + $0x50] sm:$0xff]
        %v3257 = vld [vmem:[%s3245 + $0x58] sm:$0xff]
        %v3258 = vld [vmem:[%s3245 + $0x60] sm:$0xff]
        %v3259 = vld [vmem:[%s3245 + $0x68] sm:$0xff]
        %v3260 = vld [vmem:[%s3245 + $0x70] sm:$0xff]
        %v3261 = vld [vmem:[%s3245 + $0x78] sm:$0xff]
        %v3262 = vld [vmem:[%s3245 + $0x80] sm:$0xff]
        %v3263 = vld [vmem:[%s3245 + $0x88] sm:$0xff]
        %v3264 = vld [vmem:[%s3245 + $0x90] sm:$0xff]
        %v3265 = vld [vmem:[%s3245 + $0x98] sm:$0xff]
        %v3266 = vld [vmem:[%s3245 + $0xa0] sm:$0xff]
        %v3267 = vld [vmem:[%s3245 + $0xa8] sm:$0xff]
        %v3268 = vld [vmem:[%s3245 + $0xb0] sm:$0xff]
        %v3269 = vld [vmem:[%s3245 + $0xb8] sm:$0xff]
        %v3270 = vld [vmem:[%s3245 + $0xc0] sm:$0xff]
        %v3271 = vld [vmem:[%s3245 + $0xc8] sm:$0xff]
        %v3272 = vld [vmem:[%s3245 + $0xd0] sm:$0xff]
        %v3273 = vld [vmem:[%s3245 + $0xd8] sm:$0xff]
        %v3274 = vld [vmem:[%s3245 + $0xe0] sm:$0xff]
        %v3275 = vld [vmem:[%s3245 + $0xe8] sm:$0xff]
        %v3276 = vld [vmem:[%s3245 + $0xf0] sm:$0xff]
        %v3277 = vld [vmem:[%s3245 + $0xf8] sm:$0xff]
        %3278 = vmatpush.msra.mxu0 %v3276
        %3279 = vmatpush.msra.mxu0 %v3274
        %3280 = vmatpush.msra.mxu0 %v3272
        %3281 = vmatpush.msra.mxu0 %v3270
        %3282 = vmatpush.msra.mxu0 %v3268
        %3283 = vmatpush.msra.mxu0 %v3266
        %3284 = vmatpush.msra.mxu0 %v3264
        %3285 = vmatpush.msra.mxu0 %v3262
        %3286 = vmatpush.msra.mxu0 %v3260
        %3287 = vmatpush.msra.mxu0 %v3258
        %3288 = vmatpush.msra.mxu0 %v3256
        %3289 = vmatpush.msra.mxu0 %v3254
        %3290 = vmatpush.msra.mxu0 %v3252
        %3291 = vmatpush.msra.mxu0 %v3250
        %3292 = vmatpush.msra.mxu0 %v3248
        %3293 = vmatpush.msra.mxu0 %v3246
        %3294 = vmatmul.f32.gmra.mxu0 %v3240
        %v3295 = vpop.f32.mrf.mxu0
        %v3296 = vadd.f32 0.0, %v3295
        %3297 = vmatmul.f32.gmra.mxu0 %v3243
        %v3298 = vpop.f32.mrf.mxu0
        %v3299 = vadd.f32 0.0, %v3298
        %3300 = vdwg.mxu0
        %3301 = vmatpush.msra.mxu0 %v3277
        %3302 = vmatpush.msra.mxu0 %v3275
        %3303 = vmatpush.msra.mxu0 %v3273
        %3304 = vmatpush.msra.mxu0 %v3271
        %3305 = vmatpush.msra.mxu0 %v3269
        %3306 = vmatpush.msra.mxu0 %v3267
        %3307 = vmatpush.msra.mxu0 %v3265
        %3308 = vmatpush.msra.mxu0 %v3263
        %3309 = vmatpush.msra.mxu0 %v3261
        %3310 = vmatpush.msra.mxu0 %v3259
        %3311 = vmatpush.msra.mxu0 %v3257
        %3312 = vmatpush.msra.mxu0 %v3255
        %3313 = vmatpush.msra.mxu0 %v3253
        %3314 = vmatpush.msra.mxu0 %v3251
        %3315 = vmatpush.msra.mxu0 %v3249
        %3316 = vmatpush.msra.mxu0 %v3247
        %3317 = vmatmul.f32.gmra.mxu0 %v3240
        %v3318 = vpop.f32.mrf.mxu0
        %v3319 = vadd.f32 0.0, %v3318
        %3320 = vmatmul.f32.gmra.mxu0 %v3243
        %v3321 = vpop.f32.mrf.mxu0
        %v3322 = vadd.f32 0.0, %v3321
        %3323 = vdwg.mxu0
        %v3324 = vadd.f32 %v3209, %v3296
        %v3325 = vadd.f32 %v3210, %v3319
        %v3326 = vadd.f32 %v3211, %v3299
        %v3327 = vadd.f32 %v3212, %v3322
        %s3328 = scalar_lea.vmem [#allocation10], 96
        %v3329 = vld [vmem:[%s3328] sm:$0xff]
        %v3330 = vld [vmem:[%s3328 + $0x8] sm:$0xff]
        %v3332 = vsel %vm1144, %v3329, 0
        %v3335 = vsel %vm1144, %v3330, 0
        %3337 = vmatpush.msra.mxu0 0.0
        %3338 = vmatpush.msra.mxu0 0.0
        %3339 = vmatpush.msra.mxu0 0.0
        %3340 = vmatpush.msra.mxu0 0.0
        %3341 = vmatpush.msra.mxu0 0.0
        %3342 = vmatpush.msra.mxu0 0.0
        %3343 = vmatpush.msra.mxu0 0.0
        %3344 = vmatpush.msra.mxu0 0.0
        %3345 = vmatpush.msra.mxu0 %v2647
        %3346 = vmatpush.msra.mxu0 %v2646
        %3347 = vmatpush.msra.mxu0 %v2645
        %3348 = vmatpush.msra.mxu0 %v2644
        %3349 = vmatpush.msra.mxu0 %v2643
        %3350 = vmatpush.msra.mxu0 %v2642
        %3351 = vmatpush.msra.mxu0 %v2641
        %3352 = vmatpush.msra.mxu0 %v2640
        %3353 = vmatmul.f32.gmra.mxu0 %v3332
        %v3354 = vpop.f32.mrf.mxu0
        %v3355 = vadd.f32 0.0, %v3354
        %3356 = vmatmul.f32.gmra.mxu0 %v3335
        %v3357 = vpop.f32.mrf.mxu0
        %v3358 = vadd.f32 0.0, %v3357
        %3359 = vdwg.mxu0
        %s3360 = scalar_lea.vmem [#allocation11], 1536
        %v3361 = vld [vmem:[%s3360] sm:$0xff]
        %v3362 = vld [vmem:[%s3360 + $0x8] sm:$0xff]
        %v3363 = vld [vmem:[%s3360 + $0x10] sm:$0xff]
        %v3364 = vld [vmem:[%s3360 + $0x18] sm:$0xff]
        %v3365 = vld [vmem:[%s3360 + $0x20] sm:$0xff]
        %v3366 = vld [vmem:[%s3360 + $0x28] sm:$0xff]
        %v3367 = vld [vmem:[%s3360 + $0x30] sm:$0xff]
        %v3368 = vld [vmem:[%s3360 + $0x38] sm:$0xff]
        %v3369 = vld [vmem:[%s3360 + $0x40] sm:$0xff]
        %v3370 = vld [vmem:[%s3360 + $0x48] sm:$0xff]
        %v3371 = vld [vmem:[%s3360 + $0x50] sm:$0xff]
        %v3372 = vld [vmem:[%s3360 + $0x58] sm:$0xff]
        %v3373 = vld [vmem:[%s3360 + $0x60] sm:$0xff]
        %v3374 = vld [vmem:[%s3360 + $0x68] sm:$0xff]
        %v3375 = vld [vmem:[%s3360 + $0x70] sm:$0xff]
        %v3376 = vld [vmem:[%s3360 + $0x78] sm:$0xff]
        %v3377 = vld [vmem:[%s3360 + $0x80] sm:$0xff]
        %v3378 = vld [vmem:[%s3360 + $0x88] sm:$0xff]
        %v3379 = vld [vmem:[%s3360 + $0x90] sm:$0xff]
        %v3380 = vld [vmem:[%s3360 + $0x98] sm:$0xff]
        %v3381 = vld [vmem:[%s3360 + $0xa0] sm:$0xff]
        %v3382 = vld [vmem:[%s3360 + $0xa8] sm:$0xff]
        %v3383 = vld [vmem:[%s3360 + $0xb0] sm:$0xff]
        %v3384 = vld [vmem:[%s3360 + $0xb8] sm:$0xff]
        %v3385 = vld [vmem:[%s3360 + $0xc0] sm:$0xff]
        %v3386 = vld [vmem:[%s3360 + $0xc8] sm:$0xff]
        %v3387 = vld [vmem:[%s3360 + $0xd0] sm:$0xff]
        %v3388 = vld [vmem:[%s3360 + $0xd8] sm:$0xff]
        %v3389 = vld [vmem:[%s3360 + $0xe0] sm:$0xff]
        %v3390 = vld [vmem:[%s3360 + $0xe8] sm:$0xff]
        %v3391 = vld [vmem:[%s3360 + $0xf0] sm:$0xff]
        %v3392 = vld [vmem:[%s3360 + $0xf8] sm:$0xff]
        %3393 = vmatpush.msra.mxu0 %v3391
        %3394 = vmatpush.msra.mxu0 %v3389
        %3395 = vmatpush.msra.mxu0 %v3387
        %3396 = vmatpush.msra.mxu0 %v3385
        %3397 = vmatpush.msra.mxu0 %v3383
        %3398 = vmatpush.msra.mxu0 %v3381
        %3399 = vmatpush.msra.mxu0 %v3379
        %3400 = vmatpush.msra.mxu0 %v3377
        %3401 = vmatpush.msra.mxu0 %v3375
        %3402 = vmatpush.msra.mxu0 %v3373
        %3403 = vmatpush.msra.mxu0 %v3371
        %3404 = vmatpush.msra.mxu0 %v3369
        %3405 = vmatpush.msra.mxu0 %v3367
        %3406 = vmatpush.msra.mxu0 %v3365
        %3407 = vmatpush.msra.mxu0 %v3363
        %3408 = vmatpush.msra.mxu0 %v3361
        %3409 = vmatmul.f32.gmra.mxu0 %v3355
        %v3410 = vpop.f32.mrf.mxu0
        %v3411 = vadd.f32 0.0, %v3410
        %3412 = vmatmul.f32.gmra.mxu0 %v3358
        %v3413 = vpop.f32.mrf.mxu0
        %v3414 = vadd.f32 0.0, %v3413
        %3415 = vdwg.mxu0
        %3416 = vmatpush.msra.mxu0 %v3392
        %3417 = vmatpush.msra.mxu0 %v3390
        %3418 = vmatpush.msra.mxu0 %v3388
        %3419 = vmatpush.msra.mxu0 %v3386
        %3420 = vmatpush.msra.mxu0 %v3384
        %3421 = vmatpush.msra.mxu0 %v3382
        %3422 = vmatpush.msra.mxu0 %v3380
        %3423 = vmatpush.msra.mxu0 %v3378
        %3424 = vmatpush.msra.mxu0 %v3376
        %3425 = vmatpush.msra.mxu0 %v3374
        %3426 = vmatpush.msra.mxu0 %v3372
        %3427 = vmatpush.msra.mxu0 %v3370
        %3428 = vmatpush.msra.mxu0 %v3368
        %3429 = vmatpush.msra.mxu0 %v3366
        %3430 = vmatpush.msra.mxu0 %v3364
        %3431 = vmatpush.msra.mxu0 %v3362
        %3432 = vmatmul.f32.gmra.mxu0 %v3355
        %v3433 = vpop.f32.mrf.mxu0
        %v3434 = vadd.f32 0.0, %v3433
        %3435 = vmatmul.f32.gmra.mxu0 %v3358
        %v3436 = vpop.f32.mrf.mxu0
        %v3437 = vadd.f32 0.0, %v3436
        %3438 = vdwg.mxu0
        %v3439 = vadd.f32 %v3324, %v3411
        %v3440 = vadd.f32 %v3325, %v3434
        %v3441 = vadd.f32 %v3326, %v3414
        %v3442 = vadd.f32 %v3327, %v3437
        %s3443 = scalar_lea.vmem [#allocation10], 112
        %v3444 = vld [vmem:[%s3443] sm:$0xff]
        %v3445 = vld [vmem:[%s3443 + $0x8] sm:$0xff]
        %v3447 = vsel %vm1144, %v3444, 0
        %v3450 = vsel %vm1144, %v3445, 0
        %3452 = vmatpush.msra.mxu0 0.0
        %3453 = vmatpush.msra.mxu0 0.0
        %3454 = vmatpush.msra.mxu0 0.0
        %3455 = vmatpush.msra.mxu0 0.0
        %3456 = vmatpush.msra.mxu0 0.0
        %3457 = vmatpush.msra.mxu0 0.0
        %3458 = vmatpush.msra.mxu0 0.0
        %3459 = vmatpush.msra.mxu0 0.0
        %3460 = vmatpush.msra.mxu0 %v2647
        %3461 = vmatpush.msra.mxu0 %v2646
        %3462 = vmatpush.msra.mxu0 %v2645
        %3463 = vmatpush.msra.mxu0 %v2644
        %3464 = vmatpush.msra.mxu0 %v2643
        %3465 = vmatpush.msra.mxu0 %v2642
        %3466 = vmatpush.msra.mxu0 %v2641
        %3467 = vmatpush.msra.mxu0 %v2640
        %3468 = vmatmul.f32.gmra.mxu0 %v3447
        %v3469 = vpop.f32.mrf.mxu0
        %v3470 = vadd.f32 0.0, %v3469
        %3471 = vmatmul.f32.gmra.mxu0 %v3450
        %v3472 = vpop.f32.mrf.mxu0
        %v3473 = vadd.f32 0.0, %v3472
        %3474 = vdwg.mxu0
        %s3475 = scalar_lea.vmem [#allocation11], 1792
        %v3476 = vld [vmem:[%s3475] sm:$0xff]
        %v3477 = vld [vmem:[%s3475 + $0x8] sm:$0xff]
        %v3478 = vld [vmem:[%s3475 + $0x10] sm:$0xff]
        %v3479 = vld [vmem:[%s3475 + $0x18] sm:$0xff]
        %v3480 = vld [vmem:[%s3475 + $0x20] sm:$0xff]
        %v3481 = vld [vmem:[%s3475 + $0x28] sm:$0xff]
        %v3482 = vld [vmem:[%s3475 + $0x30] sm:$0xff]
        %v3483 = vld [vmem:[%s3475 + $0x38] sm:$0xff]
        %v3484 = vld [vmem:[%s3475 + $0x40] sm:$0xff]
        %v3485 = vld [vmem:[%s3475 + $0x48] sm:$0xff]
        %v3486 = vld [vmem:[%s3475 + $0x50] sm:$0xff]
        %v3487 = vld [vmem:[%s3475 + $0x58] sm:$0xff]
        %v3488 = vld [vmem:[%s3475 + $0x60] sm:$0xff]
        %v3489 = vld [vmem:[%s3475 + $0x68] sm:$0xff]
        %v3490 = vld [vmem:[%s3475 + $0x70] sm:$0xff]
        %v3491 = vld [vmem:[%s3475 + $0x78] sm:$0xff]
        %v3492 = vld [vmem:[%s3475 + $0x80] sm:$0xff]
        %v3493 = vld [vmem:[%s3475 + $0x88] sm:$0xff]
        %v3494 = vld [vmem:[%s3475 + $0x90] sm:$0xff]
        %v3495 = vld [vmem:[%s3475 + $0x98] sm:$0xff]
        %v3496 = vld [vmem:[%s3475 + $0xa0] sm:$0xff]
        %v3497 = vld [vmem:[%s3475 + $0xa8] sm:$0xff]
        %v3498 = vld [vmem:[%s3475 + $0xb0] sm:$0xff]
        %v3499 = vld [vmem:[%s3475 + $0xb8] sm:$0xff]
        %v3500 = vld [vmem:[%s3475 + $0xc0] sm:$0xff]
        %v3501 = vld [vmem:[%s3475 + $0xc8] sm:$0xff]
        %v3502 = vld [vmem:[%s3475 + $0xd0] sm:$0xff]
        %v3503 = vld [vmem:[%s3475 + $0xd8] sm:$0xff]
        %v3504 = vld [vmem:[%s3475 + $0xe0] sm:$0xff]
        %v3505 = vld [vmem:[%s3475 + $0xe8] sm:$0xff]
        %v3506 = vld [vmem:[%s3475 + $0xf0] sm:$0xff]
        %v3507 = vld [vmem:[%s3475 + $0xf8] sm:$0xff]
        %3508 = vmatpush.msra.mxu0 %v3506
        %3509 = vmatpush.msra.mxu0 %v3504
        %3510 = vmatpush.msra.mxu0 %v3502
        %3511 = vmatpush.msra.mxu0 %v3500
        %3512 = vmatpush.msra.mxu0 %v3498
        %3513 = vmatpush.msra.mxu0 %v3496
        %3514 = vmatpush.msra.mxu0 %v3494
        %3515 = vmatpush.msra.mxu0 %v3492
        %3516 = vmatpush.msra.mxu0 %v3490
        %3517 = vmatpush.msra.mxu0 %v3488
        %3518 = vmatpush.msra.mxu0 %v3486
        %3519 = vmatpush.msra.mxu0 %v3484
        %3520 = vmatpush.msra.mxu0 %v3482
        %3521 = vmatpush.msra.mxu0 %v3480
        %3522 = vmatpush.msra.mxu0 %v3478
        %3523 = vmatpush.msra.mxu0 %v3476
        %3524 = vmatmul.f32.gmra.mxu0 %v3470
        %v3525 = vpop.f32.mrf.mxu0
        %v3526 = vadd.f32 0.0, %v3525
        %3527 = vmatmul.f32.gmra.mxu0 %v3473
        %v3528 = vpop.f32.mrf.mxu0
        %v3529 = vadd.f32 0.0, %v3528
        %3530 = vdwg.mxu0
        %3531 = vmatpush.msra.mxu0 %v3507
        %3532 = vmatpush.msra.mxu0 %v3505
        %3533 = vmatpush.msra.mxu0 %v3503
        %3534 = vmatpush.msra.mxu0 %v3501
        %3535 = vmatpush.msra.mxu0 %v3499
        %3536 = vmatpush.msra.mxu0 %v3497
        %3537 = vmatpush.msra.mxu0 %v3495
        %3538 = vmatpush.msra.mxu0 %v3493
        %3539 = vmatpush.msra.mxu0 %v3491
        %3540 = vmatpush.msra.mxu0 %v3489
        %3541 = vmatpush.msra.mxu0 %v3487
        %3542 = vmatpush.msra.mxu0 %v3485
        %3543 = vmatpush.msra.mxu0 %v3483
        %3544 = vmatpush.msra.mxu0 %v3481
        %3545 = vmatpush.msra.mxu0 %v3479
        %3546 = vmatpush.msra.mxu0 %v3477
        %3547 = vmatmul.f32.gmra.mxu0 %v3470
        %v3548 = vpop.f32.mrf.mxu0
        %v3549 = vadd.f32 0.0, %v3548
        %3550 = vmatmul.f32.gmra.mxu0 %v3473
        %v3551 = vpop.f32.mrf.mxu0
        %v3552 = vadd.f32 0.0, %v3551
        %3553 = vdwg.mxu0
        %v3554 = vadd.f32 %v3439, %v3526
        %v3555 = vadd.f32 %v3440, %v3549
        %v3556 = vadd.f32 %v3441, %v3529
        %v3557 = vadd.f32 %v3442, %v3552
        %s3558 = scalar_lea.vmem [#allocation10], 128
        %v3559 = vld [vmem:[%s3558] sm:$0xff]
        %v3560 = vld [vmem:[%s3558 + $0x8] sm:$0xff]
        %v3562 = vsel %vm1144, %v3559, 0
        %v3565 = vsel %vm1144, %v3560, 0
        %3567 = vmatpush.msra.mxu0 0.0
        %3568 = vmatpush.msra.mxu0 0.0
        %3569 = vmatpush.msra.mxu0 0.0
        %3570 = vmatpush.msra.mxu0 0.0
        %3571 = vmatpush.msra.mxu0 0.0
        %3572 = vmatpush.msra.mxu0 0.0
        %3573 = vmatpush.msra.mxu0 0.0
        %3574 = vmatpush.msra.mxu0 0.0
        %3575 = vmatpush.msra.mxu0 %v2647
        %3576 = vmatpush.msra.mxu0 %v2646
        %3577 = vmatpush.msra.mxu0 %v2645
        %3578 = vmatpush.msra.mxu0 %v2644
        %3579 = vmatpush.msra.mxu0 %v2643
        %3580 = vmatpush.msra.mxu0 %v2642
        %3581 = vmatpush.msra.mxu0 %v2641
        %3582 = vmatpush.msra.mxu0 %v2640
        %3583 = vmatmul.f32.gmra.mxu0 %v3562
        %v3584 = vpop.f32.mrf.mxu0
        %v3585 = vadd.f32 0.0, %v3584
        %3586 = vmatmul.f32.gmra.mxu0 %v3565
        %v3587 = vpop.f32.mrf.mxu0
        %v3588 = vadd.f32 0.0, %v3587
        %3589 = vdwg.mxu0
        %s3590 = scalar_lea.vmem [#allocation11], 2048
        %v3591 = vld [vmem:[%s3590] sm:$0xff]
        %v3592 = vld [vmem:[%s3590 + $0x8] sm:$0xff]
        %v3593 = vld [vmem:[%s3590 + $0x10] sm:$0xff]
        %v3594 = vld [vmem:[%s3590 + $0x18] sm:$0xff]
        %v3595 = vld [vmem:[%s3590 + $0x20] sm:$0xff]
        %v3596 = vld [vmem:[%s3590 + $0x28] sm:$0xff]
        %v3597 = vld [vmem:[%s3590 + $0x30] sm:$0xff]
        %v3598 = vld [vmem:[%s3590 + $0x38] sm:$0xff]
        %v3599 = vld [vmem:[%s3590 + $0x40] sm:$0xff]
        %v3600 = vld [vmem:[%s3590 + $0x48] sm:$0xff]
        %v3601 = vld [vmem:[%s3590 + $0x50] sm:$0xff]
        %v3602 = vld [vmem:[%s3590 + $0x58] sm:$0xff]
        %v3603 = vld [vmem:[%s3590 + $0x60] sm:$0xff]
        %v3604 = vld [vmem:[%s3590 + $0x68] sm:$0xff]
        %v3605 = vld [vmem:[%s3590 + $0x70] sm:$0xff]
        %v3606 = vld [vmem:[%s3590 + $0x78] sm:$0xff]
        %v3607 = vld [vmem:[%s3590 + $0x80] sm:$0xff]
        %v3608 = vld [vmem:[%s3590 + $0x88] sm:$0xff]
        %v3609 = vld [vmem:[%s3590 + $0x90] sm:$0xff]
        %v3610 = vld [vmem:[%s3590 + $0x98] sm:$0xff]
        %v3611 = vld [vmem:[%s3590 + $0xa0] sm:$0xff]
        %v3612 = vld [vmem:[%s3590 + $0xa8] sm:$0xff]
        %v3613 = vld [vmem:[%s3590 + $0xb0] sm:$0xff]
        %v3614 = vld [vmem:[%s3590 + $0xb8] sm:$0xff]
        %v3615 = vld [vmem:[%s3590 + $0xc0] sm:$0xff]
        %v3616 = vld [vmem:[%s3590 + $0xc8] sm:$0xff]
        %v3617 = vld [vmem:[%s3590 + $0xd0] sm:$0xff]
        %v3618 = vld [vmem:[%s3590 + $0xd8] sm:$0xff]
        %v3619 = vld [vmem:[%s3590 + $0xe0] sm:$0xff]
        %v3620 = vld [vmem:[%s3590 + $0xe8] sm:$0xff]
        %v3621 = vld [vmem:[%s3590 + $0xf0] sm:$0xff]
        %v3622 = vld [vmem:[%s3590 + $0xf8] sm:$0xff]
        %3623 = vmatpush.msra.mxu0 %v3621
        %3624 = vmatpush.msra.mxu0 %v3619
        %3625 = vmatpush.msra.mxu0 %v3617
        %3626 = vmatpush.msra.mxu0 %v3615
        %3627 = vmatpush.msra.mxu0 %v3613
        %3628 = vmatpush.msra.mxu0 %v3611
        %3629 = vmatpush.msra.mxu0 %v3609
        %3630 = vmatpush.msra.mxu0 %v3607
        %3631 = vmatpush.msra.mxu0 %v3605
        %3632 = vmatpush.msra.mxu0 %v3603
        %3633 = vmatpush.msra.mxu0 %v3601
        %3634 = vmatpush.msra.mxu0 %v3599
        %3635 = vmatpush.msra.mxu0 %v3597
        %3636 = vmatpush.msra.mxu0 %v3595
        %3637 = vmatpush.msra.mxu0 %v3593
        %3638 = vmatpush.msra.mxu0 %v3591
        %3639 = vmatmul.f32.gmra.mxu0 %v3585
        %v3640 = vpop.f32.mrf.mxu0
        %v3641 = vadd.f32 0.0, %v3640
        %3642 = vmatmul.f32.gmra.mxu0 %v3588
        %v3643 = vpop.f32.mrf.mxu0
        %v3644 = vadd.f32 0.0, %v3643
        %3645 = vdwg.mxu0
        %3646 = vmatpush.msra.mxu0 %v3622
        %3647 = vmatpush.msra.mxu0 %v3620
        %3648 = vmatpush.msra.mxu0 %v3618
        %3649 = vmatpush.msra.mxu0 %v3616
        %3650 = vmatpush.msra.mxu0 %v3614
        %3651 = vmatpush.msra.mxu0 %v3612
        %3652 = vmatpush.msra.mxu0 %v3610
        %3653 = vmatpush.msra.mxu0 %v3608
        %3654 = vmatpush.msra.mxu0 %v3606
        %3655 = vmatpush.msra.mxu0 %v3604
        %3656 = vmatpush.msra.mxu0 %v3602
        %3657 = vmatpush.msra.mxu0 %v3600
        %3658 = vmatpush.msra.mxu0 %v3598
        %3659 = vmatpush.msra.mxu0 %v3596
        %3660 = vmatpush.msra.mxu0 %v3594
        %3661 = vmatpush.msra.mxu0 %v3592
        %3662 = vmatmul.f32.gmra.mxu0 %v3585
        %v3663 = vpop.f32.mrf.mxu0
        %v3664 = vadd.f32 0.0, %v3663
        %3665 = vmatmul.f32.gmra.mxu0 %v3588
        %v3666 = vpop.f32.mrf.mxu0
        %v3667 = vadd.f32 0.0, %v3666
        %3668 = vdwg.mxu0
        %v3669 = vadd.f32 %v3554, %v3641
        %v3670 = vadd.f32 %v3555, %v3664
        %v3671 = vadd.f32 %v3556, %v3644
        %v3672 = vadd.f32 %v3557, %v3667
        %v3673 = vld [vmem:[#allocation13] sm:$0x3]
        %v3675 = vperm.slane %v3673, 0
        %v3676 = vperm.slane %v3673, 1
        %v3679 = vadd.f32 %v3669, %v3675
        %v3680 = vadd.f32 %v3670, %v3676
        %v3681 = vadd.f32 %v3671, %v3675
        %v3682 = vadd.f32 %v3672, %v3676
        %vm3683 = vcmp.ge.f32.partialorder %v3679, 0.0
        %vm3684 = vcmp.ge.f32.partialorder %v3680, 0.0
        %vm3685 = vcmp.ge.f32.partialorder %v3681, 0.0
        %vm3686 = vcmp.ge.f32.partialorder %v3682, 0.0
        %v3687 = vmul.f32 %v3679, 0.2
        %v3688 = vmul.f32 %v3680, 0.2
        %v3689 = vmul.f32 %v3681, 0.2
        %v3690 = vmul.f32 %v3682, 0.2
        %v3691 = vsel %vm3683, %v3679, %v3687
        %v3692 = vsel %vm3684, %v3680, %v3688
        %v3693 = vsel %vm3685, %v3681, %v3689
        %v3694 = vsel %vm3686, %v3682, %v3690
        %v3695 = vadd.f32 %v3691, %v3693
        %v3696 = vrot.slane %v3695, 4
        %v3697 = vadd.f32 %v3695, %v3696
        %v3698 = vrot.slane %v3697, 2
        %v3699 = vadd.f32 %v3697, %v3698
        %v3700 = vrot.slane %v3699, 1
        %v3701 = vadd.f32 %v3699, %v3700
        %v3702 = vadd.f32 %v3692, %v3694
        %v3703 = vrot.slane %v3702, 4
        %v3704 = vadd.f32 %v3702, %v3703
        %v3705 = vrot.slane %v3704, 2
        %v3706 = vadd.f32 %v3704, %v3705
        %v3707 = vrot.slane %v3706, 1
        %v3708 = vadd.f32 %v3706, %v3707
        %v3709 = vrcp.pop 16.0
        %v3710 = vmul.f32 16.0, %v3709
        %v3711 = vsub.f32 1.0, %v3710
        %v3712 = vmul.f32 %v3709, %v3711
        %v3713 = vadd.f32 %v3709, %v3712
        %vm3714 = vweird.f32 %v3709
        %v3715 = vsel %vm3714, %v3709, %v3713
        %v3716 = vmul.f32 %v3701, %v3715
        %v3717 = vmul.f32 %v3708, %v3715
        %v3718 = vsub.f32 %v3691, %v3716
        %v3719 = vsub.f32 %v3692, %v3717
        %v3720 = vsub.f32 %v3693, %v3716
        %v3721 = vsub.f32 %v3694, %v3717
        %v3722 = vmul.f32 %v3718, %v3718
        %v3723 = vmul.f32 %v3719, %v3719
        %v3724 = vmul.f32 %v3720, %v3720
        %v3725 = vmul.f32 %v3721, %v3721
        %v3726 = vadd.f32 %v3722, %v3724
        %v3727 = vrot.slane %v3726, 4
        %v3728 = vadd.f32 %v3726, %v3727
        %v3729 = vrot.slane %v3728, 2
        %v3730 = vadd.f32 %v3728, %v3729
        %v3731 = vrot.slane %v3730, 1
        %v3732 = vadd.f32 %v3730, %v3731
        %v3733 = vadd.f32 %v3723, %v3725
        %v3734 = vrot.slane %v3733, 4
        %v3735 = vadd.f32 %v3733, %v3734
        %v3736 = vrot.slane %v3735, 2
        %v3737 = vadd.f32 %v3735, %v3736
        %v3738 = vrot.slane %v3737, 1
        %v3739 = vadd.f32 %v3737, %v3738
        %v3740 = vmul.f32 %v3732, %v3715
        %v3741 = vmul.f32 %v3739, %v3715
        %v3742 = vadd.f32 %v3740, 1e-05
        %v3743 = vadd.f32 %v3741, 1e-05
        %v3744 = vrsqrt.pop %v3742
        %v3745 = vmul.f32 %v3744, %v3742
        %v3746 = vmul.f32 %v3745, %v3744
        %v3747 = vmul.f32 0.5, %v3746
        %v3748 = vsub.f32 1.5, %v3747
        %v3749 = vmul.f32 %v3744, %v3748
        %vm3750 = vweird.f32 %v3742
        %vm3751 = vweird.f32 %v3744
        %vm3752 = vmor %vm3750, %vm3751
        %v3753 = vsel %vm3752, %v3744, %v3749
        %v3754 = vrsqrt.pop %v3743
        %v3755 = vmul.f32 %v3754, %v3743
        %v3756 = vmul.f32 %v3755, %v3754
        %v3757 = vmul.f32 0.5, %v3756
        %v3758 = vsub.f32 1.5, %v3757
        %v3759 = vmul.f32 %v3754, %v3758
        %vm3760 = vweird.f32 %v3743
        %vm3761 = vweird.f32 %v3754
        %vm3762 = vmor %vm3760, %vm3761
        %v3763 = vsel %vm3762, %v3754, %v3759
        %v3764 = vmul.f32 %v3718, %v3753
        %v3765 = vmul.f32 %v3719, %v3763
        %v3766 = vmul.f32 %v3720, %v3753
        %v3767 = vmul.f32 %v3721, %v3763
        %v3768 = vld [vmem:[#allocation14] sm:$0xf]
        %vm3769 = vcmask 130048
        %v3771 = vsel %vm3769, %v3768, 0
        %3773 = vmatpush.msra.mxu0 0.0
        %3774 = vmatpush.msra.mxu0 0.0
        %3775 = vmatpush.msra.mxu0 0.0
        %3776 = vmatpush.msra.mxu0 0.0
        %3777 = vmatpush.msra.mxu0 0.0
        %3778 = vmatpush.msra.mxu0 0.0
        %3779 = vmatpush.msra.mxu0 0.0
        %3780 = vmatpush.msra.mxu0 0.0
        %3781 = vmatpush.msra.mxu0 0.0
        %3782 = vmatpush.msra.mxu0 0.0
        %3783 = vmatpush.msra.mxu0 0.0
        %3784 = vmatpush.msra.mxu0 0.0
        %3785 = vmatpush.msra.mxu0 0.0
        %3786 = vmatpush.msra.mxu0 0.0
        %3787 = vmatpush.msra.mxu0 %v3766
        %3788 = vmatpush.msra.mxu0 %v3764
        %3789 = vmatmul.f32.gmra.mxu0 %v3771
        %v3790 = vpop.f32.mrf.mxu0
        %v3791 = vadd.f32 0.0, %v3790
        %3792 = vdwg.mxu0
        %3793 = vmatpush.msra.mxu0 0.0
        %3794 = vmatpush.msra.mxu0 0.0
        %3795 = vmatpush.msra.mxu0 0.0
        %3796 = vmatpush.msra.mxu0 0.0
        %3797 = vmatpush.msra.mxu0 0.0
        %3798 = vmatpush.msra.mxu0 0.0
        %3799 = vmatpush.msra.mxu0 0.0
        %3800 = vmatpush.msra.mxu0 0.0
        %3801 = vmatpush.msra.mxu0 0.0
        %3802 = vmatpush.msra.mxu0 0.0
        %3803 = vmatpush.msra.mxu0 0.0
        %3804 = vmatpush.msra.mxu0 0.0
        %3805 = vmatpush.msra.mxu0 0.0
        %3806 = vmatpush.msra.mxu0 0.0
        %3807 = vmatpush.msra.mxu0 %v3767
        %3808 = vmatpush.msra.mxu0 %v3765
        %3809 = vmatmul.f32.gmra.mxu0 %v3771
        %v3810 = vpop.f32.mrf.mxu0
        %v3811 = vadd.f32 0.0, %v3810
        %3812 = vdwg.mxu0
        %v3813 = vld [vmem:[#allocation16] sm:$0xff]
        %v3814 = vld [vmem:[#allocation16 + $0x8] sm:$0xff]
        %v3815 = vld [vmem:[#allocation16 + $0x10] sm:$0xff]
        %v3816 = vld [vmem:[#allocation16 + $0x18] sm:$0xff]
        %v3817 = vld [vmem:[#allocation16 + $0x20] sm:$0xff]
        %v3818 = vld [vmem:[#allocation16 + $0x28] sm:$0xff]
        %v3819 = vld [vmem:[#allocation16 + $0x30] sm:$0xff]
        %v3820 = vld [vmem:[#allocation16 + $0x38] sm:$0xff]
        %v3821 = vld [vmem:[#allocation16 + $0x40] sm:$0xff]
        %v3822 = vld [vmem:[#allocation16 + $0x48] sm:$0xff]
        %v3823 = vld [vmem:[#allocation16 + $0x50] sm:$0xff]
        %v3824 = vld [vmem:[#allocation16 + $0x58] sm:$0xff]
        %v3825 = vld [vmem:[#allocation16 + $0x60] sm:$0xff]
        %v3826 = vld [vmem:[#allocation16 + $0x68] sm:$0xff]
        %v3827 = vld [vmem:[#allocation16 + $0x70] sm:$0xff]
        %v3828 = vld [vmem:[#allocation16 + $0x78] sm:$0xff]
        %v3829 = vld [vmem:[#allocation16 + $0x80] sm:$0xff]
        %v3830 = vld [vmem:[#allocation16 + $0x88] sm:$0xff]
        %v3831 = vld [vmem:[#allocation16 + $0x90] sm:$0xff]
        %v3832 = vld [vmem:[#allocation16 + $0x98] sm:$0xff]
        %v3833 = vld [vmem:[#allocation16 + $0xa0] sm:$0xff]
        %v3834 = vld [vmem:[#allocation16 + $0xa8] sm:$0xff]
        %v3835 = vld [vmem:[#allocation16 + $0xb0] sm:$0xff]
        %v3836 = vld [vmem:[#allocation16 + $0xb8] sm:$0xff]
        %v3837 = vld [vmem:[#allocation16 + $0xc0] sm:$0xff]
        %v3838 = vld [vmem:[#allocation16 + $0xc8] sm:$0xff]
        %v3839 = vld [vmem:[#allocation16 + $0xd0] sm:$0xff]
        %v3840 = vld [vmem:[#allocation16 + $0xd8] sm:$0xff]
        %v3841 = vld [vmem:[#allocation16 + $0xe0] sm:$0xff]
        %v3842 = vld [vmem:[#allocation16 + $0xe8] sm:$0xff]
        %v3843 = vld [vmem:[#allocation16 + $0xf0] sm:$0xff]
        %v3844 = vld [vmem:[#allocation16 + $0xf8] sm:$0xff]
        %v3845 = vld [vmem:[#allocation16 + $0x100] sm:$0xff]
        %v3846 = vld [vmem:[#allocation16 + $0x108] sm:$0xff]
        %v3847 = vld [vmem:[#allocation16 + $0x110] sm:$0xff]
        %v3848 = vld [vmem:[#allocation16 + $0x118] sm:$0xff]
        %v3849 = vld [vmem:[#allocation16 + $0x120] sm:$0xff]
        %v3850 = vld [vmem:[#allocation16 + $0x128] sm:$0xff]
        %v3851 = vld [vmem:[#allocation16 + $0x130] sm:$0xff]
        %v3852 = vld [vmem:[#allocation16 + $0x138] sm:$0xff]
        %v3853 = vld [vmem:[#allocation16 + $0x140] sm:$0xff]
        %v3854 = vld [vmem:[#allocation16 + $0x148] sm:$0xff]
        %v3855 = vld [vmem:[#allocation16 + $0x150] sm:$0xff]
        %v3856 = vld [vmem:[#allocation16 + $0x158] sm:$0xff]
        %v3857 = vld [vmem:[#allocation16 + $0x160] sm:$0xff]
        %v3858 = vld [vmem:[#allocation16 + $0x168] sm:$0xff]
        %v3859 = vld [vmem:[#allocation16 + $0x170] sm:$0xff]
        %v3860 = vld [vmem:[#allocation16 + $0x178] sm:$0xff]
        %v3861 = vld [vmem:[#allocation16 + $0x180] sm:$0xff]
        %v3862 = vld [vmem:[#allocation16 + $0x188] sm:$0xff]
        %v3863 = vld [vmem:[#allocation16 + $0x190] sm:$0xff]
        %v3864 = vld [vmem:[#allocation16 + $0x198] sm:$0xff]
        %v3865 = vld [vmem:[#allocation16 + $0x1a0] sm:$0xff]
        %v3866 = vld [vmem:[#allocation16 + $0x1a8] sm:$0xff]
        %v3867 = vld [vmem:[#allocation16 + $0x1b0] sm:$0xff]
        %v3868 = vld [vmem:[#allocation16 + $0x1b8] sm:$0xff]
        %v3869 = vld [vmem:[#allocation16 + $0x1c0] sm:$0xff]
        %v3870 = vld [vmem:[#allocation16 + $0x1c8] sm:$0xff]
        %v3871 = vld [vmem:[#allocation16 + $0x1d0] sm:$0xff]
        %v3872 = vld [vmem:[#allocation16 + $0x1d8] sm:$0xff]
        %v3873 = vld [vmem:[#allocation16 + $0x1e0] sm:$0xff]
        %v3874 = vld [vmem:[#allocation16 + $0x1e8] sm:$0xff]
        %v3875 = vld [vmem:[#allocation16 + $0x1f0] sm:$0xff]
        %v3876 = vld [vmem:[#allocation16 + $0x1f8] sm:$0xff]
        %v3877 = vld [vmem:[#allocation16 + $0x200] sm:$0xff]
        %v3878 = vld [vmem:[#allocation16 + $0x208] sm:$0xff]
        %v3879 = vld [vmem:[#allocation16 + $0x210] sm:$0xff]
        %v3880 = vld [vmem:[#allocation16 + $0x218] sm:$0xff]
        %v3881 = vld [vmem:[#allocation16 + $0x220] sm:$0xff]
        %v3882 = vld [vmem:[#allocation16 + $0x228] sm:$0xff]
        %v3883 = vld [vmem:[#allocation16 + $0x230] sm:$0xff]
        %v3884 = vld [vmem:[#allocation16 + $0x238] sm:$0xff]
        %v3885 = vld [vmem:[#allocation16 + $0x240] sm:$0xff]
        %v3886 = vld [vmem:[#allocation16 + $0x248] sm:$0xff]
        %v3887 = vld [vmem:[#allocation16 + $0x250] sm:$0xff]
        %v3888 = vld [vmem:[#allocation16 + $0x258] sm:$0xff]
        %v3889 = vld [vmem:[#allocation16 + $0x260] sm:$0xff]
        %v3890 = vld [vmem:[#allocation16 + $0x268] sm:$0xff]
        %v3891 = vld [vmem:[#allocation16 + $0x270] sm:$0xff]
        %v3892 = vld [vmem:[#allocation16 + $0x278] sm:$0xff]
        %v3893 = vld [vmem:[#allocation16 + $0x280] sm:$0xff]
        %v3894 = vld [vmem:[#allocation16 + $0x288] sm:$0xff]
        %v3895 = vld [vmem:[#allocation16 + $0x290] sm:$0xff]
        %v3896 = vld [vmem:[#allocation16 + $0x298] sm:$0xff]
        %v3897 = vld [vmem:[#allocation16 + $0x2a0] sm:$0xff]
        %v3898 = vld [vmem:[#allocation16 + $0x2a8] sm:$0xff]
        %v3899 = vld [vmem:[#allocation16 + $0x2b0] sm:$0xff]
        %v3900 = vld [vmem:[#allocation16 + $0x2b8] sm:$0xff]
        %v3901 = vld [vmem:[#allocation16 + $0x2c0] sm:$0xff]
        %v3902 = vld [vmem:[#allocation16 + $0x2c8] sm:$0xff]
        %v3903 = vld [vmem:[#allocation16 + $0x2d0] sm:$0xff]
        %v3904 = vld [vmem:[#allocation16 + $0x2d8] sm:$0xff]
        %v3905 = vld [vmem:[#allocation16 + $0x2e0] sm:$0xff]
        %v3906 = vld [vmem:[#allocation16 + $0x2e8] sm:$0xff]
        %v3907 = vld [vmem:[#allocation16 + $0x2f0] sm:$0xff]
        %v3908 = vld [vmem:[#allocation16 + $0x2f8] sm:$0xff]
        %v3909 = vld [vmem:[#allocation16 + $0x300] sm:$0xff]
        %v3910 = vld [vmem:[#allocation16 + $0x308] sm:$0xff]
        %v3911 = vld [vmem:[#allocation16 + $0x310] sm:$0xff]
        %v3912 = vld [vmem:[#allocation16 + $0x318] sm:$0xff]
        %v3913 = vld [vmem:[#allocation16 + $0x320] sm:$0xff]
        %v3914 = vld [vmem:[#allocation16 + $0x328] sm:$0xff]
        %v3915 = vld [vmem:[#allocation16 + $0x330] sm:$0xff]
        %v3916 = vld [vmem:[#allocation16 + $0x338] sm:$0xff]
        %v3917 = vld [vmem:[#allocation16 + $0x340] sm:$0xff]
        %v3918 = vld [vmem:[#allocation16 + $0x348] sm:$0xff]
        %v3919 = vld [vmem:[#allocation16 + $0x350] sm:$0xff]
        %v3920 = vld [vmem:[#allocation16 + $0x358] sm:$0xff]
        %v3921 = vld [vmem:[#allocation16 + $0x360] sm:$0xff]
        %v3922 = vld [vmem:[#allocation16 + $0x368] sm:$0xff]
        %v3923 = vld [vmem:[#allocation16 + $0x370] sm:$0xff]
        %v3924 = vld [vmem:[#allocation16 + $0x378] sm:$0xff]
        %v3925 = vld [vmem:[#allocation16 + $0x380] sm:$0xff]
        %v3926 = vld [vmem:[#allocation16 + $0x388] sm:$0xff]
        %v3927 = vld [vmem:[#allocation16 + $0x390] sm:$0xff]
        %v3928 = vld [vmem:[#allocation16 + $0x398] sm:$0xff]
        %v3929 = vld [vmem:[#allocation16 + $0x3a0] sm:$0xff]
        %v3930 = vld [vmem:[#allocation16 + $0x3a8] sm:$0xff]
        %v3931 = vld [vmem:[#allocation16 + $0x3b0] sm:$0xff]
        %v3932 = vld [vmem:[#allocation16 + $0x3b8] sm:$0xff]
        %v3933 = vld [vmem:[#allocation16 + $0x3c0] sm:$0xff]
        %v3934 = vld [vmem:[#allocation16 + $0x3c8] sm:$0xff]
        %v3935 = vld [vmem:[#allocation16 + $0x3d0] sm:$0xff]
        %v3936 = vld [vmem:[#allocation16 + $0x3d8] sm:$0xff]
        %v3937 = vld [vmem:[#allocation16 + $0x3e0] sm:$0xff]
        %v3938 = vld [vmem:[#allocation16 + $0x3e8] sm:$0xff]
        %v3939 = vld [vmem:[#allocation16 + $0x3f0] sm:$0xff]
        %v3940 = vld [vmem:[#allocation16 + $0x3f8] sm:$0xff]
        %s3941 = scalar_lea.vmem [#allocation14], 4
        %v3942 = vld [vmem:[%s3941] sm:$0xf]
        %v3944 = vsel %vm3769, %v3942, 0
        %3946 = vmatpush.msra.mxu0 0.0
        %3947 = vmatpush.msra.mxu0 0.0
        %3948 = vmatpush.msra.mxu0 0.0
        %3949 = vmatpush.msra.mxu0 0.0
        %3950 = vmatpush.msra.mxu0 0.0
        %3951 = vmatpush.msra.mxu0 0.0
        %3952 = vmatpush.msra.mxu0 0.0
        %3953 = vmatpush.msra.mxu0 0.0
        %3954 = vmatpush.msra.mxu0 0.0
        %3955 = vmatpush.msra.mxu0 0.0
        %3956 = vmatpush.msra.mxu0 0.0
        %3957 = vmatpush.msra.mxu0 0.0
        %3958 = vmatpush.msra.mxu0 0.0
        %3959 = vmatpush.msra.mxu0 0.0
        %3960 = vmatpush.msra.mxu0 %v3766
        %3961 = vmatpush.msra.mxu0 %v3764
        %3962 = vmatmul.f32.gmra.mxu0 %v3944
        %v3963 = vpop.f32.mrf.mxu0
        %v3964 = vadd.f32 0.0, %v3963
        %3965 = vdwg.mxu0
        %3966 = vmatpush.msra.mxu0 0.0
        %3967 = vmatpush.msra.mxu0 0.0
        %3968 = vmatpush.msra.mxu0 0.0
        %3969 = vmatpush.msra.mxu0 0.0
        %3970 = vmatpush.msra.mxu0 0.0
        %3971 = vmatpush.msra.mxu0 0.0
        %3972 = vmatpush.msra.mxu0 0.0
        %3973 = vmatpush.msra.mxu0 0.0
        %3974 = vmatpush.msra.mxu0 0.0
        %3975 = vmatpush.msra.mxu0 0.0
        %3976 = vmatpush.msra.mxu0 0.0
        %3977 = vmatpush.msra.mxu0 0.0
        %3978 = vmatpush.msra.mxu0 0.0
        %3979 = vmatpush.msra.mxu0 0.0
        %3980 = vmatpush.msra.mxu0 %v3767
        %3981 = vmatpush.msra.mxu0 %v3765
        %3982 = vmatmul.f32.gmra.mxu0 %v3944
        %v3983 = vpop.f32.mrf.mxu0
        %v3984 = vadd.f32 0.0, %v3983
        %3985 = vdwg.mxu0
        %s3986 = scalar_lea.vmem [#allocation16], 1024
        %v3987 = vld [vmem:[%s3986] sm:$0xff]
        %v3988 = vld [vmem:[%s3986 + $0x8] sm:$0xff]
        %v3989 = vld [vmem:[%s3986 + $0x10] sm:$0xff]
        %v3990 = vld [vmem:[%s3986 + $0x18] sm:$0xff]
        %v3991 = vld [vmem:[%s3986 + $0x20] sm:$0xff]
        %v3992 = vld [vmem:[%s3986 + $0x28] sm:$0xff]
        %v3993 = vld [vmem:[%s3986 + $0x30] sm:$0xff]
        %v3994 = vld [vmem:[%s3986 + $0x38] sm:$0xff]
        %v3995 = vld [vmem:[%s3986 + $0x40] sm:$0xff]
        %v3996 = vld [vmem:[%s3986 + $0x48] sm:$0xff]
        %v3997 = vld [vmem:[%s3986 + $0x50] sm:$0xff]
        %v3998 = vld [vmem:[%s3986 + $0x58] sm:$0xff]
        %v3999 = vld [vmem:[%s3986 + $0x60] sm:$0xff]
        %v4000 = vld [vmem:[%s3986 + $0x68] sm:$0xff]
        %v4001 = vld [vmem:[%s3986 + $0x70] sm:$0xff]
        %v4002 = vld [vmem:[%s3986 + $0x78] sm:$0xff]
        %v4003 = vld [vmem:[%s3986 + $0x80] sm:$0xff]
        %v4004 = vld [vmem:[%s3986 + $0x88] sm:$0xff]
        %v4005 = vld [vmem:[%s3986 + $0x90] sm:$0xff]
        %v4006 = vld [vmem:[%s3986 + $0x98] sm:$0xff]
        %v4007 = vld [vmem:[%s3986 + $0xa0] sm:$0xff]
        %v4008 = vld [vmem:[%s3986 + $0xa8] sm:$0xff]
        %v4009 = vld [vmem:[%s3986 + $0xb0] sm:$0xff]
        %v4010 = vld [vmem:[%s3986 + $0xb8] sm:$0xff]
        %v4011 = vld [vmem:[%s3986 + $0xc0] sm:$0xff]
        %v4012 = vld [vmem:[%s3986 + $0xc8] sm:$0xff]
        %v4013 = vld [vmem:[%s3986 + $0xd0] sm:$0xff]
        %v4014 = vld [vmem:[%s3986 + $0xd8] sm:$0xff]
        %v4015 = vld [vmem:[%s3986 + $0xe0] sm:$0xff]
        %v4016 = vld [vmem:[%s3986 + $0xe8] sm:$0xff]
        %v4017 = vld [vmem:[%s3986 + $0xf0] sm:$0xff]
        %v4018 = vld [vmem:[%s3986 + $0xf8] sm:$0xff]
        %v4019 = vld [vmem:[%s3986 + $0x100] sm:$0xff]
        %v4020 = vld [vmem:[%s3986 + $0x108] sm:$0xff]
        %v4021 = vld [vmem:[%s3986 + $0x110] sm:$0xff]
        %v4022 = vld [vmem:[%s3986 + $0x118] sm:$0xff]
        %v4023 = vld [vmem:[%s3986 + $0x120] sm:$0xff]
        %v4024 = vld [vmem:[%s3986 + $0x128] sm:$0xff]
        %v4025 = vld [vmem:[%s3986 + $0x130] sm:$0xff]
        %v4026 = vld [vmem:[%s3986 + $0x138] sm:$0xff]
        %v4027 = vld [vmem:[%s3986 + $0x140] sm:$0xff]
        %v4028 = vld [vmem:[%s3986 + $0x148] sm:$0xff]
        %v4029 = vld [vmem:[%s3986 + $0x150] sm:$0xff]
        %v4030 = vld [vmem:[%s3986 + $0x158] sm:$0xff]
        %v4031 = vld [vmem:[%s3986 + $0x160] sm:$0xff]
        %v4032 = vld [vmem:[%s3986 + $0x168] sm:$0xff]
        %v4033 = vld [vmem:[%s3986 + $0x170] sm:$0xff]
        %v4034 = vld [vmem:[%s3986 + $0x178] sm:$0xff]
        %v4035 = vld [vmem:[%s3986 + $0x180] sm:$0xff]
        %v4036 = vld [vmem:[%s3986 + $0x188] sm:$0xff]
        %v4037 = vld [vmem:[%s3986 + $0x190] sm:$0xff]
        %v4038 = vld [vmem:[%s3986 + $0x198] sm:$0xff]
        %v4039 = vld [vmem:[%s3986 + $0x1a0] sm:$0xff]
        %v4040 = vld [vmem:[%s3986 + $0x1a8] sm:$0xff]
        %v4041 = vld [vmem:[%s3986 + $0x1b0] sm:$0xff]
        %v4042 = vld [vmem:[%s3986 + $0x1b8] sm:$0xff]
        %v4043 = vld [vmem:[%s3986 + $0x1c0] sm:$0xff]
        %v4044 = vld [vmem:[%s3986 + $0x1c8] sm:$0xff]
        %v4045 = vld [vmem:[%s3986 + $0x1d0] sm:$0xff]
        %v4046 = vld [vmem:[%s3986 + $0x1d8] sm:$0xff]
        %v4047 = vld [vmem:[%s3986 + $0x1e0] sm:$0xff]
        %v4048 = vld [vmem:[%s3986 + $0x1e8] sm:$0xff]
        %v4049 = vld [vmem:[%s3986 + $0x1f0] sm:$0xff]
        %v4050 = vld [vmem:[%s3986 + $0x1f8] sm:$0xff]
        %v4051 = vld [vmem:[%s3986 + $0x200] sm:$0xff]
        %v4052 = vld [vmem:[%s3986 + $0x208] sm:$0xff]
        %v4053 = vld [vmem:[%s3986 + $0x210] sm:$0xff]
        %v4054 = vld [vmem:[%s3986 + $0x218] sm:$0xff]
        %v4055 = vld [vmem:[%s3986 + $0x220] sm:$0xff]
        %v4056 = vld [vmem:[%s3986 + $0x228] sm:$0xff]
        %v4057 = vld [vmem:[%s3986 + $0x230] sm:$0xff]
        %v4058 = vld [vmem:[%s3986 + $0x238] sm:$0xff]
        %v4059 = vld [vmem:[%s3986 + $0x240] sm:$0xff]
        %v4060 = vld [vmem:[%s3986 + $0x248] sm:$0xff]
        %v4061 = vld [vmem:[%s3986 + $0x250] sm:$0xff]
        %v4062 = vld [vmem:[%s3986 + $0x258] sm:$0xff]
        %v4063 = vld [vmem:[%s3986 + $0x260] sm:$0xff]
        %v4064 = vld [vmem:[%s3986 + $0x268] sm:$0xff]
        %v4065 = vld [vmem:[%s3986 + $0x270] sm:$0xff]
        %v4066 = vld [vmem:[%s3986 + $0x278] sm:$0xff]
        %v4067 = vld [vmem:[%s3986 + $0x280] sm:$0xff]
        %v4068 = vld [vmem:[%s3986 + $0x288] sm:$0xff]
        %v4069 = vld [vmem:[%s3986 + $0x290] sm:$0xff]
        %v4070 = vld [vmem:[%s3986 + $0x298] sm:$0xff]
        %v4071 = vld [vmem:[%s3986 + $0x2a0] sm:$0xff]
        %v4072 = vld [vmem:[%s3986 + $0x2a8] sm:$0xff]
        %v4073 = vld [vmem:[%s3986 + $0x2b0] sm:$0xff]
        %v4074 = vld [vmem:[%s3986 + $0x2b8] sm:$0xff]
        %v4075 = vld [vmem:[%s3986 + $0x2c0] sm:$0xff]
        %v4076 = vld [vmem:[%s3986 + $0x2c8] sm:$0xff]
        %v4077 = vld [vmem:[%s3986 + $0x2d0] sm:$0xff]
        %v4078 = vld [vmem:[%s3986 + $0x2d8] sm:$0xff]
        %v4079 = vld [vmem:[%s3986 + $0x2e0] sm:$0xff]
        %v4080 = vld [vmem:[%s3986 + $0x2e8] sm:$0xff]
        %v4081 = vld [vmem:[%s3986 + $0x2f0] sm:$0xff]
        %v4082 = vld [vmem:[%s3986 + $0x2f8] sm:$0xff]
        %v4083 = vld [vmem:[%s3986 + $0x300] sm:$0xff]
        %v4084 = vld [vmem:[%s3986 + $0x308] sm:$0xff]
        %v4085 = vld [vmem:[%s3986 + $0x310] sm:$0xff]
        %v4086 = vld [vmem:[%s3986 + $0x318] sm:$0xff]
        %v4087 = vld [vmem:[%s3986 + $0x320] sm:$0xff]
        %v4088 = vld [vmem:[%s3986 + $0x328] sm:$0xff]
        %v4089 = vld [vmem:[%s3986 + $0x330] sm:$0xff]
        %v4090 = vld [vmem:[%s3986 + $0x338] sm:$0xff]
        %v4091 = vld [vmem:[%s3986 + $0x340] sm:$0xff]
        %v4092 = vld [vmem:[%s3986 + $0x348] sm:$0xff]
        %v4093 = vld [vmem:[%s3986 + $0x350] sm:$0xff]
        %v4094 = vld [vmem:[%s3986 + $0x358] sm:$0xff]
        %v4095 = vld [vmem:[%s3986 + $0x360] sm:$0xff]
        %v4096 = vld [vmem:[%s3986 + $0x368] sm:$0xff]
        %v4097 = vld [vmem:[%s3986 + $0x370] sm:$0xff]
        %v4098 = vld [vmem:[%s3986 + $0x378] sm:$0xff]
        %v4099 = vld [vmem:[%s3986 + $0x380] sm:$0xff]
        %v4100 = vld [vmem:[%s3986 + $0x388] sm:$0xff]
        %v4101 = vld [vmem:[%s3986 + $0x390] sm:$0xff]
        %v4102 = vld [vmem:[%s3986 + $0x398] sm:$0xff]
        %v4103 = vld [vmem:[%s3986 + $0x3a0] sm:$0xff]
        %v4104 = vld [vmem:[%s3986 + $0x3a8] sm:$0xff]
        %v4105 = vld [vmem:[%s3986 + $0x3b0] sm:$0xff]
        %v4106 = vld [vmem:[%s3986 + $0x3b8] sm:$0xff]
        %v4107 = vld [vmem:[%s3986 + $0x3c0] sm:$0xff]
        %v4108 = vld [vmem:[%s3986 + $0x3c8] sm:$0xff]
        %v4109 = vld [vmem:[%s3986 + $0x3d0] sm:$0xff]
        %v4110 = vld [vmem:[%s3986 + $0x3d8] sm:$0xff]
        %v4111 = vld [vmem:[%s3986 + $0x3e0] sm:$0xff]
        %v4112 = vld [vmem:[%s3986 + $0x3e8] sm:$0xff]
        %v4113 = vld [vmem:[%s3986 + $0x3f0] sm:$0xff]
        %v4114 = vld [vmem:[%s3986 + $0x3f8] sm:$0xff]
        %4115 = vmatpush.msra.mxu0 %v4047
        %4116 = vmatpush.msra.mxu0 %v4043
        %4117 = vmatpush.msra.mxu0 %v4039
        %4118 = vmatpush.msra.mxu0 %v4035
        %4119 = vmatpush.msra.mxu0 %v4031
        %4120 = vmatpush.msra.mxu0 %v4027
        %4121 = vmatpush.msra.mxu0 %v4023
        %4122 = vmatpush.msra.mxu0 %v4019
        %4123 = vmatpush.msra.mxu0 %v4015
        %4124 = vmatpush.msra.mxu0 %v4011
        %4125 = vmatpush.msra.mxu0 %v4007
        %4126 = vmatpush.msra.mxu0 %v4003
        %4127 = vmatpush.msra.mxu0 %v3999
        %4128 = vmatpush.msra.mxu0 %v3995
        %4129 = vmatpush.msra.mxu0 %v3991
        %4130 = vmatpush.msra.mxu0 %v3987
        %4131 = vmatmul.f32.gmra.mxu0 %v3964
        %v4132 = vpop.f32.mrf.mxu0
        %v4133 = vadd.f32 0.0, %v4132
        %4134 = vdwg.mxu0
        %4135 = vmatpush.msra.mxu0 %v4111
        %4136 = vmatpush.msra.mxu0 %v4107
        %4137 = vmatpush.msra.mxu0 %v4103
        %4138 = vmatpush.msra.mxu0 %v4099
        %4139 = vmatpush.msra.mxu0 %v4095
        %4140 = vmatpush.msra.mxu0 %v4091
        %4141 = vmatpush.msra.mxu0 %v4087
        %4142 = vmatpush.msra.mxu0 %v4083
        %4143 = vmatpush.msra.mxu0 %v4079
        %4144 = vmatpush.msra.mxu0 %v4075
        %4145 = vmatpush.msra.mxu0 %v4071
        %4146 = vmatpush.msra.mxu0 %v4067
        %4147 = vmatpush.msra.mxu0 %v4063
        %4148 = vmatpush.msra.mxu0 %v4059
        %4149 = vmatpush.msra.mxu0 %v4055
        %4150 = vmatpush.msra.mxu0 %v4051
        %4151 = vmatmul.f32.gmra.mxu0 %v3984
        %v4152 = vpop.f32.mrf.mxu0
        %v4153 = vadd.f32 %v4133, %v4152
        %4154 = vdwg.mxu0
        %4155 = vmatpush.msra.mxu0 %v4048
        %4156 = vmatpush.msra.mxu0 %v4044
        %4157 = vmatpush.msra.mxu0 %v4040
        %4158 = vmatpush.msra.mxu0 %v4036
        %4159 = vmatpush.msra.mxu0 %v4032
        %4160 = vmatpush.msra.mxu0 %v4028
        %4161 = vmatpush.msra.mxu0 %v4024
        %4162 = vmatpush.msra.mxu0 %v4020
        %4163 = vmatpush.msra.mxu0 %v4016
        %4164 = vmatpush.msra.mxu0 %v4012
        %4165 = vmatpush.msra.mxu0 %v4008
        %4166 = vmatpush.msra.mxu0 %v4004
        %4167 = vmatpush.msra.mxu0 %v4000
        %4168 = vmatpush.msra.mxu0 %v3996
        %4169 = vmatpush.msra.mxu0 %v3992
        %4170 = vmatpush.msra.mxu0 %v3988
        %4171 = vmatmul.f32.gmra.mxu0 %v3964
        %v4172 = vpop.f32.mrf.mxu0
        %v4173 = vadd.f32 0.0, %v4172
        %4174 = vdwg.mxu0
        %4175 = vmatpush.msra.mxu0 %v4112
        %4176 = vmatpush.msra.mxu0 %v4108
        %4177 = vmatpush.msra.mxu0 %v4104
        %4178 = vmatpush.msra.mxu0 %v4100
        %4179 = vmatpush.msra.mxu0 %v4096
        %4180 = vmatpush.msra.mxu0 %v4092
        %4181 = vmatpush.msra.mxu0 %v4088
        %4182 = vmatpush.msra.mxu0 %v4084
        %4183 = vmatpush.msra.mxu0 %v4080
        %4184 = vmatpush.msra.mxu0 %v4076
        %4185 = vmatpush.msra.mxu0 %v4072
        %4186 = vmatpush.msra.mxu0 %v4068
        %4187 = vmatpush.msra.mxu0 %v4064
        %4188 = vmatpush.msra.mxu0 %v4060
        %4189 = vmatpush.msra.mxu0 %v4056
        %4190 = vmatpush.msra.mxu0 %v4052
        %4191 = vmatmul.f32.gmra.mxu0 %v3984
        %v4192 = vpop.f32.mrf.mxu0
        %v4193 = vadd.f32 %v4173, %v4192
        %4194 = vdwg.mxu0
        %4195 = vmatpush.msra.mxu0 %v4049
        %4196 = vmatpush.msra.mxu0 %v4045
        %4197 = vmatpush.msra.mxu0 %v4041
        %4198 = vmatpush.msra.mxu0 %v4037
        %4199 = vmatpush.msra.mxu0 %v4033
        %4200 = vmatpush.msra.mxu0 %v4029
        %4201 = vmatpush.msra.mxu0 %v4025
        %4202 = vmatpush.msra.mxu0 %v4021
        %4203 = vmatpush.msra.mxu0 %v4017
        %4204 = vmatpush.msra.mxu0 %v4013
        %4205 = vmatpush.msra.mxu0 %v4009
        %4206 = vmatpush.msra.mxu0 %v4005
        %4207 = vmatpush.msra.mxu0 %v4001
        %4208 = vmatpush.msra.mxu0 %v3997
        %4209 = vmatpush.msra.mxu0 %v3993
        %4210 = vmatpush.msra.mxu0 %v3989
        %4211 = vmatmul.f32.gmra.mxu0 %v3964
        %v4212 = vpop.f32.mrf.mxu0
        %v4213 = vadd.f32 0.0, %v4212
        %4214 = vdwg.mxu0
        %4215 = vmatpush.msra.mxu0 %v4113
        %4216 = vmatpush.msra.mxu0 %v4109
        %4217 = vmatpush.msra.mxu0 %v4105
        %4218 = vmatpush.msra.mxu0 %v4101
        %4219 = vmatpush.msra.mxu0 %v4097
        %4220 = vmatpush.msra.mxu0 %v4093
        %4221 = vmatpush.msra.mxu0 %v4089
        %4222 = vmatpush.msra.mxu0 %v4085
        %4223 = vmatpush.msra.mxu0 %v4081
        %4224 = vmatpush.msra.mxu0 %v4077
        %4225 = vmatpush.msra.mxu0 %v4073
        %4226 = vmatpush.msra.mxu0 %v4069
        %4227 = vmatpush.msra.mxu0 %v4065
        %4228 = vmatpush.msra.mxu0 %v4061
        %4229 = vmatpush.msra.mxu0 %v4057
        %4230 = vmatpush.msra.mxu0 %v4053
        %4231 = vmatmul.f32.gmra.mxu0 %v3984
        %v4232 = vpop.f32.mrf.mxu0
        %v4233 = vadd.f32 %v4213, %v4232
        %4234 = vdwg.mxu0
        %4235 = vmatpush.msra.mxu0 %v4050
        %4236 = vmatpush.msra.mxu0 %v4046
        %4237 = vmatpush.msra.mxu0 %v4042
        %4238 = vmatpush.msra.mxu0 %v4038
        %4239 = vmatpush.msra.mxu0 %v4034
        %4240 = vmatpush.msra.mxu0 %v4030
        %4241 = vmatpush.msra.mxu0 %v4026
        %4242 = vmatpush.msra.mxu0 %v4022
        %4243 = vmatpush.msra.mxu0 %v4018
        %4244 = vmatpush.msra.mxu0 %v4014
        %4245 = vmatpush.msra.mxu0 %v4010
        %4246 = vmatpush.msra.mxu0 %v4006
        %4247 = vmatpush.msra.mxu0 %v4002
        %4248 = vmatpush.msra.mxu0 %v3998
        %4249 = vmatpush.msra.mxu0 %v3994
        %4250 = vmatpush.msra.mxu0 %v3990
        %4251 = vmatmul.f32.gmra.mxu0 %v3964
        %v4252 = vpop.f32.mrf.mxu0
        %v4253 = vadd.f32 0.0, %v4252
        %4254 = vdwg.mxu0
        %4255 = vmatpush.msra.mxu0 %v4114
        %4256 = vmatpush.msra.mxu0 %v4110
        %4257 = vmatpush.msra.mxu0 %v4106
        %4258 = vmatpush.msra.mxu0 %v4102
        %4259 = vmatpush.msra.mxu0 %v4098
        %4260 = vmatpush.msra.mxu0 %v4094
        %4261 = vmatpush.msra.mxu0 %v4090
        %4262 = vmatpush.msra.mxu0 %v4086
        %4263 = vmatpush.msra.mxu0 %v4082
        %4264 = vmatpush.msra.mxu0 %v4078
        %4265 = vmatpush.msra.mxu0 %v4074
        %4266 = vmatpush.msra.mxu0 %v4070
        %4267 = vmatpush.msra.mxu0 %v4066
        %4268 = vmatpush.msra.mxu0 %v4062
        %4269 = vmatpush.msra.mxu0 %v4058
        %4270 = vmatpush.msra.mxu0 %v4054
        %4271 = vmatmul.f32.gmra.mxu0 %v3984
        %v4272 = vpop.f32.mrf.mxu0
        %v4273 = vadd.f32 %v4253, %v4272
        %4274 = vdwg.mxu0
        %4275 = vmatpush.msra.mxu0 %v3873
        %4276 = vmatpush.msra.mxu0 %v3869
        %4277 = vmatpush.msra.mxu0 %v3865
        %4278 = vmatpush.msra.mxu0 %v3861
        %4279 = vmatpush.msra.mxu0 %v3857
        %4280 = vmatpush.msra.mxu0 %v3853
        %4281 = vmatpush.msra.mxu0 %v3849
        %4282 = vmatpush.msra.mxu0 %v3845
        %4283 = vmatpush.msra.mxu0 %v3841
        %4284 = vmatpush.msra.mxu0 %v3837
        %4285 = vmatpush.msra.mxu0 %v3833
        %4286 = vmatpush.msra.mxu0 %v3829
        %4287 = vmatpush.msra.mxu0 %v3825
        %4288 = vmatpush.msra.mxu0 %v3821
        %4289 = vmatpush.msra.mxu0 %v3817
        %4290 = vmatpush.msra.mxu0 %v3813
        %4291 = vmatmul.f32.gmra.mxu0 %v3791
        %v4292 = vpop.f32.mrf.mxu0
        %v4293 = vadd.f32 %v4153, %v4292
        %4294 = vdwg.mxu0
        %4295 = vmatpush.msra.mxu0 %v3937
        %4296 = vmatpush.msra.mxu0 %v3933
        %4297 = vmatpush.msra.mxu0 %v3929
        %4298 = vmatpush.msra.mxu0 %v3925
        %4299 = vmatpush.msra.mxu0 %v3921
        %4300 = vmatpush.msra.mxu0 %v3917
        %4301 = vmatpush.msra.mxu0 %v3913
        %4302 = vmatpush.msra.mxu0 %v3909
        %4303 = vmatpush.msra.mxu0 %v3905
        %4304 = vmatpush.msra.mxu0 %v3901
        %4305 = vmatpush.msra.mxu0 %v3897
        %4306 = vmatpush.msra.mxu0 %v3893
        %4307 = vmatpush.msra.mxu0 %v3889
        %4308 = vmatpush.msra.mxu0 %v3885
        %4309 = vmatpush.msra.mxu0 %v3881
        %4310 = vmatpush.msra.mxu0 %v3877
        %4311 = vmatmul.f32.gmra.mxu0 %v3811
        %v4312 = vpop.f32.mrf.mxu0
        %v4313 = vadd.f32 %v4293, %v4312
        %4314 = vdwg.mxu0
        %4315 = vmatpush.msra.mxu0 %v3874
        %4316 = vmatpush.msra.mxu0 %v3870
        %4317 = vmatpush.msra.mxu0 %v3866
        %4318 = vmatpush.msra.mxu0 %v3862
        %4319 = vmatpush.msra.mxu0 %v3858
        %4320 = vmatpush.msra.mxu0 %v3854
        %4321 = vmatpush.msra.mxu0 %v3850
        %4322 = vmatpush.msra.mxu0 %v3846
        %4323 = vmatpush.msra.mxu0 %v3842
        %4324 = vmatpush.msra.mxu0 %v3838
        %4325 = vmatpush.msra.mxu0 %v3834
        %4326 = vmatpush.msra.mxu0 %v3830
        %4327 = vmatpush.msra.mxu0 %v3826
        %4328 = vmatpush.msra.mxu0 %v3822
        %4329 = vmatpush.msra.mxu0 %v3818
        %4330 = vmatpush.msra.mxu0 %v3814
        %4331 = vmatmul.f32.gmra.mxu0 %v3791
        %v4332 = vpop.f32.mrf.mxu0
        %v4333 = vadd.f32 %v4193, %v4332
        %4334 = vdwg.mxu0
        %4335 = vmatpush.msra.mxu0 %v3938
        %4336 = vmatpush.msra.mxu0 %v3934
        %4337 = vmatpush.msra.mxu0 %v3930
        %4338 = vmatpush.msra.mxu0 %v3926
        %4339 = vmatpush.msra.mxu0 %v3922
        %4340 = vmatpush.msra.mxu0 %v3918
        %4341 = vmatpush.msra.mxu0 %v3914
        %4342 = vmatpush.msra.mxu0 %v3910
        %4343 = vmatpush.msra.mxu0 %v3906
        %4344 = vmatpush.msra.mxu0 %v3902
        %4345 = vmatpush.msra.mxu0 %v3898
        %4346 = vmatpush.msra.mxu0 %v3894
        %4347 = vmatpush.msra.mxu0 %v3890
        %4348 = vmatpush.msra.mxu0 %v3886
        %4349 = vmatpush.msra.mxu0 %v3882
        %4350 = vmatpush.msra.mxu0 %v3878
        %4351 = vmatmul.f32.gmra.mxu0 %v3811
        %v4352 = vpop.f32.mrf.mxu0
        %v4353 = vadd.f32 %v4333, %v4352
        %4354 = vdwg.mxu0
        %4355 = vmatpush.msra.mxu0 %v3875
        %4356 = vmatpush.msra.mxu0 %v3871
        %4357 = vmatpush.msra.mxu0 %v3867
        %4358 = vmatpush.msra.mxu0 %v3863
        %4359 = vmatpush.msra.mxu0 %v3859
        %4360 = vmatpush.msra.mxu0 %v3855
        %4361 = vmatpush.msra.mxu0 %v3851
        %4362 = vmatpush.msra.mxu0 %v3847
        %4363 = vmatpush.msra.mxu0 %v3843
        %4364 = vmatpush.msra.mxu0 %v3839
        %4365 = vmatpush.msra.mxu0 %v3835
        %4366 = vmatpush.msra.mxu0 %v3831
        %4367 = vmatpush.msra.mxu0 %v3827
        %4368 = vmatpush.msra.mxu0 %v3823
        %4369 = vmatpush.msra.mxu0 %v3819
        %4370 = vmatpush.msra.mxu0 %v3815
        %4371 = vmatmul.f32.gmra.mxu0 %v3791
        %v4372 = vpop.f32.mrf.mxu0
        %v4373 = vadd.f32 %v4233, %v4372
        %4374 = vdwg.mxu0
        %4375 = vmatpush.msra.mxu0 %v3939
        %4376 = vmatpush.msra.mxu0 %v3935
        %4377 = vmatpush.msra.mxu0 %v3931
        %4378 = vmatpush.msra.mxu0 %v3927
        %4379 = vmatpush.msra.mxu0 %v3923
        %4380 = vmatpush.msra.mxu0 %v3919
        %4381 = vmatpush.msra.mxu0 %v3915
        %4382 = vmatpush.msra.mxu0 %v3911
        %4383 = vmatpush.msra.mxu0 %v3907
        %4384 = vmatpush.msra.mxu0 %v3903
        %4385 = vmatpush.msra.mxu0 %v3899
        %4386 = vmatpush.msra.mxu0 %v3895
        %4387 = vmatpush.msra.mxu0 %v3891
        %4388 = vmatpush.msra.mxu0 %v3887
        %4389 = vmatpush.msra.mxu0 %v3883
        %4390 = vmatpush.msra.mxu0 %v3879
        %4391 = vmatmul.f32.gmra.mxu0 %v3811
        %v4392 = vpop.f32.mrf.mxu0
        %v4393 = vadd.f32 %v4373, %v4392
        %4394 = vdwg.mxu0
        %4395 = vmatpush.msra.mxu0 %v3876
        %4396 = vmatpush.msra.mxu0 %v3872
        %4397 = vmatpush.msra.mxu0 %v3868
        %4398 = vmatpush.msra.mxu0 %v3864
        %4399 = vmatpush.msra.mxu0 %v3860
        %4400 = vmatpush.msra.mxu0 %v3856
        %4401 = vmatpush.msra.mxu0 %v3852
        %4402 = vmatpush.msra.mxu0 %v3848
        %4403 = vmatpush.msra.mxu0 %v3844
        %4404 = vmatpush.msra.mxu0 %v3840
        %4405 = vmatpush.msra.mxu0 %v3836
        %4406 = vmatpush.msra.mxu0 %v3832
        %4407 = vmatpush.msra.mxu0 %v3828
        %4408 = vmatpush.msra.mxu0 %v3824
        %4409 = vmatpush.msra.mxu0 %v3820
        %4410 = vmatpush.msra.mxu0 %v3816
        %4411 = vmatmul.f32.gmra.mxu0 %v3791
        %v4412 = vpop.f32.mrf.mxu0
        %v4413 = vadd.f32 %v4273, %v4412
        %4414 = vdwg.mxu0
        %4415 = vmatpush.msra.mxu0 %v3940
        %4416 = vmatpush.msra.mxu0 %v3936
        %4417 = vmatpush.msra.mxu0 %v3932
        %4418 = vmatpush.msra.mxu0 %v3928
        %4419 = vmatpush.msra.mxu0 %v3924
        %4420 = vmatpush.msra.mxu0 %v3920
        %4421 = vmatpush.msra.mxu0 %v3916
        %4422 = vmatpush.msra.mxu0 %v3912
        %4423 = vmatpush.msra.mxu0 %v3908
        %4424 = vmatpush.msra.mxu0 %v3904
        %4425 = vmatpush.msra.mxu0 %v3900
        %4426 = vmatpush.msra.mxu0 %v3896
        %4427 = vmatpush.msra.mxu0 %v3892
        %4428 = vmatpush.msra.mxu0 %v3888
        %4429 = vmatpush.msra.mxu0 %v3884
        %4430 = vmatpush.msra.mxu0 %v3880
        %4431 = vmatmul.f32.gmra.mxu0 %v3811
        %v4432 = vpop.f32.mrf.mxu0
        %v4433 = vadd.f32 %v4413, %v4432
        %4434 = vdwg.mxu0
        %s4435 = scalar_lea.vmem [#allocation14], 8
        %v4436 = vld [vmem:[%s4435] sm:$0xf]
        %v4438 = vsel %vm3769, %v4436, 0
        %4440 = vmatpush.msra.mxu0 0.0
        %4441 = vmatpush.msra.mxu0 0.0
        %4442 = vmatpush.msra.mxu0 0.0
        %4443 = vmatpush.msra.mxu0 0.0
        %4444 = vmatpush.msra.mxu0 0.0
        %4445 = vmatpush.msra.mxu0 0.0
        %4446 = vmatpush.msra.mxu0 0.0
        %4447 = vmatpush.msra.mxu0 0.0
        %4448 = vmatpush.msra.mxu0 0.0
        %4449 = vmatpush.msra.mxu0 0.0
        %4450 = vmatpush.msra.mxu0 0.0
        %4451 = vmatpush.msra.mxu0 0.0
        %4452 = vmatpush.msra.mxu0 0.0
        %4453 = vmatpush.msra.mxu0 0.0
        %4454 = vmatpush.msra.mxu0 %v3766
        %4455 = vmatpush.msra.mxu0 %v3764
        %4456 = vmatmul.f32.gmra.mxu0 %v4438
        %v4457 = vpop.f32.mrf.mxu0
        %v4458 = vadd.f32 0.0, %v4457
        %4459 = vdwg.mxu0
        %4460 = vmatpush.msra.mxu0 0.0
        %4461 = vmatpush.msra.mxu0 0.0
        %4462 = vmatpush.msra.mxu0 0.0
        %4463 = vmatpush.msra.mxu0 0.0
        %4464 = vmatpush.msra.mxu0 0.0
        %4465 = vmatpush.msra.mxu0 0.0
        %4466 = vmatpush.msra.mxu0 0.0
        %4467 = vmatpush.msra.mxu0 0.0
        %4468 = vmatpush.msra.mxu0 0.0
        %4469 = vmatpush.msra.mxu0 0.0
        %4470 = vmatpush.msra.mxu0 0.0
        %4471 = vmatpush.msra.mxu0 0.0
        %4472 = vmatpush.msra.mxu0 0.0
        %4473 = vmatpush.msra.mxu0 0.0
        %4474 = vmatpush.msra.mxu0 %v3767
        %4475 = vmatpush.msra.mxu0 %v3765
        %4476 = vmatmul.f32.gmra.mxu0 %v4438
        %v4477 = vpop.f32.mrf.mxu0
        %v4478 = vadd.f32 0.0, %v4477
        %4479 = vdwg.mxu0
        %s4480 = scalar_lea.vmem [#allocation16], 2048
        %v4481 = vld [vmem:[%s4480] sm:$0xff]
        %v4482 = vld [vmem:[%s4480 + $0x8] sm:$0xff]
        %v4483 = vld [vmem:[%s4480 + $0x10] sm:$0xff]
        %v4484 = vld [vmem:[%s4480 + $0x18] sm:$0xff]
        %v4485 = vld [vmem:[%s4480 + $0x20] sm:$0xff]
        %v4486 = vld [vmem:[%s4480 + $0x28] sm:$0xff]
        %v4487 = vld [vmem:[%s4480 + $0x30] sm:$0xff]
        %v4488 = vld [vmem:[%s4480 + $0x38] sm:$0xff]
        %v4489 = vld [vmem:[%s4480 + $0x40] sm:$0xff]
        %v4490 = vld [vmem:[%s4480 + $0x48] sm:$0xff]
        %v4491 = vld [vmem:[%s4480 + $0x50] sm:$0xff]
        %v4492 = vld [vmem:[%s4480 + $0x58] sm:$0xff]
        %v4493 = vld [vmem:[%s4480 + $0x60] sm:$0xff]
        %v4494 = vld [vmem:[%s4480 + $0x68] sm:$0xff]
        %v4495 = vld [vmem:[%s4480 + $0x70] sm:$0xff]
        %v4496 = vld [vmem:[%s4480 + $0x78] sm:$0xff]
        %v4497 = vld [vmem:[%s4480 + $0x80] sm:$0xff]
        %v4498 = vld [vmem:[%s4480 + $0x88] sm:$0xff]
        %v4499 = vld [vmem:[%s4480 + $0x90] sm:$0xff]
        %v4500 = vld [vmem:[%s4480 + $0x98] sm:$0xff]
        %v4501 = vld [vmem:[%s4480 + $0xa0] sm:$0xff]
        %v4502 = vld [vmem:[%s4480 + $0xa8] sm:$0xff]
        %v4503 = vld [vmem:[%s4480 + $0xb0] sm:$0xff]
        %v4504 = vld [vmem:[%s4480 + $0xb8] sm:$0xff]
        %v4505 = vld [vmem:[%s4480 + $0xc0] sm:$0xff]
        %v4506 = vld [vmem:[%s4480 + $0xc8] sm:$0xff]
        %v4507 = vld [vmem:[%s4480 + $0xd0] sm:$0xff]
        %v4508 = vld [vmem:[%s4480 + $0xd8] sm:$0xff]
        %v4509 = vld [vmem:[%s4480 + $0xe0] sm:$0xff]
        %v4510 = vld [vmem:[%s4480 + $0xe8] sm:$0xff]
        %v4511 = vld [vmem:[%s4480 + $0xf0] sm:$0xff]
        %v4512 = vld [vmem:[%s4480 + $0xf8] sm:$0xff]
        %v4513 = vld [vmem:[%s4480 + $0x100] sm:$0xff]
        %v4514 = vld [vmem:[%s4480 + $0x108] sm:$0xff]
        %v4515 = vld [vmem:[%s4480 + $0x110] sm:$0xff]
        %v4516 = vld [vmem:[%s4480 + $0x118] sm:$0xff]
        %v4517 = vld [vmem:[%s4480 + $0x120] sm:$0xff]
        %v4518 = vld [vmem:[%s4480 + $0x128] sm:$0xff]
        %v4519 = vld [vmem:[%s4480 + $0x130] sm:$0xff]
        %v4520 = vld [vmem:[%s4480 + $0x138] sm:$0xff]
        %v4521 = vld [vmem:[%s4480 + $0x140] sm:$0xff]
        %v4522 = vld [vmem:[%s4480 + $0x148] sm:$0xff]
        %v4523 = vld [vmem:[%s4480 + $0x150] sm:$0xff]
        %v4524 = vld [vmem:[%s4480 + $0x158] sm:$0xff]
        %v4525 = vld [vmem:[%s4480 + $0x160] sm:$0xff]
        %v4526 = vld [vmem:[%s4480 + $0x168] sm:$0xff]
        %v4527 = vld [vmem:[%s4480 + $0x170] sm:$0xff]
        %v4528 = vld [vmem:[%s4480 + $0x178] sm:$0xff]
        %v4529 = vld [vmem:[%s4480 + $0x180] sm:$0xff]
        %v4530 = vld [vmem:[%s4480 + $0x188] sm:$0xff]
        %v4531 = vld [vmem:[%s4480 + $0x190] sm:$0xff]
        %v4532 = vld [vmem:[%s4480 + $0x198] sm:$0xff]
        %v4533 = vld [vmem:[%s4480 + $0x1a0] sm:$0xff]
        %v4534 = vld [vmem:[%s4480 + $0x1a8] sm:$0xff]
        %v4535 = vld [vmem:[%s4480 + $0x1b0] sm:$0xff]
        %v4536 = vld [vmem:[%s4480 + $0x1b8] sm:$0xff]
        %v4537 = vld [vmem:[%s4480 + $0x1c0] sm:$0xff]
        %v4538 = vld [vmem:[%s4480 + $0x1c8] sm:$0xff]
        %v4539 = vld [vmem:[%s4480 + $0x1d0] sm:$0xff]
        %v4540 = vld [vmem:[%s4480 + $0x1d8] sm:$0xff]
        %v4541 = vld [vmem:[%s4480 + $0x1e0] sm:$0xff]
        %v4542 = vld [vmem:[%s4480 + $0x1e8] sm:$0xff]
        %v4543 = vld [vmem:[%s4480 + $0x1f0] sm:$0xff]
        %v4544 = vld [vmem:[%s4480 + $0x1f8] sm:$0xff]
        %v4545 = vld [vmem:[%s4480 + $0x200] sm:$0xff]
        %v4546 = vld [vmem:[%s4480 + $0x208] sm:$0xff]
        %v4547 = vld [vmem:[%s4480 + $0x210] sm:$0xff]
        %v4548 = vld [vmem:[%s4480 + $0x218] sm:$0xff]
        %v4549 = vld [vmem:[%s4480 + $0x220] sm:$0xff]
        %v4550 = vld [vmem:[%s4480 + $0x228] sm:$0xff]
        %v4551 = vld [vmem:[%s4480 + $0x230] sm:$0xff]
        %v4552 = vld [vmem:[%s4480 + $0x238] sm:$0xff]
        %v4553 = vld [vmem:[%s4480 + $0x240] sm:$0xff]
        %v4554 = vld [vmem:[%s4480 + $0x248] sm:$0xff]
        %v4555 = vld [vmem:[%s4480 + $0x250] sm:$0xff]
        %v4556 = vld [vmem:[%s4480 + $0x258] sm:$0xff]
        %v4557 = vld [vmem:[%s4480 + $0x260] sm:$0xff]
        %v4558 = vld [vmem:[%s4480 + $0x268] sm:$0xff]
        %v4559 = vld [vmem:[%s4480 + $0x270] sm:$0xff]
        %v4560 = vld [vmem:[%s4480 + $0x278] sm:$0xff]
        %v4561 = vld [vmem:[%s4480 + $0x280] sm:$0xff]
        %v4562 = vld [vmem:[%s4480 + $0x288] sm:$0xff]
        %v4563 = vld [vmem:[%s4480 + $0x290] sm:$0xff]
        %v4564 = vld [vmem:[%s4480 + $0x298] sm:$0xff]
        %v4565 = vld [vmem:[%s4480 + $0x2a0] sm:$0xff]
        %v4566 = vld [vmem:[%s4480 + $0x2a8] sm:$0xff]
        %v4567 = vld [vmem:[%s4480 + $0x2b0] sm:$0xff]
        %v4568 = vld [vmem:[%s4480 + $0x2b8] sm:$0xff]
        %v4569 = vld [vmem:[%s4480 + $0x2c0] sm:$0xff]
        %v4570 = vld [vmem:[%s4480 + $0x2c8] sm:$0xff]
        %v4571 = vld [vmem:[%s4480 + $0x2d0] sm:$0xff]
        %v4572 = vld [vmem:[%s4480 + $0x2d8] sm:$0xff]
        %v4573 = vld [vmem:[%s4480 + $0x2e0] sm:$0xff]
        %v4574 = vld [vmem:[%s4480 + $0x2e8] sm:$0xff]
        %v4575 = vld [vmem:[%s4480 + $0x2f0] sm:$0xff]
        %v4576 = vld [vmem:[%s4480 + $0x2f8] sm:$0xff]
        %v4577 = vld [vmem:[%s4480 + $0x300] sm:$0xff]
        %v4578 = vld [vmem:[%s4480 + $0x308] sm:$0xff]
        %v4579 = vld [vmem:[%s4480 + $0x310] sm:$0xff]
        %v4580 = vld [vmem:[%s4480 + $0x318] sm:$0xff]
        %v4581 = vld [vmem:[%s4480 + $0x320] sm:$0xff]
        %v4582 = vld [vmem:[%s4480 + $0x328] sm:$0xff]
        %v4583 = vld [vmem:[%s4480 + $0x330] sm:$0xff]
        %v4584 = vld [vmem:[%s4480 + $0x338] sm:$0xff]
        %v4585 = vld [vmem:[%s4480 + $0x340] sm:$0xff]
        %v4586 = vld [vmem:[%s4480 + $0x348] sm:$0xff]
        %v4587 = vld [vmem:[%s4480 + $0x350] sm:$0xff]
        %v4588 = vld [vmem:[%s4480 + $0x358] sm:$0xff]
        %v4589 = vld [vmem:[%s4480 + $0x360] sm:$0xff]
        %v4590 = vld [vmem:[%s4480 + $0x368] sm:$0xff]
        %v4591 = vld [vmem:[%s4480 + $0x370] sm:$0xff]
        %v4592 = vld [vmem:[%s4480 + $0x378] sm:$0xff]
        %v4593 = vld [vmem:[%s4480 + $0x380] sm:$0xff]
        %v4594 = vld [vmem:[%s4480 + $0x388] sm:$0xff]
        %v4595 = vld [vmem:[%s4480 + $0x390] sm:$0xff]
        %v4596 = vld [vmem:[%s4480 + $0x398] sm:$0xff]
        %v4597 = vld [vmem:[%s4480 + $0x3a0] sm:$0xff]
        %v4598 = vld [vmem:[%s4480 + $0x3a8] sm:$0xff]
        %v4599 = vld [vmem:[%s4480 + $0x3b0] sm:$0xff]
        %v4600 = vld [vmem:[%s4480 + $0x3b8] sm:$0xff]
        %v4601 = vld [vmem:[%s4480 + $0x3c0] sm:$0xff]
        %v4602 = vld [vmem:[%s4480 + $0x3c8] sm:$0xff]
        %v4603 = vld [vmem:[%s4480 + $0x3d0] sm:$0xff]
        %v4604 = vld [vmem:[%s4480 + $0x3d8] sm:$0xff]
        %v4605 = vld [vmem:[%s4480 + $0x3e0] sm:$0xff]
        %v4606 = vld [vmem:[%s4480 + $0x3e8] sm:$0xff]
        %v4607 = vld [vmem:[%s4480 + $0x3f0] sm:$0xff]
        %v4608 = vld [vmem:[%s4480 + $0x3f8] sm:$0xff]
        %4609 = vmatpush.msra.mxu0 %v4541
        %4610 = vmatpush.msra.mxu0 %v4537
        %4611 = vmatpush.msra.mxu0 %v4533
        %4612 = vmatpush.msra.mxu0 %v4529
        %4613 = vmatpush.msra.mxu0 %v4525
        %4614 = vmatpush.msra.mxu0 %v4521
        %4615 = vmatpush.msra.mxu0 %v4517
        %4616 = vmatpush.msra.mxu0 %v4513
        %4617 = vmatpush.msra.mxu0 %v4509
        %4618 = vmatpush.msra.mxu0 %v4505
        %4619 = vmatpush.msra.mxu0 %v4501
        %4620 = vmatpush.msra.mxu0 %v4497
        %4621 = vmatpush.msra.mxu0 %v4493
        %4622 = vmatpush.msra.mxu0 %v4489
        %4623 = vmatpush.msra.mxu0 %v4485
        %4624 = vmatpush.msra.mxu0 %v4481
        %4625 = vmatmul.f32.gmra.mxu0 %v4458
        %v4626 = vpop.f32.mrf.mxu0
        %v4627 = vadd.f32 0.0, %v4626
        %4628 = vdwg.mxu0
        %4629 = vmatpush.msra.mxu0 %v4605
        %4630 = vmatpush.msra.mxu0 %v4601
        %4631 = vmatpush.msra.mxu0 %v4597
        %4632 = vmatpush.msra.mxu0 %v4593
        %4633 = vmatpush.msra.mxu0 %v4589
        %4634 = vmatpush.msra.mxu0 %v4585
        %4635 = vmatpush.msra.mxu0 %v4581
        %4636 = vmatpush.msra.mxu0 %v4577
        %4637 = vmatpush.msra.mxu0 %v4573
        %4638 = vmatpush.msra.mxu0 %v4569
        %4639 = vmatpush.msra.mxu0 %v4565
        %4640 = vmatpush.msra.mxu0 %v4561
        %4641 = vmatpush.msra.mxu0 %v4557
        %4642 = vmatpush.msra.mxu0 %v4553
        %4643 = vmatpush.msra.mxu0 %v4549
        %4644 = vmatpush.msra.mxu0 %v4545
        %4645 = vmatmul.f32.gmra.mxu0 %v4478
        %v4646 = vpop.f32.mrf.mxu0
        %v4647 = vadd.f32 %v4627, %v4646
        %4648 = vdwg.mxu0
        %4649 = vmatpush.msra.mxu0 %v4542
        %4650 = vmatpush.msra.mxu0 %v4538
        %4651 = vmatpush.msra.mxu0 %v4534
        %4652 = vmatpush.msra.mxu0 %v4530
        %4653 = vmatpush.msra.mxu0 %v4526
        %4654 = vmatpush.msra.mxu0 %v4522
        %4655 = vmatpush.msra.mxu0 %v4518
        %4656 = vmatpush.msra.mxu0 %v4514
        %4657 = vmatpush.msra.mxu0 %v4510
        %4658 = vmatpush.msra.mxu0 %v4506
        %4659 = vmatpush.msra.mxu0 %v4502
        %4660 = vmatpush.msra.mxu0 %v4498
        %4661 = vmatpush.msra.mxu0 %v4494
        %4662 = vmatpush.msra.mxu0 %v4490
        %4663 = vmatpush.msra.mxu0 %v4486
        %4664 = vmatpush.msra.mxu0 %v4482
        %4665 = vmatmul.f32.gmra.mxu0 %v4458
        %v4666 = vpop.f32.mrf.mxu0
        %v4667 = vadd.f32 0.0, %v4666
        %4668 = vdwg.mxu0
        %4669 = vmatpush.msra.mxu0 %v4606
        %4670 = vmatpush.msra.mxu0 %v4602
        %4671 = vmatpush.msra.mxu0 %v4598
        %4672 = vmatpush.msra.mxu0 %v4594
        %4673 = vmatpush.msra.mxu0 %v4590
        %4674 = vmatpush.msra.mxu0 %v4586
        %4675 = vmatpush.msra.mxu0 %v4582
        %4676 = vmatpush.msra.mxu0 %v4578
        %4677 = vmatpush.msra.mxu0 %v4574
        %4678 = vmatpush.msra.mxu0 %v4570
        %4679 = vmatpush.msra.mxu0 %v4566
        %4680 = vmatpush.msra.mxu0 %v4562
        %4681 = vmatpush.msra.mxu0 %v4558
        %4682 = vmatpush.msra.mxu0 %v4554
        %4683 = vmatpush.msra.mxu0 %v4550
        %4684 = vmatpush.msra.mxu0 %v4546
        %4685 = vmatmul.f32.gmra.mxu0 %v4478
        %v4686 = vpop.f32.mrf.mxu0
        %v4687 = vadd.f32 %v4667, %v4686
        %4688 = vdwg.mxu0
        %4689 = vmatpush.msra.mxu0 %v4543
        %4690 = vmatpush.msra.mxu0 %v4539
        %4691 = vmatpush.msra.mxu0 %v4535
        %4692 = vmatpush.msra.mxu0 %v4531
        %4693 = vmatpush.msra.mxu0 %v4527
        %4694 = vmatpush.msra.mxu0 %v4523
        %4695 = vmatpush.msra.mxu0 %v4519
        %4696 = vmatpush.msra.mxu0 %v4515
        %4697 = vmatpush.msra.mxu0 %v4511
        %4698 = vmatpush.msra.mxu0 %v4507
        %4699 = vmatpush.msra.mxu0 %v4503
        %4700 = vmatpush.msra.mxu0 %v4499
        %4701 = vmatpush.msra.mxu0 %v4495
        %4702 = vmatpush.msra.mxu0 %v4491
        %4703 = vmatpush.msra.mxu0 %v4487
        %4704 = vmatpush.msra.mxu0 %v4483
        %4705 = vmatmul.f32.gmra.mxu0 %v4458
        %v4706 = vpop.f32.mrf.mxu0
        %v4707 = vadd.f32 0.0, %v4706
        %4708 = vdwg.mxu0
        %4709 = vmatpush.msra.mxu0 %v4607
        %4710 = vmatpush.msra.mxu0 %v4603
        %4711 = vmatpush.msra.mxu0 %v4599
        %4712 = vmatpush.msra.mxu0 %v4595
        %4713 = vmatpush.msra.mxu0 %v4591
        %4714 = vmatpush.msra.mxu0 %v4587
        %4715 = vmatpush.msra.mxu0 %v4583
        %4716 = vmatpush.msra.mxu0 %v4579
        %4717 = vmatpush.msra.mxu0 %v4575
        %4718 = vmatpush.msra.mxu0 %v4571
        %4719 = vmatpush.msra.mxu0 %v4567
        %4720 = vmatpush.msra.mxu0 %v4563
        %4721 = vmatpush.msra.mxu0 %v4559
        %4722 = vmatpush.msra.mxu0 %v4555
        %4723 = vmatpush.msra.mxu0 %v4551
        %4724 = vmatpush.msra.mxu0 %v4547
        %4725 = vmatmul.f32.gmra.mxu0 %v4478
        %v4726 = vpop.f32.mrf.mxu0
        %v4727 = vadd.f32 %v4707, %v4726
        %4728 = vdwg.mxu0
        %4729 = vmatpush.msra.mxu0 %v4544
        %4730 = vmatpush.msra.mxu0 %v4540
        %4731 = vmatpush.msra.mxu0 %v4536
        %4732 = vmatpush.msra.mxu0 %v4532
        %4733 = vmatpush.msra.mxu0 %v4528
        %4734 = vmatpush.msra.mxu0 %v4524
        %4735 = vmatpush.msra.mxu0 %v4520
        %4736 = vmatpush.msra.mxu0 %v4516
        %4737 = vmatpush.msra.mxu0 %v4512
        %4738 = vmatpush.msra.mxu0 %v4508
        %4739 = vmatpush.msra.mxu0 %v4504
        %4740 = vmatpush.msra.mxu0 %v4500
        %4741 = vmatpush.msra.mxu0 %v4496
        %4742 = vmatpush.msra.mxu0 %v4492
        %4743 = vmatpush.msra.mxu0 %v4488
        %4744 = vmatpush.msra.mxu0 %v4484
        %4745 = vmatmul.f32.gmra.mxu0 %v4458
        %v4746 = vpop.f32.mrf.mxu0
        %v4747 = vadd.f32 0.0, %v4746
        %4748 = vdwg.mxu0
        %4749 = vmatpush.msra.mxu0 %v4608
        %4750 = vmatpush.msra.mxu0 %v4604
        %4751 = vmatpush.msra.mxu0 %v4600
        %4752 = vmatpush.msra.mxu0 %v4596
        %4753 = vmatpush.msra.mxu0 %v4592
        %4754 = vmatpush.msra.mxu0 %v4588
        %4755 = vmatpush.msra.mxu0 %v4584
        %4756 = vmatpush.msra.mxu0 %v4580
        %4757 = vmatpush.msra.mxu0 %v4576
        %4758 = vmatpush.msra.mxu0 %v4572
        %4759 = vmatpush.msra.mxu0 %v4568
        %4760 = vmatpush.msra.mxu0 %v4564
        %4761 = vmatpush.msra.mxu0 %v4560
        %4762 = vmatpush.msra.mxu0 %v4556
        %4763 = vmatpush.msra.mxu0 %v4552
        %4764 = vmatpush.msra.mxu0 %v4548
        %4765 = vmatmul.f32.gmra.mxu0 %v4478
        %v4766 = vpop.f32.mrf.mxu0
        %v4767 = vadd.f32 %v4747, %v4766
        %4768 = vdwg.mxu0
        %v4769 = vadd.f32 %v4313, %v4647
        %v4770 = vadd.f32 %v4353, %v4687
        %v4771 = vadd.f32 %v4393, %v4727
        %v4772 = vadd.f32 %v4433, %v4767
        %s4773 = scalar_lea.vmem [#allocation14], 12
        %v4774 = vld [vmem:[%s4773] sm:$0xf]
        %v4776 = vsel %vm3769, %v4774, 0
        %4778 = vmatpush.msra.mxu0 0.0
        %4779 = vmatpush.msra.mxu0 0.0
        %4780 = vmatpush.msra.mxu0 0.0
        %4781 = vmatpush.msra.mxu0 0.0
        %4782 = vmatpush.msra.mxu0 0.0
        %4783 = vmatpush.msra.mxu0 0.0
        %4784 = vmatpush.msra.mxu0 0.0
        %4785 = vmatpush.msra.mxu0 0.0
        %4786 = vmatpush.msra.mxu0 0.0
        %4787 = vmatpush.msra.mxu0 0.0
        %4788 = vmatpush.msra.mxu0 0.0
        %4789 = vmatpush.msra.mxu0 0.0
        %4790 = vmatpush.msra.mxu0 0.0
        %4791 = vmatpush.msra.mxu0 0.0
        %4792 = vmatpush.msra.mxu0 %v3766
        %4793 = vmatpush.msra.mxu0 %v3764
        %4794 = vmatmul.f32.gmra.mxu0 %v4776
        %v4795 = vpop.f32.mrf.mxu0
        %v4796 = vadd.f32 0.0, %v4795
        %4797 = vdwg.mxu0
        %4798 = vmatpush.msra.mxu0 0.0
        %4799 = vmatpush.msra.mxu0 0.0
        %4800 = vmatpush.msra.mxu0 0.0
        %4801 = vmatpush.msra.mxu0 0.0
        %4802 = vmatpush.msra.mxu0 0.0
        %4803 = vmatpush.msra.mxu0 0.0
        %4804 = vmatpush.msra.mxu0 0.0
        %4805 = vmatpush.msra.mxu0 0.0
        %4806 = vmatpush.msra.mxu0 0.0
        %4807 = vmatpush.msra.mxu0 0.0
        %4808 = vmatpush.msra.mxu0 0.0
        %4809 = vmatpush.msra.mxu0 0.0
        %4810 = vmatpush.msra.mxu0 0.0
        %4811 = vmatpush.msra.mxu0 0.0
        %4812 = vmatpush.msra.mxu0 %v3767
        %4813 = vmatpush.msra.mxu0 %v3765
        %4814 = vmatmul.f32.gmra.mxu0 %v4776
        %v4815 = vpop.f32.mrf.mxu0
        %v4816 = vadd.f32 0.0, %v4815
        %4817 = vdwg.mxu0
        %s4818 = scalar_lea.vmem [#allocation16], 3072
        %v4819 = vld [vmem:[%s4818] sm:$0xff]
        %v4820 = vld [vmem:[%s4818 + $0x8] sm:$0xff]
        %v4821 = vld [vmem:[%s4818 + $0x10] sm:$0xff]
        %v4822 = vld [vmem:[%s4818 + $0x18] sm:$0xff]
        %v4823 = vld [vmem:[%s4818 + $0x20] sm:$0xff]
        %v4824 = vld [vmem:[%s4818 + $0x28] sm:$0xff]
        %v4825 = vld [vmem:[%s4818 + $0x30] sm:$0xff]
        %v4826 = vld [vmem:[%s4818 + $0x38] sm:$0xff]
        %v4827 = vld [vmem:[%s4818 + $0x40] sm:$0xff]
        %v4828 = vld [vmem:[%s4818 + $0x48] sm:$0xff]
        %v4829 = vld [vmem:[%s4818 + $0x50] sm:$0xff]
        %v4830 = vld [vmem:[%s4818 + $0x58] sm:$0xff]
        %v4831 = vld [vmem:[%s4818 + $0x60] sm:$0xff]
        %v4832 = vld [vmem:[%s4818 + $0x68] sm:$0xff]
        %v4833 = vld [vmem:[%s4818 + $0x70] sm:$0xff]
        %v4834 = vld [vmem:[%s4818 + $0x78] sm:$0xff]
        %v4835 = vld [vmem:[%s4818 + $0x80] sm:$0xff]
        %v4836 = vld [vmem:[%s4818 + $0x88] sm:$0xff]
        %v4837 = vld [vmem:[%s4818 + $0x90] sm:$0xff]
        %v4838 = vld [vmem:[%s4818 + $0x98] sm:$0xff]
        %v4839 = vld [vmem:[%s4818 + $0xa0] sm:$0xff]
        %v4840 = vld [vmem:[%s4818 + $0xa8] sm:$0xff]
        %v4841 = vld [vmem:[%s4818 + $0xb0] sm:$0xff]
        %v4842 = vld [vmem:[%s4818 + $0xb8] sm:$0xff]
        %v4843 = vld [vmem:[%s4818 + $0xc0] sm:$0xff]
        %v4844 = vld [vmem:[%s4818 + $0xc8] sm:$0xff]
        %v4845 = vld [vmem:[%s4818 + $0xd0] sm:$0xff]
        %v4846 = vld [vmem:[%s4818 + $0xd8] sm:$0xff]
        %v4847 = vld [vmem:[%s4818 + $0xe0] sm:$0xff]
        %v4848 = vld [vmem:[%s4818 + $0xe8] sm:$0xff]
        %v4849 = vld [vmem:[%s4818 + $0xf0] sm:$0xff]
        %v4850 = vld [vmem:[%s4818 + $0xf8] sm:$0xff]
        %v4851 = vld [vmem:[%s4818 + $0x100] sm:$0xff]
        %v4852 = vld [vmem:[%s4818 + $0x108] sm:$0xff]
        %v4853 = vld [vmem:[%s4818 + $0x110] sm:$0xff]
        %v4854 = vld [vmem:[%s4818 + $0x118] sm:$0xff]
        %v4855 = vld [vmem:[%s4818 + $0x120] sm:$0xff]
        %v4856 = vld [vmem:[%s4818 + $0x128] sm:$0xff]
        %v4857 = vld [vmem:[%s4818 + $0x130] sm:$0xff]
        %v4858 = vld [vmem:[%s4818 + $0x138] sm:$0xff]
        %v4859 = vld [vmem:[%s4818 + $0x140] sm:$0xff]
        %v4860 = vld [vmem:[%s4818 + $0x148] sm:$0xff]
        %v4861 = vld [vmem:[%s4818 + $0x150] sm:$0xff]
        %v4862 = vld [vmem:[%s4818 + $0x158] sm:$0xff]
        %v4863 = vld [vmem:[%s4818 + $0x160] sm:$0xff]
        %v4864 = vld [vmem:[%s4818 + $0x168] sm:$0xff]
        %v4865 = vld [vmem:[%s4818 + $0x170] sm:$0xff]
        %v4866 = vld [vmem:[%s4818 + $0x178] sm:$0xff]
        %v4867 = vld [vmem:[%s4818 + $0x180] sm:$0xff]
        %v4868 = vld [vmem:[%s4818 + $0x188] sm:$0xff]
        %v4869 = vld [vmem:[%s4818 + $0x190] sm:$0xff]
        %v4870 = vld [vmem:[%s4818 + $0x198] sm:$0xff]
        %v4871 = vld [vmem:[%s4818 + $0x1a0] sm:$0xff]
        %v4872 = vld [vmem:[%s4818 + $0x1a8] sm:$0xff]
        %v4873 = vld [vmem:[%s4818 + $0x1b0] sm:$0xff]
        %v4874 = vld [vmem:[%s4818 + $0x1b8] sm:$0xff]
        %v4875 = vld [vmem:[%s4818 + $0x1c0] sm:$0xff]
        %v4876 = vld [vmem:[%s4818 + $0x1c8] sm:$0xff]
        %v4877 = vld [vmem:[%s4818 + $0x1d0] sm:$0xff]
        %v4878 = vld [vmem:[%s4818 + $0x1d8] sm:$0xff]
        %v4879 = vld [vmem:[%s4818 + $0x1e0] sm:$0xff]
        %v4880 = vld [vmem:[%s4818 + $0x1e8] sm:$0xff]
        %v4881 = vld [vmem:[%s4818 + $0x1f0] sm:$0xff]
        %v4882 = vld [vmem:[%s4818 + $0x1f8] sm:$0xff]
        %v4883 = vld [vmem:[%s4818 + $0x200] sm:$0xff]
        %v4884 = vld [vmem:[%s4818 + $0x208] sm:$0xff]
        %v4885 = vld [vmem:[%s4818 + $0x210] sm:$0xff]
        %v4886 = vld [vmem:[%s4818 + $0x218] sm:$0xff]
        %v4887 = vld [vmem:[%s4818 + $0x220] sm:$0xff]
        %v4888 = vld [vmem:[%s4818 + $0x228] sm:$0xff]
        %v4889 = vld [vmem:[%s4818 + $0x230] sm:$0xff]
        %v4890 = vld [vmem:[%s4818 + $0x238] sm:$0xff]
        %v4891 = vld [vmem:[%s4818 + $0x240] sm:$0xff]
        %v4892 = vld [vmem:[%s4818 + $0x248] sm:$0xff]
        %v4893 = vld [vmem:[%s4818 + $0x250] sm:$0xff]
        %v4894 = vld [vmem:[%s4818 + $0x258] sm:$0xff]
        %v4895 = vld [vmem:[%s4818 + $0x260] sm:$0xff]
        %v4896 = vld [vmem:[%s4818 + $0x268] sm:$0xff]
        %v4897 = vld [vmem:[%s4818 + $0x270] sm:$0xff]
        %v4898 = vld [vmem:[%s4818 + $0x278] sm:$0xff]
        %v4899 = vld [vmem:[%s4818 + $0x280] sm:$0xff]
        %v4900 = vld [vmem:[%s4818 + $0x288] sm:$0xff]
        %v4901 = vld [vmem:[%s4818 + $0x290] sm:$0xff]
        %v4902 = vld [vmem:[%s4818 + $0x298] sm:$0xff]
        %v4903 = vld [vmem:[%s4818 + $0x2a0] sm:$0xff]
        %v4904 = vld [vmem:[%s4818 + $0x2a8] sm:$0xff]
        %v4905 = vld [vmem:[%s4818 + $0x2b0] sm:$0xff]
        %v4906 = vld [vmem:[%s4818 + $0x2b8] sm:$0xff]
        %v4907 = vld [vmem:[%s4818 + $0x2c0] sm:$0xff]
        %v4908 = vld [vmem:[%s4818 + $0x2c8] sm:$0xff]
        %v4909 = vld [vmem:[%s4818 + $0x2d0] sm:$0xff]
        %v4910 = vld [vmem:[%s4818 + $0x2d8] sm:$0xff]
        %v4911 = vld [vmem:[%s4818 + $0x2e0] sm:$0xff]
        %v4912 = vld [vmem:[%s4818 + $0x2e8] sm:$0xff]
        %v4913 = vld [vmem:[%s4818 + $0x2f0] sm:$0xff]
        %v4914 = vld [vmem:[%s4818 + $0x2f8] sm:$0xff]
        %v4915 = vld [vmem:[%s4818 + $0x300] sm:$0xff]
        %v4916 = vld [vmem:[%s4818 + $0x308] sm:$0xff]
        %v4917 = vld [vmem:[%s4818 + $0x310] sm:$0xff]
        %v4918 = vld [vmem:[%s4818 + $0x318] sm:$0xff]
        %v4919 = vld [vmem:[%s4818 + $0x320] sm:$0xff]
        %v4920 = vld [vmem:[%s4818 + $0x328] sm:$0xff]
        %v4921 = vld [vmem:[%s4818 + $0x330] sm:$0xff]
        %v4922 = vld [vmem:[%s4818 + $0x338] sm:$0xff]
        %v4923 = vld [vmem:[%s4818 + $0x340] sm:$0xff]
        %v4924 = vld [vmem:[%s4818 + $0x348] sm:$0xff]
        %v4925 = vld [vmem:[%s4818 + $0x350] sm:$0xff]
        %v4926 = vld [vmem:[%s4818 + $0x358] sm:$0xff]
        %v4927 = vld [vmem:[%s4818 + $0x360] sm:$0xff]
        %v4928 = vld [vmem:[%s4818 + $0x368] sm:$0xff]
        %v4929 = vld [vmem:[%s4818 + $0x370] sm:$0xff]
        %v4930 = vld [vmem:[%s4818 + $0x378] sm:$0xff]
        %v4931 = vld [vmem:[%s4818 + $0x380] sm:$0xff]
        %v4932 = vld [vmem:[%s4818 + $0x388] sm:$0xff]
        %v4933 = vld [vmem:[%s4818 + $0x390] sm:$0xff]
        %v4934 = vld [vmem:[%s4818 + $0x398] sm:$0xff]
        %v4935 = vld [vmem:[%s4818 + $0x3a0] sm:$0xff]
        %v4936 = vld [vmem:[%s4818 + $0x3a8] sm:$0xff]
        %v4937 = vld [vmem:[%s4818 + $0x3b0] sm:$0xff]
        %v4938 = vld [vmem:[%s4818 + $0x3b8] sm:$0xff]
        %v4939 = vld [vmem:[%s4818 + $0x3c0] sm:$0xff]
        %v4940 = vld [vmem:[%s4818 + $0x3c8] sm:$0xff]
        %v4941 = vld [vmem:[%s4818 + $0x3d0] sm:$0xff]
        %v4942 = vld [vmem:[%s4818 + $0x3d8] sm:$0xff]
        %v4943 = vld [vmem:[%s4818 + $0x3e0] sm:$0xff]
        %v4944 = vld [vmem:[%s4818 + $0x3e8] sm:$0xff]
        %v4945 = vld [vmem:[%s4818 + $0x3f0] sm:$0xff]
        %v4946 = vld [vmem:[%s4818 + $0x3f8] sm:$0xff]
        %4947 = vmatpush.msra.mxu0 %v4879
        %4948 = vmatpush.msra.mxu0 %v4875
        %4949 = vmatpush.msra.mxu0 %v4871
        %4950 = vmatpush.msra.mxu0 %v4867
        %4951 = vmatpush.msra.mxu0 %v4863
        %4952 = vmatpush.msra.mxu0 %v4859
        %4953 = vmatpush.msra.mxu0 %v4855
        %4954 = vmatpush.msra.mxu0 %v4851
        %4955 = vmatpush.msra.mxu0 %v4847
        %4956 = vmatpush.msra.mxu0 %v4843
        %4957 = vmatpush.msra.mxu0 %v4839
        %4958 = vmatpush.msra.mxu0 %v4835
        %4959 = vmatpush.msra.mxu0 %v4831
        %4960 = vmatpush.msra.mxu0 %v4827
        %4961 = vmatpush.msra.mxu0 %v4823
        %4962 = vmatpush.msra.mxu0 %v4819
        %4963 = vmatmul.f32.gmra.mxu0 %v4796
        %v4964 = vpop.f32.mrf.mxu0
        %v4965 = vadd.f32 0.0, %v4964
        %4966 = vdwg.mxu0
        %4967 = vmatpush.msra.mxu0 %v4943
        %4968 = vmatpush.msra.mxu0 %v4939
        %4969 = vmatpush.msra.mxu0 %v4935
        %4970 = vmatpush.msra.mxu0 %v4931
        %4971 = vmatpush.msra.mxu0 %v4927
        %4972 = vmatpush.msra.mxu0 %v4923
        %4973 = vmatpush.msra.mxu0 %v4919
        %4974 = vmatpush.msra.mxu0 %v4915
        %4975 = vmatpush.msra.mxu0 %v4911
        %4976 = vmatpush.msra.mxu0 %v4907
        %4977 = vmatpush.msra.mxu0 %v4903
        %4978 = vmatpush.msra.mxu0 %v4899
        %4979 = vmatpush.msra.mxu0 %v4895
        %4980 = vmatpush.msra.mxu0 %v4891
        %4981 = vmatpush.msra.mxu0 %v4887
        %4982 = vmatpush.msra.mxu0 %v4883
        %4983 = vmatmul.f32.gmra.mxu0 %v4816
        %v4984 = vpop.f32.mrf.mxu0
        %v4985 = vadd.f32 %v4965, %v4984
        %4986 = vdwg.mxu0
        %4987 = vmatpush.msra.mxu0 %v4880
        %4988 = vmatpush.msra.mxu0 %v4876
        %4989 = vmatpush.msra.mxu0 %v4872
        %4990 = vmatpush.msra.mxu0 %v4868
        %4991 = vmatpush.msra.mxu0 %v4864
        %4992 = vmatpush.msra.mxu0 %v4860
        %4993 = vmatpush.msra.mxu0 %v4856
        %4994 = vmatpush.msra.mxu0 %v4852
        %4995 = vmatpush.msra.mxu0 %v4848
        %4996 = vmatpush.msra.mxu0 %v4844
        %4997 = vmatpush.msra.mxu0 %v4840
        %4998 = vmatpush.msra.mxu0 %v4836
        %4999 = vmatpush.msra.mxu0 %v4832
        %5000 = vmatpush.msra.mxu0 %v4828
        %5001 = vmatpush.msra.mxu0 %v4824
        %5002 = vmatpush.msra.mxu0 %v4820
        %5003 = vmatmul.f32.gmra.mxu0 %v4796
        %v5004 = vpop.f32.mrf.mxu0
        %v5005 = vadd.f32 0.0, %v5004
        %5006 = vdwg.mxu0
        %5007 = vmatpush.msra.mxu0 %v4944
        %5008 = vmatpush.msra.mxu0 %v4940
        %5009 = vmatpush.msra.mxu0 %v4936
        %5010 = vmatpush.msra.mxu0 %v4932
        %5011 = vmatpush.msra.mxu0 %v4928
        %5012 = vmatpush.msra.mxu0 %v4924
        %5013 = vmatpush.msra.mxu0 %v4920
        %5014 = vmatpush.msra.mxu0 %v4916
        %5015 = vmatpush.msra.mxu0 %v4912
        %5016 = vmatpush.msra.mxu0 %v4908
        %5017 = vmatpush.msra.mxu0 %v4904
        %5018 = vmatpush.msra.mxu0 %v4900
        %5019 = vmatpush.msra.mxu0 %v4896
        %5020 = vmatpush.msra.mxu0 %v4892
        %5021 = vmatpush.msra.mxu0 %v4888
        %5022 = vmatpush.msra.mxu0 %v4884
        %5023 = vmatmul.f32.gmra.mxu0 %v4816
        %v5024 = vpop.f32.mrf.mxu0
        %v5025 = vadd.f32 %v5005, %v5024
        %5026 = vdwg.mxu0
        %5027 = vmatpush.msra.mxu0 %v4881
        %5028 = vmatpush.msra.mxu0 %v4877
        %5029 = vmatpush.msra.mxu0 %v4873
        %5030 = vmatpush.msra.mxu0 %v4869
        %5031 = vmatpush.msra.mxu0 %v4865
        %5032 = vmatpush.msra.mxu0 %v4861
        %5033 = vmatpush.msra.mxu0 %v4857
        %5034 = vmatpush.msra.mxu0 %v4853
        %5035 = vmatpush.msra.mxu0 %v4849
        %5036 = vmatpush.msra.mxu0 %v4845
        %5037 = vmatpush.msra.mxu0 %v4841
        %5038 = vmatpush.msra.mxu0 %v4837
        %5039 = vmatpush.msra.mxu0 %v4833
        %5040 = vmatpush.msra.mxu0 %v4829
        %5041 = vmatpush.msra.mxu0 %v4825
        %5042 = vmatpush.msra.mxu0 %v4821
        %5043 = vmatmul.f32.gmra.mxu0 %v4796
        %v5044 = vpop.f32.mrf.mxu0
        %v5045 = vadd.f32 0.0, %v5044
        %5046 = vdwg.mxu0
        %5047 = vmatpush.msra.mxu0 %v4945
        %5048 = vmatpush.msra.mxu0 %v4941
        %5049 = vmatpush.msra.mxu0 %v4937
        %5050 = vmatpush.msra.mxu0 %v4933
        %5051 = vmatpush.msra.mxu0 %v4929
        %5052 = vmatpush.msra.mxu0 %v4925
        %5053 = vmatpush.msra.mxu0 %v4921
        %5054 = vmatpush.msra.mxu0 %v4917
        %5055 = vmatpush.msra.mxu0 %v4913
        %5056 = vmatpush.msra.mxu0 %v4909
        %5057 = vmatpush.msra.mxu0 %v4905
        %5058 = vmatpush.msra.mxu0 %v4901
        %5059 = vmatpush.msra.mxu0 %v4897
        %5060 = vmatpush.msra.mxu0 %v4893
        %5061 = vmatpush.msra.mxu0 %v4889
        %5062 = vmatpush.msra.mxu0 %v4885
        %5063 = vmatmul.f32.gmra.mxu0 %v4816
        %v5064 = vpop.f32.mrf.mxu0
        %v5065 = vadd.f32 %v5045, %v5064
        %5066 = vdwg.mxu0
        %5067 = vmatpush.msra.mxu0 %v4882
        %5068 = vmatpush.msra.mxu0 %v4878
        %5069 = vmatpush.msra.mxu0 %v4874
        %5070 = vmatpush.msra.mxu0 %v4870
        %5071 = vmatpush.msra.mxu0 %v4866
        %5072 = vmatpush.msra.mxu0 %v4862
        %5073 = vmatpush.msra.mxu0 %v4858
        %5074 = vmatpush.msra.mxu0 %v4854
        %5075 = vmatpush.msra.mxu0 %v4850
        %5076 = vmatpush.msra.mxu0 %v4846
        %5077 = vmatpush.msra.mxu0 %v4842
        %5078 = vmatpush.msra.mxu0 %v4838
        %5079 = vmatpush.msra.mxu0 %v4834
        %5080 = vmatpush.msra.mxu0 %v4830
        %5081 = vmatpush.msra.mxu0 %v4826
        %5082 = vmatpush.msra.mxu0 %v4822
        %5083 = vmatmul.f32.gmra.mxu0 %v4796
        %v5084 = vpop.f32.mrf.mxu0
        %v5085 = vadd.f32 0.0, %v5084
        %5086 = vdwg.mxu0
        %5087 = vmatpush.msra.mxu0 %v4946
        %5088 = vmatpush.msra.mxu0 %v4942
        %5089 = vmatpush.msra.mxu0 %v4938
        %5090 = vmatpush.msra.mxu0 %v4934
        %5091 = vmatpush.msra.mxu0 %v4930
        %5092 = vmatpush.msra.mxu0 %v4926
        %5093 = vmatpush.msra.mxu0 %v4922
        %5094 = vmatpush.msra.mxu0 %v4918
        %5095 = vmatpush.msra.mxu0 %v4914
        %5096 = vmatpush.msra.mxu0 %v4910
        %5097 = vmatpush.msra.mxu0 %v4906
        %5098 = vmatpush.msra.mxu0 %v4902
        %5099 = vmatpush.msra.mxu0 %v4898
        %5100 = vmatpush.msra.mxu0 %v4894
        %5101 = vmatpush.msra.mxu0 %v4890
        %5102 = vmatpush.msra.mxu0 %v4886
        %5103 = vmatmul.f32.gmra.mxu0 %v4816
        %v5104 = vpop.f32.mrf.mxu0
        %v5105 = vadd.f32 %v5085, %v5104
        %5106 = vdwg.mxu0
        %v5107 = vadd.f32 %v4769, %v4985
        %v5108 = vadd.f32 %v4770, %v5025
        %v5109 = vadd.f32 %v4771, %v5065
        %v5110 = vadd.f32 %v4772, %v5105
        %s5111 = scalar_lea.vmem [#allocation14], 16
        %v5112 = vld [vmem:[%s5111] sm:$0xf]
        %v5114 = vsel %vm3769, %v5112, 0
        %5116 = vmatpush.msra.mxu0 0.0
        %5117 = vmatpush.msra.mxu0 0.0
        %5118 = vmatpush.msra.mxu0 0.0
        %5119 = vmatpush.msra.mxu0 0.0
        %5120 = vmatpush.msra.mxu0 0.0
        %5121 = vmatpush.msra.mxu0 0.0
        %5122 = vmatpush.msra.mxu0 0.0
        %5123 = vmatpush.msra.mxu0 0.0
        %5124 = vmatpush.msra.mxu0 0.0
        %5125 = vmatpush.msra.mxu0 0.0
        %5126 = vmatpush.msra.mxu0 0.0
        %5127 = vmatpush.msra.mxu0 0.0
        %5128 = vmatpush.msra.mxu0 0.0
        %5129 = vmatpush.msra.mxu0 0.0
        %5130 = vmatpush.msra.mxu0 %v3766
        %5131 = vmatpush.msra.mxu0 %v3764
        %5132 = vmatmul.f32.gmra.mxu0 %v5114
        %v5133 = vpop.f32.mrf.mxu0
        %v5134 = vadd.f32 0.0, %v5133
        %5135 = vdwg.mxu0
        %5136 = vmatpush.msra.mxu0 0.0
        %5137 = vmatpush.msra.mxu0 0.0
        %5138 = vmatpush.msra.mxu0 0.0
        %5139 = vmatpush.msra.mxu0 0.0
        %5140 = vmatpush.msra.mxu0 0.0
        %5141 = vmatpush.msra.mxu0 0.0
        %5142 = vmatpush.msra.mxu0 0.0
        %5143 = vmatpush.msra.mxu0 0.0
        %5144 = vmatpush.msra.mxu0 0.0
        %5145 = vmatpush.msra.mxu0 0.0
        %5146 = vmatpush.msra.mxu0 0.0
        %5147 = vmatpush.msra.mxu0 0.0
        %5148 = vmatpush.msra.mxu0 0.0
        %5149 = vmatpush.msra.mxu0 0.0
        %5150 = vmatpush.msra.mxu0 %v3767
        %5151 = vmatpush.msra.mxu0 %v3765
        %5152 = vmatmul.f32.gmra.mxu0 %v5114
        %v5153 = vpop.f32.mrf.mxu0
        %v5154 = vadd.f32 0.0, %v5153
        %5155 = vdwg.mxu0
        %s5156 = scalar_lea.vmem [#allocation16], 4096
        %v5157 = vld [vmem:[%s5156] sm:$0xff]
        %v5158 = vld [vmem:[%s5156 + $0x8] sm:$0xff]
        %v5159 = vld [vmem:[%s5156 + $0x10] sm:$0xff]
        %v5160 = vld [vmem:[%s5156 + $0x18] sm:$0xff]
        %v5161 = vld [vmem:[%s5156 + $0x20] sm:$0xff]
        %v5162 = vld [vmem:[%s5156 + $0x28] sm:$0xff]
        %v5163 = vld [vmem:[%s5156 + $0x30] sm:$0xff]
        %v5164 = vld [vmem:[%s5156 + $0x38] sm:$0xff]
        %v5165 = vld [vmem:[%s5156 + $0x40] sm:$0xff]
        %v5166 = vld [vmem:[%s5156 + $0x48] sm:$0xff]
        %v5167 = vld [vmem:[%s5156 + $0x50] sm:$0xff]
        %v5168 = vld [vmem:[%s5156 + $0x58] sm:$0xff]
        %v5169 = vld [vmem:[%s5156 + $0x60] sm:$0xff]
        %v5170 = vld [vmem:[%s5156 + $0x68] sm:$0xff]
        %v5171 = vld [vmem:[%s5156 + $0x70] sm:$0xff]
        %v5172 = vld [vmem:[%s5156 + $0x78] sm:$0xff]
        %v5173 = vld [vmem:[%s5156 + $0x80] sm:$0xff]
        %v5174 = vld [vmem:[%s5156 + $0x88] sm:$0xff]
        %v5175 = vld [vmem:[%s5156 + $0x90] sm:$0xff]
        %v5176 = vld [vmem:[%s5156 + $0x98] sm:$0xff]
        %v5177 = vld [vmem:[%s5156 + $0xa0] sm:$0xff]
        %v5178 = vld [vmem:[%s5156 + $0xa8] sm:$0xff]
        %v5179 = vld [vmem:[%s5156 + $0xb0] sm:$0xff]
        %v5180 = vld [vmem:[%s5156 + $0xb8] sm:$0xff]
        %v5181 = vld [vmem:[%s5156 + $0xc0] sm:$0xff]
        %v5182 = vld [vmem:[%s5156 + $0xc8] sm:$0xff]
        %v5183 = vld [vmem:[%s5156 + $0xd0] sm:$0xff]
        %v5184 = vld [vmem:[%s5156 + $0xd8] sm:$0xff]
        %v5185 = vld [vmem:[%s5156 + $0xe0] sm:$0xff]
        %v5186 = vld [vmem:[%s5156 + $0xe8] sm:$0xff]
        %v5187 = vld [vmem:[%s5156 + $0xf0] sm:$0xff]
        %v5188 = vld [vmem:[%s5156 + $0xf8] sm:$0xff]
        %v5189 = vld [vmem:[%s5156 + $0x100] sm:$0xff]
        %v5190 = vld [vmem:[%s5156 + $0x108] sm:$0xff]
        %v5191 = vld [vmem:[%s5156 + $0x110] sm:$0xff]
        %v5192 = vld [vmem:[%s5156 + $0x118] sm:$0xff]
        %v5193 = vld [vmem:[%s5156 + $0x120] sm:$0xff]
        %v5194 = vld [vmem:[%s5156 + $0x128] sm:$0xff]
        %v5195 = vld [vmem:[%s5156 + $0x130] sm:$0xff]
        %v5196 = vld [vmem:[%s5156 + $0x138] sm:$0xff]
        %v5197 = vld [vmem:[%s5156 + $0x140] sm:$0xff]
        %v5198 = vld [vmem:[%s5156 + $0x148] sm:$0xff]
        %v5199 = vld [vmem:[%s5156 + $0x150] sm:$0xff]
        %v5200 = vld [vmem:[%s5156 + $0x158] sm:$0xff]
        %v5201 = vld [vmem:[%s5156 + $0x160] sm:$0xff]
        %v5202 = vld [vmem:[%s5156 + $0x168] sm:$0xff]
        %v5203 = vld [vmem:[%s5156 + $0x170] sm:$0xff]
        %v5204 = vld [vmem:[%s5156 + $0x178] sm:$0xff]
        %v5205 = vld [vmem:[%s5156 + $0x180] sm:$0xff]
        %v5206 = vld [vmem:[%s5156 + $0x188] sm:$0xff]
        %v5207 = vld [vmem:[%s5156 + $0x190] sm:$0xff]
        %v5208 = vld [vmem:[%s5156 + $0x198] sm:$0xff]
        %v5209 = vld [vmem:[%s5156 + $0x1a0] sm:$0xff]
        %v5210 = vld [vmem:[%s5156 + $0x1a8] sm:$0xff]
        %v5211 = vld [vmem:[%s5156 + $0x1b0] sm:$0xff]
        %v5212 = vld [vmem:[%s5156 + $0x1b8] sm:$0xff]
        %v5213 = vld [vmem:[%s5156 + $0x1c0] sm:$0xff]
        %v5214 = vld [vmem:[%s5156 + $0x1c8] sm:$0xff]
        %v5215 = vld [vmem:[%s5156 + $0x1d0] sm:$0xff]
        %v5216 = vld [vmem:[%s5156 + $0x1d8] sm:$0xff]
        %v5217 = vld [vmem:[%s5156 + $0x1e0] sm:$0xff]
        %v5218 = vld [vmem:[%s5156 + $0x1e8] sm:$0xff]
        %v5219 = vld [vmem:[%s5156 + $0x1f0] sm:$0xff]
        %v5220 = vld [vmem:[%s5156 + $0x1f8] sm:$0xff]
        %v5221 = vld [vmem:[%s5156 + $0x200] sm:$0xff]
        %v5222 = vld [vmem:[%s5156 + $0x208] sm:$0xff]
        %v5223 = vld [vmem:[%s5156 + $0x210] sm:$0xff]
        %v5224 = vld [vmem:[%s5156 + $0x218] sm:$0xff]
        %v5225 = vld [vmem:[%s5156 + $0x220] sm:$0xff]
        %v5226 = vld [vmem:[%s5156 + $0x228] sm:$0xff]
        %v5227 = vld [vmem:[%s5156 + $0x230] sm:$0xff]
        %v5228 = vld [vmem:[%s5156 + $0x238] sm:$0xff]
        %v5229 = vld [vmem:[%s5156 + $0x240] sm:$0xff]
        %v5230 = vld [vmem:[%s5156 + $0x248] sm:$0xff]
        %v5231 = vld [vmem:[%s5156 + $0x250] sm:$0xff]
        %v5232 = vld [vmem:[%s5156 + $0x258] sm:$0xff]
        %v5233 = vld [vmem:[%s5156 + $0x260] sm:$0xff]
        %v5234 = vld [vmem:[%s5156 + $0x268] sm:$0xff]
        %v5235 = vld [vmem:[%s5156 + $0x270] sm:$0xff]
        %v5236 = vld [vmem:[%s5156 + $0x278] sm:$0xff]
        %v5237 = vld [vmem:[%s5156 + $0x280] sm:$0xff]
        %v5238 = vld [vmem:[%s5156 + $0x288] sm:$0xff]
        %v5239 = vld [vmem:[%s5156 + $0x290] sm:$0xff]
        %v5240 = vld [vmem:[%s5156 + $0x298] sm:$0xff]
        %v5241 = vld [vmem:[%s5156 + $0x2a0] sm:$0xff]
        %v5242 = vld [vmem:[%s5156 + $0x2a8] sm:$0xff]
        %v5243 = vld [vmem:[%s5156 + $0x2b0] sm:$0xff]
        %v5244 = vld [vmem:[%s5156 + $0x2b8] sm:$0xff]
        %v5245 = vld [vmem:[%s5156 + $0x2c0] sm:$0xff]
        %v5246 = vld [vmem:[%s5156 + $0x2c8] sm:$0xff]
        %v5247 = vld [vmem:[%s5156 + $0x2d0] sm:$0xff]
        %v5248 = vld [vmem:[%s5156 + $0x2d8] sm:$0xff]
        %v5249 = vld [vmem:[%s5156 + $0x2e0] sm:$0xff]
        %v5250 = vld [vmem:[%s5156 + $0x2e8] sm:$0xff]
        %v5251 = vld [vmem:[%s5156 + $0x2f0] sm:$0xff]
        %v5252 = vld [vmem:[%s5156 + $0x2f8] sm:$0xff]
        %v5253 = vld [vmem:[%s5156 + $0x300] sm:$0xff]
        %v5254 = vld [vmem:[%s5156 + $0x308] sm:$0xff]
        %v5255 = vld [vmem:[%s5156 + $0x310] sm:$0xff]
        %v5256 = vld [vmem:[%s5156 + $0x318] sm:$0xff]
        %v5257 = vld [vmem:[%s5156 + $0x320] sm:$0xff]
        %v5258 = vld [vmem:[%s5156 + $0x328] sm:$0xff]
        %v5259 = vld [vmem:[%s5156 + $0x330] sm:$0xff]
        %v5260 = vld [vmem:[%s5156 + $0x338] sm:$0xff]
        %v5261 = vld [vmem:[%s5156 + $0x340] sm:$0xff]
        %v5262 = vld [vmem:[%s5156 + $0x348] sm:$0xff]
        %v5263 = vld [vmem:[%s5156 + $0x350] sm:$0xff]
        %v5264 = vld [vmem:[%s5156 + $0x358] sm:$0xff]
        %v5265 = vld [vmem:[%s5156 + $0x360] sm:$0xff]
        %v5266 = vld [vmem:[%s5156 + $0x368] sm:$0xff]
        %v5267 = vld [vmem:[%s5156 + $0x370] sm:$0xff]
        %v5268 = vld [vmem:[%s5156 + $0x378] sm:$0xff]
        %v5269 = vld [vmem:[%s5156 + $0x380] sm:$0xff]
        %v5270 = vld [vmem:[%s5156 + $0x388] sm:$0xff]
        %v5271 = vld [vmem:[%s5156 + $0x390] sm:$0xff]
        %v5272 = vld [vmem:[%s5156 + $0x398] sm:$0xff]
        %v5273 = vld [vmem:[%s5156 + $0x3a0] sm:$0xff]
        %v5274 = vld [vmem:[%s5156 + $0x3a8] sm:$0xff]
        %v5275 = vld [vmem:[%s5156 + $0x3b0] sm:$0xff]
        %v5276 = vld [vmem:[%s5156 + $0x3b8] sm:$0xff]
        %v5277 = vld [vmem:[%s5156 + $0x3c0] sm:$0xff]
        %v5278 = vld [vmem:[%s5156 + $0x3c8] sm:$0xff]
        %v5279 = vld [vmem:[%s5156 + $0x3d0] sm:$0xff]
        %v5280 = vld [vmem:[%s5156 + $0x3d8] sm:$0xff]
        %v5281 = vld [vmem:[%s5156 + $0x3e0] sm:$0xff]
        %v5282 = vld [vmem:[%s5156 + $0x3e8] sm:$0xff]
        %v5283 = vld [vmem:[%s5156 + $0x3f0] sm:$0xff]
        %v5284 = vld [vmem:[%s5156 + $0x3f8] sm:$0xff]
        %5285 = vmatpush.msra.mxu0 %v5217
        %5286 = vmatpush.msra.mxu0 %v5213
        %5287 = vmatpush.msra.mxu0 %v5209
        %5288 = vmatpush.msra.mxu0 %v5205
        %5289 = vmatpush.msra.mxu0 %v5201
        %5290 = vmatpush.msra.mxu0 %v5197
        %5291 = vmatpush.msra.mxu0 %v5193
        %5292 = vmatpush.msra.mxu0 %v5189
        %5293 = vmatpush.msra.mxu0 %v5185
        %5294 = vmatpush.msra.mxu0 %v5181
        %5295 = vmatpush.msra.mxu0 %v5177
        %5296 = vmatpush.msra.mxu0 %v5173
        %5297 = vmatpush.msra.mxu0 %v5169
        %5298 = vmatpush.msra.mxu0 %v5165
        %5299 = vmatpush.msra.mxu0 %v5161
        %5300 = vmatpush.msra.mxu0 %v5157
        %5301 = vmatmul.f32.gmra.mxu0 %v5134
        %v5302 = vpop.f32.mrf.mxu0
        %v5303 = vadd.f32 0.0, %v5302
        %5304 = vdwg.mxu0
        %5305 = vmatpush.msra.mxu0 %v5281
        %5306 = vmatpush.msra.mxu0 %v5277
        %5307 = vmatpush.msra.mxu0 %v5273
        %5308 = vmatpush.msra.mxu0 %v5269
        %5309 = vmatpush.msra.mxu0 %v5265
        %5310 = vmatpush.msra.mxu0 %v5261
        %5311 = vmatpush.msra.mxu0 %v5257
        %5312 = vmatpush.msra.mxu0 %v5253
        %5313 = vmatpush.msra.mxu0 %v5249
        %5314 = vmatpush.msra.mxu0 %v5245
        %5315 = vmatpush.msra.mxu0 %v5241
        %5316 = vmatpush.msra.mxu0 %v5237
        %5317 = vmatpush.msra.mxu0 %v5233
        %5318 = vmatpush.msra.mxu0 %v5229
        %5319 = vmatpush.msra.mxu0 %v5225
        %5320 = vmatpush.msra.mxu0 %v5221
        %5321 = vmatmul.f32.gmra.mxu0 %v5154
        %v5322 = vpop.f32.mrf.mxu0
        %v5323 = vadd.f32 %v5303, %v5322
        %5324 = vdwg.mxu0
        %5325 = vmatpush.msra.mxu0 %v5218
        %5326 = vmatpush.msra.mxu0 %v5214
        %5327 = vmatpush.msra.mxu0 %v5210
        %5328 = vmatpush.msra.mxu0 %v5206
        %5329 = vmatpush.msra.mxu0 %v5202
        %5330 = vmatpush.msra.mxu0 %v5198
        %5331 = vmatpush.msra.mxu0 %v5194
        %5332 = vmatpush.msra.mxu0 %v5190
        %5333 = vmatpush.msra.mxu0 %v5186
        %5334 = vmatpush.msra.mxu0 %v5182
        %5335 = vmatpush.msra.mxu0 %v5178
        %5336 = vmatpush.msra.mxu0 %v5174
        %5337 = vmatpush.msra.mxu0 %v5170
        %5338 = vmatpush.msra.mxu0 %v5166
        %5339 = vmatpush.msra.mxu0 %v5162
        %5340 = vmatpush.msra.mxu0 %v5158
        %5341 = vmatmul.f32.gmra.mxu0 %v5134
        %v5342 = vpop.f32.mrf.mxu0
        %v5343 = vadd.f32 0.0, %v5342
        %5344 = vdwg.mxu0
        %5345 = vmatpush.msra.mxu0 %v5282
        %5346 = vmatpush.msra.mxu0 %v5278
        %5347 = vmatpush.msra.mxu0 %v5274
        %5348 = vmatpush.msra.mxu0 %v5270
        %5349 = vmatpush.msra.mxu0 %v5266
        %5350 = vmatpush.msra.mxu0 %v5262
        %5351 = vmatpush.msra.mxu0 %v5258
        %5352 = vmatpush.msra.mxu0 %v5254
        %5353 = vmatpush.msra.mxu0 %v5250
        %5354 = vmatpush.msra.mxu0 %v5246
        %5355 = vmatpush.msra.mxu0 %v5242
        %5356 = vmatpush.msra.mxu0 %v5238
        %5357 = vmatpush.msra.mxu0 %v5234
        %5358 = vmatpush.msra.mxu0 %v5230
        %5359 = vmatpush.msra.mxu0 %v5226
        %5360 = vmatpush.msra.mxu0 %v5222
        %5361 = vmatmul.f32.gmra.mxu0 %v5154
        %v5362 = vpop.f32.mrf.mxu0
        %v5363 = vadd.f32 %v5343, %v5362
        %5364 = vdwg.mxu0
        %5365 = vmatpush.msra.mxu0 %v5219
        %5366 = vmatpush.msra.mxu0 %v5215
        %5367 = vmatpush.msra.mxu0 %v5211
        %5368 = vmatpush.msra.mxu0 %v5207
        %5369 = vmatpush.msra.mxu0 %v5203
        %5370 = vmatpush.msra.mxu0 %v5199
        %5371 = vmatpush.msra.mxu0 %v5195
        %5372 = vmatpush.msra.mxu0 %v5191
        %5373 = vmatpush.msra.mxu0 %v5187
        %5374 = vmatpush.msra.mxu0 %v5183
        %5375 = vmatpush.msra.mxu0 %v5179
        %5376 = vmatpush.msra.mxu0 %v5175
        %5377 = vmatpush.msra.mxu0 %v5171
        %5378 = vmatpush.msra.mxu0 %v5167
        %5379 = vmatpush.msra.mxu0 %v5163
        %5380 = vmatpush.msra.mxu0 %v5159
        %5381 = vmatmul.f32.gmra.mxu0 %v5134
        %v5382 = vpop.f32.mrf.mxu0
        %v5383 = vadd.f32 0.0, %v5382
        %5384 = vdwg.mxu0
        %5385 = vmatpush.msra.mxu0 %v5283
        %5386 = vmatpush.msra.mxu0 %v5279
        %5387 = vmatpush.msra.mxu0 %v5275
        %5388 = vmatpush.msra.mxu0 %v5271
        %5389 = vmatpush.msra.mxu0 %v5267
        %5390 = vmatpush.msra.mxu0 %v5263
        %5391 = vmatpush.msra.mxu0 %v5259
        %5392 = vmatpush.msra.mxu0 %v5255
        %5393 = vmatpush.msra.mxu0 %v5251
        %5394 = vmatpush.msra.mxu0 %v5247
        %5395 = vmatpush.msra.mxu0 %v5243
        %5396 = vmatpush.msra.mxu0 %v5239
        %5397 = vmatpush.msra.mxu0 %v5235
        %5398 = vmatpush.msra.mxu0 %v5231
        %5399 = vmatpush.msra.mxu0 %v5227
        %5400 = vmatpush.msra.mxu0 %v5223
        %5401 = vmatmul.f32.gmra.mxu0 %v5154
        %v5402 = vpop.f32.mrf.mxu0
        %v5403 = vadd.f32 %v5383, %v5402
        %5404 = vdwg.mxu0
        %5405 = vmatpush.msra.mxu0 %v5220
        %5406 = vmatpush.msra.mxu0 %v5216
        %5407 = vmatpush.msra.mxu0 %v5212
        %5408 = vmatpush.msra.mxu0 %v5208
        %5409 = vmatpush.msra.mxu0 %v5204
        %5410 = vmatpush.msra.mxu0 %v5200
        %5411 = vmatpush.msra.mxu0 %v5196
        %5412 = vmatpush.msra.mxu0 %v5192
        %5413 = vmatpush.msra.mxu0 %v5188
        %5414 = vmatpush.msra.mxu0 %v5184
        %5415 = vmatpush.msra.mxu0 %v5180
        %5416 = vmatpush.msra.mxu0 %v5176
        %5417 = vmatpush.msra.mxu0 %v5172
        %5418 = vmatpush.msra.mxu0 %v5168
        %5419 = vmatpush.msra.mxu0 %v5164
        %5420 = vmatpush.msra.mxu0 %v5160
        %5421 = vmatmul.f32.gmra.mxu0 %v5134
        %v5422 = vpop.f32.mrf.mxu0
        %v5423 = vadd.f32 0.0, %v5422
        %5424 = vdwg.mxu0
        %5425 = vmatpush.msra.mxu0 %v5284
        %5426 = vmatpush.msra.mxu0 %v5280
        %5427 = vmatpush.msra.mxu0 %v5276
        %5428 = vmatpush.msra.mxu0 %v5272
        %5429 = vmatpush.msra.mxu0 %v5268
        %5430 = vmatpush.msra.mxu0 %v5264
        %5431 = vmatpush.msra.mxu0 %v5260
        %5432 = vmatpush.msra.mxu0 %v5256
        %5433 = vmatpush.msra.mxu0 %v5252
        %5434 = vmatpush.msra.mxu0 %v5248
        %5435 = vmatpush.msra.mxu0 %v5244
        %5436 = vmatpush.msra.mxu0 %v5240
        %5437 = vmatpush.msra.mxu0 %v5236
        %5438 = vmatpush.msra.mxu0 %v5232
        %5439 = vmatpush.msra.mxu0 %v5228
        %5440 = vmatpush.msra.mxu0 %v5224
        %5441 = vmatmul.f32.gmra.mxu0 %v5154
        %v5442 = vpop.f32.mrf.mxu0
        %v5443 = vadd.f32 %v5423, %v5442
        %5444 = vdwg.mxu0
        %v5445 = vadd.f32 %v5107, %v5323
        %v5446 = vadd.f32 %v5108, %v5363
        %v5447 = vadd.f32 %v5109, %v5403
        %v5448 = vadd.f32 %v5110, %v5443
        %s5449 = scalar_lea.vmem [#allocation14], 20
        %v5450 = vld [vmem:[%s5449] sm:$0xf]
        %v5452 = vsel %vm3769, %v5450, 0
        %5454 = vmatpush.msra.mxu0 0.0
        %5455 = vmatpush.msra.mxu0 0.0
        %5456 = vmatpush.msra.mxu0 0.0
        %5457 = vmatpush.msra.mxu0 0.0
        %5458 = vmatpush.msra.mxu0 0.0
        %5459 = vmatpush.msra.mxu0 0.0
        %5460 = vmatpush.msra.mxu0 0.0
        %5461 = vmatpush.msra.mxu0 0.0
        %5462 = vmatpush.msra.mxu0 0.0
        %5463 = vmatpush.msra.mxu0 0.0
        %5464 = vmatpush.msra.mxu0 0.0
        %5465 = vmatpush.msra.mxu0 0.0
        %5466 = vmatpush.msra.mxu0 0.0
        %5467 = vmatpush.msra.mxu0 0.0
        %5468 = vmatpush.msra.mxu0 %v3766
        %5469 = vmatpush.msra.mxu0 %v3764
        %5470 = vmatmul.f32.gmra.mxu0 %v5452
        %v5471 = vpop.f32.mrf.mxu0
        %v5472 = vadd.f32 0.0, %v5471
        %5473 = vdwg.mxu0
        %5474 = vmatpush.msra.mxu0 0.0
        %5475 = vmatpush.msra.mxu0 0.0
        %5476 = vmatpush.msra.mxu0 0.0
        %5477 = vmatpush.msra.mxu0 0.0
        %5478 = vmatpush.msra.mxu0 0.0
        %5479 = vmatpush.msra.mxu0 0.0
        %5480 = vmatpush.msra.mxu0 0.0
        %5481 = vmatpush.msra.mxu0 0.0
        %5482 = vmatpush.msra.mxu0 0.0
        %5483 = vmatpush.msra.mxu0 0.0
        %5484 = vmatpush.msra.mxu0 0.0
        %5485 = vmatpush.msra.mxu0 0.0
        %5486 = vmatpush.msra.mxu0 0.0
        %5487 = vmatpush.msra.mxu0 0.0
        %5488 = vmatpush.msra.mxu0 %v3767
        %5489 = vmatpush.msra.mxu0 %v3765
        %5490 = vmatmul.f32.gmra.mxu0 %v5452
        %v5491 = vpop.f32.mrf.mxu0
        %v5492 = vadd.f32 0.0, %v5491
        %5493 = vdwg.mxu0
        %s5494 = scalar_lea.vmem [#allocation16], 5120
        %v5495 = vld [vmem:[%s5494] sm:$0xff]
        %v5496 = vld [vmem:[%s5494 + $0x8] sm:$0xff]
        %v5497 = vld [vmem:[%s5494 + $0x10] sm:$0xff]
        %v5498 = vld [vmem:[%s5494 + $0x18] sm:$0xff]
        %v5499 = vld [vmem:[%s5494 + $0x20] sm:$0xff]
        %v5500 = vld [vmem:[%s5494 + $0x28] sm:$0xff]
        %v5501 = vld [vmem:[%s5494 + $0x30] sm:$0xff]
        %v5502 = vld [vmem:[%s5494 + $0x38] sm:$0xff]
        %v5503 = vld [vmem:[%s5494 + $0x40] sm:$0xff]
        %v5504 = vld [vmem:[%s5494 + $0x48] sm:$0xff]
        %v5505 = vld [vmem:[%s5494 + $0x50] sm:$0xff]
        %v5506 = vld [vmem:[%s5494 + $0x58] sm:$0xff]
        %v5507 = vld [vmem:[%s5494 + $0x60] sm:$0xff]
        %v5508 = vld [vmem:[%s5494 + $0x68] sm:$0xff]
        %v5509 = vld [vmem:[%s5494 + $0x70] sm:$0xff]
        %v5510 = vld [vmem:[%s5494 + $0x78] sm:$0xff]
        %v5511 = vld [vmem:[%s5494 + $0x80] sm:$0xff]
        %v5512 = vld [vmem:[%s5494 + $0x88] sm:$0xff]
        %v5513 = vld [vmem:[%s5494 + $0x90] sm:$0xff]
        %v5514 = vld [vmem:[%s5494 + $0x98] sm:$0xff]
        %v5515 = vld [vmem:[%s5494 + $0xa0] sm:$0xff]
        %v5516 = vld [vmem:[%s5494 + $0xa8] sm:$0xff]
        %v5517 = vld [vmem:[%s5494 + $0xb0] sm:$0xff]
        %v5518 = vld [vmem:[%s5494 + $0xb8] sm:$0xff]
        %v5519 = vld [vmem:[%s5494 + $0xc0] sm:$0xff]
        %v5520 = vld [vmem:[%s5494 + $0xc8] sm:$0xff]
        %v5521 = vld [vmem:[%s5494 + $0xd0] sm:$0xff]
        %v5522 = vld [vmem:[%s5494 + $0xd8] sm:$0xff]
        %v5523 = vld [vmem:[%s5494 + $0xe0] sm:$0xff]
        %v5524 = vld [vmem:[%s5494 + $0xe8] sm:$0xff]
        %v5525 = vld [vmem:[%s5494 + $0xf0] sm:$0xff]
        %v5526 = vld [vmem:[%s5494 + $0xf8] sm:$0xff]
        %v5527 = vld [vmem:[%s5494 + $0x100] sm:$0xff]
        %v5528 = vld [vmem:[%s5494 + $0x108] sm:$0xff]
        %v5529 = vld [vmem:[%s5494 + $0x110] sm:$0xff]
        %v5530 = vld [vmem:[%s5494 + $0x118] sm:$0xff]
        %v5531 = vld [vmem:[%s5494 + $0x120] sm:$0xff]
        %v5532 = vld [vmem:[%s5494 + $0x128] sm:$0xff]
        %v5533 = vld [vmem:[%s5494 + $0x130] sm:$0xff]
        %v5534 = vld [vmem:[%s5494 + $0x138] sm:$0xff]
        %v5535 = vld [vmem:[%s5494 + $0x140] sm:$0xff]
        %v5536 = vld [vmem:[%s5494 + $0x148] sm:$0xff]
        %v5537 = vld [vmem:[%s5494 + $0x150] sm:$0xff]
        %v5538 = vld [vmem:[%s5494 + $0x158] sm:$0xff]
        %v5539 = vld [vmem:[%s5494 + $0x160] sm:$0xff]
        %v5540 = vld [vmem:[%s5494 + $0x168] sm:$0xff]
        %v5541 = vld [vmem:[%s5494 + $0x170] sm:$0xff]
        %v5542 = vld [vmem:[%s5494 + $0x178] sm:$0xff]
        %v5543 = vld [vmem:[%s5494 + $0x180] sm:$0xff]
        %v5544 = vld [vmem:[%s5494 + $0x188] sm:$0xff]
        %v5545 = vld [vmem:[%s5494 + $0x190] sm:$0xff]
        %v5546 = vld [vmem:[%s5494 + $0x198] sm:$0xff]
        %v5547 = vld [vmem:[%s5494 + $0x1a0] sm:$0xff]
        %v5548 = vld [vmem:[%s5494 + $0x1a8] sm:$0xff]
        %v5549 = vld [vmem:[%s5494 + $0x1b0] sm:$0xff]
        %v5550 = vld [vmem:[%s5494 + $0x1b8] sm:$0xff]
        %v5551 = vld [vmem:[%s5494 + $0x1c0] sm:$0xff]
        %v5552 = vld [vmem:[%s5494 + $0x1c8] sm:$0xff]
        %v5553 = vld [vmem:[%s5494 + $0x1d0] sm:$0xff]
        %v5554 = vld [vmem:[%s5494 + $0x1d8] sm:$0xff]
        %v5555 = vld [vmem:[%s5494 + $0x1e0] sm:$0xff]
        %v5556 = vld [vmem:[%s5494 + $0x1e8] sm:$0xff]
        %v5557 = vld [vmem:[%s5494 + $0x1f0] sm:$0xff]
        %v5558 = vld [vmem:[%s5494 + $0x1f8] sm:$0xff]
        %v5559 = vld [vmem:[%s5494 + $0x200] sm:$0xff]
        %v5560 = vld [vmem:[%s5494 + $0x208] sm:$0xff]
        %v5561 = vld [vmem:[%s5494 + $0x210] sm:$0xff]
        %v5562 = vld [vmem:[%s5494 + $0x218] sm:$0xff]
        %v5563 = vld [vmem:[%s5494 + $0x220] sm:$0xff]
        %v5564 = vld [vmem:[%s5494 + $0x228] sm:$0xff]
        %v5565 = vld [vmem:[%s5494 + $0x230] sm:$0xff]
        %v5566 = vld [vmem:[%s5494 + $0x238] sm:$0xff]
        %v5567 = vld [vmem:[%s5494 + $0x240] sm:$0xff]
        %v5568 = vld [vmem:[%s5494 + $0x248] sm:$0xff]
        %v5569 = vld [vmem:[%s5494 + $0x250] sm:$0xff]
        %v5570 = vld [vmem:[%s5494 + $0x258] sm:$0xff]
        %v5571 = vld [vmem:[%s5494 + $0x260] sm:$0xff]
        %v5572 = vld [vmem:[%s5494 + $0x268] sm:$0xff]
        %v5573 = vld [vmem:[%s5494 + $0x270] sm:$0xff]
        %v5574 = vld [vmem:[%s5494 + $0x278] sm:$0xff]
        %v5575 = vld [vmem:[%s5494 + $0x280] sm:$0xff]
        %v5576 = vld [vmem:[%s5494 + $0x288] sm:$0xff]
        %v5577 = vld [vmem:[%s5494 + $0x290] sm:$0xff]
        %v5578 = vld [vmem:[%s5494 + $0x298] sm:$0xff]
        %v5579 = vld [vmem:[%s5494 + $0x2a0] sm:$0xff]
        %v5580 = vld [vmem:[%s5494 + $0x2a8] sm:$0xff]
        %v5581 = vld [vmem:[%s5494 + $0x2b0] sm:$0xff]
        %v5582 = vld [vmem:[%s5494 + $0x2b8] sm:$0xff]
        %v5583 = vld [vmem:[%s5494 + $0x2c0] sm:$0xff]
        %v5584 = vld [vmem:[%s5494 + $0x2c8] sm:$0xff]
        %v5585 = vld [vmem:[%s5494 + $0x2d0] sm:$0xff]
        %v5586 = vld [vmem:[%s5494 + $0x2d8] sm:$0xff]
        %v5587 = vld [vmem:[%s5494 + $0x2e0] sm:$0xff]
        %v5588 = vld [vmem:[%s5494 + $0x2e8] sm:$0xff]
        %v5589 = vld [vmem:[%s5494 + $0x2f0] sm:$0xff]
        %v5590 = vld [vmem:[%s5494 + $0x2f8] sm:$0xff]
        %v5591 = vld [vmem:[%s5494 + $0x300] sm:$0xff]
        %v5592 = vld [vmem:[%s5494 + $0x308] sm:$0xff]
        %v5593 = vld [vmem:[%s5494 + $0x310] sm:$0xff]
        %v5594 = vld [vmem:[%s5494 + $0x318] sm:$0xff]
        %v5595 = vld [vmem:[%s5494 + $0x320] sm:$0xff]
        %v5596 = vld [vmem:[%s5494 + $0x328] sm:$0xff]
        %v5597 = vld [vmem:[%s5494 + $0x330] sm:$0xff]
        %v5598 = vld [vmem:[%s5494 + $0x338] sm:$0xff]
        %v5599 = vld [vmem:[%s5494 + $0x340] sm:$0xff]
        %v5600 = vld [vmem:[%s5494 + $0x348] sm:$0xff]
        %v5601 = vld [vmem:[%s5494 + $0x350] sm:$0xff]
        %v5602 = vld [vmem:[%s5494 + $0x358] sm:$0xff]
        %v5603 = vld [vmem:[%s5494 + $0x360] sm:$0xff]
        %v5604 = vld [vmem:[%s5494 + $0x368] sm:$0xff]
        %v5605 = vld [vmem:[%s5494 + $0x370] sm:$0xff]
        %v5606 = vld [vmem:[%s5494 + $0x378] sm:$0xff]
        %v5607 = vld [vmem:[%s5494 + $0x380] sm:$0xff]
        %v5608 = vld [vmem:[%s5494 + $0x388] sm:$0xff]
        %v5609 = vld [vmem:[%s5494 + $0x390] sm:$0xff]
        %v5610 = vld [vmem:[%s5494 + $0x398] sm:$0xff]
        %v5611 = vld [vmem:[%s5494 + $0x3a0] sm:$0xff]
        %v5612 = vld [vmem:[%s5494 + $0x3a8] sm:$0xff]
        %v5613 = vld [vmem:[%s5494 + $0x3b0] sm:$0xff]
        %v5614 = vld [vmem:[%s5494 + $0x3b8] sm:$0xff]
        %v5615 = vld [vmem:[%s5494 + $0x3c0] sm:$0xff]
        %v5616 = vld [vmem:[%s5494 + $0x3c8] sm:$0xff]
        %v5617 = vld [vmem:[%s5494 + $0x3d0] sm:$0xff]
        %v5618 = vld [vmem:[%s5494 + $0x3d8] sm:$0xff]
        %v5619 = vld [vmem:[%s5494 + $0x3e0] sm:$0xff]
        %v5620 = vld [vmem:[%s5494 + $0x3e8] sm:$0xff]
        %v5621 = vld [vmem:[%s5494 + $0x3f0] sm:$0xff]
        %v5622 = vld [vmem:[%s5494 + $0x3f8] sm:$0xff]
        %5623 = vmatpush.msra.mxu0 %v5555
        %5624 = vmatpush.msra.mxu0 %v5551
        %5625 = vmatpush.msra.mxu0 %v5547
        %5626 = vmatpush.msra.mxu0 %v5543
        %5627 = vmatpush.msra.mxu0 %v5539
        %5628 = vmatpush.msra.mxu0 %v5535
        %5629 = vmatpush.msra.mxu0 %v5531
        %5630 = vmatpush.msra.mxu0 %v5527
        %5631 = vmatpush.msra.mxu0 %v5523
        %5632 = vmatpush.msra.mxu0 %v5519
        %5633 = vmatpush.msra.mxu0 %v5515
        %5634 = vmatpush.msra.mxu0 %v5511
        %5635 = vmatpush.msra.mxu0 %v5507
        %5636 = vmatpush.msra.mxu0 %v5503
        %5637 = vmatpush.msra.mxu0 %v5499
        %5638 = vmatpush.msra.mxu0 %v5495
        %5639 = vmatmul.f32.gmra.mxu0 %v5472
        %v5640 = vpop.f32.mrf.mxu0
        %v5641 = vadd.f32 0.0, %v5640
        %5642 = vdwg.mxu0
        %5643 = vmatpush.msra.mxu0 %v5619
        %5644 = vmatpush.msra.mxu0 %v5615
        %5645 = vmatpush.msra.mxu0 %v5611
        %5646 = vmatpush.msra.mxu0 %v5607
        %5647 = vmatpush.msra.mxu0 %v5603
        %5648 = vmatpush.msra.mxu0 %v5599
        %5649 = vmatpush.msra.mxu0 %v5595
        %5650 = vmatpush.msra.mxu0 %v5591
        %5651 = vmatpush.msra.mxu0 %v5587
        %5652 = vmatpush.msra.mxu0 %v5583
        %5653 = vmatpush.msra.mxu0 %v5579
        %5654 = vmatpush.msra.mxu0 %v5575
        %5655 = vmatpush.msra.mxu0 %v5571
        %5656 = vmatpush.msra.mxu0 %v5567
        %5657 = vmatpush.msra.mxu0 %v5563
        %5658 = vmatpush.msra.mxu0 %v5559
        %5659 = vmatmul.f32.gmra.mxu0 %v5492
        %v5660 = vpop.f32.mrf.mxu0
        %v5661 = vadd.f32 %v5641, %v5660
        %5662 = vdwg.mxu0
        %5663 = vmatpush.msra.mxu0 %v5556
        %5664 = vmatpush.msra.mxu0 %v5552
        %5665 = vmatpush.msra.mxu0 %v5548
        %5666 = vmatpush.msra.mxu0 %v5544
        %5667 = vmatpush.msra.mxu0 %v5540
        %5668 = vmatpush.msra.mxu0 %v5536
        %5669 = vmatpush.msra.mxu0 %v5532
        %5670 = vmatpush.msra.mxu0 %v5528
        %5671 = vmatpush.msra.mxu0 %v5524
        %5672 = vmatpush.msra.mxu0 %v5520
        %5673 = vmatpush.msra.mxu0 %v5516
        %5674 = vmatpush.msra.mxu0 %v5512
        %5675 = vmatpush.msra.mxu0 %v5508
        %5676 = vmatpush.msra.mxu0 %v5504
        %5677 = vmatpush.msra.mxu0 %v5500
        %5678 = vmatpush.msra.mxu0 %v5496
        %5679 = vmatmul.f32.gmra.mxu0 %v5472
        %v5680 = vpop.f32.mrf.mxu0
        %v5681 = vadd.f32 0.0, %v5680
        %5682 = vdwg.mxu0
        %5683 = vmatpush.msra.mxu0 %v5620
        %5684 = vmatpush.msra.mxu0 %v5616
        %5685 = vmatpush.msra.mxu0 %v5612
        %5686 = vmatpush.msra.mxu0 %v5608
        %5687 = vmatpush.msra.mxu0 %v5604
        %5688 = vmatpush.msra.mxu0 %v5600
        %5689 = vmatpush.msra.mxu0 %v5596
        %5690 = vmatpush.msra.mxu0 %v5592
        %5691 = vmatpush.msra.mxu0 %v5588
        %5692 = vmatpush.msra.mxu0 %v5584
        %5693 = vmatpush.msra.mxu0 %v5580
        %5694 = vmatpush.msra.mxu0 %v5576
        %5695 = vmatpush.msra.mxu0 %v5572
        %5696 = vmatpush.msra.mxu0 %v5568
        %5697 = vmatpush.msra.mxu0 %v5564
        %5698 = vmatpush.msra.mxu0 %v5560
        %5699 = vmatmul.f32.gmra.mxu0 %v5492
        %v5700 = vpop.f32.mrf.mxu0
        %v5701 = vadd.f32 %v5681, %v5700
        %5702 = vdwg.mxu0
        %5703 = vmatpush.msra.mxu0 %v5557
        %5704 = vmatpush.msra.mxu0 %v5553
        %5705 = vmatpush.msra.mxu0 %v5549
        %5706 = vmatpush.msra.mxu0 %v5545
        %5707 = vmatpush.msra.mxu0 %v5541
        %5708 = vmatpush.msra.mxu0 %v5537
        %5709 = vmatpush.msra.mxu0 %v5533
        %5710 = vmatpush.msra.mxu0 %v5529
        %5711 = vmatpush.msra.mxu0 %v5525
        %5712 = vmatpush.msra.mxu0 %v5521
        %5713 = vmatpush.msra.mxu0 %v5517
        %5714 = vmatpush.msra.mxu0 %v5513
        %5715 = vmatpush.msra.mxu0 %v5509
        %5716 = vmatpush.msra.mxu0 %v5505
        %5717 = vmatpush.msra.mxu0 %v5501
        %5718 = vmatpush.msra.mxu0 %v5497
        %5719 = vmatmul.f32.gmra.mxu0 %v5472
        %v5720 = vpop.f32.mrf.mxu0
        %v5721 = vadd.f32 0.0, %v5720
        %5722 = vdwg.mxu0
        %5723 = vmatpush.msra.mxu0 %v5621
        %5724 = vmatpush.msra.mxu0 %v5617
        %5725 = vmatpush.msra.mxu0 %v5613
        %5726 = vmatpush.msra.mxu0 %v5609
        %5727 = vmatpush.msra.mxu0 %v5605
        %5728 = vmatpush.msra.mxu0 %v5601
        %5729 = vmatpush.msra.mxu0 %v5597
        %5730 = vmatpush.msra.mxu0 %v5593
        %5731 = vmatpush.msra.mxu0 %v5589
        %5732 = vmatpush.msra.mxu0 %v5585
        %5733 = vmatpush.msra.mxu0 %v5581
        %5734 = vmatpush.msra.mxu0 %v5577
        %5735 = vmatpush.msra.mxu0 %v5573
        %5736 = vmatpush.msra.mxu0 %v5569
        %5737 = vmatpush.msra.mxu0 %v5565
        %5738 = vmatpush.msra.mxu0 %v5561
        %5739 = vmatmul.f32.gmra.mxu0 %v5492
        %v5740 = vpop.f32.mrf.mxu0
        %v5741 = vadd.f32 %v5721, %v5740
        %5742 = vdwg.mxu0
        %5743 = vmatpush.msra.mxu0 %v5558
        %5744 = vmatpush.msra.mxu0 %v5554
        %5745 = vmatpush.msra.mxu0 %v5550
        %5746 = vmatpush.msra.mxu0 %v5546
        %5747 = vmatpush.msra.mxu0 %v5542
        %5748 = vmatpush.msra.mxu0 %v5538
        %5749 = vmatpush.msra.mxu0 %v5534
        %5750 = vmatpush.msra.mxu0 %v5530
        %5751 = vmatpush.msra.mxu0 %v5526
        %5752 = vmatpush.msra.mxu0 %v5522
        %5753 = vmatpush.msra.mxu0 %v5518
        %5754 = vmatpush.msra.mxu0 %v5514
        %5755 = vmatpush.msra.mxu0 %v5510
        %5756 = vmatpush.msra.mxu0 %v5506
        %5757 = vmatpush.msra.mxu0 %v5502
        %5758 = vmatpush.msra.mxu0 %v5498
        %5759 = vmatmul.f32.gmra.mxu0 %v5472
        %v5760 = vpop.f32.mrf.mxu0
        %v5761 = vadd.f32 0.0, %v5760
        %5762 = vdwg.mxu0
        %5763 = vmatpush.msra.mxu0 %v5622
        %5764 = vmatpush.msra.mxu0 %v5618
        %5765 = vmatpush.msra.mxu0 %v5614
        %5766 = vmatpush.msra.mxu0 %v5610
        %5767 = vmatpush.msra.mxu0 %v5606
        %5768 = vmatpush.msra.mxu0 %v5602
        %5769 = vmatpush.msra.mxu0 %v5598
        %5770 = vmatpush.msra.mxu0 %v5594
        %5771 = vmatpush.msra.mxu0 %v5590
        %5772 = vmatpush.msra.mxu0 %v5586
        %5773 = vmatpush.msra.mxu0 %v5582
        %5774 = vmatpush.msra.mxu0 %v5578
        %5775 = vmatpush.msra.mxu0 %v5574
        %5776 = vmatpush.msra.mxu0 %v5570
        %5777 = vmatpush.msra.mxu0 %v5566
        %5778 = vmatpush.msra.mxu0 %v5562
        %5779 = vmatmul.f32.gmra.mxu0 %v5492
        %v5780 = vpop.f32.mrf.mxu0
        %v5781 = vadd.f32 %v5761, %v5780
        %5782 = vdwg.mxu0
        %v5783 = vadd.f32 %v5445, %v5661
        %v5784 = vadd.f32 %v5446, %v5701
        %v5785 = vadd.f32 %v5447, %v5741
        %v5786 = vadd.f32 %v5448, %v5781
        %s5787 = scalar_lea.vmem [#allocation14], 24
        %v5788 = vld [vmem:[%s5787] sm:$0xf]
        %v5790 = vsel %vm3769, %v5788, 0
        %5792 = vmatpush.msra.mxu0 0.0
        %5793 = vmatpush.msra.mxu0 0.0
        %5794 = vmatpush.msra.mxu0 0.0
        %5795 = vmatpush.msra.mxu0 0.0
        %5796 = vmatpush.msra.mxu0 0.0
        %5797 = vmatpush.msra.mxu0 0.0
        %5798 = vmatpush.msra.mxu0 0.0
        %5799 = vmatpush.msra.mxu0 0.0
        %5800 = vmatpush.msra.mxu0 0.0
        %5801 = vmatpush.msra.mxu0 0.0
        %5802 = vmatpush.msra.mxu0 0.0
        %5803 = vmatpush.msra.mxu0 0.0
        %5804 = vmatpush.msra.mxu0 0.0
        %5805 = vmatpush.msra.mxu0 0.0
        %5806 = vmatpush.msra.mxu0 %v3766
        %5807 = vmatpush.msra.mxu0 %v3764
        %5808 = vmatmul.f32.gmra.mxu0 %v5790
        %v5809 = vpop.f32.mrf.mxu0
        %v5810 = vadd.f32 0.0, %v5809
        %5811 = vdwg.mxu0
        %5812 = vmatpush.msra.mxu0 0.0
        %5813 = vmatpush.msra.mxu0 0.0
        %5814 = vmatpush.msra.mxu0 0.0
        %5815 = vmatpush.msra.mxu0 0.0
        %5816 = vmatpush.msra.mxu0 0.0
        %5817 = vmatpush.msra.mxu0 0.0
        %5818 = vmatpush.msra.mxu0 0.0
        %5819 = vmatpush.msra.mxu0 0.0
        %5820 = vmatpush.msra.mxu0 0.0
        %5821 = vmatpush.msra.mxu0 0.0
        %5822 = vmatpush.msra.mxu0 0.0
        %5823 = vmatpush.msra.mxu0 0.0
        %5824 = vmatpush.msra.mxu0 0.0
        %5825 = vmatpush.msra.mxu0 0.0
        %5826 = vmatpush.msra.mxu0 %v3767
        %5827 = vmatpush.msra.mxu0 %v3765
        %5828 = vmatmul.f32.gmra.mxu0 %v5790
        %v5829 = vpop.f32.mrf.mxu0
        %v5830 = vadd.f32 0.0, %v5829
        %5831 = vdwg.mxu0
        %s5832 = scalar_lea.vmem [#allocation16], 6144
        %v5833 = vld [vmem:[%s5832] sm:$0xff]
        %v5834 = vld [vmem:[%s5832 + $0x8] sm:$0xff]
        %v5835 = vld [vmem:[%s5832 + $0x10] sm:$0xff]
        %v5836 = vld [vmem:[%s5832 + $0x18] sm:$0xff]
        %v5837 = vld [vmem:[%s5832 + $0x20] sm:$0xff]
        %v5838 = vld [vmem:[%s5832 + $0x28] sm:$0xff]
        %v5839 = vld [vmem:[%s5832 + $0x30] sm:$0xff]
        %v5840 = vld [vmem:[%s5832 + $0x38] sm:$0xff]
        %v5841 = vld [vmem:[%s5832 + $0x40] sm:$0xff]
        %v5842 = vld [vmem:[%s5832 + $0x48] sm:$0xff]
        %v5843 = vld [vmem:[%s5832 + $0x50] sm:$0xff]
        %v5844 = vld [vmem:[%s5832 + $0x58] sm:$0xff]
        %v5845 = vld [vmem:[%s5832 + $0x60] sm:$0xff]
        %v5846 = vld [vmem:[%s5832 + $0x68] sm:$0xff]
        %v5847 = vld [vmem:[%s5832 + $0x70] sm:$0xff]
        %v5848 = vld [vmem:[%s5832 + $0x78] sm:$0xff]
        %v5849 = vld [vmem:[%s5832 + $0x80] sm:$0xff]
        %v5850 = vld [vmem:[%s5832 + $0x88] sm:$0xff]
        %v5851 = vld [vmem:[%s5832 + $0x90] sm:$0xff]
        %v5852 = vld [vmem:[%s5832 + $0x98] sm:$0xff]
        %v5853 = vld [vmem:[%s5832 + $0xa0] sm:$0xff]
        %v5854 = vld [vmem:[%s5832 + $0xa8] sm:$0xff]
        %v5855 = vld [vmem:[%s5832 + $0xb0] sm:$0xff]
        %v5856 = vld [vmem:[%s5832 + $0xb8] sm:$0xff]
        %v5857 = vld [vmem:[%s5832 + $0xc0] sm:$0xff]
        %v5858 = vld [vmem:[%s5832 + $0xc8] sm:$0xff]
        %v5859 = vld [vmem:[%s5832 + $0xd0] sm:$0xff]
        %v5860 = vld [vmem:[%s5832 + $0xd8] sm:$0xff]
        %v5861 = vld [vmem:[%s5832 + $0xe0] sm:$0xff]
        %v5862 = vld [vmem:[%s5832 + $0xe8] sm:$0xff]
        %v5863 = vld [vmem:[%s5832 + $0xf0] sm:$0xff]
        %v5864 = vld [vmem:[%s5832 + $0xf8] sm:$0xff]
        %v5865 = vld [vmem:[%s5832 + $0x100] sm:$0xff]
        %v5866 = vld [vmem:[%s5832 + $0x108] sm:$0xff]
        %v5867 = vld [vmem:[%s5832 + $0x110] sm:$0xff]
        %v5868 = vld [vmem:[%s5832 + $0x118] sm:$0xff]
        %v5869 = vld [vmem:[%s5832 + $0x120] sm:$0xff]
        %v5870 = vld [vmem:[%s5832 + $0x128] sm:$0xff]
        %v5871 = vld [vmem:[%s5832 + $0x130] sm:$0xff]
        %v5872 = vld [vmem:[%s5832 + $0x138] sm:$0xff]
        %v5873 = vld [vmem:[%s5832 + $0x140] sm:$0xff]
        %v5874 = vld [vmem:[%s5832 + $0x148] sm:$0xff]
        %v5875 = vld [vmem:[%s5832 + $0x150] sm:$0xff]
        %v5876 = vld [vmem:[%s5832 + $0x158] sm:$0xff]
        %v5877 = vld [vmem:[%s5832 + $0x160] sm:$0xff]
        %v5878 = vld [vmem:[%s5832 + $0x168] sm:$0xff]
        %v5879 = vld [vmem:[%s5832 + $0x170] sm:$0xff]
        %v5880 = vld [vmem:[%s5832 + $0x178] sm:$0xff]
        %v5881 = vld [vmem:[%s5832 + $0x180] sm:$0xff]
        %v5882 = vld [vmem:[%s5832 + $0x188] sm:$0xff]
        %v5883 = vld [vmem:[%s5832 + $0x190] sm:$0xff]
        %v5884 = vld [vmem:[%s5832 + $0x198] sm:$0xff]
        %v5885 = vld [vmem:[%s5832 + $0x1a0] sm:$0xff]
        %v5886 = vld [vmem:[%s5832 + $0x1a8] sm:$0xff]
        %v5887 = vld [vmem:[%s5832 + $0x1b0] sm:$0xff]
        %v5888 = vld [vmem:[%s5832 + $0x1b8] sm:$0xff]
        %v5889 = vld [vmem:[%s5832 + $0x1c0] sm:$0xff]
        %v5890 = vld [vmem:[%s5832 + $0x1c8] sm:$0xff]
        %v5891 = vld [vmem:[%s5832 + $0x1d0] sm:$0xff]
        %v5892 = vld [vmem:[%s5832 + $0x1d8] sm:$0xff]
        %v5893 = vld [vmem:[%s5832 + $0x1e0] sm:$0xff]
        %v5894 = vld [vmem:[%s5832 + $0x1e8] sm:$0xff]
        %v5895 = vld [vmem:[%s5832 + $0x1f0] sm:$0xff]
        %v5896 = vld [vmem:[%s5832 + $0x1f8] sm:$0xff]
        %v5897 = vld [vmem:[%s5832 + $0x200] sm:$0xff]
        %v5898 = vld [vmem:[%s5832 + $0x208] sm:$0xff]
        %v5899 = vld [vmem:[%s5832 + $0x210] sm:$0xff]
        %v5900 = vld [vmem:[%s5832 + $0x218] sm:$0xff]
        %v5901 = vld [vmem:[%s5832 + $0x220] sm:$0xff]
        %v5902 = vld [vmem:[%s5832 + $0x228] sm:$0xff]
        %v5903 = vld [vmem:[%s5832 + $0x230] sm:$0xff]
        %v5904 = vld [vmem:[%s5832 + $0x238] sm:$0xff]
        %v5905 = vld [vmem:[%s5832 + $0x240] sm:$0xff]
        %v5906 = vld [vmem:[%s5832 + $0x248] sm:$0xff]
        %v5907 = vld [vmem:[%s5832 + $0x250] sm:$0xff]
        %v5908 = vld [vmem:[%s5832 + $0x258] sm:$0xff]
        %v5909 = vld [vmem:[%s5832 + $0x260] sm:$0xff]
        %v5910 = vld [vmem:[%s5832 + $0x268] sm:$0xff]
        %v5911 = vld [vmem:[%s5832 + $0x270] sm:$0xff]
        %v5912 = vld [vmem:[%s5832 + $0x278] sm:$0xff]
        %v5913 = vld [vmem:[%s5832 + $0x280] sm:$0xff]
        %v5914 = vld [vmem:[%s5832 + $0x288] sm:$0xff]
        %v5915 = vld [vmem:[%s5832 + $0x290] sm:$0xff]
        %v5916 = vld [vmem:[%s5832 + $0x298] sm:$0xff]
        %v5917 = vld [vmem:[%s5832 + $0x2a0] sm:$0xff]
        %v5918 = vld [vmem:[%s5832 + $0x2a8] sm:$0xff]
        %v5919 = vld [vmem:[%s5832 + $0x2b0] sm:$0xff]
        %v5920 = vld [vmem:[%s5832 + $0x2b8] sm:$0xff]
        %v5921 = vld [vmem:[%s5832 + $0x2c0] sm:$0xff]
        %v5922 = vld [vmem:[%s5832 + $0x2c8] sm:$0xff]
        %v5923 = vld [vmem:[%s5832 + $0x2d0] sm:$0xff]
        %v5924 = vld [vmem:[%s5832 + $0x2d8] sm:$0xff]
        %v5925 = vld [vmem:[%s5832 + $0x2e0] sm:$0xff]
        %v5926 = vld [vmem:[%s5832 + $0x2e8] sm:$0xff]
        %v5927 = vld [vmem:[%s5832 + $0x2f0] sm:$0xff]
        %v5928 = vld [vmem:[%s5832 + $0x2f8] sm:$0xff]
        %v5929 = vld [vmem:[%s5832 + $0x300] sm:$0xff]
        %v5930 = vld [vmem:[%s5832 + $0x308] sm:$0xff]
        %v5931 = vld [vmem:[%s5832 + $0x310] sm:$0xff]
        %v5932 = vld [vmem:[%s5832 + $0x318] sm:$0xff]
        %v5933 = vld [vmem:[%s5832 + $0x320] sm:$0xff]
        %v5934 = vld [vmem:[%s5832 + $0x328] sm:$0xff]
        %v5935 = vld [vmem:[%s5832 + $0x330] sm:$0xff]
        %v5936 = vld [vmem:[%s5832 + $0x338] sm:$0xff]
        %v5937 = vld [vmem:[%s5832 + $0x340] sm:$0xff]
        %v5938 = vld [vmem:[%s5832 + $0x348] sm:$0xff]
        %v5939 = vld [vmem:[%s5832 + $0x350] sm:$0xff]
        %v5940 = vld [vmem:[%s5832 + $0x358] sm:$0xff]
        %v5941 = vld [vmem:[%s5832 + $0x360] sm:$0xff]
        %v5942 = vld [vmem:[%s5832 + $0x368] sm:$0xff]
        %v5943 = vld [vmem:[%s5832 + $0x370] sm:$0xff]
        %v5944 = vld [vmem:[%s5832 + $0x378] sm:$0xff]
        %v5945 = vld [vmem:[%s5832 + $0x380] sm:$0xff]
        %v5946 = vld [vmem:[%s5832 + $0x388] sm:$0xff]
        %v5947 = vld [vmem:[%s5832 + $0x390] sm:$0xff]
        %v5948 = vld [vmem:[%s5832 + $0x398] sm:$0xff]
        %v5949 = vld [vmem:[%s5832 + $0x3a0] sm:$0xff]
        %v5950 = vld [vmem:[%s5832 + $0x3a8] sm:$0xff]
        %v5951 = vld [vmem:[%s5832 + $0x3b0] sm:$0xff]
        %v5952 = vld [vmem:[%s5832 + $0x3b8] sm:$0xff]
        %v5953 = vld [vmem:[%s5832 + $0x3c0] sm:$0xff]
        %v5954 = vld [vmem:[%s5832 + $0x3c8] sm:$0xff]
        %v5955 = vld [vmem:[%s5832 + $0x3d0] sm:$0xff]
        %v5956 = vld [vmem:[%s5832 + $0x3d8] sm:$0xff]
        %v5957 = vld [vmem:[%s5832 + $0x3e0] sm:$0xff]
        %v5958 = vld [vmem:[%s5832 + $0x3e8] sm:$0xff]
        %v5959 = vld [vmem:[%s5832 + $0x3f0] sm:$0xff]
        %v5960 = vld [vmem:[%s5832 + $0x3f8] sm:$0xff]
        %5961 = vmatpush.msra.mxu0 %v5893
        %5962 = vmatpush.msra.mxu0 %v5889
        %5963 = vmatpush.msra.mxu0 %v5885
        %5964 = vmatpush.msra.mxu0 %v5881
        %5965 = vmatpush.msra.mxu0 %v5877
        %5966 = vmatpush.msra.mxu0 %v5873
        %5967 = vmatpush.msra.mxu0 %v5869
        %5968 = vmatpush.msra.mxu0 %v5865
        %5969 = vmatpush.msra.mxu0 %v5861
        %5970 = vmatpush.msra.mxu0 %v5857
        %5971 = vmatpush.msra.mxu0 %v5853
        %5972 = vmatpush.msra.mxu0 %v5849
        %5973 = vmatpush.msra.mxu0 %v5845
        %5974 = vmatpush.msra.mxu0 %v5841
        %5975 = vmatpush.msra.mxu0 %v5837
        %5976 = vmatpush.msra.mxu0 %v5833
        %5977 = vmatmul.f32.gmra.mxu0 %v5810
        %v5978 = vpop.f32.mrf.mxu0
        %v5979 = vadd.f32 0.0, %v5978
        %5980 = vdwg.mxu0
        %5981 = vmatpush.msra.mxu0 %v5957
        %5982 = vmatpush.msra.mxu0 %v5953
        %5983 = vmatpush.msra.mxu0 %v5949
        %5984 = vmatpush.msra.mxu0 %v5945
        %5985 = vmatpush.msra.mxu0 %v5941
        %5986 = vmatpush.msra.mxu0 %v5937
        %5987 = vmatpush.msra.mxu0 %v5933
        %5988 = vmatpush.msra.mxu0 %v5929
        %5989 = vmatpush.msra.mxu0 %v5925
        %5990 = vmatpush.msra.mxu0 %v5921
        %5991 = vmatpush.msra.mxu0 %v5917
        %5992 = vmatpush.msra.mxu0 %v5913
        %5993 = vmatpush.msra.mxu0 %v5909
        %5994 = vmatpush.msra.mxu0 %v5905
        %5995 = vmatpush.msra.mxu0 %v5901
        %5996 = vmatpush.msra.mxu0 %v5897
        %5997 = vmatmul.f32.gmra.mxu0 %v5830
        %v5998 = vpop.f32.mrf.mxu0
        %v5999 = vadd.f32 %v5979, %v5998
        %6000 = vdwg.mxu0
        %6001 = vmatpush.msra.mxu0 %v5894
        %6002 = vmatpush.msra.mxu0 %v5890
        %6003 = vmatpush.msra.mxu0 %v5886
        %6004 = vmatpush.msra.mxu0 %v5882
        %6005 = vmatpush.msra.mxu0 %v5878
        %6006 = vmatpush.msra.mxu0 %v5874
        %6007 = vmatpush.msra.mxu0 %v5870
        %6008 = vmatpush.msra.mxu0 %v5866
        %6009 = vmatpush.msra.mxu0 %v5862
        %6010 = vmatpush.msra.mxu0 %v5858
        %6011 = vmatpush.msra.mxu0 %v5854
        %6012 = vmatpush.msra.mxu0 %v5850
        %6013 = vmatpush.msra.mxu0 %v5846
        %6014 = vmatpush.msra.mxu0 %v5842
        %6015 = vmatpush.msra.mxu0 %v5838
        %6016 = vmatpush.msra.mxu0 %v5834
        %6017 = vmatmul.f32.gmra.mxu0 %v5810
        %v6018 = vpop.f32.mrf.mxu0
        %v6019 = vadd.f32 0.0, %v6018
        %6020 = vdwg.mxu0
        %6021 = vmatpush.msra.mxu0 %v5958
        %6022 = vmatpush.msra.mxu0 %v5954
        %6023 = vmatpush.msra.mxu0 %v5950
        %6024 = vmatpush.msra.mxu0 %v5946
        %6025 = vmatpush.msra.mxu0 %v5942
        %6026 = vmatpush.msra.mxu0 %v5938
        %6027 = vmatpush.msra.mxu0 %v5934
        %6028 = vmatpush.msra.mxu0 %v5930
        %6029 = vmatpush.msra.mxu0 %v5926
        %6030 = vmatpush.msra.mxu0 %v5922
        %6031 = vmatpush.msra.mxu0 %v5918
        %6032 = vmatpush.msra.mxu0 %v5914
        %6033 = vmatpush.msra.mxu0 %v5910
        %6034 = vmatpush.msra.mxu0 %v5906
        %6035 = vmatpush.msra.mxu0 %v5902
        %6036 = vmatpush.msra.mxu0 %v5898
        %6037 = vmatmul.f32.gmra.mxu0 %v5830
        %v6038 = vpop.f32.mrf.mxu0
        %v6039 = vadd.f32 %v6019, %v6038
        %6040 = vdwg.mxu0
        %6041 = vmatpush.msra.mxu0 %v5895
        %6042 = vmatpush.msra.mxu0 %v5891
        %6043 = vmatpush.msra.mxu0 %v5887
        %6044 = vmatpush.msra.mxu0 %v5883
        %6045 = vmatpush.msra.mxu0 %v5879
        %6046 = vmatpush.msra.mxu0 %v5875
        %6047 = vmatpush.msra.mxu0 %v5871
        %6048 = vmatpush.msra.mxu0 %v5867
        %6049 = vmatpush.msra.mxu0 %v5863
        %6050 = vmatpush.msra.mxu0 %v5859
        %6051 = vmatpush.msra.mxu0 %v5855
        %6052 = vmatpush.msra.mxu0 %v5851
        %6053 = vmatpush.msra.mxu0 %v5847
        %6054 = vmatpush.msra.mxu0 %v5843
        %6055 = vmatpush.msra.mxu0 %v5839
        %6056 = vmatpush.msra.mxu0 %v5835
        %6057 = vmatmul.f32.gmra.mxu0 %v5810
        %v6058 = vpop.f32.mrf.mxu0
        %v6059 = vadd.f32 0.0, %v6058
        %6060 = vdwg.mxu0
        %6061 = vmatpush.msra.mxu0 %v5959
        %6062 = vmatpush.msra.mxu0 %v5955
        %6063 = vmatpush.msra.mxu0 %v5951
        %6064 = vmatpush.msra.mxu0 %v5947
        %6065 = vmatpush.msra.mxu0 %v5943
        %6066 = vmatpush.msra.mxu0 %v5939
        %6067 = vmatpush.msra.mxu0 %v5935
        %6068 = vmatpush.msra.mxu0 %v5931
        %6069 = vmatpush.msra.mxu0 %v5927
        %6070 = vmatpush.msra.mxu0 %v5923
        %6071 = vmatpush.msra.mxu0 %v5919
        %6072 = vmatpush.msra.mxu0 %v5915
        %6073 = vmatpush.msra.mxu0 %v5911
        %6074 = vmatpush.msra.mxu0 %v5907
        %6075 = vmatpush.msra.mxu0 %v5903
        %6076 = vmatpush.msra.mxu0 %v5899
        %6077 = vmatmul.f32.gmra.mxu0 %v5830
        %v6078 = vpop.f32.mrf.mxu0
        %v6079 = vadd.f32 %v6059, %v6078
        %6080 = vdwg.mxu0
        %6081 = vmatpush.msra.mxu0 %v5896
        %6082 = vmatpush.msra.mxu0 %v5892
        %6083 = vmatpush.msra.mxu0 %v5888
        %6084 = vmatpush.msra.mxu0 %v5884
        %6085 = vmatpush.msra.mxu0 %v5880
        %6086 = vmatpush.msra.mxu0 %v5876
        %6087 = vmatpush.msra.mxu0 %v5872
        %6088 = vmatpush.msra.mxu0 %v5868
        %6089 = vmatpush.msra.mxu0 %v5864
        %6090 = vmatpush.msra.mxu0 %v5860
        %6091 = vmatpush.msra.mxu0 %v5856
        %6092 = vmatpush.msra.mxu0 %v5852
        %6093 = vmatpush.msra.mxu0 %v5848
        %6094 = vmatpush.msra.mxu0 %v5844
        %6095 = vmatpush.msra.mxu0 %v5840
        %6096 = vmatpush.msra.mxu0 %v5836
        %6097 = vmatmul.f32.gmra.mxu0 %v5810
        %v6098 = vpop.f32.mrf.mxu0
        %v6099 = vadd.f32 0.0, %v6098
        %6100 = vdwg.mxu0
        %6101 = vmatpush.msra.mxu0 %v5960
        %6102 = vmatpush.msra.mxu0 %v5956
        %6103 = vmatpush.msra.mxu0 %v5952
        %6104 = vmatpush.msra.mxu0 %v5948
        %6105 = vmatpush.msra.mxu0 %v5944
        %6106 = vmatpush.msra.mxu0 %v5940
        %6107 = vmatpush.msra.mxu0 %v5936
        %6108 = vmatpush.msra.mxu0 %v5932
        %6109 = vmatpush.msra.mxu0 %v5928
        %6110 = vmatpush.msra.mxu0 %v5924
        %6111 = vmatpush.msra.mxu0 %v5920
        %6112 = vmatpush.msra.mxu0 %v5916
        %6113 = vmatpush.msra.mxu0 %v5912
        %6114 = vmatpush.msra.mxu0 %v5908
        %6115 = vmatpush.msra.mxu0 %v5904
        %6116 = vmatpush.msra.mxu0 %v5900
        %6117 = vmatmul.f32.gmra.mxu0 %v5830
        %v6118 = vpop.f32.mrf.mxu0
        %v6119 = vadd.f32 %v6099, %v6118
        %6120 = vdwg.mxu0
        %v6121 = vadd.f32 %v5783, %v5999
        %v6122 = vadd.f32 %v5784, %v6039
        %v6123 = vadd.f32 %v5785, %v6079
        %v6124 = vadd.f32 %v5786, %v6119
        %s6125 = scalar_lea.vmem [#allocation14], 28
        %v6126 = vld [vmem:[%s6125] sm:$0xf]
        %v6128 = vsel %vm3769, %v6126, 0
        %6130 = vmatpush.msra.mxu0 0.0
        %6131 = vmatpush.msra.mxu0 0.0
        %6132 = vmatpush.msra.mxu0 0.0
        %6133 = vmatpush.msra.mxu0 0.0
        %6134 = vmatpush.msra.mxu0 0.0
        %6135 = vmatpush.msra.mxu0 0.0
        %6136 = vmatpush.msra.mxu0 0.0
        %6137 = vmatpush.msra.mxu0 0.0
        %6138 = vmatpush.msra.mxu0 0.0
        %6139 = vmatpush.msra.mxu0 0.0
        %6140 = vmatpush.msra.mxu0 0.0
        %6141 = vmatpush.msra.mxu0 0.0
        %6142 = vmatpush.msra.mxu0 0.0
        %6143 = vmatpush.msra.mxu0 0.0
        %6144 = vmatpush.msra.mxu0 %v3766
        %6145 = vmatpush.msra.mxu0 %v3764
        %6146 = vmatmul.f32.gmra.mxu0 %v6128
        %v6147 = vpop.f32.mrf.mxu0
        %v6148 = vadd.f32 0.0, %v6147
        %6149 = vdwg.mxu0
        %6150 = vmatpush.msra.mxu0 0.0
        %6151 = vmatpush.msra.mxu0 0.0
        %6152 = vmatpush.msra.mxu0 0.0
        %6153 = vmatpush.msra.mxu0 0.0
        %6154 = vmatpush.msra.mxu0 0.0
        %6155 = vmatpush.msra.mxu0 0.0
        %6156 = vmatpush.msra.mxu0 0.0
        %6157 = vmatpush.msra.mxu0 0.0
        %6158 = vmatpush.msra.mxu0 0.0
        %6159 = vmatpush.msra.mxu0 0.0
        %6160 = vmatpush.msra.mxu0 0.0
        %6161 = vmatpush.msra.mxu0 0.0
        %6162 = vmatpush.msra.mxu0 0.0
        %6163 = vmatpush.msra.mxu0 0.0
        %6164 = vmatpush.msra.mxu0 %v3767
        %6165 = vmatpush.msra.mxu0 %v3765
        %6166 = vmatmul.f32.gmra.mxu0 %v6128
        %v6167 = vpop.f32.mrf.mxu0
        %v6168 = vadd.f32 0.0, %v6167
        %6169 = vdwg.mxu0
        %s6170 = scalar_lea.vmem [#allocation16], 7168
        %v6171 = vld [vmem:[%s6170] sm:$0xff]
        %v6172 = vld [vmem:[%s6170 + $0x8] sm:$0xff]
        %v6173 = vld [vmem:[%s6170 + $0x10] sm:$0xff]
        %v6174 = vld [vmem:[%s6170 + $0x18] sm:$0xff]
        %v6175 = vld [vmem:[%s6170 + $0x20] sm:$0xff]
        %v6176 = vld [vmem:[%s6170 + $0x28] sm:$0xff]
        %v6177 = vld [vmem:[%s6170 + $0x30] sm:$0xff]
        %v6178 = vld [vmem:[%s6170 + $0x38] sm:$0xff]
        %v6179 = vld [vmem:[%s6170 + $0x40] sm:$0xff]
        %v6180 = vld [vmem:[%s6170 + $0x48] sm:$0xff]
        %v6181 = vld [vmem:[%s6170 + $0x50] sm:$0xff]
        %v6182 = vld [vmem:[%s6170 + $0x58] sm:$0xff]
        %v6183 = vld [vmem:[%s6170 + $0x60] sm:$0xff]
        %v6184 = vld [vmem:[%s6170 + $0x68] sm:$0xff]
        %v6185 = vld [vmem:[%s6170 + $0x70] sm:$0xff]
        %v6186 = vld [vmem:[%s6170 + $0x78] sm:$0xff]
        %v6187 = vld [vmem:[%s6170 + $0x80] sm:$0xff]
        %v6188 = vld [vmem:[%s6170 + $0x88] sm:$0xff]
        %v6189 = vld [vmem:[%s6170 + $0x90] sm:$0xff]
        %v6190 = vld [vmem:[%s6170 + $0x98] sm:$0xff]
        %v6191 = vld [vmem:[%s6170 + $0xa0] sm:$0xff]
        %v6192 = vld [vmem:[%s6170 + $0xa8] sm:$0xff]
        %v6193 = vld [vmem:[%s6170 + $0xb0] sm:$0xff]
        %v6194 = vld [vmem:[%s6170 + $0xb8] sm:$0xff]
        %v6195 = vld [vmem:[%s6170 + $0xc0] sm:$0xff]
        %v6196 = vld [vmem:[%s6170 + $0xc8] sm:$0xff]
        %v6197 = vld [vmem:[%s6170 + $0xd0] sm:$0xff]
        %v6198 = vld [vmem:[%s6170 + $0xd8] sm:$0xff]
        %v6199 = vld [vmem:[%s6170 + $0xe0] sm:$0xff]
        %v6200 = vld [vmem:[%s6170 + $0xe8] sm:$0xff]
        %v6201 = vld [vmem:[%s6170 + $0xf0] sm:$0xff]
        %v6202 = vld [vmem:[%s6170 + $0xf8] sm:$0xff]
        %v6203 = vld [vmem:[%s6170 + $0x100] sm:$0xff]
        %v6204 = vld [vmem:[%s6170 + $0x108] sm:$0xff]
        %v6205 = vld [vmem:[%s6170 + $0x110] sm:$0xff]
        %v6206 = vld [vmem:[%s6170 + $0x118] sm:$0xff]
        %v6207 = vld [vmem:[%s6170 + $0x120] sm:$0xff]
        %v6208 = vld [vmem:[%s6170 + $0x128] sm:$0xff]
        %v6209 = vld [vmem:[%s6170 + $0x130] sm:$0xff]
        %v6210 = vld [vmem:[%s6170 + $0x138] sm:$0xff]
        %v6211 = vld [vmem:[%s6170 + $0x140] sm:$0xff]
        %v6212 = vld [vmem:[%s6170 + $0x148] sm:$0xff]
        %v6213 = vld [vmem:[%s6170 + $0x150] sm:$0xff]
        %v6214 = vld [vmem:[%s6170 + $0x158] sm:$0xff]
        %v6215 = vld [vmem:[%s6170 + $0x160] sm:$0xff]
        %v6216 = vld [vmem:[%s6170 + $0x168] sm:$0xff]
        %v6217 = vld [vmem:[%s6170 + $0x170] sm:$0xff]
        %v6218 = vld [vmem:[%s6170 + $0x178] sm:$0xff]
        %v6219 = vld [vmem:[%s6170 + $0x180] sm:$0xff]
        %v6220 = vld [vmem:[%s6170 + $0x188] sm:$0xff]
        %v6221 = vld [vmem:[%s6170 + $0x190] sm:$0xff]
        %v6222 = vld [vmem:[%s6170 + $0x198] sm:$0xff]
        %v6223 = vld [vmem:[%s6170 + $0x1a0] sm:$0xff]
        %v6224 = vld [vmem:[%s6170 + $0x1a8] sm:$0xff]
        %v6225 = vld [vmem:[%s6170 + $0x1b0] sm:$0xff]
        %v6226 = vld [vmem:[%s6170 + $0x1b8] sm:$0xff]
        %v6227 = vld [vmem:[%s6170 + $0x1c0] sm:$0xff]
        %v6228 = vld [vmem:[%s6170 + $0x1c8] sm:$0xff]
        %v6229 = vld [vmem:[%s6170 + $0x1d0] sm:$0xff]
        %v6230 = vld [vmem:[%s6170 + $0x1d8] sm:$0xff]
        %v6231 = vld [vmem:[%s6170 + $0x1e0] sm:$0xff]
        %v6232 = vld [vmem:[%s6170 + $0x1e8] sm:$0xff]
        %v6233 = vld [vmem:[%s6170 + $0x1f0] sm:$0xff]
        %v6234 = vld [vmem:[%s6170 + $0x1f8] sm:$0xff]
        %v6235 = vld [vmem:[%s6170 + $0x200] sm:$0xff]
        %v6236 = vld [vmem:[%s6170 + $0x208] sm:$0xff]
        %v6237 = vld [vmem:[%s6170 + $0x210] sm:$0xff]
        %v6238 = vld [vmem:[%s6170 + $0x218] sm:$0xff]
        %v6239 = vld [vmem:[%s6170 + $0x220] sm:$0xff]
        %v6240 = vld [vmem:[%s6170 + $0x228] sm:$0xff]
        %v6241 = vld [vmem:[%s6170 + $0x230] sm:$0xff]
        %v6242 = vld [vmem:[%s6170 + $0x238] sm:$0xff]
        %v6243 = vld [vmem:[%s6170 + $0x240] sm:$0xff]
        %v6244 = vld [vmem:[%s6170 + $0x248] sm:$0xff]
        %v6245 = vld [vmem:[%s6170 + $0x250] sm:$0xff]
        %v6246 = vld [vmem:[%s6170 + $0x258] sm:$0xff]
        %v6247 = vld [vmem:[%s6170 + $0x260] sm:$0xff]
        %v6248 = vld [vmem:[%s6170 + $0x268] sm:$0xff]
        %v6249 = vld [vmem:[%s6170 + $0x270] sm:$0xff]
        %v6250 = vld [vmem:[%s6170 + $0x278] sm:$0xff]
        %v6251 = vld [vmem:[%s6170 + $0x280] sm:$0xff]
        %v6252 = vld [vmem:[%s6170 + $0x288] sm:$0xff]
        %v6253 = vld [vmem:[%s6170 + $0x290] sm:$0xff]
        %v6254 = vld [vmem:[%s6170 + $0x298] sm:$0xff]
        %v6255 = vld [vmem:[%s6170 + $0x2a0] sm:$0xff]
        %v6256 = vld [vmem:[%s6170 + $0x2a8] sm:$0xff]
        %v6257 = vld [vmem:[%s6170 + $0x2b0] sm:$0xff]
        %v6258 = vld [vmem:[%s6170 + $0x2b8] sm:$0xff]
        %v6259 = vld [vmem:[%s6170 + $0x2c0] sm:$0xff]
        %v6260 = vld [vmem:[%s6170 + $0x2c8] sm:$0xff]
        %v6261 = vld [vmem:[%s6170 + $0x2d0] sm:$0xff]
        %v6262 = vld [vmem:[%s6170 + $0x2d8] sm:$0xff]
        %v6263 = vld [vmem:[%s6170 + $0x2e0] sm:$0xff]
        %v6264 = vld [vmem:[%s6170 + $0x2e8] sm:$0xff]
        %v6265 = vld [vmem:[%s6170 + $0x2f0] sm:$0xff]
        %v6266 = vld [vmem:[%s6170 + $0x2f8] sm:$0xff]
        %v6267 = vld [vmem:[%s6170 + $0x300] sm:$0xff]
        %v6268 = vld [vmem:[%s6170 + $0x308] sm:$0xff]
        %v6269 = vld [vmem:[%s6170 + $0x310] sm:$0xff]
        %v6270 = vld [vmem:[%s6170 + $0x318] sm:$0xff]
        %v6271 = vld [vmem:[%s6170 + $0x320] sm:$0xff]
        %v6272 = vld [vmem:[%s6170 + $0x328] sm:$0xff]
        %v6273 = vld [vmem:[%s6170 + $0x330] sm:$0xff]
        %v6274 = vld [vmem:[%s6170 + $0x338] sm:$0xff]
        %v6275 = vld [vmem:[%s6170 + $0x340] sm:$0xff]
        %v6276 = vld [vmem:[%s6170 + $0x348] sm:$0xff]
        %v6277 = vld [vmem:[%s6170 + $0x350] sm:$0xff]
        %v6278 = vld [vmem:[%s6170 + $0x358] sm:$0xff]
        %v6279 = vld [vmem:[%s6170 + $0x360] sm:$0xff]
        %v6280 = vld [vmem:[%s6170 + $0x368] sm:$0xff]
        %v6281 = vld [vmem:[%s6170 + $0x370] sm:$0xff]
        %v6282 = vld [vmem:[%s6170 + $0x378] sm:$0xff]
        %v6283 = vld [vmem:[%s6170 + $0x380] sm:$0xff]
        %v6284 = vld [vmem:[%s6170 + $0x388] sm:$0xff]
        %v6285 = vld [vmem:[%s6170 + $0x390] sm:$0xff]
        %v6286 = vld [vmem:[%s6170 + $0x398] sm:$0xff]
        %v6287 = vld [vmem:[%s6170 + $0x3a0] sm:$0xff]
        %v6288 = vld [vmem:[%s6170 + $0x3a8] sm:$0xff]
        %v6289 = vld [vmem:[%s6170 + $0x3b0] sm:$0xff]
        %v6290 = vld [vmem:[%s6170 + $0x3b8] sm:$0xff]
        %v6291 = vld [vmem:[%s6170 + $0x3c0] sm:$0xff]
        %v6292 = vld [vmem:[%s6170 + $0x3c8] sm:$0xff]
        %v6293 = vld [vmem:[%s6170 + $0x3d0] sm:$0xff]
        %v6294 = vld [vmem:[%s6170 + $0x3d8] sm:$0xff]
        %v6295 = vld [vmem:[%s6170 + $0x3e0] sm:$0xff]
        %v6296 = vld [vmem:[%s6170 + $0x3e8] sm:$0xff]
        %v6297 = vld [vmem:[%s6170 + $0x3f0] sm:$0xff]
        %v6298 = vld [vmem:[%s6170 + $0x3f8] sm:$0xff]
        %6299 = vmatpush.msra.mxu0 %v6231
        %6300 = vmatpush.msra.mxu0 %v6227
        %6301 = vmatpush.msra.mxu0 %v6223
        %6302 = vmatpush.msra.mxu0 %v6219
        %6303 = vmatpush.msra.mxu0 %v6215
        %6304 = vmatpush.msra.mxu0 %v6211
        %6305 = vmatpush.msra.mxu0 %v6207
        %6306 = vmatpush.msra.mxu0 %v6203
        %6307 = vmatpush.msra.mxu0 %v6199
        %6308 = vmatpush.msra.mxu0 %v6195
        %6309 = vmatpush.msra.mxu0 %v6191
        %6310 = vmatpush.msra.mxu0 %v6187
        %6311 = vmatpush.msra.mxu0 %v6183
        %6312 = vmatpush.msra.mxu0 %v6179
        %6313 = vmatpush.msra.mxu0 %v6175
        %6314 = vmatpush.msra.mxu0 %v6171
        %6315 = vmatmul.f32.gmra.mxu0 %v6148
        %v6316 = vpop.f32.mrf.mxu0
        %v6317 = vadd.f32 0.0, %v6316
        %6318 = vdwg.mxu0
        %6319 = vmatpush.msra.mxu0 %v6295
        %6320 = vmatpush.msra.mxu0 %v6291
        %6321 = vmatpush.msra.mxu0 %v6287
        %6322 = vmatpush.msra.mxu0 %v6283
        %6323 = vmatpush.msra.mxu0 %v6279
        %6324 = vmatpush.msra.mxu0 %v6275
        %6325 = vmatpush.msra.mxu0 %v6271
        %6326 = vmatpush.msra.mxu0 %v6267
        %6327 = vmatpush.msra.mxu0 %v6263
        %6328 = vmatpush.msra.mxu0 %v6259
        %6329 = vmatpush.msra.mxu0 %v6255
        %6330 = vmatpush.msra.mxu0 %v6251
        %6331 = vmatpush.msra.mxu0 %v6247
        %6332 = vmatpush.msra.mxu0 %v6243
        %6333 = vmatpush.msra.mxu0 %v6239
        %6334 = vmatpush.msra.mxu0 %v6235
        %6335 = vmatmul.f32.gmra.mxu0 %v6168
        %v6336 = vpop.f32.mrf.mxu0
        %v6337 = vadd.f32 %v6317, %v6336
        %6338 = vdwg.mxu0
        %6339 = vmatpush.msra.mxu0 %v6232
        %6340 = vmatpush.msra.mxu0 %v6228
        %6341 = vmatpush.msra.mxu0 %v6224
        %6342 = vmatpush.msra.mxu0 %v6220
        %6343 = vmatpush.msra.mxu0 %v6216
        %6344 = vmatpush.msra.mxu0 %v6212
        %6345 = vmatpush.msra.mxu0 %v6208
        %6346 = vmatpush.msra.mxu0 %v6204
        %6347 = vmatpush.msra.mxu0 %v6200
        %6348 = vmatpush.msra.mxu0 %v6196
        %6349 = vmatpush.msra.mxu0 %v6192
        %6350 = vmatpush.msra.mxu0 %v6188
        %6351 = vmatpush.msra.mxu0 %v6184
        %6352 = vmatpush.msra.mxu0 %v6180
        %6353 = vmatpush.msra.mxu0 %v6176
        %6354 = vmatpush.msra.mxu0 %v6172
        %6355 = vmatmul.f32.gmra.mxu0 %v6148
        %v6356 = vpop.f32.mrf.mxu0
        %v6357 = vadd.f32 0.0, %v6356
        %6358 = vdwg.mxu0
        %6359 = vmatpush.msra.mxu0 %v6296
        %6360 = vmatpush.msra.mxu0 %v6292
        %6361 = vmatpush.msra.mxu0 %v6288
        %6362 = vmatpush.msra.mxu0 %v6284
        %6363 = vmatpush.msra.mxu0 %v6280
        %6364 = vmatpush.msra.mxu0 %v6276
        %6365 = vmatpush.msra.mxu0 %v6272
        %6366 = vmatpush.msra.mxu0 %v6268
        %6367 = vmatpush.msra.mxu0 %v6264
        %6368 = vmatpush.msra.mxu0 %v6260
        %6369 = vmatpush.msra.mxu0 %v6256
        %6370 = vmatpush.msra.mxu0 %v6252
        %6371 = vmatpush.msra.mxu0 %v6248
        %6372 = vmatpush.msra.mxu0 %v6244
        %6373 = vmatpush.msra.mxu0 %v6240
        %6374 = vmatpush.msra.mxu0 %v6236
        %6375 = vmatmul.f32.gmra.mxu0 %v6168
        %v6376 = vpop.f32.mrf.mxu0
        %v6377 = vadd.f32 %v6357, %v6376
        %6378 = vdwg.mxu0
        %6379 = vmatpush.msra.mxu0 %v6233
        %6380 = vmatpush.msra.mxu0 %v6229
        %6381 = vmatpush.msra.mxu0 %v6225
        %6382 = vmatpush.msra.mxu0 %v6221
        %6383 = vmatpush.msra.mxu0 %v6217
        %6384 = vmatpush.msra.mxu0 %v6213
        %6385 = vmatpush.msra.mxu0 %v6209
        %6386 = vmatpush.msra.mxu0 %v6205
        %6387 = vmatpush.msra.mxu0 %v6201
        %6388 = vmatpush.msra.mxu0 %v6197
        %6389 = vmatpush.msra.mxu0 %v6193
        %6390 = vmatpush.msra.mxu0 %v6189
        %6391 = vmatpush.msra.mxu0 %v6185
        %6392 = vmatpush.msra.mxu0 %v6181
        %6393 = vmatpush.msra.mxu0 %v6177
        %6394 = vmatpush.msra.mxu0 %v6173
        %6395 = vmatmul.f32.gmra.mxu0 %v6148
        %v6396 = vpop.f32.mrf.mxu0
        %v6397 = vadd.f32 0.0, %v6396
        %6398 = vdwg.mxu0
        %6399 = vmatpush.msra.mxu0 %v6297
        %6400 = vmatpush.msra.mxu0 %v6293
        %6401 = vmatpush.msra.mxu0 %v6289
        %6402 = vmatpush.msra.mxu0 %v6285
        %6403 = vmatpush.msra.mxu0 %v6281
        %6404 = vmatpush.msra.mxu0 %v6277
        %6405 = vmatpush.msra.mxu0 %v6273
        %6406 = vmatpush.msra.mxu0 %v6269
        %6407 = vmatpush.msra.mxu0 %v6265
        %6408 = vmatpush.msra.mxu0 %v6261
        %6409 = vmatpush.msra.mxu0 %v6257
        %6410 = vmatpush.msra.mxu0 %v6253
        %6411 = vmatpush.msra.mxu0 %v6249
        %6412 = vmatpush.msra.mxu0 %v6245
        %6413 = vmatpush.msra.mxu0 %v6241
        %6414 = vmatpush.msra.mxu0 %v6237
        %6415 = vmatmul.f32.gmra.mxu0 %v6168
        %v6416 = vpop.f32.mrf.mxu0
        %v6417 = vadd.f32 %v6397, %v6416
        %6418 = vdwg.mxu0
        %6419 = vmatpush.msra.mxu0 %v6234
        %6420 = vmatpush.msra.mxu0 %v6230
        %6421 = vmatpush.msra.mxu0 %v6226
        %6422 = vmatpush.msra.mxu0 %v6222
        %6423 = vmatpush.msra.mxu0 %v6218
        %6424 = vmatpush.msra.mxu0 %v6214
        %6425 = vmatpush.msra.mxu0 %v6210
        %6426 = vmatpush.msra.mxu0 %v6206
        %6427 = vmatpush.msra.mxu0 %v6202
        %6428 = vmatpush.msra.mxu0 %v6198
        %6429 = vmatpush.msra.mxu0 %v6194
        %6430 = vmatpush.msra.mxu0 %v6190
        %6431 = vmatpush.msra.mxu0 %v6186
        %6432 = vmatpush.msra.mxu0 %v6182
        %6433 = vmatpush.msra.mxu0 %v6178
        %6434 = vmatpush.msra.mxu0 %v6174
        %6435 = vmatmul.f32.gmra.mxu0 %v6148
        %v6436 = vpop.f32.mrf.mxu0
        %v6437 = vadd.f32 0.0, %v6436
        %6438 = vdwg.mxu0
        %6439 = vmatpush.msra.mxu0 %v6298
        %6440 = vmatpush.msra.mxu0 %v6294
        %6441 = vmatpush.msra.mxu0 %v6290
        %6442 = vmatpush.msra.mxu0 %v6286
        %6443 = vmatpush.msra.mxu0 %v6282
        %6444 = vmatpush.msra.mxu0 %v6278
        %6445 = vmatpush.msra.mxu0 %v6274
        %6446 = vmatpush.msra.mxu0 %v6270
        %6447 = vmatpush.msra.mxu0 %v6266
        %6448 = vmatpush.msra.mxu0 %v6262
        %6449 = vmatpush.msra.mxu0 %v6258
        %6450 = vmatpush.msra.mxu0 %v6254
        %6451 = vmatpush.msra.mxu0 %v6250
        %6452 = vmatpush.msra.mxu0 %v6246
        %6453 = vmatpush.msra.mxu0 %v6242
        %6454 = vmatpush.msra.mxu0 %v6238
        %6455 = vmatmul.f32.gmra.mxu0 %v6168
        %v6456 = vpop.f32.mrf.mxu0
        %v6457 = vadd.f32 %v6437, %v6456
        %6458 = vdwg.mxu0
        %v6459 = vadd.f32 %v6121, %v6337
        %v6460 = vadd.f32 %v6122, %v6377
        %v6461 = vadd.f32 %v6123, %v6417
        %v6462 = vadd.f32 %v6124, %v6457
        %s6463 = scalar_lea.vmem [#allocation14], 32
        %v6464 = vld [vmem:[%s6463] sm:$0xf]
        %v6466 = vsel %vm3769, %v6464, 0
        %6468 = vmatpush.msra.mxu0 0.0
        %6469 = vmatpush.msra.mxu0 0.0
        %6470 = vmatpush.msra.mxu0 0.0
        %6471 = vmatpush.msra.mxu0 0.0
        %6472 = vmatpush.msra.mxu0 0.0
        %6473 = vmatpush.msra.mxu0 0.0
        %6474 = vmatpush.msra.mxu0 0.0
        %6475 = vmatpush.msra.mxu0 0.0
        %6476 = vmatpush.msra.mxu0 0.0
        %6477 = vmatpush.msra.mxu0 0.0
        %6478 = vmatpush.msra.mxu0 0.0
        %6479 = vmatpush.msra.mxu0 0.0
        %6480 = vmatpush.msra.mxu0 0.0
        %6481 = vmatpush.msra.mxu0 0.0
        %6482 = vmatpush.msra.mxu0 %v3766
        %6483 = vmatpush.msra.mxu0 %v3764
        %6484 = vmatmul.f32.gmra.mxu0 %v6466
        %v6485 = vpop.f32.mrf.mxu0
        %v6486 = vadd.f32 0.0, %v6485
        %6487 = vdwg.mxu0
        %6488 = vmatpush.msra.mxu0 0.0
        %6489 = vmatpush.msra.mxu0 0.0
        %6490 = vmatpush.msra.mxu0 0.0
        %6491 = vmatpush.msra.mxu0 0.0
        %6492 = vmatpush.msra.mxu0 0.0
        %6493 = vmatpush.msra.mxu0 0.0
        %6494 = vmatpush.msra.mxu0 0.0
        %6495 = vmatpush.msra.mxu0 0.0
        %6496 = vmatpush.msra.mxu0 0.0
        %6497 = vmatpush.msra.mxu0 0.0
        %6498 = vmatpush.msra.mxu0 0.0
        %6499 = vmatpush.msra.mxu0 0.0
        %6500 = vmatpush.msra.mxu0 0.0
        %6501 = vmatpush.msra.mxu0 0.0
        %6502 = vmatpush.msra.mxu0 %v3767
        %6503 = vmatpush.msra.mxu0 %v3765
        %6504 = vmatmul.f32.gmra.mxu0 %v6466
        %v6505 = vpop.f32.mrf.mxu0
        %v6506 = vadd.f32 0.0, %v6505
        %6507 = vdwg.mxu0
        %s6508 = scalar_lea.vmem [#allocation16], 8192
        %v6509 = vld [vmem:[%s6508] sm:$0xff]
        %v6510 = vld [vmem:[%s6508 + $0x8] sm:$0xff]
        %v6511 = vld [vmem:[%s6508 + $0x10] sm:$0xff]
        %v6512 = vld [vmem:[%s6508 + $0x18] sm:$0xff]
        %v6513 = vld [vmem:[%s6508 + $0x20] sm:$0xff]
        %v6514 = vld [vmem:[%s6508 + $0x28] sm:$0xff]
        %v6515 = vld [vmem:[%s6508 + $0x30] sm:$0xff]
        %v6516 = vld [vmem:[%s6508 + $0x38] sm:$0xff]
        %v6517 = vld [vmem:[%s6508 + $0x40] sm:$0xff]
        %v6518 = vld [vmem:[%s6508 + $0x48] sm:$0xff]
        %v6519 = vld [vmem:[%s6508 + $0x50] sm:$0xff]
        %v6520 = vld [vmem:[%s6508 + $0x58] sm:$0xff]
        %v6521 = vld [vmem:[%s6508 + $0x60] sm:$0xff]
        %v6522 = vld [vmem:[%s6508 + $0x68] sm:$0xff]
        %v6523 = vld [vmem:[%s6508 + $0x70] sm:$0xff]
        %v6524 = vld [vmem:[%s6508 + $0x78] sm:$0xff]
        %v6525 = vld [vmem:[%s6508 + $0x80] sm:$0xff]
        %v6526 = vld [vmem:[%s6508 + $0x88] sm:$0xff]
        %v6527 = vld [vmem:[%s6508 + $0x90] sm:$0xff]
        %v6528 = vld [vmem:[%s6508 + $0x98] sm:$0xff]
        %v6529 = vld [vmem:[%s6508 + $0xa0] sm:$0xff]
        %v6530 = vld [vmem:[%s6508 + $0xa8] sm:$0xff]
        %v6531 = vld [vmem:[%s6508 + $0xb0] sm:$0xff]
        %v6532 = vld [vmem:[%s6508 + $0xb8] sm:$0xff]
        %v6533 = vld [vmem:[%s6508 + $0xc0] sm:$0xff]
        %v6534 = vld [vmem:[%s6508 + $0xc8] sm:$0xff]
        %v6535 = vld [vmem:[%s6508 + $0xd0] sm:$0xff]
        %v6536 = vld [vmem:[%s6508 + $0xd8] sm:$0xff]
        %v6537 = vld [vmem:[%s6508 + $0xe0] sm:$0xff]
        %v6538 = vld [vmem:[%s6508 + $0xe8] sm:$0xff]
        %v6539 = vld [vmem:[%s6508 + $0xf0] sm:$0xff]
        %v6540 = vld [vmem:[%s6508 + $0xf8] sm:$0xff]
        %v6541 = vld [vmem:[%s6508 + $0x100] sm:$0xff]
        %v6542 = vld [vmem:[%s6508 + $0x108] sm:$0xff]
        %v6543 = vld [vmem:[%s6508 + $0x110] sm:$0xff]
        %v6544 = vld [vmem:[%s6508 + $0x118] sm:$0xff]
        %v6545 = vld [vmem:[%s6508 + $0x120] sm:$0xff]
        %v6546 = vld [vmem:[%s6508 + $0x128] sm:$0xff]
        %v6547 = vld [vmem:[%s6508 + $0x130] sm:$0xff]
        %v6548 = vld [vmem:[%s6508 + $0x138] sm:$0xff]
        %v6549 = vld [vmem:[%s6508 + $0x140] sm:$0xff]
        %v6550 = vld [vmem:[%s6508 + $0x148] sm:$0xff]
        %v6551 = vld [vmem:[%s6508 + $0x150] sm:$0xff]
        %v6552 = vld [vmem:[%s6508 + $0x158] sm:$0xff]
        %v6553 = vld [vmem:[%s6508 + $0x160] sm:$0xff]
        %v6554 = vld [vmem:[%s6508 + $0x168] sm:$0xff]
        %v6555 = vld [vmem:[%s6508 + $0x170] sm:$0xff]
        %v6556 = vld [vmem:[%s6508 + $0x178] sm:$0xff]
        %v6557 = vld [vmem:[%s6508 + $0x180] sm:$0xff]
        %v6558 = vld [vmem:[%s6508 + $0x188] sm:$0xff]
        %v6559 = vld [vmem:[%s6508 + $0x190] sm:$0xff]
        %v6560 = vld [vmem:[%s6508 + $0x198] sm:$0xff]
        %v6561 = vld [vmem:[%s6508 + $0x1a0] sm:$0xff]
        %v6562 = vld [vmem:[%s6508 + $0x1a8] sm:$0xff]
        %v6563 = vld [vmem:[%s6508 + $0x1b0] sm:$0xff]
        %v6564 = vld [vmem:[%s6508 + $0x1b8] sm:$0xff]
        %v6565 = vld [vmem:[%s6508 + $0x1c0] sm:$0xff]
        %v6566 = vld [vmem:[%s6508 + $0x1c8] sm:$0xff]
        %v6567 = vld [vmem:[%s6508 + $0x1d0] sm:$0xff]
        %v6568 = vld [vmem:[%s6508 + $0x1d8] sm:$0xff]
        %v6569 = vld [vmem:[%s6508 + $0x1e0] sm:$0xff]
        %v6570 = vld [vmem:[%s6508 + $0x1e8] sm:$0xff]
        %v6571 = vld [vmem:[%s6508 + $0x1f0] sm:$0xff]
        %v6572 = vld [vmem:[%s6508 + $0x1f8] sm:$0xff]
        %v6573 = vld [vmem:[%s6508 + $0x200] sm:$0xff]
        %v6574 = vld [vmem:[%s6508 + $0x208] sm:$0xff]
        %v6575 = vld [vmem:[%s6508 + $0x210] sm:$0xff]
        %v6576 = vld [vmem:[%s6508 + $0x218] sm:$0xff]
        %v6577 = vld [vmem:[%s6508 + $0x220] sm:$0xff]
        %v6578 = vld [vmem:[%s6508 + $0x228] sm:$0xff]
        %v6579 = vld [vmem:[%s6508 + $0x230] sm:$0xff]
        %v6580 = vld [vmem:[%s6508 + $0x238] sm:$0xff]
        %v6581 = vld [vmem:[%s6508 + $0x240] sm:$0xff]
        %v6582 = vld [vmem:[%s6508 + $0x248] sm:$0xff]
        %v6583 = vld [vmem:[%s6508 + $0x250] sm:$0xff]
        %v6584 = vld [vmem:[%s6508 + $0x258] sm:$0xff]
        %v6585 = vld [vmem:[%s6508 + $0x260] sm:$0xff]
        %v6586 = vld [vmem:[%s6508 + $0x268] sm:$0xff]
        %v6587 = vld [vmem:[%s6508 + $0x270] sm:$0xff]
        %v6588 = vld [vmem:[%s6508 + $0x278] sm:$0xff]
        %v6589 = vld [vmem:[%s6508 + $0x280] sm:$0xff]
        %v6590 = vld [vmem:[%s6508 + $0x288] sm:$0xff]
        %v6591 = vld [vmem:[%s6508 + $0x290] sm:$0xff]
        %v6592 = vld [vmem:[%s6508 + $0x298] sm:$0xff]
        %v6593 = vld [vmem:[%s6508 + $0x2a0] sm:$0xff]
        %v6594 = vld [vmem:[%s6508 + $0x2a8] sm:$0xff]
        %v6595 = vld [vmem:[%s6508 + $0x2b0] sm:$0xff]
        %v6596 = vld [vmem:[%s6508 + $0x2b8] sm:$0xff]
        %v6597 = vld [vmem:[%s6508 + $0x2c0] sm:$0xff]
        %v6598 = vld [vmem:[%s6508 + $0x2c8] sm:$0xff]
        %v6599 = vld [vmem:[%s6508 + $0x2d0] sm:$0xff]
        %v6600 = vld [vmem:[%s6508 + $0x2d8] sm:$0xff]
        %v6601 = vld [vmem:[%s6508 + $0x2e0] sm:$0xff]
        %v6602 = vld [vmem:[%s6508 + $0x2e8] sm:$0xff]
        %v6603 = vld [vmem:[%s6508 + $0x2f0] sm:$0xff]
        %v6604 = vld [vmem:[%s6508 + $0x2f8] sm:$0xff]
        %v6605 = vld [vmem:[%s6508 + $0x300] sm:$0xff]
        %v6606 = vld [vmem:[%s6508 + $0x308] sm:$0xff]
        %v6607 = vld [vmem:[%s6508 + $0x310] sm:$0xff]
        %v6608 = vld [vmem:[%s6508 + $0x318] sm:$0xff]
        %v6609 = vld [vmem:[%s6508 + $0x320] sm:$0xff]
        %v6610 = vld [vmem:[%s6508 + $0x328] sm:$0xff]
        %v6611 = vld [vmem:[%s6508 + $0x330] sm:$0xff]
        %v6612 = vld [vmem:[%s6508 + $0x338] sm:$0xff]
        %v6613 = vld [vmem:[%s6508 + $0x340] sm:$0xff]
        %v6614 = vld [vmem:[%s6508 + $0x348] sm:$0xff]
        %v6615 = vld [vmem:[%s6508 + $0x350] sm:$0xff]
        %v6616 = vld [vmem:[%s6508 + $0x358] sm:$0xff]
        %v6617 = vld [vmem:[%s6508 + $0x360] sm:$0xff]
        %v6618 = vld [vmem:[%s6508 + $0x368] sm:$0xff]
        %v6619 = vld [vmem:[%s6508 + $0x370] sm:$0xff]
        %v6620 = vld [vmem:[%s6508 + $0x378] sm:$0xff]
        %v6621 = vld [vmem:[%s6508 + $0x380] sm:$0xff]
        %v6622 = vld [vmem:[%s6508 + $0x388] sm:$0xff]
        %v6623 = vld [vmem:[%s6508 + $0x390] sm:$0xff]
        %v6624 = vld [vmem:[%s6508 + $0x398] sm:$0xff]
        %v6625 = vld [vmem:[%s6508 + $0x3a0] sm:$0xff]
        %v6626 = vld [vmem:[%s6508 + $0x3a8] sm:$0xff]
        %v6627 = vld [vmem:[%s6508 + $0x3b0] sm:$0xff]
        %v6628 = vld [vmem:[%s6508 + $0x3b8] sm:$0xff]
        %v6629 = vld [vmem:[%s6508 + $0x3c0] sm:$0xff]
        %v6630 = vld [vmem:[%s6508 + $0x3c8] sm:$0xff]
        %v6631 = vld [vmem:[%s6508 + $0x3d0] sm:$0xff]
        %v6632 = vld [vmem:[%s6508 + $0x3d8] sm:$0xff]
        %v6633 = vld [vmem:[%s6508 + $0x3e0] sm:$0xff]
        %v6634 = vld [vmem:[%s6508 + $0x3e8] sm:$0xff]
        %v6635 = vld [vmem:[%s6508 + $0x3f0] sm:$0xff]
        %v6636 = vld [vmem:[%s6508 + $0x3f8] sm:$0xff]
        %6637 = vmatpush.msra.mxu0 %v6569
        %6638 = vmatpush.msra.mxu0 %v6565
        %6639 = vmatpush.msra.mxu0 %v6561
        %6640 = vmatpush.msra.mxu0 %v6557
        %6641 = vmatpush.msra.mxu0 %v6553
        %6642 = vmatpush.msra.mxu0 %v6549
        %6643 = vmatpush.msra.mxu0 %v6545
        %6644 = vmatpush.msra.mxu0 %v6541
        %6645 = vmatpush.msra.mxu0 %v6537
        %6646 = vmatpush.msra.mxu0 %v6533
        %6647 = vmatpush.msra.mxu0 %v6529
        %6648 = vmatpush.msra.mxu0 %v6525
        %6649 = vmatpush.msra.mxu0 %v6521
        %6650 = vmatpush.msra.mxu0 %v6517
        %6651 = vmatpush.msra.mxu0 %v6513
        %6652 = vmatpush.msra.mxu0 %v6509
        %6653 = vmatmul.f32.gmra.mxu0 %v6486
        %v6654 = vpop.f32.mrf.mxu0
        %v6655 = vadd.f32 0.0, %v6654
        %6656 = vdwg.mxu0
        %6657 = vmatpush.msra.mxu0 %v6633
        %6658 = vmatpush.msra.mxu0 %v6629
        %6659 = vmatpush.msra.mxu0 %v6625
        %6660 = vmatpush.msra.mxu0 %v6621
        %6661 = vmatpush.msra.mxu0 %v6617
        %6662 = vmatpush.msra.mxu0 %v6613
        %6663 = vmatpush.msra.mxu0 %v6609
        %6664 = vmatpush.msra.mxu0 %v6605
        %6665 = vmatpush.msra.mxu0 %v6601
        %6666 = vmatpush.msra.mxu0 %v6597
        %6667 = vmatpush.msra.mxu0 %v6593
        %6668 = vmatpush.msra.mxu0 %v6589
        %6669 = vmatpush.msra.mxu0 %v6585
        %6670 = vmatpush.msra.mxu0 %v6581
        %6671 = vmatpush.msra.mxu0 %v6577
        %6672 = vmatpush.msra.mxu0 %v6573
        %6673 = vmatmul.f32.gmra.mxu0 %v6506
        %v6674 = vpop.f32.mrf.mxu0
        %v6675 = vadd.f32 %v6655, %v6674
        %6676 = vdwg.mxu0
        %6677 = vmatpush.msra.mxu0 %v6570
        %6678 = vmatpush.msra.mxu0 %v6566
        %6679 = vmatpush.msra.mxu0 %v6562
        %6680 = vmatpush.msra.mxu0 %v6558
        %6681 = vmatpush.msra.mxu0 %v6554
        %6682 = vmatpush.msra.mxu0 %v6550
        %6683 = vmatpush.msra.mxu0 %v6546
        %6684 = vmatpush.msra.mxu0 %v6542
        %6685 = vmatpush.msra.mxu0 %v6538
        %6686 = vmatpush.msra.mxu0 %v6534
        %6687 = vmatpush.msra.mxu0 %v6530
        %6688 = vmatpush.msra.mxu0 %v6526
        %6689 = vmatpush.msra.mxu0 %v6522
        %6690 = vmatpush.msra.mxu0 %v6518
        %6691 = vmatpush.msra.mxu0 %v6514
        %6692 = vmatpush.msra.mxu0 %v6510
        %6693 = vmatmul.f32.gmra.mxu0 %v6486
        %v6694 = vpop.f32.mrf.mxu0
        %v6695 = vadd.f32 0.0, %v6694
        %6696 = vdwg.mxu0
        %6697 = vmatpush.msra.mxu0 %v6634
        %6698 = vmatpush.msra.mxu0 %v6630
        %6699 = vmatpush.msra.mxu0 %v6626
        %6700 = vmatpush.msra.mxu0 %v6622
        %6701 = vmatpush.msra.mxu0 %v6618
        %6702 = vmatpush.msra.mxu0 %v6614
        %6703 = vmatpush.msra.mxu0 %v6610
        %6704 = vmatpush.msra.mxu0 %v6606
        %6705 = vmatpush.msra.mxu0 %v6602
        %6706 = vmatpush.msra.mxu0 %v6598
        %6707 = vmatpush.msra.mxu0 %v6594
        %6708 = vmatpush.msra.mxu0 %v6590
        %6709 = vmatpush.msra.mxu0 %v6586
        %6710 = vmatpush.msra.mxu0 %v6582
        %6711 = vmatpush.msra.mxu0 %v6578
        %6712 = vmatpush.msra.mxu0 %v6574
        %6713 = vmatmul.f32.gmra.mxu0 %v6506
        %v6714 = vpop.f32.mrf.mxu0
        %v6715 = vadd.f32 %v6695, %v6714
        %6716 = vdwg.mxu0
        %6717 = vmatpush.msra.mxu0 %v6571
        %6718 = vmatpush.msra.mxu0 %v6567
        %6719 = vmatpush.msra.mxu0 %v6563
        %6720 = vmatpush.msra.mxu0 %v6559
        %6721 = vmatpush.msra.mxu0 %v6555
        %6722 = vmatpush.msra.mxu0 %v6551
        %6723 = vmatpush.msra.mxu0 %v6547
        %6724 = vmatpush.msra.mxu0 %v6543
        %6725 = vmatpush.msra.mxu0 %v6539
        %6726 = vmatpush.msra.mxu0 %v6535
        %6727 = vmatpush.msra.mxu0 %v6531
        %6728 = vmatpush.msra.mxu0 %v6527
        %6729 = vmatpush.msra.mxu0 %v6523
        %6730 = vmatpush.msra.mxu0 %v6519
        %6731 = vmatpush.msra.mxu0 %v6515
        %6732 = vmatpush.msra.mxu0 %v6511
        %6733 = vmatmul.f32.gmra.mxu0 %v6486
        %v6734 = vpop.f32.mrf.mxu0
        %v6735 = vadd.f32 0.0, %v6734
        %6736 = vdwg.mxu0
        %6737 = vmatpush.msra.mxu0 %v6635
        %6738 = vmatpush.msra.mxu0 %v6631
        %6739 = vmatpush.msra.mxu0 %v6627
        %6740 = vmatpush.msra.mxu0 %v6623
        %6741 = vmatpush.msra.mxu0 %v6619
        %6742 = vmatpush.msra.mxu0 %v6615
        %6743 = vmatpush.msra.mxu0 %v6611
        %6744 = vmatpush.msra.mxu0 %v6607
        %6745 = vmatpush.msra.mxu0 %v6603
        %6746 = vmatpush.msra.mxu0 %v6599
        %6747 = vmatpush.msra.mxu0 %v6595
        %6748 = vmatpush.msra.mxu0 %v6591
        %6749 = vmatpush.msra.mxu0 %v6587
        %6750 = vmatpush.msra.mxu0 %v6583
        %6751 = vmatpush.msra.mxu0 %v6579
        %6752 = vmatpush.msra.mxu0 %v6575
        %6753 = vmatmul.f32.gmra.mxu0 %v6506
        %v6754 = vpop.f32.mrf.mxu0
        %v6755 = vadd.f32 %v6735, %v6754
        %6756 = vdwg.mxu0
        %6757 = vmatpush.msra.mxu0 %v6572
        %6758 = vmatpush.msra.mxu0 %v6568
        %6759 = vmatpush.msra.mxu0 %v6564
        %6760 = vmatpush.msra.mxu0 %v6560
        %6761 = vmatpush.msra.mxu0 %v6556
        %6762 = vmatpush.msra.mxu0 %v6552
        %6763 = vmatpush.msra.mxu0 %v6548
        %6764 = vmatpush.msra.mxu0 %v6544
        %6765 = vmatpush.msra.mxu0 %v6540
        %6766 = vmatpush.msra.mxu0 %v6536
        %6767 = vmatpush.msra.mxu0 %v6532
        %6768 = vmatpush.msra.mxu0 %v6528
        %6769 = vmatpush.msra.mxu0 %v6524
        %6770 = vmatpush.msra.mxu0 %v6520
        %6771 = vmatpush.msra.mxu0 %v6516
        %6772 = vmatpush.msra.mxu0 %v6512
        %6773 = vmatmul.f32.gmra.mxu0 %v6486
        %v6774 = vpop.f32.mrf.mxu0
        %v6775 = vadd.f32 0.0, %v6774
        %6776 = vdwg.mxu0
        %6777 = vmatpush.msra.mxu0 %v6636
        %6778 = vmatpush.msra.mxu0 %v6632
        %6779 = vmatpush.msra.mxu0 %v6628
        %6780 = vmatpush.msra.mxu0 %v6624
        %6781 = vmatpush.msra.mxu0 %v6620
        %6782 = vmatpush.msra.mxu0 %v6616
        %6783 = vmatpush.msra.mxu0 %v6612
        %6784 = vmatpush.msra.mxu0 %v6608
        %6785 = vmatpush.msra.mxu0 %v6604
        %6786 = vmatpush.msra.mxu0 %v6600
        %6787 = vmatpush.msra.mxu0 %v6596
        %6788 = vmatpush.msra.mxu0 %v6592
        %6789 = vmatpush.msra.mxu0 %v6588
        %6790 = vmatpush.msra.mxu0 %v6584
        %6791 = vmatpush.msra.mxu0 %v6580
        %6792 = vmatpush.msra.mxu0 %v6576
        %6793 = vmatmul.f32.gmra.mxu0 %v6506
        %v6794 = vpop.f32.mrf.mxu0
        %v6795 = vadd.f32 %v6775, %v6794
        %6796 = vdwg.mxu0
        %v6797 = vadd.f32 %v6459, %v6675
        %v6798 = vadd.f32 %v6460, %v6715
        %v6799 = vadd.f32 %v6461, %v6755
        %v6800 = vadd.f32 %v6462, %v6795
        %v6801 = vld [vmem:[#allocation17] sm:$0xf]
        %v6803 = vperm.slane %v6801, 0
        %v6804 = vperm.slane %v6801, 1
        %v6805 = vperm.slane %v6801, 2
        %v6806 = vperm.slane %v6801, 3
        %v6811 = vadd.f32 %v6797, %v6803
        %v6812 = vadd.f32 %v6798, %v6804
        %v6813 = vadd.f32 %v6799, %v6805
        %v6814 = vadd.f32 %v6800, %v6806
        %vm6815 = vcmp.ge.f32.partialorder %v6811, 0.0
        %vm6816 = vcmp.ge.f32.partialorder %v6812, 0.0
        %vm6817 = vcmp.ge.f32.partialorder %v6813, 0.0
        %vm6818 = vcmp.ge.f32.partialorder %v6814, 0.0
        %v6819 = vmul.f32 %v6811, 0.2
        %v6820 = vmul.f32 %v6812, 0.2
        %v6821 = vmul.f32 %v6813, 0.2
        %v6822 = vmul.f32 %v6814, 0.2
        %v6823 = vsel %vm6815, %v6811, %v6819
        %v6824 = vsel %vm6816, %v6812, %v6820
        %v6825 = vsel %vm6817, %v6813, %v6821
        %v6826 = vsel %vm6818, %v6814, %v6822
        %vm6827 = vcmask 1043456
        %v6828 = vsel %vm6827, %v6823, 0.0
        %v6829 = vrot.slane %v6828, 4
        %v6830 = vadd.f32 %v6828, %v6829
        %v6831 = vrot.slane %v6830, 2
        %v6832 = vadd.f32 %v6830, %v6831
        %v6833 = vrot.slane %v6832, 1
        %v6834 = vadd.f32 %v6832, %v6833
        %v6835 = vsel %vm6827, %v6824, 0.0
        %v6836 = vrot.slane %v6835, 4
        %v6837 = vadd.f32 %v6835, %v6836
        %v6838 = vrot.slane %v6837, 2
        %v6839 = vadd.f32 %v6837, %v6838
        %v6840 = vrot.slane %v6839, 1
        %v6841 = vadd.f32 %v6839, %v6840
        %v6842 = vsel %vm6827, %v6825, 0.0
        %v6843 = vrot.slane %v6842, 4
        %v6844 = vadd.f32 %v6842, %v6843
        %v6845 = vrot.slane %v6844, 2
        %v6846 = vadd.f32 %v6844, %v6845
        %v6847 = vrot.slane %v6846, 1
        %v6848 = vadd.f32 %v6846, %v6847
        %v6849 = vsel %vm6827, %v6826, 0.0
        %v6850 = vrot.slane %v6849, 4
        %v6851 = vadd.f32 %v6849, %v6850
        %v6852 = vrot.slane %v6851, 2
        %v6853 = vadd.f32 %v6851, %v6852
        %v6854 = vrot.slane %v6853, 1
        %v6855 = vadd.f32 %v6853, %v6854
        %v6856 = vrcp.pop 4.0
        %v6857 = vmul.f32 4.0, %v6856
        %v6858 = vsub.f32 1.0, %v6857
        %v6859 = vmul.f32 %v6856, %v6858
        %v6860 = vadd.f32 %v6856, %v6859
        %vm6861 = vweird.f32 %v6856
        %v6862 = vsel %vm6861, %v6856, %v6860
        %v6863 = vmul.f32 %v6834, %v6862
        %v6864 = vmul.f32 %v6841, %v6862
        %v6865 = vmul.f32 %v6848, %v6862
        %v6866 = vmul.f32 %v6855, %v6862
        %v6867 = vsub.f32 %v6823, %v6863
        %v6868 = vsub.f32 %v6824, %v6864
        %v6869 = vsub.f32 %v6825, %v6865
        %v6870 = vsub.f32 %v6826, %v6866
        %v6871 = vmul.f32 %v6867, %v6867
        %v6872 = vmul.f32 %v6868, %v6868
        %v6873 = vmul.f32 %v6869, %v6869
        %v6874 = vmul.f32 %v6870, %v6870
        %v6875 = vsel %vm6827, %v6871, 0.0
        %v6876 = vrot.slane %v6875, 4
        %v6877 = vadd.f32 %v6875, %v6876
        %v6878 = vrot.slane %v6877, 2
        %v6879 = vadd.f32 %v6877, %v6878
        %v6880 = vrot.slane %v6879, 1
        %v6881 = vadd.f32 %v6879, %v6880
        %v6882 = vsel %vm6827, %v6872, 0.0
        %v6883 = vrot.slane %v6882, 4
        %v6884 = vadd.f32 %v6882, %v6883
        %v6885 = vrot.slane %v6884, 2
        %v6886 = vadd.f32 %v6884, %v6885
        %v6887 = vrot.slane %v6886, 1
        %v6888 = vadd.f32 %v6886, %v6887
        %v6889 = vsel %vm6827, %v6873, 0.0
        %v6890 = vrot.slane %v6889, 4
        %v6891 = vadd.f32 %v6889, %v6890
        %v6892 = vrot.slane %v6891, 2
        %v6893 = vadd.f32 %v6891, %v6892
        %v6894 = vrot.slane %v6893, 1
        %v6895 = vadd.f32 %v6893, %v6894
        %v6896 = vsel %vm6827, %v6874, 0.0
        %v6897 = vrot.slane %v6896, 4
        %v6898 = vadd.f32 %v6896, %v6897
        %v6899 = vrot.slane %v6898, 2
        %v6900 = vadd.f32 %v6898, %v6899
        %v6901 = vrot.slane %v6900, 1
        %v6902 = vadd.f32 %v6900, %v6901
        %v6903 = vmul.f32 %v6881, %v6862
        %v6904 = vmul.f32 %v6888, %v6862
        %v6905 = vmul.f32 %v6895, %v6862
        %v6906 = vmul.f32 %v6902, %v6862
        %v6907 = vadd.f32 %v6903, 1e-05
        %v6908 = vadd.f32 %v6904, 1e-05
        %v6909 = vadd.f32 %v6905, 1e-05
        %v6910 = vadd.f32 %v6906, 1e-05
        %v6911 = vrsqrt.pop %v6907
        %v6912 = vmul.f32 %v6911, %v6907
        %v6913 = vmul.f32 %v6912, %v6911
        %v6914 = vmul.f32 0.5, %v6913
        %v6915 = vsub.f32 1.5, %v6914
        %v6916 = vmul.f32 %v6911, %v6915
        %vm6917 = vweird.f32 %v6907
        %vm6918 = vweird.f32 %v6911
        %vm6919 = vmor %vm6917, %vm6918
        %v6920 = vsel %vm6919, %v6911, %v6916
        %v6921 = vrsqrt.pop %v6908
        %v6922 = vmul.f32 %v6921, %v6908
        %v6923 = vmul.f32 %v6922, %v6921
        %v6924 = vmul.f32 0.5, %v6923
        %v6925 = vsub.f32 1.5, %v6924
        %v6926 = vmul.f32 %v6921, %v6925
        %vm6927 = vweird.f32 %v6908
        %vm6928 = vweird.f32 %v6921
        %vm6929 = vmor %vm6927, %vm6928
        %v6930 = vsel %vm6929, %v6921, %v6926
        %v6931 = vrsqrt.pop %v6909
        %v6932 = vmul.f32 %v6931, %v6909
        %v6933 = vmul.f32 %v6932, %v6931
        %v6934 = vmul.f32 0.5, %v6933
        %v6935 = vsub.f32 1.5, %v6934
        %v6936 = vmul.f32 %v6931, %v6935
        %vm6937 = vweird.f32 %v6909
        %vm6938 = vweird.f32 %v6931
        %vm6939 = vmor %vm6937, %vm6938
        %v6940 = vsel %vm6939, %v6931, %v6936
        %v6941 = vrsqrt.pop %v6910
        %v6942 = vmul.f32 %v6941, %v6910
        %v6943 = vmul.f32 %v6942, %v6941
        %v6944 = vmul.f32 0.5, %v6943
        %v6945 = vsub.f32 1.5, %v6944
        %v6946 = vmul.f32 %v6941, %v6945
        %vm6947 = vweird.f32 %v6910
        %vm6948 = vweird.f32 %v6941
        %vm6949 = vmor %vm6947, %vm6948
        %v6950 = vsel %vm6949, %v6941, %v6946
        %v6951 = vmul.f32 %v6867, %v6920
        %v6952 = vmul.f32 %v6868, %v6930
        %v6953 = vmul.f32 %v6869, %v6940
        %v6954 = vmul.f32 %v6870, %v6950
        %v6955 = vld [vmem:[%s12] sm:$0xf]
        %vm6956 = vcmask 31744
        %v6958 = vsel %vm6956, %v6955, 0
        %v6961 = vsel %vm6827, %v6951, 0
        %v6964 = vsel %vm6827, %v6952, 0
        %v6967 = vsel %vm6827, %v6953, 0
        %v6970 = vsel %vm6827, %v6954, 0
        %6972 = vmatpush.msra.mxu0 0.0
        %6973 = vmatpush.msra.mxu0 0.0
        %6974 = vmatpush.msra.mxu0 0.0
        %6975 = vmatpush.msra.mxu0 0.0
        %6976 = vmatpush.msra.mxu0 0.0
        %6977 = vmatpush.msra.mxu0 0.0
        %6978 = vmatpush.msra.mxu0 0.0
        %6979 = vmatpush.msra.mxu0 0.0
        %6980 = vmatpush.msra.mxu0 0.0
        %6981 = vmatpush.msra.mxu0 0.0
        %6982 = vmatpush.msra.mxu0 0.0
        %6983 = vmatpush.msra.mxu0 0.0
        %6984 = vmatpush.msra.mxu0 0.0
        %6985 = vmatpush.msra.mxu0 0.0
        %6986 = vmatpush.msra.mxu0 0.0
        %6987 = vmatpush.msra.mxu0 %v6961
        %6988 = vmatmul.f32.gmra.mxu0 %v6958
        %v6989 = vpop.f32.mrf.mxu0
        %v6990 = vadd.f32 0.0, %v6989
        %6991 = vdwg.mxu0
        %6992 = vmatpush.msra.mxu0 0.0
        %6993 = vmatpush.msra.mxu0 0.0
        %6994 = vmatpush.msra.mxu0 0.0
        %6995 = vmatpush.msra.mxu0 0.0
        %6996 = vmatpush.msra.mxu0 0.0
        %6997 = vmatpush.msra.mxu0 0.0
        %6998 = vmatpush.msra.mxu0 0.0
        %6999 = vmatpush.msra.mxu0 0.0
        %7000 = vmatpush.msra.mxu0 0.0
        %7001 = vmatpush.msra.mxu0 0.0
        %7002 = vmatpush.msra.mxu0 0.0
        %7003 = vmatpush.msra.mxu0 0.0
        %7004 = vmatpush.msra.mxu0 0.0
        %7005 = vmatpush.msra.mxu0 0.0
        %7006 = vmatpush.msra.mxu0 0.0
        %7007 = vmatpush.msra.mxu0 %v6964
        %7008 = vmatmul.f32.gmra.mxu0 %v6958
        %v7009 = vpop.f32.mrf.mxu0
        %v7010 = vadd.f32 0.0, %v7009
        %7011 = vdwg.mxu0
        %7012 = vmatpush.msra.mxu0 0.0
        %7013 = vmatpush.msra.mxu0 0.0
        %7014 = vmatpush.msra.mxu0 0.0
        %7015 = vmatpush.msra.mxu0 0.0
        %7016 = vmatpush.msra.mxu0 0.0
        %7017 = vmatpush.msra.mxu0 0.0
        %7018 = vmatpush.msra.mxu0 0.0
        %7019 = vmatpush.msra.mxu0 0.0
        %7020 = vmatpush.msra.mxu0 0.0
        %7021 = vmatpush.msra.mxu0 0.0
        %7022 = vmatpush.msra.mxu0 0.0
        %7023 = vmatpush.msra.mxu0 0.0
        %7024 = vmatpush.msra.mxu0 0.0
        %7025 = vmatpush.msra.mxu0 0.0
        %7026 = vmatpush.msra.mxu0 0.0
        %7027 = vmatpush.msra.mxu0 %v6967
        %7028 = vmatmul.f32.gmra.mxu0 %v6958
        %v7029 = vpop.f32.mrf.mxu0
        %v7030 = vadd.f32 0.0, %v7029
        %7031 = vdwg.mxu0
        %7032 = vmatpush.msra.mxu0 0.0
        %7033 = vmatpush.msra.mxu0 0.0
        %7034 = vmatpush.msra.mxu0 0.0
        %7035 = vmatpush.msra.mxu0 0.0
        %7036 = vmatpush.msra.mxu0 0.0
        %7037 = vmatpush.msra.mxu0 0.0
        %7038 = vmatpush.msra.mxu0 0.0
        %7039 = vmatpush.msra.mxu0 0.0
        %7040 = vmatpush.msra.mxu0 0.0
        %7041 = vmatpush.msra.mxu0 0.0
        %7042 = vmatpush.msra.mxu0 0.0
        %7043 = vmatpush.msra.mxu0 0.0
        %7044 = vmatpush.msra.mxu0 0.0
        %7045 = vmatpush.msra.mxu0 0.0
        %7046 = vmatpush.msra.mxu0 0.0
        %7047 = vmatpush.msra.mxu0 %v6970
        %7048 = vmatmul.f32.gmra.mxu0 %v6958
        %v7049 = vpop.f32.mrf.mxu0
        %v7050 = vadd.f32 0.0, %v7049
        %7051 = vdwg.mxu0
        %v7052 = vld [vmem:[#allocation19] sm:$0xf]
        %v7054 = vperm.slane %v7052, 0
        %v7055 = vperm.slane %v7052, 1
        %v7056 = vperm.slane %v7052, 2
        %v7057 = vperm.slane %v7052, 3
        %v7062 = vmul.f32 %v6990, %v7054
        %v7063 = vmul.f32 %v7010, %v7055
        %v7064 = vmul.f32 %v7030, %v7056
        %v7065 = vmul.f32 %v7050, %v7057
        %v7066 = vsel %vm6827, %v7062, 0.0
        %v7067 = vsel %vm6827, %v7063, 0.0
        %v7068 = vadd.f32 %v7066, %v7067
        %v7069 = vsel %vm6827, %v7064, 0.0
        %v7070 = vadd.f32 %v7068, %v7069
        %v7071 = vsel %vm6827, %v7065, 0.0
        %v7072 = vadd.f32 %v7070, %v7071
        %7073 = vadd.xlane.f32.xlu0 %v7072
        %v7074 = vpop.xlane.xlu0 %7073
        %v7075 = vadd.f32 %v7074, 0.0
        %s7076 = scalar_lea.vmem %s12, 4
        %v7077 = vld [vmem:[%s7076] sm:$0xf]
        %v7079 = vsel %vm6956, %v7077, 0
        %7081 = vmatpush.msra.mxu0 0.0
        %7082 = vmatpush.msra.mxu0 0.0
        %7083 = vmatpush.msra.mxu0 0.0
        %7084 = vmatpush.msra.mxu0 0.0
        %7085 = vmatpush.msra.mxu0 0.0
        %7086 = vmatpush.msra.mxu0 0.0
        %7087 = vmatpush.msra.mxu0 0.0
        %7088 = vmatpush.msra.mxu0 0.0
        %7089 = vmatpush.msra.mxu0 0.0
        %7090 = vmatpush.msra.mxu0 0.0
        %7091 = vmatpush.msra.mxu0 0.0
        %7092 = vmatpush.msra.mxu0 0.0
        %7093 = vmatpush.msra.mxu0 0.0
        %7094 = vmatpush.msra.mxu0 0.0
        %7095 = vmatpush.msra.mxu0 0.0
        %7096 = vmatpush.msra.mxu0 %v6961
        %7097 = vmatmul.f32.gmra.mxu0 %v7079
        %v7098 = vpop.f32.mrf.mxu0
        %v7099 = vadd.f32 0.0, %v7098
        %7100 = vdwg.mxu0
        %7101 = vmatpush.msra.mxu0 0.0
        %7102 = vmatpush.msra.mxu0 0.0
        %7103 = vmatpush.msra.mxu0 0.0
        %7104 = vmatpush.msra.mxu0 0.0
        %7105 = vmatpush.msra.mxu0 0.0
        %7106 = vmatpush.msra.mxu0 0.0
        %7107 = vmatpush.msra.mxu0 0.0
        %7108 = vmatpush.msra.mxu0 0.0
        %7109 = vmatpush.msra.mxu0 0.0
        %7110 = vmatpush.msra.mxu0 0.0
        %7111 = vmatpush.msra.mxu0 0.0
        %7112 = vmatpush.msra.mxu0 0.0
        %7113 = vmatpush.msra.mxu0 0.0
        %7114 = vmatpush.msra.mxu0 0.0
        %7115 = vmatpush.msra.mxu0 0.0
        %7116 = vmatpush.msra.mxu0 %v6964
        %7117 = vmatmul.f32.gmra.mxu0 %v7079
        %v7118 = vpop.f32.mrf.mxu0
        %v7119 = vadd.f32 0.0, %v7118
        %7120 = vdwg.mxu0
        %7121 = vmatpush.msra.mxu0 0.0
        %7122 = vmatpush.msra.mxu0 0.0
        %7123 = vmatpush.msra.mxu0 0.0
        %7124 = vmatpush.msra.mxu0 0.0
        %7125 = vmatpush.msra.mxu0 0.0
        %7126 = vmatpush.msra.mxu0 0.0
        %7127 = vmatpush.msra.mxu0 0.0
        %7128 = vmatpush.msra.mxu0 0.0
        %7129 = vmatpush.msra.mxu0 0.0
        %7130 = vmatpush.msra.mxu0 0.0
        %7131 = vmatpush.msra.mxu0 0.0
        %7132 = vmatpush.msra.mxu0 0.0
        %7133 = vmatpush.msra.mxu0 0.0
        %7134 = vmatpush.msra.mxu0 0.0
        %7135 = vmatpush.msra.mxu0 0.0
        %7136 = vmatpush.msra.mxu0 %v6967
        %7137 = vmatmul.f32.gmra.mxu0 %v7079
        %v7138 = vpop.f32.mrf.mxu0
        %v7139 = vadd.f32 0.0, %v7138
        %7140 = vdwg.mxu0
        %7141 = vmatpush.msra.mxu0 0.0
        %7142 = vmatpush.msra.mxu0 0.0
        %7143 = vmatpush.msra.mxu0 0.0
        %7144 = vmatpush.msra.mxu0 0.0
        %7145 = vmatpush.msra.mxu0 0.0
        %7146 = vmatpush.msra.mxu0 0.0
        %7147 = vmatpush.msra.mxu0 0.0
        %7148 = vmatpush.msra.mxu0 0.0
        %7149 = vmatpush.msra.mxu0 0.0
        %7150 = vmatpush.msra.mxu0 0.0
        %7151 = vmatpush.msra.mxu0 0.0
        %7152 = vmatpush.msra.mxu0 0.0
        %7153 = vmatpush.msra.mxu0 0.0
        %7154 = vmatpush.msra.mxu0 0.0
        %7155 = vmatpush.msra.mxu0 0.0
        %7156 = vmatpush.msra.mxu0 %v6970
        %7157 = vmatmul.f32.gmra.mxu0 %v7079
        %v7158 = vpop.f32.mrf.mxu0
        %v7159 = vadd.f32 0.0, %v7158
        %7160 = vdwg.mxu0
        %s7161 = scalar_lea.vmem [#allocation19], 4
        %v7162 = vld [vmem:[%s7161] sm:$0xf]
        %v7164 = vperm.slane %v7162, 0
        %v7165 = vperm.slane %v7162, 1
        %v7166 = vperm.slane %v7162, 2
        %v7167 = vperm.slane %v7162, 3
        %v7172 = vmul.f32 %v7099, %v7164
        %v7173 = vmul.f32 %v7119, %v7165
        %v7174 = vmul.f32 %v7139, %v7166
        %v7175 = vmul.f32 %v7159, %v7167
        %v7176 = vsel %vm6827, %v7172, 0.0
        %v7177 = vsel %vm6827, %v7173, 0.0
        %v7178 = vadd.f32 %v7176, %v7177
        %v7179 = vsel %vm6827, %v7174, 0.0
        %v7180 = vadd.f32 %v7178, %v7179
        %v7181 = vsel %vm6827, %v7175, 0.0
        %v7182 = vadd.f32 %v7180, %v7181
        %7183 = vadd.xlane.f32.xlu0 %v7182
        %v7184 = vpop.xlane.xlu0 %7183
        %v7185 = vadd.f32 %v7075, %v7184
        %s7186 = scalar_lea.vmem %s12, 8
        %v7187 = vld [vmem:[%s7186] sm:$0xf]
        %v7189 = vsel %vm6956, %v7187, 0
        %7191 = vmatpush.msra.mxu0 0.0
        %7192 = vmatpush.msra.mxu0 0.0
        %7193 = vmatpush.msra.mxu0 0.0
        %7194 = vmatpush.msra.mxu0 0.0
        %7195 = vmatpush.msra.mxu0 0.0
        %7196 = vmatpush.msra.mxu0 0.0
        %7197 = vmatpush.msra.mxu0 0.0
        %7198 = vmatpush.msra.mxu0 0.0
        %7199 = vmatpush.msra.mxu0 0.0
        %7200 = vmatpush.msra.mxu0 0.0
        %7201 = vmatpush.msra.mxu0 0.0
        %7202 = vmatpush.msra.mxu0 0.0
        %7203 = vmatpush.msra.mxu0 0.0
        %7204 = vmatpush.msra.mxu0 0.0
        %7205 = vmatpush.msra.mxu0 0.0
        %7206 = vmatpush.msra.mxu0 %v6961
        %7207 = vmatmul.f32.gmra.mxu0 %v7189
        %v7208 = vpop.f32.mrf.mxu0
        %v7209 = vadd.f32 0.0, %v7208
        %7210 = vdwg.mxu0
        %7211 = vmatpush.msra.mxu0 0.0
        %7212 = vmatpush.msra.mxu0 0.0
        %7213 = vmatpush.msra.mxu0 0.0
        %7214 = vmatpush.msra.mxu0 0.0
        %7215 = vmatpush.msra.mxu0 0.0
        %7216 = vmatpush.msra.mxu0 0.0
        %7217 = vmatpush.msra.mxu0 0.0
        %7218 = vmatpush.msra.mxu0 0.0
        %7219 = vmatpush.msra.mxu0 0.0
        %7220 = vmatpush.msra.mxu0 0.0
        %7221 = vmatpush.msra.mxu0 0.0
        %7222 = vmatpush.msra.mxu0 0.0
        %7223 = vmatpush.msra.mxu0 0.0
        %7224 = vmatpush.msra.mxu0 0.0
        %7225 = vmatpush.msra.mxu0 0.0
        %7226 = vmatpush.msra.mxu0 %v6964
        %7227 = vmatmul.f32.gmra.mxu0 %v7189
        %v7228 = vpop.f32.mrf.mxu0
        %v7229 = vadd.f32 0.0, %v7228
        %7230 = vdwg.mxu0
        %7231 = vmatpush.msra.mxu0 0.0
        %7232 = vmatpush.msra.mxu0 0.0
        %7233 = vmatpush.msra.mxu0 0.0
        %7234 = vmatpush.msra.mxu0 0.0
        %7235 = vmatpush.msra.mxu0 0.0
        %7236 = vmatpush.msra.mxu0 0.0
        %7237 = vmatpush.msra.mxu0 0.0
        %7238 = vmatpush.msra.mxu0 0.0
        %7239 = vmatpush.msra.mxu0 0.0
        %7240 = vmatpush.msra.mxu0 0.0
        %7241 = vmatpush.msra.mxu0 0.0
        %7242 = vmatpush.msra.mxu0 0.0
        %7243 = vmatpush.msra.mxu0 0.0
        %7244 = vmatpush.msra.mxu0 0.0
        %7245 = vmatpush.msra.mxu0 0.0
        %7246 = vmatpush.msra.mxu0 %v6967
        %7247 = vmatmul.f32.gmra.mxu0 %v7189
        %v7248 = vpop.f32.mrf.mxu0
        %v7249 = vadd.f32 0.0, %v7248
        %7250 = vdwg.mxu0
        %7251 = vmatpush.msra.mxu0 0.0
        %7252 = vmatpush.msra.mxu0 0.0
        %7253 = vmatpush.msra.mxu0 0.0
        %7254 = vmatpush.msra.mxu0 0.0
        %7255 = vmatpush.msra.mxu0 0.0
        %7256 = vmatpush.msra.mxu0 0.0
        %7257 = vmatpush.msra.mxu0 0.0
        %7258 = vmatpush.msra.mxu0 0.0
        %7259 = vmatpush.msra.mxu0 0.0
        %7260 = vmatpush.msra.mxu0 0.0
        %7261 = vmatpush.msra.mxu0 0.0
        %7262 = vmatpush.msra.mxu0 0.0
        %7263 = vmatpush.msra.mxu0 0.0
        %7264 = vmatpush.msra.mxu0 0.0
        %7265 = vmatpush.msra.mxu0 0.0
        %7266 = vmatpush.msra.mxu0 %v6970
        %7267 = vmatmul.f32.gmra.mxu0 %v7189
        %v7268 = vpop.f32.mrf.mxu0
        %v7269 = vadd.f32 0.0, %v7268
        %7270 = vdwg.mxu0
        %s7271 = scalar_lea.vmem [#allocation19], 8
        %v7272 = vld [vmem:[%s7271] sm:$0xf]
        %v7274 = vperm.slane %v7272, 0
        %v7275 = vperm.slane %v7272, 1
        %v7276 = vperm.slane %v7272, 2
        %v7277 = vperm.slane %v7272, 3
        %v7282 = vmul.f32 %v7209, %v7274
        %v7283 = vmul.f32 %v7229, %v7275
        %v7284 = vmul.f32 %v7249, %v7276
        %v7285 = vmul.f32 %v7269, %v7277
        %v7286 = vsel %vm6827, %v7282, 0.0
        %v7287 = vsel %vm6827, %v7283, 0.0
        %v7288 = vadd.f32 %v7286, %v7287
        %v7289 = vsel %vm6827, %v7284, 0.0
        %v7290 = vadd.f32 %v7288, %v7289
        %v7291 = vsel %vm6827, %v7285, 0.0
        %v7292 = vadd.f32 %v7290, %v7291
        %7293 = vadd.xlane.f32.xlu0 %v7292
        %v7294 = vpop.xlane.xlu0 %7293
        %v7295 = vadd.f32 %v7185, %v7294
        %s7296 = scalar_lea.vmem %s12, 12
        %v7297 = vld [vmem:[%s7296] sm:$0xf]
        %v7299 = vsel %vm6956, %v7297, 0
        %7301 = vmatpush.msra.mxu0 0.0
        %7302 = vmatpush.msra.mxu0 0.0
        %7303 = vmatpush.msra.mxu0 0.0
        %7304 = vmatpush.msra.mxu0 0.0
        %7305 = vmatpush.msra.mxu0 0.0
        %7306 = vmatpush.msra.mxu0 0.0
        %7307 = vmatpush.msra.mxu0 0.0
        %7308 = vmatpush.msra.mxu0 0.0
        %7309 = vmatpush.msra.mxu0 0.0
        %7310 = vmatpush.msra.mxu0 0.0
        %7311 = vmatpush.msra.mxu0 0.0
        %7312 = vmatpush.msra.mxu0 0.0
        %7313 = vmatpush.msra.mxu0 0.0
        %7314 = vmatpush.msra.mxu0 0.0
        %7315 = vmatpush.msra.mxu0 0.0
        %7316 = vmatpush.msra.mxu0 %v6961
        %7317 = vmatmul.f32.gmra.mxu0 %v7299
        %v7318 = vpop.f32.mrf.mxu0
        %v7319 = vadd.f32 0.0, %v7318
        %7320 = vdwg.mxu0
        %7321 = vmatpush.msra.mxu0 0.0
        %7322 = vmatpush.msra.mxu0 0.0
        %7323 = vmatpush.msra.mxu0 0.0
        %7324 = vmatpush.msra.mxu0 0.0
        %7325 = vmatpush.msra.mxu0 0.0
        %7326 = vmatpush.msra.mxu0 0.0
        %7327 = vmatpush.msra.mxu0 0.0
        %7328 = vmatpush.msra.mxu0 0.0
        %7329 = vmatpush.msra.mxu0 0.0
        %7330 = vmatpush.msra.mxu0 0.0
        %7331 = vmatpush.msra.mxu0 0.0
        %7332 = vmatpush.msra.mxu0 0.0
        %7333 = vmatpush.msra.mxu0 0.0
        %7334 = vmatpush.msra.mxu0 0.0
        %7335 = vmatpush.msra.mxu0 0.0
        %7336 = vmatpush.msra.mxu0 %v6964
        %7337 = vmatmul.f32.gmra.mxu0 %v7299
        %v7338 = vpop.f32.mrf.mxu0
        %v7339 = vadd.f32 0.0, %v7338
        %7340 = vdwg.mxu0
        %7341 = vmatpush.msra.mxu0 0.0
        %7342 = vmatpush.msra.mxu0 0.0
        %7343 = vmatpush.msra.mxu0 0.0
        %7344 = vmatpush.msra.mxu0 0.0
        %7345 = vmatpush.msra.mxu0 0.0
        %7346 = vmatpush.msra.mxu0 0.0
        %7347 = vmatpush.msra.mxu0 0.0
        %7348 = vmatpush.msra.mxu0 0.0
        %7349 = vmatpush.msra.mxu0 0.0
        %7350 = vmatpush.msra.mxu0 0.0
        %7351 = vmatpush.msra.mxu0 0.0
        %7352 = vmatpush.msra.mxu0 0.0
        %7353 = vmatpush.msra.mxu0 0.0
        %7354 = vmatpush.msra.mxu0 0.0
        %7355 = vmatpush.msra.mxu0 0.0
        %7356 = vmatpush.msra.mxu0 %v6967
        %7357 = vmatmul.f32.gmra.mxu0 %v7299
        %v7358 = vpop.f32.mrf.mxu0
        %v7359 = vadd.f32 0.0, %v7358
        %7360 = vdwg.mxu0
        %7361 = vmatpush.msra.mxu0 0.0
        %7362 = vmatpush.msra.mxu0 0.0
        %7363 = vmatpush.msra.mxu0 0.0
        %7364 = vmatpush.msra.mxu0 0.0
        %7365 = vmatpush.msra.mxu0 0.0
        %7366 = vmatpush.msra.mxu0 0.0
        %7367 = vmatpush.msra.mxu0 0.0
        %7368 = vmatpush.msra.mxu0 0.0
        %7369 = vmatpush.msra.mxu0 0.0
        %7370 = vmatpush.msra.mxu0 0.0
        %7371 = vmatpush.msra.mxu0 0.0
        %7372 = vmatpush.msra.mxu0 0.0
        %7373 = vmatpush.msra.mxu0 0.0
        %7374 = vmatpush.msra.mxu0 0.0
        %7375 = vmatpush.msra.mxu0 0.0
        %7376 = vmatpush.msra.mxu0 %v6970
        %7377 = vmatmul.f32.gmra.mxu0 %v7299
        %v7378 = vpop.f32.mrf.mxu0
        %v7379 = vadd.f32 0.0, %v7378
        %7380 = vdwg.mxu0
        %s7381 = scalar_lea.vmem [#allocation19], 12
        %v7382 = vld [vmem:[%s7381] sm:$0xf]
        %v7384 = vperm.slane %v7382, 0
        %v7385 = vperm.slane %v7382, 1
        %v7386 = vperm.slane %v7382, 2
        %v7387 = vperm.slane %v7382, 3
        %v7392 = vmul.f32 %v7319, %v7384
        %v7393 = vmul.f32 %v7339, %v7385
        %v7394 = vmul.f32 %v7359, %v7386
        %v7395 = vmul.f32 %v7379, %v7387
        %v7396 = vsel %vm6827, %v7392, 0.0
        %v7397 = vsel %vm6827, %v7393, 0.0
        %v7398 = vadd.f32 %v7396, %v7397
        %v7399 = vsel %vm6827, %v7394, 0.0
        %v7400 = vadd.f32 %v7398, %v7399
        %v7401 = vsel %vm6827, %v7395, 0.0
        %v7402 = vadd.f32 %v7400, %v7401
        %7403 = vadd.xlane.f32.xlu0 %v7402
        %v7404 = vpop.xlane.xlu0 %7403
        %v7405 = vadd.f32 %v7295, %v7404
        %s7406 = scalar_lea.vmem %s12, 16
        %v7407 = vld [vmem:[%s7406] sm:$0xf]
        %v7409 = vsel %vm6956, %v7407, 0
        %7411 = vmatpush.msra.mxu0 0.0
        %7412 = vmatpush.msra.mxu0 0.0
        %7413 = vmatpush.msra.mxu0 0.0
        %7414 = vmatpush.msra.mxu0 0.0
        %7415 = vmatpush.msra.mxu0 0.0
        %7416 = vmatpush.msra.mxu0 0.0
        %7417 = vmatpush.msra.mxu0 0.0
        %7418 = vmatpush.msra.mxu0 0.0
        %7419 = vmatpush.msra.mxu0 0.0
        %7420 = vmatpush.msra.mxu0 0.0
        %7421 = vmatpush.msra.mxu0 0.0
        %7422 = vmatpush.msra.mxu0 0.0
        %7423 = vmatpush.msra.mxu0 0.0
        %7424 = vmatpush.msra.mxu0 0.0
        %7425 = vmatpush.msra.mxu0 0.0
        %7426 = vmatpush.msra.mxu0 %v6961
        %7427 = vmatmul.f32.gmra.mxu0 %v7409
        %v7428 = vpop.f32.mrf.mxu0
        %v7429 = vadd.f32 0.0, %v7428
        %7430 = vdwg.mxu0
        %7431 = vmatpush.msra.mxu0 0.0
        %7432 = vmatpush.msra.mxu0 0.0
        %7433 = vmatpush.msra.mxu0 0.0
        %7434 = vmatpush.msra.mxu0 0.0
        %7435 = vmatpush.msra.mxu0 0.0
        %7436 = vmatpush.msra.mxu0 0.0
        %7437 = vmatpush.msra.mxu0 0.0
        %7438 = vmatpush.msra.mxu0 0.0
        %7439 = vmatpush.msra.mxu0 0.0
        %7440 = vmatpush.msra.mxu0 0.0
        %7441 = vmatpush.msra.mxu0 0.0
        %7442 = vmatpush.msra.mxu0 0.0
        %7443 = vmatpush.msra.mxu0 0.0
        %7444 = vmatpush.msra.mxu0 0.0
        %7445 = vmatpush.msra.mxu0 0.0
        %7446 = vmatpush.msra.mxu0 %v6964
        %7447 = vmatmul.f32.gmra.mxu0 %v7409
        %v7448 = vpop.f32.mrf.mxu0
        %v7449 = vadd.f32 0.0, %v7448
        %7450 = vdwg.mxu0
        %7451 = vmatpush.msra.mxu0 0.0
        %7452 = vmatpush.msra.mxu0 0.0
        %7453 = vmatpush.msra.mxu0 0.0
        %7454 = vmatpush.msra.mxu0 0.0
        %7455 = vmatpush.msra.mxu0 0.0
        %7456 = vmatpush.msra.mxu0 0.0
        %7457 = vmatpush.msra.mxu0 0.0
        %7458 = vmatpush.msra.mxu0 0.0
        %7459 = vmatpush.msra.mxu0 0.0
        %7460 = vmatpush.msra.mxu0 0.0
        %7461 = vmatpush.msra.mxu0 0.0
        %7462 = vmatpush.msra.mxu0 0.0
        %7463 = vmatpush.msra.mxu0 0.0
        %7464 = vmatpush.msra.mxu0 0.0
        %7465 = vmatpush.msra.mxu0 0.0
        %7466 = vmatpush.msra.mxu0 %v6967
        %7467 = vmatmul.f32.gmra.mxu0 %v7409
        %v7468 = vpop.f32.mrf.mxu0
        %v7469 = vadd.f32 0.0, %v7468
        %7470 = vdwg.mxu0
        %7471 = vmatpush.msra.mxu0 0.0
        %7472 = vmatpush.msra.mxu0 0.0
        %7473 = vmatpush.msra.mxu0 0.0
        %7474 = vmatpush.msra.mxu0 0.0
        %7475 = vmatpush.msra.mxu0 0.0
        %7476 = vmatpush.msra.mxu0 0.0
        %7477 = vmatpush.msra.mxu0 0.0
        %7478 = vmatpush.msra.mxu0 0.0
        %7479 = vmatpush.msra.mxu0 0.0
        %7480 = vmatpush.msra.mxu0 0.0
        %7481 = vmatpush.msra.mxu0 0.0
        %7482 = vmatpush.msra.mxu0 0.0
        %7483 = vmatpush.msra.mxu0 0.0
        %7484 = vmatpush.msra.mxu0 0.0
        %7485 = vmatpush.msra.mxu0 0.0
        %7486 = vmatpush.msra.mxu0 %v6970
        %7487 = vmatmul.f32.gmra.mxu0 %v7409
        %v7488 = vpop.f32.mrf.mxu0
        %v7489 = vadd.f32 0.0, %v7488
        %7490 = vdwg.mxu0
        %s7491 = scalar_lea.vmem [#allocation19], 16
        %v7492 = vld [vmem:[%s7491] sm:$0xf]
        %v7494 = vperm.slane %v7492, 0
        %v7495 = vperm.slane %v7492, 1
        %v7496 = vperm.slane %v7492, 2
        %v7497 = vperm.slane %v7492, 3
        %v7502 = vmul.f32 %v7429, %v7494
        %v7503 = vmul.f32 %v7449, %v7495
        %v7504 = vmul.f32 %v7469, %v7496
        %v7505 = vmul.f32 %v7489, %v7497
        %v7506 = vsel %vm6827, %v7502, 0.0
        %v7507 = vsel %vm6827, %v7503, 0.0
        %v7508 = vadd.f32 %v7506, %v7507
        %v7509 = vsel %vm6827, %v7504, 0.0
        %v7510 = vadd.f32 %v7508, %v7509
        %v7511 = vsel %vm6827, %v7505, 0.0
        %v7512 = vadd.f32 %v7510, %v7511
        %7513 = vadd.xlane.f32.xlu0 %v7512
        %v7514 = vpop.xlane.xlu0 %7513
        %v7515 = vadd.f32 %v7405, %v7514
        %s7516 = scalar_lea.vmem %s12, 20
        %v7517 = vld [vmem:[%s7516] sm:$0xf]
        %v7519 = vsel %vm6956, %v7517, 0
        %7521 = vmatpush.msra.mxu0 0.0
        %7522 = vmatpush.msra.mxu0 0.0
        %7523 = vmatpush.msra.mxu0 0.0
        %7524 = vmatpush.msra.mxu0 0.0
        %7525 = vmatpush.msra.mxu0 0.0
        %7526 = vmatpush.msra.mxu0 0.0
        %7527 = vmatpush.msra.mxu0 0.0
        %7528 = vmatpush.msra.mxu0 0.0
        %7529 = vmatpush.msra.mxu0 0.0
        %7530 = vmatpush.msra.mxu0 0.0
        %7531 = vmatpush.msra.mxu0 0.0
        %7532 = vmatpush.msra.mxu0 0.0
        %7533 = vmatpush.msra.mxu0 0.0
        %7534 = vmatpush.msra.mxu0 0.0
        %7535 = vmatpush.msra.mxu0 0.0
        %7536 = vmatpush.msra.mxu0 %v6961
        %7537 = vmatmul.f32.gmra.mxu0 %v7519
        %v7538 = vpop.f32.mrf.mxu0
        %v7539 = vadd.f32 0.0, %v7538
        %7540 = vdwg.mxu0
        %7541 = vmatpush.msra.mxu0 0.0
        %7542 = vmatpush.msra.mxu0 0.0
        %7543 = vmatpush.msra.mxu0 0.0
        %7544 = vmatpush.msra.mxu0 0.0
        %7545 = vmatpush.msra.mxu0 0.0
        %7546 = vmatpush.msra.mxu0 0.0
        %7547 = vmatpush.msra.mxu0 0.0
        %7548 = vmatpush.msra.mxu0 0.0
        %7549 = vmatpush.msra.mxu0 0.0
        %7550 = vmatpush.msra.mxu0 0.0
        %7551 = vmatpush.msra.mxu0 0.0
        %7552 = vmatpush.msra.mxu0 0.0
        %7553 = vmatpush.msra.mxu0 0.0
        %7554 = vmatpush.msra.mxu0 0.0
        %7555 = vmatpush.msra.mxu0 0.0
        %7556 = vmatpush.msra.mxu0 %v6964
        %7557 = vmatmul.f32.gmra.mxu0 %v7519
        %v7558 = vpop.f32.mrf.mxu0
        %v7559 = vadd.f32 0.0, %v7558
        %7560 = vdwg.mxu0
        %7561 = vmatpush.msra.mxu0 0.0
        %7562 = vmatpush.msra.mxu0 0.0
        %7563 = vmatpush.msra.mxu0 0.0
        %7564 = vmatpush.msra.mxu0 0.0
        %7565 = vmatpush.msra.mxu0 0.0
        %7566 = vmatpush.msra.mxu0 0.0
        %7567 = vmatpush.msra.mxu0 0.0
        %7568 = vmatpush.msra.mxu0 0.0
        %7569 = vmatpush.msra.mxu0 0.0
        %7570 = vmatpush.msra.mxu0 0.0
        %7571 = vmatpush.msra.mxu0 0.0
        %7572 = vmatpush.msra.mxu0 0.0
        %7573 = vmatpush.msra.mxu0 0.0
        %7574 = vmatpush.msra.mxu0 0.0
        %7575 = vmatpush.msra.mxu0 0.0
        %7576 = vmatpush.msra.mxu0 %v6967
        %7577 = vmatmul.f32.gmra.mxu0 %v7519
        %v7578 = vpop.f32.mrf.mxu0
        %v7579 = vadd.f32 0.0, %v7578
        %7580 = vdwg.mxu0
        %7581 = vmatpush.msra.mxu0 0.0
        %7582 = vmatpush.msra.mxu0 0.0
        %7583 = vmatpush.msra.mxu0 0.0
        %7584 = vmatpush.msra.mxu0 0.0
        %7585 = vmatpush.msra.mxu0 0.0
        %7586 = vmatpush.msra.mxu0 0.0
        %7587 = vmatpush.msra.mxu0 0.0
        %7588 = vmatpush.msra.mxu0 0.0
        %7589 = vmatpush.msra.mxu0 0.0
        %7590 = vmatpush.msra.mxu0 0.0
        %7591 = vmatpush.msra.mxu0 0.0
        %7592 = vmatpush.msra.mxu0 0.0
        %7593 = vmatpush.msra.mxu0 0.0
        %7594 = vmatpush.msra.mxu0 0.0
        %7595 = vmatpush.msra.mxu0 0.0
        %7596 = vmatpush.msra.mxu0 %v6970
        %7597 = vmatmul.f32.gmra.mxu0 %v7519
        %v7598 = vpop.f32.mrf.mxu0
        %v7599 = vadd.f32 0.0, %v7598
        %7600 = vdwg.mxu0
        %s7601 = scalar_lea.vmem [#allocation19], 20
        %v7602 = vld [vmem:[%s7601] sm:$0xf]
        %v7604 = vperm.slane %v7602, 0
        %v7605 = vperm.slane %v7602, 1
        %v7606 = vperm.slane %v7602, 2
        %v7607 = vperm.slane %v7602, 3
        %v7612 = vmul.f32 %v7539, %v7604
        %v7613 = vmul.f32 %v7559, %v7605
        %v7614 = vmul.f32 %v7579, %v7606
        %v7615 = vmul.f32 %v7599, %v7607
        %v7616 = vsel %vm6827, %v7612, 0.0
        %v7617 = vsel %vm6827, %v7613, 0.0
        %v7618 = vadd.f32 %v7616, %v7617
        %v7619 = vsel %vm6827, %v7614, 0.0
        %v7620 = vadd.f32 %v7618, %v7619
        %v7621 = vsel %vm6827, %v7615, 0.0
        %v7622 = vadd.f32 %v7620, %v7621
        %7623 = vadd.xlane.f32.xlu0 %v7622
        %v7624 = vpop.xlane.xlu0 %7623
        %v7625 = vadd.f32 %v7515, %v7624
        %s7626 = scalar_lea.vmem %s12, 24
        %v7627 = vld [vmem:[%s7626] sm:$0xf]
        %v7629 = vsel %vm6956, %v7627, 0
        %7631 = vmatpush.msra.mxu0 0.0
        %7632 = vmatpush.msra.mxu0 0.0
        %7633 = vmatpush.msra.mxu0 0.0
        %7634 = vmatpush.msra.mxu0 0.0
        %7635 = vmatpush.msra.mxu0 0.0
        %7636 = vmatpush.msra.mxu0 0.0
        %7637 = vmatpush.msra.mxu0 0.0
        %7638 = vmatpush.msra.mxu0 0.0
        %7639 = vmatpush.msra.mxu0 0.0
        %7640 = vmatpush.msra.mxu0 0.0
        %7641 = vmatpush.msra.mxu0 0.0
        %7642 = vmatpush.msra.mxu0 0.0
        %7643 = vmatpush.msra.mxu0 0.0
        %7644 = vmatpush.msra.mxu0 0.0
        %7645 = vmatpush.msra.mxu0 0.0
        %7646 = vmatpush.msra.mxu0 %v6961
        %7647 = vmatmul.f32.gmra.mxu0 %v7629
        %v7648 = vpop.f32.mrf.mxu0
        %v7649 = vadd.f32 0.0, %v7648
        %7650 = vdwg.mxu0
        %7651 = vmatpush.msra.mxu0 0.0
        %7652 = vmatpush.msra.mxu0 0.0
        %7653 = vmatpush.msra.mxu0 0.0
        %7654 = vmatpush.msra.mxu0 0.0
        %7655 = vmatpush.msra.mxu0 0.0
        %7656 = vmatpush.msra.mxu0 0.0
        %7657 = vmatpush.msra.mxu0 0.0
        %7658 = vmatpush.msra.mxu0 0.0
        %7659 = vmatpush.msra.mxu0 0.0
        %7660 = vmatpush.msra.mxu0 0.0
        %7661 = vmatpush.msra.mxu0 0.0
        %7662 = vmatpush.msra.mxu0 0.0
        %7663 = vmatpush.msra.mxu0 0.0
        %7664 = vmatpush.msra.mxu0 0.0
        %7665 = vmatpush.msra.mxu0 0.0
        %7666 = vmatpush.msra.mxu0 %v6964
        %7667 = vmatmul.f32.gmra.mxu0 %v7629
        %v7668 = vpop.f32.mrf.mxu0
        %v7669 = vadd.f32 0.0, %v7668
        %7670 = vdwg.mxu0
        %7671 = vmatpush.msra.mxu0 0.0
        %7672 = vmatpush.msra.mxu0 0.0
        %7673 = vmatpush.msra.mxu0 0.0
        %7674 = vmatpush.msra.mxu0 0.0
        %7675 = vmatpush.msra.mxu0 0.0
        %7676 = vmatpush.msra.mxu0 0.0
        %7677 = vmatpush.msra.mxu0 0.0
        %7678 = vmatpush.msra.mxu0 0.0
        %7679 = vmatpush.msra.mxu0 0.0
        %7680 = vmatpush.msra.mxu0 0.0
        %7681 = vmatpush.msra.mxu0 0.0
        %7682 = vmatpush.msra.mxu0 0.0
        %7683 = vmatpush.msra.mxu0 0.0
        %7684 = vmatpush.msra.mxu0 0.0
        %7685 = vmatpush.msra.mxu0 0.0
        %7686 = vmatpush.msra.mxu0 %v6967
        %7687 = vmatmul.f32.gmra.mxu0 %v7629
        %v7688 = vpop.f32.mrf.mxu0
        %v7689 = vadd.f32 0.0, %v7688
        %7690 = vdwg.mxu0
        %7691 = vmatpush.msra.mxu0 0.0
        %7692 = vmatpush.msra.mxu0 0.0
        %7693 = vmatpush.msra.mxu0 0.0
        %7694 = vmatpush.msra.mxu0 0.0
        %7695 = vmatpush.msra.mxu0 0.0
        %7696 = vmatpush.msra.mxu0 0.0
        %7697 = vmatpush.msra.mxu0 0.0
        %7698 = vmatpush.msra.mxu0 0.0
        %7699 = vmatpush.msra.mxu0 0.0
        %7700 = vmatpush.msra.mxu0 0.0
        %7701 = vmatpush.msra.mxu0 0.0
        %7702 = vmatpush.msra.mxu0 0.0
        %7703 = vmatpush.msra.mxu0 0.0
        %7704 = vmatpush.msra.mxu0 0.0
        %7705 = vmatpush.msra.mxu0 0.0
        %7706 = vmatpush.msra.mxu0 %v6970
        %7707 = vmatmul.f32.gmra.mxu0 %v7629
        %v7708 = vpop.f32.mrf.mxu0
        %v7709 = vadd.f32 0.0, %v7708
        %7710 = vdwg.mxu0
        %s7711 = scalar_lea.vmem [#allocation19], 24
        %v7712 = vld [vmem:[%s7711] sm:$0xf]
        %v7714 = vperm.slane %v7712, 0
        %v7715 = vperm.slane %v7712, 1
        %v7716 = vperm.slane %v7712, 2
        %v7717 = vperm.slane %v7712, 3
        %v7722 = vmul.f32 %v7649, %v7714
        %v7723 = vmul.f32 %v7669, %v7715
        %v7724 = vmul.f32 %v7689, %v7716
        %v7725 = vmul.f32 %v7709, %v7717
        %v7726 = vsel %vm6827, %v7722, 0.0
        %v7727 = vsel %vm6827, %v7723, 0.0
        %v7728 = vadd.f32 %v7726, %v7727
        %v7729 = vsel %vm6827, %v7724, 0.0
        %v7730 = vadd.f32 %v7728, %v7729
        %v7731 = vsel %vm6827, %v7725, 0.0
        %v7732 = vadd.f32 %v7730, %v7731
        %7733 = vadd.xlane.f32.xlu0 %v7732
        %v7734 = vpop.xlane.xlu0 %7733
        %v7735 = vadd.f32 %v7625, %v7734
        %s7736 = scalar_lea.vmem %s12, 28
        %v7737 = vld [vmem:[%s7736] sm:$0xf]
        %v7739 = vsel %vm6956, %v7737, 0
        %7741 = vmatpush.msra.mxu0 0.0
        %7742 = vmatpush.msra.mxu0 0.0
        %7743 = vmatpush.msra.mxu0 0.0
        %7744 = vmatpush.msra.mxu0 0.0
        %7745 = vmatpush.msra.mxu0 0.0
        %7746 = vmatpush.msra.mxu0 0.0
        %7747 = vmatpush.msra.mxu0 0.0
        %7748 = vmatpush.msra.mxu0 0.0
        %7749 = vmatpush.msra.mxu0 0.0
        %7750 = vmatpush.msra.mxu0 0.0
        %7751 = vmatpush.msra.mxu0 0.0
        %7752 = vmatpush.msra.mxu0 0.0
        %7753 = vmatpush.msra.mxu0 0.0
        %7754 = vmatpush.msra.mxu0 0.0
        %7755 = vmatpush.msra.mxu0 0.0
        %7756 = vmatpush.msra.mxu0 %v6961
        %7757 = vmatmul.f32.gmra.mxu0 %v7739
        %v7758 = vpop.f32.mrf.mxu0
        %v7759 = vadd.f32 0.0, %v7758
        %7760 = vdwg.mxu0
        %7761 = vmatpush.msra.mxu0 0.0
        %7762 = vmatpush.msra.mxu0 0.0
        %7763 = vmatpush.msra.mxu0 0.0
        %7764 = vmatpush.msra.mxu0 0.0
        %7765 = vmatpush.msra.mxu0 0.0
        %7766 = vmatpush.msra.mxu0 0.0
        %7767 = vmatpush.msra.mxu0 0.0
        %7768 = vmatpush.msra.mxu0 0.0
        %7769 = vmatpush.msra.mxu0 0.0
        %7770 = vmatpush.msra.mxu0 0.0
        %7771 = vmatpush.msra.mxu0 0.0
        %7772 = vmatpush.msra.mxu0 0.0
        %7773 = vmatpush.msra.mxu0 0.0
        %7774 = vmatpush.msra.mxu0 0.0
        %7775 = vmatpush.msra.mxu0 0.0
        %7776 = vmatpush.msra.mxu0 %v6964
        %7777 = vmatmul.f32.gmra.mxu0 %v7739
        %v7778 = vpop.f32.mrf.mxu0
        %v7779 = vadd.f32 0.0, %v7778
        %7780 = vdwg.mxu0
        %7781 = vmatpush.msra.mxu0 0.0
        %7782 = vmatpush.msra.mxu0 0.0
        %7783 = vmatpush.msra.mxu0 0.0
        %7784 = vmatpush.msra.mxu0 0.0
        %7785 = vmatpush.msra.mxu0 0.0
        %7786 = vmatpush.msra.mxu0 0.0
        %7787 = vmatpush.msra.mxu0 0.0
        %7788 = vmatpush.msra.mxu0 0.0
        %7789 = vmatpush.msra.mxu0 0.0
        %7790 = vmatpush.msra.mxu0 0.0
        %7791 = vmatpush.msra.mxu0 0.0
        %7792 = vmatpush.msra.mxu0 0.0
        %7793 = vmatpush.msra.mxu0 0.0
        %7794 = vmatpush.msra.mxu0 0.0
        %7795 = vmatpush.msra.mxu0 0.0
        %7796 = vmatpush.msra.mxu0 %v6967
        %7797 = vmatmul.f32.gmra.mxu0 %v7739
        %v7798 = vpop.f32.mrf.mxu0
        %v7799 = vadd.f32 0.0, %v7798
        %7800 = vdwg.mxu0
        %7801 = vmatpush.msra.mxu0 0.0
        %7802 = vmatpush.msra.mxu0 0.0
        %7803 = vmatpush.msra.mxu0 0.0
        %7804 = vmatpush.msra.mxu0 0.0
        %7805 = vmatpush.msra.mxu0 0.0
        %7806 = vmatpush.msra.mxu0 0.0
        %7807 = vmatpush.msra.mxu0 0.0
        %7808 = vmatpush.msra.mxu0 0.0
        %7809 = vmatpush.msra.mxu0 0.0
        %7810 = vmatpush.msra.mxu0 0.0
        %7811 = vmatpush.msra.mxu0 0.0
        %7812 = vmatpush.msra.mxu0 0.0
        %7813 = vmatpush.msra.mxu0 0.0
        %7814 = vmatpush.msra.mxu0 0.0
        %7815 = vmatpush.msra.mxu0 0.0
        %7816 = vmatpush.msra.mxu0 %v6970
        %7817 = vmatmul.f32.gmra.mxu0 %v7739
        %v7818 = vpop.f32.mrf.mxu0
        %v7819 = vadd.f32 0.0, %v7818
        %7820 = vdwg.mxu0
        %s7821 = scalar_lea.vmem [#allocation19], 28
        %v7822 = vld [vmem:[%s7821] sm:$0xf]
        %v7824 = vperm.slane %v7822, 0
        %v7825 = vperm.slane %v7822, 1
        %v7826 = vperm.slane %v7822, 2
        %v7827 = vperm.slane %v7822, 3
        %v7832 = vmul.f32 %v7759, %v7824
        %v7833 = vmul.f32 %v7779, %v7825
        %v7834 = vmul.f32 %v7799, %v7826
        %v7835 = vmul.f32 %v7819, %v7827
        %v7836 = vsel %vm6827, %v7832, 0.0
        %v7837 = vsel %vm6827, %v7833, 0.0
        %v7838 = vadd.f32 %v7836, %v7837
        %v7839 = vsel %vm6827, %v7834, 0.0
        %v7840 = vadd.f32 %v7838, %v7839
        %v7841 = vsel %vm6827, %v7835, 0.0
        %v7842 = vadd.f32 %v7840, %v7841
        %7843 = vadd.xlane.f32.xlu0 %v7842
        %v7844 = vpop.xlane.xlu0 %7843
        %v7845 = vadd.f32 %v7735, %v7844
        %s7846 = scalar_lea.vmem %s12, 32
        %v7847 = vld [vmem:[%s7846] sm:$0xf]
        %v7849 = vsel %vm6956, %v7847, 0
        %7851 = vmatpush.msra.mxu0 0.0
        %7852 = vmatpush.msra.mxu0 0.0
        %7853 = vmatpush.msra.mxu0 0.0
        %7854 = vmatpush.msra.mxu0 0.0
        %7855 = vmatpush.msra.mxu0 0.0
        %7856 = vmatpush.msra.mxu0 0.0
        %7857 = vmatpush.msra.mxu0 0.0
        %7858 = vmatpush.msra.mxu0 0.0
        %7859 = vmatpush.msra.mxu0 0.0
        %7860 = vmatpush.msra.mxu0 0.0
        %7861 = vmatpush.msra.mxu0 0.0
        %7862 = vmatpush.msra.mxu0 0.0
        %7863 = vmatpush.msra.mxu0 0.0
        %7864 = vmatpush.msra.mxu0 0.0
        %7865 = vmatpush.msra.mxu0 0.0
        %7866 = vmatpush.msra.mxu0 %v6961
        %7867 = vmatmul.f32.gmra.mxu0 %v7849
        %v7868 = vpop.f32.mrf.mxu0
        %v7869 = vadd.f32 0.0, %v7868
        %7870 = vdwg.mxu0
        %7871 = vmatpush.msra.mxu0 0.0
        %7872 = vmatpush.msra.mxu0 0.0
        %7873 = vmatpush.msra.mxu0 0.0
        %7874 = vmatpush.msra.mxu0 0.0
        %7875 = vmatpush.msra.mxu0 0.0
        %7876 = vmatpush.msra.mxu0 0.0
        %7877 = vmatpush.msra.mxu0 0.0
        %7878 = vmatpush.msra.mxu0 0.0
        %7879 = vmatpush.msra.mxu0 0.0
        %7880 = vmatpush.msra.mxu0 0.0
        %7881 = vmatpush.msra.mxu0 0.0
        %7882 = vmatpush.msra.mxu0 0.0
        %7883 = vmatpush.msra.mxu0 0.0
        %7884 = vmatpush.msra.mxu0 0.0
        %7885 = vmatpush.msra.mxu0 0.0
        %7886 = vmatpush.msra.mxu0 %v6964
        %7887 = vmatmul.f32.gmra.mxu0 %v7849
        %v7888 = vpop.f32.mrf.mxu0
        %v7889 = vadd.f32 0.0, %v7888
        %7890 = vdwg.mxu0
        %7891 = vmatpush.msra.mxu0 0.0
        %7892 = vmatpush.msra.mxu0 0.0
        %7893 = vmatpush.msra.mxu0 0.0
        %7894 = vmatpush.msra.mxu0 0.0
        %7895 = vmatpush.msra.mxu0 0.0
        %7896 = vmatpush.msra.mxu0 0.0
        %7897 = vmatpush.msra.mxu0 0.0
        %7898 = vmatpush.msra.mxu0 0.0
        %7899 = vmatpush.msra.mxu0 0.0
        %7900 = vmatpush.msra.mxu0 0.0
        %7901 = vmatpush.msra.mxu0 0.0
        %7902 = vmatpush.msra.mxu0 0.0
        %7903 = vmatpush.msra.mxu0 0.0
        %7904 = vmatpush.msra.mxu0 0.0
        %7905 = vmatpush.msra.mxu0 0.0
        %7906 = vmatpush.msra.mxu0 %v6967
        %7907 = vmatmul.f32.gmra.mxu0 %v7849
        %v7908 = vpop.f32.mrf.mxu0
        %v7909 = vadd.f32 0.0, %v7908
        %7910 = vdwg.mxu0
        %7911 = vmatpush.msra.mxu0 0.0
        %7912 = vmatpush.msra.mxu0 0.0
        %7913 = vmatpush.msra.mxu0 0.0
        %7914 = vmatpush.msra.mxu0 0.0
        %7915 = vmatpush.msra.mxu0 0.0
        %7916 = vmatpush.msra.mxu0 0.0
        %7917 = vmatpush.msra.mxu0 0.0
        %7918 = vmatpush.msra.mxu0 0.0
        %7919 = vmatpush.msra.mxu0 0.0
        %7920 = vmatpush.msra.mxu0 0.0
        %7921 = vmatpush.msra.mxu0 0.0
        %7922 = vmatpush.msra.mxu0 0.0
        %7923 = vmatpush.msra.mxu0 0.0
        %7924 = vmatpush.msra.mxu0 0.0
        %7925 = vmatpush.msra.mxu0 0.0
        %7926 = vmatpush.msra.mxu0 %v6970
        %7927 = vmatmul.f32.gmra.mxu0 %v7849
        %v7928 = vpop.f32.mrf.mxu0
        %v7929 = vadd.f32 0.0, %v7928
        %7930 = vdwg.mxu0
        %s7931 = scalar_lea.vmem [#allocation19], 32
        %v7932 = vld [vmem:[%s7931] sm:$0xf]
        %v7934 = vperm.slane %v7932, 0
        %v7935 = vperm.slane %v7932, 1
        %v7936 = vperm.slane %v7932, 2
        %v7937 = vperm.slane %v7932, 3
        %v7942 = vmul.f32 %v7869, %v7934
        %v7943 = vmul.f32 %v7889, %v7935
        %v7944 = vmul.f32 %v7909, %v7936
        %v7945 = vmul.f32 %v7929, %v7937
        %v7946 = vsel %vm6827, %v7942, 0.0
        %v7947 = vsel %vm6827, %v7943, 0.0
        %v7948 = vadd.f32 %v7946, %v7947
        %v7949 = vsel %vm6827, %v7944, 0.0
        %v7950 = vadd.f32 %v7948, %v7949
        %v7951 = vsel %vm6827, %v7945, 0.0
        %v7952 = vadd.f32 %v7950, %v7951
        %7953 = vadd.xlane.f32.xlu0 %v7952
        %v7954 = vpop.xlane.xlu0 %7953
        %v7955 = vadd.f32 %v7845, %v7954
        %v7956 = vld [vmem:[#allocation2] sm:$0x1]
        %v7958 = vperm.slane %v7956, 0
        %v7960 = vadd.f32 %v7955, %v7958
        %vm7961 = vcmask 3072
        %7962 = vst.msk [vmem:[%s668] sm:$0xf] %vm7961, %v7960
        %p7963 = scmp.lt.s32.totalorder %s34, 1
        %s7964 = scalar_select %p7963, %s34, 1
        %s7965 = smul.addr %s7964, 4
        %s7966 = scalar_lea.vmem %s15, %s7965
        // Predicated region
        $region125: #{discriminator_forward.1} parent=79 // pred_check
          %p7967 = pneg %p372
        $region126: #{discriminator_forward.1} parent=79 // pred_check_branch
          %7969 = sbr.rel (%p7967) target = $region128
        $region127: #{discriminator_forward.1} parent=79 // pred_region
          _
        $region128: #{discriminator_forward.1} parent=79 // pred_fallthru
          _
      $region80: #{discriminator_forward.1} parent=5 // pred_fallthru
        _
      %p7970 = scmp.le.s32.totalorder 2, %s29
      // Predicated region
      $region129: #{discriminator_forward.1} parent=5 // pred_check
        %p7971 = pneg %p7970
      $region130: #{discriminator_forward.1} parent=5 // pred_check_branch
        %7973 = sbr.rel (%p7971) target = $region132
      $region131: #{discriminator_forward.1} parent=5 // pred_region
        %s7974 = ssub.s32 %s29, 2
        // Predicated region
        $region133: #{discriminator_forward.1} parent=131 // pred_check
          %p7975 = pneg %p378
        $region134: #{discriminator_forward.1} parent=131 // pred_check_branch
          %7977 = sbr.rel (%p7975) target = $region136
        $region135: #{discriminator_forward.1} parent=131 // pred_region
          %p7978 = scmp.lt.s32.totalorder %s35, 1
          %s7979 = scalar_select %p7978, %s35, 1
          %s7980 = smul.addr %s7979, 4
          %s7981 = scalar_lea.vmem %s15, %s7980
        $region136: #{discriminator_forward.1} parent=131 // pred_fallthru
          _
      $region132: #{discriminator_forward.1} parent=5 // pred_fallthru
        _
    $region6: #{discriminator_forward.1} parent=1 // loop_footer
      %s33 = sadd.s32 1, %s29
    $region7: #{discriminator_forward.1} parent=1 // loop_footer_branch
      %28 = sbr.rel target = $region3
    $region8: #{discriminator_forward.1} parent=1 // loop_exit
      _
    %7982 = vsyncpa [#allocation4], 1
    %s7983 = scalar_lea.sflag [#allocation4], 1
    %7984 = vsyncpa %s7983, 1
    %7985 = vsyncpa [#allocation6], 1
    %7986 = vsyncpa [#allocation9], 1
    %7987 = vsyncpa [#allocation12], 1
    %7988 = vsyncpa [#allocation15], 1
    %7989 = vsyncpa [#allocation18], 1

</llo_original>
